<compile_context>
chip_gen: v7x
topology: tpu7x:2x2x1
jax: 0.10.0
libtpu: 0.0.40
codegen_flags: <defaults>
</compile_context>

<pallas_src>
import functools
import math

import jax
import jax.numpy as jnp
from jax.experimental import pallas as pl
from jax.experimental.pallas import tpu as pltpu

SMEM_SPEC = pl.BlockSpec(memory_space=pltpu.MemorySpace.SMEM)


def _vmem_limit_bytes():
    """Scoped-VMEM limit derived from the chip; conservative 64 MiB (v7x) fallback."""
    cap = 64 * 1024 * 1024
    try:
        cap = int(pltpu.get_tpu_info().vmem_capacity_bytes)
    except Exception:
        pass
    return int(max(32 * 1024 * 1024, min(0.75 * cap, 100 * 1024 * 1024)))


VMEM_LIMIT = _vmem_limit_bytes()
BLOCK_BUDGET = VMEM_LIMIT // 3          # per-pallas_call block byte budget


def _cparams():
    return pltpu.CompilerParams(
        dimension_semantics=("parallel",),
        vmem_limit_bytes=VMEM_LIMIT,
    )


def _pad_lane(x):
    return max(128, ((x + 127) // 128) * 128)


def _budget_tile(n, unit_bytes, budget_bytes, *, rows_per_unit=1, min_steps=2):
    """Units per block: largest divisor of `n` that (a) fits the byte budget,
    (b) keeps the flattened block row count a multiple of 8 when possible, and
    (c) leaves >= min_steps grid steps (megacore / pipelining) when n allows it."""
    cap = max(1, min(n, budget_bytes // max(unit_bytes, 1)))
    if n >= min_steps:
        cap = min(cap, max(1, n // min_steps))
    divisors = [d for d in range(1, cap + 1) if n % d == 0]
    aligned = [d for d in divisors if (d * rows_per_unit) % 8 == 0]
    # TODO(synk): pad `n` to a friendly multiple instead of divisor search for awkward shapes.
    return max(aligned) if aligned else max(divisors)


def _const_spec(arr):
    """Whole-array block, constant index_map -> stays VMEM-resident across grid steps."""
    # TODO(synk): pipeline_mode=pl.Buffered(1) would halve the weights' VMEM footprint.
    n = arr.ndim
    return pl.BlockSpec(arr.shape, lambda i, _n=n: (0,) * _n)


# ----------------------------- input 1x1 conv + PReLU --------------------------------

def _conv_in_kernel(x_ref, w_ref, b_ref, a_ref, o_ref):
    acc = jnp.dot(x_ref[...].astype(jnp.bfloat16), w_ref[...],
                  preferred_element_type=jnp.float32) + b_ref[...]
    a = a_ref[0]
    o_ref[...] = jnp.where(acc >= 0.0, acc, a * acc).astype(o_ref.dtype)


def conv1x1_prelu(x2d, w, b, alpha):
    M, Cin = x2d.shape
    Cout = w.shape[1]
    row_bytes = 4 * (3 * _pad_lane(Cin) + 3 * _pad_lane(Cout))
    TM = _budget_tile(M, row_bytes, BLOCK_BUDGET, rows_per_unit=1, min_steps=2)
    wb = w.astype(jnp.bfloat16)
    b2 = b.reshape(1, Cout)
    return pl.pallas_call(
        _conv_in_kernel,
        out_shape=jax.ShapeDtypeStruct((M, Cout), x2d.dtype),
        grid=(M // TM,),
        in_specs=[
            pl.BlockSpec((TM, Cin), lambda i: (i, 0)),
            _const_spec(wb),
            _const_spec(b2),
            SMEM_SPEC,
        ],
        out_specs=pl.BlockSpec((TM, Cout), lambda i: (i, 0)),
        compiler_params=_cparams(),
    )(x2d, wb, b2, alpha)


# ----------------------------- fused TransformerEncoderLayer -------------------------

def _encoder_kernel(x_ref, wqkv_ref, bqkv_ref, wo_ref, bo_ref,
                    ln1g_ref, ln1b_ref, w1_ref, b1_ref, w2_ref, b2_ref,
                    ln2g_ref, ln2b_ref, o_ref, *, seq_len, nhead, ln_eps):
    rows, C = x_ref.shape                 # rows = TB * seq_len (batch-major, seq fastest)
    S = seq_len
    TB = rows // S
    dh = C // nhead
    scale = 1.0 / math.sqrt(dh)

    x = x_ref[...].astype(jnp.float32)
    xb = x.astype(jnp.bfloat16)

    # ---- fused QKV projection: one (rows, C) @ (C, 3C) MXU matmul -------------------
    qkv = jnp.dot(xb, wqkv_ref[...], preferred_element_type=jnp.float32) + bqkv_ref[...]

    # ---- per-head attention (statically unrolled; head split/concat is lane work) ---
    # TODO(synk): for long seq_len switch to a KV-tiled online-softmax loop instead of
    # materializing the (TB, S, S) score tensor.
    head_outs = []
    for h in range(nhead):
        q = qkv[:, h * dh:(h + 1) * dh].reshape(TB, S, dh)
        k = qkv[:, C + h * dh:C + (h + 1) * dh].reshape(TB, S, dh)
        v = qkv[:, 2 * C + h * dh:2 * C + (h + 1) * dh].reshape(TB, S, dh)
        s = jnp.einsum("bqd,bkd->bqk", q.astype(jnp.bfloat16), k.astype(jnp.bfloat16),
                       preferred_element_type=jnp.float32) * scale
        m = jnp.max(s, axis=-1, keepdims=True)
        p = jnp.exp(s - m)
        p = p / jnp.sum(p, axis=-1, keepdims=True)
        oh = jnp.einsum("bqk,bkd->bqd", p.astype(jnp.bfloat16), v.astype(jnp.bfloat16),
                        preferred_element_type=jnp.float32)
        head_outs.append(oh.reshape(rows, dh))
    o_cat = jnp.concatenate(head_outs, axis=-1)            # (rows, C)

    # ---- single (rows, C) @ (C, C) output projection ---------------------------------
    attn = jnp.dot(o_cat.astype(jnp.bfloat16), wo_ref[...],
                   preferred_element_type=jnp.float32) + bo_ref[...]

    def _ln(t, g, bta):
        mu = jnp.mean(t, axis=-1, keepdims=True)
        tc = t - mu
        var = jnp.mean(tc * tc, axis=-1, keepdims=True)
        return tc * jax.lax.rsqrt(var + ln_eps) * g + bta

    # ---- residual + LayerNorm1 (post-LN, PyTorch default) ----------------------------
    x = _ln(x + attn, ln1g_ref[...], ln1b_ref[...])

    # ---- FFN (ReLU) + residual + LayerNorm2; d_ff intermediate stays in VMEM ---------
    h1 = jnp.dot(x.astype(jnp.bfloat16), w1_ref[...],
                 preferred_element_type=jnp.float32) + b1_ref[...]
    h1 = jnp.maximum(h1, 0.0)
    ff = jnp.dot(h1.astype(jnp.bfloat16), w2_ref[...],
                 preferred_element_type=jnp.float32) + b2_ref[...]
    x = _ln(x + ff, ln2g_ref[...], ln2b_ref[...])

    o_ref[...] = x.astype(o_ref.dtype)


def _encoder_seq_bytes(s, c, dff, nhead):
    cp, ffp, sp = _pad_lane(c), _pad_lane(dff), _pad_lane(s)
    io = 2 * 2 * s * cp * 4                       # x in + out, double buffered
    qkv = s * _pad_lane(3 * c) * 4 * 2            # qkv f32 + bf16 copies
    heads = 3 * nhead * s * 128 * 4               # per-head q/k/v slices (dh -> 128 lanes)
    scores = nhead * s * sp * 4 * 2               # scores + softmax temporaries
    ffn = s * ffp * (4 + 2)                       # hmid f32 + bf16 copy
    resid = 4 * s * cp * 4                        # x / attn / ff / LN temporaries
    return io + qkv + heads + scores + ffn + resid


def encoder_layer(x2d, p, *, seq_len, nhead, ln_eps=1e-5):
    """Fused post-LN TransformerEncoderLayer on (NB*S, C) rows (batch-major, seq fastest)."""
    M, C = x2d.shape
    NB = M // seq_len
    dff = p["w1"].shape[1]
    w_bytes = 2 * 2 * (3 * C * C + C * C + 2 * C * dff)          # bf16, double-buffered
    budget = max(BLOCK_BUDGET - w_bytes, BLOCK_BUDGET // 4)
    TB = _budget_tile(NB, _encoder_seq_bytes(seq_len, C, dff, nhead), budget,
                      rows_per_unit=seq_len, min_steps=2)
    blk = TB * seq_len

    wqkv = p["wqkv"].astype(jnp.bfloat16)
    wo = p["wo"].astype(jnp.bfloat16)
    w1 = p["w1"].astype(jnp.bfloat16)
    w2 = p["w2"].astype(jnp.bfloat16)
    weights = [wqkv, p["bqkv"], wo, p["bo"], p["ln1_g"], p["ln1_b"],
               w1, p["b1"], w2, p["b2"], p["ln2_g"], p["ln2_b"]]

    in_specs = [pl.BlockSpec((blk, C), lambda i: (i, 0))]
    in_specs += [_const_spec(w) for w in weights]
    return pl.pallas_call(
        functools.partial(_encoder_kernel, seq_len=seq_len, nhead=nhead, ln_eps=ln_eps),
        out_shape=jax.ShapeDtypeStruct((M, C), x2d.dtype),
        grid=(NB // TB,),
        in_specs=in_specs,
        out_specs=pl.BlockSpec((blk, C), lambda i: (i, 0)),
        compiler_params=_cparams(),
    )(x2d, *weights)


# --------------- fused GroupNorm(row/col) + k1/k2 residual + output head -------------

def _gn_head_kernel(base_ref, row_ref, col_ref, rg_ref, rb_ref, cg_ref, cb_ref,
                    k_ref, a_ref, wout_ref, bout_ref, out_ref, y_ref, *, eps):
    def gn(x, g, bta):
        # GroupNorm(1, C): per-sample reduction over the full (hw, C) slab.
        mu = jnp.mean(jnp.mean(x, axis=2, keepdims=True), axis=1, keepdims=True)
        xc = x - mu
        var = jnp.mean(jnp.mean(xc * xc, axis=2, keepdims=True), axis=1, keepdims=True)
        return xc * jax.lax.rsqrt(var + eps) * g + bta

    r = gn(row_ref[...].astype(jnp.float32), rg_ref[...], rb_ref[...])
    c = gn(col_ref[...].astype(jnp.float32), cg_ref[...], cb_ref[...])
    out = base_ref[...].astype(jnp.float32) + k_ref[0] * r + k_ref[1] * c
    out_ref[...] = out.astype(out_ref.dtype)

    # fused output head: PReLU -> 1x1 conv (saves an HBM round trip per layer)
    tb, hw, cch = out.shape
    a = a_ref[0]
    z = jnp.where(out >= 0.0, out, a * out).reshape(tb * hw, cch)
    y = jnp.dot(z.astype(jnp.bfloat16), wout_ref[...],
                preferred_element_type=jnp.float32) + bout_ref[...]
    y_ref[...] = y.reshape(tb, hw, y.shape[-1]).astype(y_ref.dtype)


def _gn_sample_bytes(hw, c, cout):
    cp, cop = _pad_lane(c), _pad_lane(cout)
    io = (3 + 1) * 2 * hw * cp * 4 + 2 * hw * cop * 4
    tmp = 6 * hw * cp * 4
    return io + tmp


def gn_fuse_head(base3, row3, col3, rg, rb, cg, cb, k, out_w, out_b, alpha, *, eps=1e-8):
    """out = base + k1*GN(row) + k2*GN(col); y = PReLU(out) @ Wout + bout (fused head)."""
    B, HW, C = base3.shape
    Cout = out_w.shape[1]
    TB = _budget_tile(B, _gn_sample_bytes(HW, C, Cout), BLOCK_BUDGET,
                      rows_per_unit=8, min_steps=2)

    rg3, rb3 = rg.reshape(1, 1, C), rb.reshape(1, 1, C)
    cg3, cb3 = cg.reshape(1, 1, C), cb.reshape(1, 1, C)
    wob = out_w.astype(jnp.bfloat16)
    ob2 = out_b.reshape(1, Cout)

    io = pl.BlockSpec((TB, HW, C), lambda i: (i, 0, 0))
    oy = pl.BlockSpec((TB, HW, Cout), lambda i: (i, 0, 0))
    return pl.pallas_call(
        functools.partial(_gn_head_kernel, eps=eps),
        out_shape=(jax.ShapeDtypeStruct((B, HW, C), base3.dtype),
                   jax.ShapeDtypeStruct((B, HW, Cout), base3.dtype)),
        grid=(B // TB,),
        in_specs=[io, io, io,
                  _const_spec(rg3), _const_spec(rb3), _const_spec(cg3), _const_spec(cb3),
                  SMEM_SPEC, SMEM_SPEC,
                  _const_spec(wob), _const_spec(ob2)],
        out_specs=[io, oy],
        compiler_params=_cparams(),
    )(base3, row3, col3, rg3, rb3, cg3, cb3, k, alpha, wob, ob2)


# ----------------------------- parameters -------------------------------------------

def _dense(key, k, n, scale=0.05):
    return scale * jax.random.normal(key, (k, n), jnp.float32)


def init_encoder_layer_params(key, d_model, d_ff, nhead):
    # NOTE: x @ W convention, head-major columns inside each of the q/k/v slabs.
    # Porting real PyTorch MHA weights ((3E, E) for x @ W^T) requires transposing.
    ks = jax.random.split(key, 4)
    E = d_model
    return dict(
        wqkv=_dense(ks[0], E, 3 * E), bqkv=jnp.zeros((1, 3 * E), jnp.float32),
        wo=_dense(ks[1], E, E), bo=jnp.zeros((1, E), jnp.float32),
        ln1_g=jnp.ones((1, E), jnp.float32), ln1_b=jnp.zeros((1, E), jnp.float32),
        w1=_dense(ks[2], E, d_ff), b1=jnp.zeros((1, d_ff), jnp.float32),
        w2=_dense(ks[3], d_ff, E), b2=jnp.zeros((1, E), jnp.float32),
        ln2_g=jnp.ones((1, E), jnp.float32), ln2_b=jnp.zeros((1, E), jnp.float32),
    )


def init_params(key, input_size, output_size, num_layers=1, d_ff=2048, nhead=4):
    C = input_size // 2
    keys = jax.random.split(key, 2 + num_layers)
    layers = []
    for i in range(num_layers):
        krow, kcol = jax.random.split(keys[2 + i], 2)
        layers.append(dict(
            row=init_encoder_layer_params(krow, C, d_ff, nhead),
            col=init_encoder_layer_params(kcol, C, d_ff, nhead),
            row_gn_g=jnp.ones((C,), jnp.float32), row_gn_b=jnp.zeros((C,), jnp.float32),
            col_gn_g=jnp.ones((C,), jnp.float32), col_gn_b=jnp.zeros((C,), jnp.float32),
        ))
    return dict(
        k=jnp.ones((2,), jnp.float32),                    # k1, k2 (torch.ones(1) each)
        in_w=_dense(keys[0], input_size, C),
        in_b=jnp.zeros((C,), jnp.float32),
        in_prelu=jnp.full((1,), 0.25, jnp.float32),       # PReLU default init
        out_w=_dense(keys[1], C, output_size),
        out_b=jnp.zeros((output_size,), jnp.float32),
        out_prelu=jnp.full((1,), 0.25, jnp.float32),
        layers=layers,
    )


# ----------------------------- forward ------------------------------------------------

def aa_forward(params, x, num_layers=1, nhead=4):
    b, cin, dim2, dim1 = x.shape
    C = params["in_w"].shape[1]
    hw = dim2 * dim1

    # NCHW -> channels-last rows, once; everything below stays channels-last.
    rows = jnp.transpose(x, (0, 2, 3, 1)).reshape(b * hw, cin)
    out2d = conv1x1_prelu(rows, params["in_w"], params["in_b"], params["in_prelu"])

    out_list = []
    for i in range(num_layers):
        lp = params["layers"][i]

        # row branch: attend along dim1, batch (b, dim2) — rows already in that order.
        row_out = encoder_layer(out2d, lp["row"], seq_len=dim1, nhead=nhead)

        # col branch: attend along dim2, batch (b, dim1).
        # TODO(synk): fold these two layout transposes into the col encoder's BlockSpec.
        col_in = jnp.transpose(out2d.reshape(b, dim2, dim1, C),
                               (0, 2, 1, 3)).reshape(b * hw, C)
        col_out = encoder_layer(col_in, lp["col"], seq_len=dim2, nhead=nhead)
        col_out = jnp.transpose(col_out.reshape(b, dim1, dim2, C),
                                (0, 2, 1, 3)).reshape(b, hw, C)

        # fused: out + k1*GN(row) + k2*GN(col), plus the PReLU + 1x1-conv output head.
        out3, y3 = gn_fuse_head(
            out2d.reshape(b, hw, C), row_out.reshape(b, hw, C), col_out,
            lp["row_gn_g"], lp["row_gn_b"], lp["col_gn_g"], lp["col_gn_b"],
            params["k"], params["out_w"], params["out_b"], params["out_prelu"],
            eps=1e-8)
        out2d = out3.reshape(b * hw, C)
        out_list.append(jnp.transpose(y3.reshape(b, dim2, dim1, -1), (0, 3, 1, 2)))

    out_nchw = jnp.transpose(out2d.reshape(b, dim2, dim1, C), (0, 3, 1, 2))
    # TODO(synk): the reference calls `output.append(output_i)` on a Tensor (a bug in the
    # snippet); we follow the evident intent and return (residual output, per-layer outputs).
    return out_nchw, out_list


if __name__ == "__main__":
    input_size, output_size = 64, 64     # hidden C = 32, nhead = 4 -> head_dim 8
    b, dim2, dim1 = 2, 8, 8
    num_layers = 1
    nhead = 4

    key = jax.random.PRNGKey(0)
    pkey, xkey = jax.random.split(key)
    params = init_params(pkey, input_size, output_size, num_layers=num_layers, nhead=nhead)
    x = jax.random.normal(xkey, (b, input_size, dim2, dim1), jnp.float32)

    fwd = jax.jit(functools.partial(aa_forward, num_layers=num_layers, nhead=nhead))
    out, out_list = fwd(params, x)
    jax.block_until_ready((out, out_list))

    assert out.shape == (b, input_size // 2, dim2, dim1)
    assert out_list[-1].shape == (b, output_size, dim2, dim1)
    assert jnp.all(jnp.isfinite(out)) and jnp.all(jnp.isfinite(out_list[-1]))
    print("KERNEL_OK")
</pallas_src>

<mosaic_0001>
module attributes {stable_mosaic.version = 11 : i64} {
  func.func @_conv_in_kernel(%arg0: i32, %arg1: memref<64x64xf32, #tpu.memory_space<vmem>>, %arg2: memref<64x32xbf16, #tpu.memory_space<vmem>>, %arg3: memref<1x32xf32, #tpu.memory_space<vmem>>, %arg4: memref<1xf32, #tpu.memory_space<smem>>, %arg5: memref<64x32xf32, #tpu.memory_space<vmem>>) attributes {dimension_semantics = [#tpu.dimension_semantics<parallel>], iteration_bounds = array<i64: 2>, scalar_prefetch = 0 : i64, scratch_operands = 0 : i64, tpu.core_type = #tpu.core_type<tc>, window_params = [{transform_indices = @transform_0, window_bounds = array<i64: 64, 64>}, {pipeline_mode = #tpu.pipeline_mode<synchronous>, transform_indices = @transform_1, window_bounds = array<i64: 64, 32>}, {pipeline_mode = #tpu.pipeline_mode<synchronous>, transform_indices = @transform_2, window_bounds = array<i64: 1, 32>}, {transform_indices = @transform_3, window_bounds = array<i64: 1>}, {transform_indices = @transform_4, window_bounds = array<i64: 64, 32>}]} {
    %c0 = arith.constant 0 : index
    %c0_0 = arith.constant 0 : index
    %0 = vector.load %arg1[%c0, %c0_0] : memref<64x64xf32, #tpu.memory_space<vmem>>, vector<64x64xf32>
    %1 = arith.truncf %0 : vector<64x64xf32> to vector<64x64xbf16>
    %c0_1 = arith.constant 0 : index
    %c0_2 = arith.constant 0 : index
    %2 = vector.load %arg2[%c0_1, %c0_2] : memref<64x32xbf16, #tpu.memory_space<vmem>>, vector<64x32xbf16>
    %cst = arith.constant dense<0.000000e+00> : vector<64x32xf32>
    %3 = tpu.matmul %1, %2, %cst {dimension_numbers = #tpu.dot_dimension_numbers<[1], [0], [0], [1], [0, 0, 1, 1], [], []>} : vector<64x64xbf16>, vector<64x32xbf16>, vector<64x32xf32> -> vector<64x32xf32>
    %c0_3 = arith.constant 0 : index
    %c0_4 = arith.constant 0 : index
    %4 = vector.load %arg3[%c0_3, %c0_4] : memref<1x32xf32, #tpu.memory_space<vmem>>, vector<1x32xf32>
    %5 = vector.broadcast %4 : vector<1x32xf32> to vector<64x32xf32>
    %6 = arith.addf %3, %5 : vector<64x32xf32>
    %c0_5 = arith.constant 0 : index
    %7 = memref.load %arg4[%c0_5] : memref<1xf32, #tpu.memory_space<smem>>
    %cst_6 = arith.constant 0.000000e+00 : f32
    %8 = vector.broadcast %cst_6 : f32 to vector<64x32xf32>
    %9 = arith.cmpf oge, %6, %8 : vector<64x32xf32>
    %10 = vector.broadcast %7 : f32 to vector<64x32xf32>
    %11 = arith.mulf %10, %6 : vector<64x32xf32>
    %12 = arith.select %9, %6, %11 : vector<64x32xi1>, vector<64x32xf32>
    %c0_7 = arith.constant 0 : index
    %c0_8 = arith.constant 0 : index
    %13 = vector.load %arg5[%c0_7, %c0_8] : memref<64x32xf32, #tpu.memory_space<vmem>>, vector<64x32xf32>
    tpu.vector_store %arg5[%c0_7, %c0_8], %12 {strides = array<i32>} : memref<64x32xf32, #tpu.memory_space<vmem>>, vector<64x32xf32>,
    return
  }
  func.func @transform_0(%arg0: i32) -> (i32, i32) {
    %c0_i32 = arith.constant 0 : i32
    %c0_i32_0 = arith.constant 0 : i32
    return %arg0, %c0_i32 : i32, i32
  }
  func.func @transform_1(%arg0: i32) -> (i32, i32) {
    %c0_i32 = arith.constant 0 : i32
    %c0_i32_0 = arith.constant 0 : i32
    %c0_i32_1 = arith.constant 0 : i32
    return %c0_i32, %c0_i32_0 : i32, i32
  }
  func.func @transform_2(%arg0: i32) -> (i32, i32) {
    %c0_i32 = arith.constant 0 : i32
    %c0_i32_0 = arith.constant 0 : i32
    %c0_i32_1 = arith.constant 0 : i32
    return %c0_i32, %c0_i32_0 : i32, i32
  }
  func.func @transform_3(%arg0: i32) -> i32 {
    %c0_i32 = arith.constant 0 : i32
    %c0_i32_0 = arith.constant 0 : i32
    return %c0_i32 : i32
  }
  func.func @transform_4(%arg0: i32) -> (i32, i32) {
    %c0_i32 = arith.constant 0 : i32
    %c0_i32_0 = arith.constant 0 : i32
    return %arg0, %c0_i32 : i32, i32
  }
}

module attributes {stable_mosaic.version = 11 : i64} {
  func.func @_encoder_kernel(%arg0: i32, %arg1: memref<64x32xf32, #tpu.memory_space<vmem>>, %arg2: memref<32x96xbf16, #tpu.memory_space<vmem>>, %arg3: memref<1x96xf32, #tpu.memory_space<vmem>>, %arg4: memref<32x32xbf16, #tpu.memory_space<vmem>>, %arg5: memref<1x32xf32, #tpu.memory_space<vmem>>, %arg6: memref<1x32xf32, #tpu.memory_space<vmem>>, %arg7: memref<1x32xf32, #tpu.memory_space<vmem>>, %arg8: memref<32x2048xbf16, #tpu.memory_space<vmem>>, %arg9: memref<1x2048xf32, #tpu.memory_space<vmem>>, %arg10: memref<2048x32xbf16, #tpu.memory_space<vmem>>, %arg11: memref<1x32xf32, #tpu.memory_space<vmem>>, %arg12: memref<1x32xf32, #tpu.memory_space<vmem>>, %arg13: memref<1x32xf32, #tpu.memory_space<vmem>>, %arg14: memref<64x32xf32, #tpu.memory_space<vmem>>) attributes {dimension_semantics = [#tpu.dimension_semantics<parallel>], iteration_bounds = array<i64: 2>, scalar_prefetch = 0 : i64, scratch_operands = 0 : i64, tpu.core_type = #tpu.core_type<tc>, window_params = [{transform_indices = @transform_0, window_bounds = array<i64: 64, 32>}, {pipeline_mode = #tpu.pipeline_mode<synchronous>, transform_indices = @transform_1, window_bounds = array<i64: 32, 96>}, {pipeline_mode = #tpu.pipeline_mode<synchronous>, transform_indices = @transform_2, window_bounds = array<i64: 1, 96>}, {pipeline_mode = #tpu.pipeline_mode<synchronous>, transform_indices = @transform_3, window_bounds = array<i64: 32, 32>}, {pipeline_mode = #tpu.pipeline_mode<synchronous>, transform_indices = @transform_4, window_bounds = array<i64: 1, 32>}, {pipeline_mode = #tpu.pipeline_mode<synchronous>, transform_indices = @transform_5, window_bounds = array<i64: 1, 32>}, {pipeline_mode = #tpu.pipeline_mode<synchronous>, transform_indices = @transform_6, window_bounds = array<i64: 1, 32>}, {pipeline_mode = #tpu.pipeline_mode<synchronous>, transform_indices = @transform_7, window_bounds = array<i64: 32, 2048>}, {pipeline_mode = #tpu.pipeline_mode<synchronous>, transform_indices = @transform_8, window_bounds = array<i64: 1, 2048>}, {pipeline_mode = #tpu.pipeline_mode<synchronous>, transform_indices = @transform_9, window_bounds = array<i64: 2048, 32>}, {pipeline_mode = #tpu.pipeline_mode<synchronous>, transform_indices = @transform_10, window_bounds = array<i64: 1, 32>}, {pipeline_mode = #tpu.pipeline_mode<synchronous>, transform_indices = @transform_11, window_bounds = array<i64: 1, 32>}, {pipeline_mode = #tpu.pipeline_mode<synchronous>, transform_indices = @transform_12, window_bounds = array<i64: 1, 32>}, {transform_indices = @transform_13, window_bounds = array<i64: 64, 32>}]} {
    %c0 = arith.constant 0 : index
    %c0_0 = arith.constant 0 : index
    %0 = vector.load %arg1[%c0, %c0_0] : memref<64x32xf32, #tpu.memory_space<vmem>>, vector<64x32xf32>
    %1 = arith.truncf %0 : vector<64x32xf32> to vector<64x32xbf16>
    %c0_1 = arith.constant 0 : index
    %c0_2 = arith.constant 0 : index
    %2 = vector.load %arg2[%c0_1, %c0_2] : memref<32x96xbf16, #tpu.memory_space<vmem>>, vector<32x96xbf16>
    %cst = arith.constant dense<0.000000e+00> : vector<64x96xf32>
    %3 = tpu.matmul %1, %2, %cst {dimension_numbers = #tpu.dot_dimension_numbers<[1], [0], [0], [1], [0, 0, 1, 1], [], []>} : vector<64x32xbf16>, vector<32x96xbf16>, vector<64x96xf32> -> vector<64x96xf32>
    %c0_3 = arith.constant 0 : index
    %c0_4 = arith.constant 0 : index
    %4 = vector.load %arg3[%c0_3, %c0_4] : memref<1x96xf32, #tpu.memory_space<vmem>>, vector<1x96xf32>
    %5 = vector.broadcast %4 : vector<1x96xf32> to vector<64x96xf32>
    %6 = arith.addf %3, %5 : vector<64x96xf32>
    %7 = vector.extract_strided_slice %6 {offsets = [0, 0], sizes = [64, 8], strides = [1, 1]} : vector<64x96xf32> to vector<64x8xf32>
    %8 = vector.shape_cast %7 : vector<64x8xf32> to vector<8x8x8xf32>
    %9 = vector.extract_strided_slice %6 {offsets = [0, 32], sizes = [64, 8], strides = [1, 1]} : vector<64x96xf32> to vector<64x8xf32>
    %10 = vector.shape_cast %9 : vector<64x8xf32> to vector<8x8x8xf32>
    %11 = vector.extract_strided_slice %6 {offsets = [0, 64], sizes = [64, 8], strides = [1, 1]} : vector<64x96xf32> to vector<64x8xf32>
    %12 = vector.shape_cast %11 : vector<64x8xf32> to vector<8x8x8xf32>
    %13 = arith.truncf %8 : vector<8x8x8xf32> to vector<8x8x8xbf16>
    %14 = arith.truncf %10 : vector<8x8x8xf32> to vector<8x8x8xbf16>
    "tpu.trace_start"() <{level = 10 : i32, message = "bqd,bkd->bqk"}> : () -> ()
    %cst_5 = arith.constant dense<0.000000e+00> : vector<8x8x8xf32>
    %15 = tpu.matmul %13, %14, %cst_5 {dimension_numbers = #tpu.dot_dimension_numbers<[2], [2], [1], [1], [0, 0, 0, 1, 1, 1], [0], [0]>} : vector<8x8x8xbf16>, vector<8x8x8xbf16>, vector<8x8x8xf32> -> vector<8x8x8xf32>
    "tpu.trace_stop"() : () -> ()
    %cst_6 = arith.constant 0.353553385 : f32
    %16 = vector.broadcast %cst_6 : f32 to vector<8x8x8xf32>
    %17 = arith.mulf %15, %16 : vector<8x8x8xf32>
    %cst_7 = arith.constant dense<0xFF800000> : vector<8x8xf32>
    %18 = vector.multi_reduction <maximumf>, %17, %cst_7 [2] : vector<8x8x8xf32> to vector<8x8xf32>
    %19 = vector.shape_cast %18 : vector<8x8xf32> to vector<8x8x1xf32>
    %20 = vector.broadcast %19 : vector<8x8x1xf32> to vector<8x8x8xf32>
    %21 = arith.subf %17, %20 : vector<8x8x8xf32>
    %22 = math.exp %21 : vector<8x8x8xf32>
    %cst_8 = arith.constant dense<0.000000e+00> : vector<8x8xf32>
    %23 = vector.multi_reduction <add>, %22, %cst_8 [2] : vector<8x8x8xf32> to vector<8x8xf32>
    %24 = vector.shape_cast %23 : vector<8x8xf32> to vector<8x8x1xf32>
    %25 = vector.broadcast %24 : vector<8x8x1xf32> to vector<8x8x8xf32>
    %26 = arith.divf %22, %25 : vector<8x8x8xf32>
    %27 = arith.truncf %26 : vector<8x8x8xf32> to vector<8x8x8xbf16>
    %28 = arith.truncf %12 : vector<8x8x8xf32> to vector<8x8x8xbf16>
    "tpu.trace_start"() <{level = 10 : i32, message = "bqk,bkd->bqd"}> : () -> ()
    %cst_9 = arith.constant dense<0.000000e+00> : vector<8x8x8xf32>
    %29 = tpu.matmul %27, %28, %cst_9 {dimension_numbers = #tpu.dot_dimension_numbers<[2], [1], [1], [2], [0, 0, 0, 1, 1, 2], [0], [0]>} : vector<8x8x8xbf16>, vector<8x8x8xbf16>, vector<8x8x8xf32> -> vector<8x8x8xf32>
    "tpu.trace_stop"() : () -> ()
    %30 = vector.shape_cast %29 : vector<8x8x8xf32> to vector<64x8xf32>
    %31 = vector.extract_strided_slice %6 {offsets = [0, 8], sizes = [64, 8], strides = [1, 1]} : vector<64x96xf32> to vector<64x8xf32>
    %32 = vector.shape_cast %31 : vector<64x8xf32> to vector<8x8x8xf32>
    %33 = vector.extract_strided_slice %6 {offsets = [0, 40], sizes = [64, 8], strides = [1, 1]} : vector<64x96xf32> to vector<64x8xf32>
    %34 = vector.shape_cast %33 : vector<64x8xf32> to vector<8x8x8xf32>
    %35 = vector.extract_strided_slice %6 {offsets = [0, 72], sizes = [64, 8], strides = [1, 1]} : vector<64x96xf32> to vector<64x8xf32>
    %36 = vector.shape_cast %35 : vector<64x8xf32> to vector<8x8x8xf32>
    %37 = arith.truncf %32 : vector<8x8x8xf32> to vector<8x8x8xbf16>
    %38 = arith.truncf %34 : vector<8x8x8xf32> to vector<8x8x8xbf16>
    "tpu.trace_start"() <{level = 10 : i32, message = "bqd,bkd->bqk"}> : () -> ()
    %cst_10 = arith.constant dense<0.000000e+00> : vector<8x8x8xf32>
    %39 = tpu.matmul %37, %38, %cst_10 {dimension_numbers = #tpu.dot_dimension_numbers<[2], [2], [1], [1], [0, 0, 0, 1, 1, 1], [0], [0]>} : vector<8x8x8xbf16>, vector<8x8x8xbf16>, vector<8x8x8xf32> -> vector<8x8x8xf32>
    "tpu.trace_stop"() : () -> ()
    %cst_11 = arith.constant 0.353553385 : f32
    %40 = vector.broadcast %cst_11 : f32 to vector<8x8x8xf32>
    %41 = arith.mulf %39, %40 : vector<8x8x8xf32>
    %cst_12 = arith.constant dense<0xFF800000> : vector<8x8xf32>
    %42 = vector.multi_reduction <maximumf>, %41, %cst_12 [2] : vector<8x8x8xf32> to vector<8x8xf32>
    %43 = vector.shape_cast %42 : vector<8x8xf32> to vector<8x8x1xf32>
    %44 = vector.broadcast %43 : vector<8x8x1xf32> to vector<8x8x8xf32>
    %45 = arith.subf %41, %44 : vector<8x8x8xf32>
    %46 = math.exp %45 : vector<8x8x8xf32>
    %cst_13 = arith.constant dense<0.000000e+00> : vector<8x8xf32>
    %47 = vector.multi_reduction <add>, %46, %cst_13 [2] : vector<8x8x8xf32> to vector<8x8xf32>
    %48 = vector.shape_cast %47 : vector<8x8xf32> to vector<8x8x1xf32>
    %49 = vector.broadcast %48 : vector<8x8x1xf32> to vector<8x8x8xf32>
    %50 = arith.divf %46, %49 : vector<8x8x8xf32>
    %51 = arith.truncf %50 : vector<8x8x8xf32> to vector<8x8x8xbf16>
    %52 = arith.truncf %36 : vector<8x8x8xf32> to vector<8x8x8xbf16>
    "tpu.trace_start"() <{level = 10 : i32, message = "bqk,bkd->bqd"}> : () -> ()
    %cst_14 = arith.constant dense<0.000000e+00> : vector<8x8x8xf32>
    %53 = tpu.matmul %51, %52, %cst_14 {dimension_numbers = #tpu.dot_dimension_numbers<[2], [1], [1], [2], [0, 0, 0, 1, 1, 2], [0], [0]>} : vector<8x8x8xbf16>, vector<8x8x8xbf16>, vector<8x8x8xf32> -> vector<8x8x8xf32>
    "tpu.trace_stop"() : () -> ()
    %54 = vector.shape_cast %53 : vector<8x8x8xf32> to vector<64x8xf32>
    %55 = vector.extract_strided_slice %6 {offsets = [0, 16], sizes = [64, 8], strides = [1, 1]} : vector<64x96xf32> to vector<64x8xf32>
    %56 = vector.shape_cast %55 : vector<64x8xf32> to vector<8x8x8xf32>
    %57 = vector.extract_strided_slice %6 {offsets = [0, 48], sizes = [64, 8], strides = [1, 1]} : vector<64x96xf32> to vector<64x8xf32>
    %58 = vector.shape_cast %57 : vector<64x8xf32> to vector<8x8x8xf32>
    %59 = vector.extract_strided_slice %6 {offsets = [0, 80], sizes = [64, 8], strides = [1, 1]} : vector<64x96xf32> to vector<64x8xf32>
    %60 = vector.shape_cast %59 : vector<64x8xf32> to vector<8x8x8xf32>
    %61 = arith.truncf %56 : vector<8x8x8xf32> to vector<8x8x8xbf16>
    %62 = arith.truncf %58 : vector<8x8x8xf32> to vector<8x8x8xbf16>
    "tpu.trace_start"() <{level = 10 : i32, message = "bqd,bkd->bqk"}> : () -> ()
    %cst_15 = arith.constant dense<0.000000e+00> : vector<8x8x8xf32>
    %63 = tpu.matmul %61, %62, %cst_15 {dimension_numbers = #tpu.dot_dimension_numbers<[2], [2], [1], [1], [0, 0, 0, 1, 1, 1], [0], [0]>} : vector<8x8x8xbf16>, vector<8x8x8xbf16>, vector<8x8x8xf32> -> vector<8x8x8xf32>
    "tpu.trace_stop"() : () -> ()
    %cst_16 = arith.constant 0.353553385 : f32
    %64 = vector.broadcast %cst_16 : f32 to vector<8x8x8xf32>
    %65 = arith.mulf %63, %64 : vector<8x8x8xf32>
    %cst_17 = arith.constant dense<0xFF800000> : vector<8x8xf32>
    %66 = vector.multi_reduction <maximumf>, %65, %cst_17 [2] : vector<8x8x8xf32> to vector<8x8xf32>
    %67 = vector.shape_cast %66 : vector<8x8xf32> to vector<8x8x1xf32>
    %68 = vector.broadcast %67 : vector<8x8x1xf32> to vector<8x8x8xf32>
    %69 = arith.subf %65, %68 : vector<8x8x8xf32>
    %70 = math.exp %69 : vector<8x8x8xf32>
    %cst_18 = arith.constant dense<0.000000e+00> : vector<8x8xf32>
    %71 = vector.multi_reduction <add>, %70, %cst_18 [2] : vector<8x8x8xf32> to vector<8x8xf32>
    %72 = vector.shape_cast %71 : vector<8x8xf32> to vector<8x8x1xf32>
    %73 = vector.broadcast %72 : vector<8x8x1xf32> to vector<8x8x8xf32>
    %74 = arith.divf %70, %73 : vector<8x8x8xf32>
    %75 = arith.truncf %74 : vector<8x8x8xf32> to vector<8x8x8xbf16>
    %76 = arith.truncf %60 : vector<8x8x8xf32> to vector<8x8x8xbf16>
    "tpu.trace_start"() <{level = 10 : i32, message = "bqk,bkd->bqd"}> : () -> ()
    %cst_19 = arith.constant dense<0.000000e+00> : vector<8x8x8xf32>
    %77 = tpu.matmul %75, %76, %cst_19 {dimension_numbers = #tpu.dot_dimension_numbers<[2], [1], [1], [2], [0, 0, 0, 1, 1, 2], [0], [0]>} : vector<8x8x8xbf16>, vector<8x8x8xbf16>, vector<8x8x8xf32> -> vector<8x8x8xf32>
    "tpu.trace_stop"() : () -> ()
    %78 = vector.shape_cast %77 : vector<8x8x8xf32> to vector<64x8xf32>
    %79 = vector.extract_strided_slice %6 {offsets = [0, 24], sizes = [64, 8], strides = [1, 1]} : vector<64x96xf32> to vector<64x8xf32>
    %80 = vector.shape_cast %79 : vector<64x8xf32> to vector<8x8x8xf32>
    %81 = vector.extract_strided_slice %6 {offsets = [0, 56], sizes = [64, 8], strides = [1, 1]} : vector<64x96xf32> to vector<64x8xf32>
    %82 = vector.shape_cast %81 : vector<64x8xf32> to vector<8x8x8xf32>
    %83 = vector.extract_strided_slice %6 {offsets = [0, 88], sizes = [64, 8], strides = [1, 1]} : vector<64x96xf32> to vector<64x8xf32>
    %84 = vector.shape_cast %83 : vector<64x8xf32> to vector<8x8x8xf32>
    %85 = arith.truncf %80 : vector<8x8x8xf32> to vector<8x8x8xbf16>
    %86 = arith.truncf %82 : vector<8x8x8xf32> to vector<8x8x8xbf16>
    "tpu.trace_start"() <{level = 10 : i32, message = "bqd,bkd->bqk"}> : () -> ()
    %cst_20 = arith.constant dense<0.000000e+00> : vector<8x8x8xf32>
    %87 = tpu.matmul %85, %86, %cst_20 {dimension_numbers = #tpu.dot_dimension_numbers<[2], [2], [1], [1], [0, 0, 0, 1, 1, 1], [0], [0]>} : vector<8x8x8xbf16>, vector<8x8x8xbf16>, vector<8x8x8xf32> -> vector<8x8x8xf32>
    "tpu.trace_stop"() : () -> ()
    %cst_21 = arith.constant 0.353553385 : f32
    %88 = vector.broadcast %cst_21 : f32 to vector<8x8x8xf32>
    %89 = arith.mulf %87, %88 : vector<8x8x8xf32>
    %cst_22 = arith.constant dense<0xFF800000> : vector<8x8xf32>
    %90 = vector.multi_reduction <maximumf>, %89, %cst_22 [2] : vector<8x8x8xf32> to vector<8x8xf32>
    %91 = vector.shape_cast %90 : vector<8x8xf32> to vector<8x8x1xf32>
    %92 = vector.broadcast %91 : vector<8x8x1xf32> to vector<8x8x8xf32>
    %93 = arith.subf %89, %92 : vector<8x8x8xf32>
    %94 = math.exp %93 : vector<8x8x8xf32>
    %cst_23 = arith.constant dense<0.000000e+00> : vector<8x8xf32>
    %95 = vector.multi_reduction <add>, %94, %cst_23 [2] : vector<8x8x8xf32> to vector<8x8xf32>
    %96 = vector.shape_cast %95 : vector<8x8xf32> to vector<8x8x1xf32>
    %97 = vector.broadcast %96 : vector<8x8x1xf32> to vector<8x8x8xf32>
    %98 = arith.divf %94, %97 : vector<8x8x8xf32>
    %99 = arith.truncf %98 : vector<8x8x8xf32> to vector<8x8x8xbf16>
    %100 = arith.truncf %84 : vector<8x8x8xf32> to vector<8x8x8xbf16>
    "tpu.trace_start"() <{level = 10 : i32, message = "bqk,bkd->bqd"}> : () -> ()
    %cst_24 = arith.constant dense<0.000000e+00> : vector<8x8x8xf32>
    %101 = tpu.matmul %99, %100, %cst_24 {dimension_numbers = #tpu.dot_dimension_numbers<[2], [1], [1], [2], [0, 0, 0, 1, 1, 2], [0], [0]>} : vector<8x8x8xbf16>, vector<8x8x8xbf16>, vector<8x8x8xf32> -> vector<8x8x8xf32>
    "tpu.trace_stop"() : () -> ()
    %102 = vector.shape_cast %101 : vector<8x8x8xf32> to vector<64x8xf32>
    %103 = tpu.concatenate %30, %54, %78, %102 in 1 : vector<64x8xf32>, vector<64x8xf32>, vector<64x8xf32>, vector<64x8xf32> -> vector<64x32xf32>
    %104 = arith.truncf %103 : vector<64x32xf32> to vector<64x32xbf16>
    %c0_25 = arith.constant 0 : index
    %c0_26 = arith.constant 0 : index
    %105 = vector.load %arg4[%c0_25, %c0_26] : memref<32x32xbf16, #tpu.memory_space<vmem>>, vector<32x32xbf16>
    %cst_27 = arith.constant dense<0.000000e+00> : vector<64x32xf32>
    %106 = tpu.matmul %104, %105, %cst_27 {dimension_numbers = #tpu.dot_dimension_numbers<[1], [0], [0], [1], [0, 0, 1, 1], [], []>} : vector<64x32xbf16>, vector<32x32xbf16>, vector<64x32xf32> -> vector<64x32xf32>
    %c0_28 = arith.constant 0 : index
    %c0_29 = arith.constant 0 : index
    %107 = vector.load %arg5[%c0_28, %c0_29] : memref<1x32xf32, #tpu.memory_space<vmem>>, vector<1x32xf32>
    %108 = vector.broadcast %107 : vector<1x32xf32> to vector<64x32xf32>
    %109 = arith.addf %106, %108 : vector<64x32xf32>
    %110 = arith.addf %0, %109 : vector<64x32xf32>
    %c0_30 = arith.constant 0 : index
    %c0_31 = arith.constant 0 : index
    %111 = vector.load %arg6[%c0_30, %c0_31] : memref<1x32xf32, #tpu.memory_space<vmem>>, vector<1x32xf32>
    %c0_32 = arith.constant 0 : index
    %c0_33 = arith.constant 0 : index
    %112 = vector.load %arg7[%c0_32, %c0_33] : memref<1x32xf32, #tpu.memory_space<vmem>>, vector<1x32xf32>
    %cst_34 = arith.constant dense<0.000000e+00> : vector<64xf32>
    %113 = vector.multi_reduction <add>, %110, %cst_34 [1] : vector<64x32xf32> to vector<64xf32>
    %114 = vector.shape_cast %113 : vector<64xf32> to vector<64x1xf32>
    %cst_35 = arith.constant 3.200000e+01 : f32
    %115 = vector.broadcast %cst_35 : f32 to vector<64x1xf32>
    %116 = arith.divf %114, %115 : vector<64x1xf32>
    %117 = vector.broadcast %116 : vector<64x1xf32> to vector<64x32xf32>
    %118 = arith.subf %110, %117 : vector<64x32xf32>
    %119 = arith.mulf %118, %118 : vector<64x32xf32>
    %cst_36 = arith.constant dense<0.000000e+00> : vector<64xf32>
    %120 = vector.multi_reduction <add>, %119, %cst_36 [1] : vector<64x32xf32> to vector<64xf32>
    %121 = vector.shape_cast %120 : vector<64xf32> to vector<64x1xf32>
    %cst_37 = arith.constant 3.200000e+01 : f32
    %122 = vector.broadcast %cst_37 : f32 to vector<64x1xf32>
    %123 = arith.divf %121, %122 : vector<64x1xf32>
    %cst_38 = arith.constant 9.99999974E-6 : f32
    %124 = vector.broadcast %cst_38 : f32 to vector<64x1xf32>
    %125 = arith.addf %123, %124 : vector<64x1xf32>
    %126 = math.rsqrt %125 : vector<64x1xf32>
    %127 = vector.broadcast %126 : vector<64x1xf32> to vector<64x32xf32>
    %128 = arith.mulf %118, %127 : vector<64x32xf32>
    %129 = vector.broadcast %111 : vector<1x32xf32> to vector<64x32xf32>
    %130 = arith.mulf %128, %129 : vector<64x32xf32>
    %131 = vector.broadcast %112 : vector<1x32xf32> to vector<64x32xf32>
    %132 = arith.addf %130, %131 : vector<64x32xf32>
    %133 = arith.truncf %132 : vector<64x32xf32> to vector<64x32xbf16>
    %c0_39 = arith.constant 0 : index
    %c0_40 = arith.constant 0 : index
    %134 = vector.load %arg8[%c0_39, %c0_40] : memref<32x2048xbf16, #tpu.memory_space<vmem>>, vector<32x2048xbf16>
    %cst_41 = arith.constant dense<0.000000e+00> : vector<64x2048xf32>
    %135 = tpu.matmul %133, %134, %cst_41 {dimension_numbers = #tpu.dot_dimension_numbers<[1], [0], [0], [1], [0, 0, 1, 1], [], []>} : vector<64x32xbf16>, vector<32x2048xbf16>, vector<64x2048xf32> -> vector<64x2048xf32>
    %c0_42 = arith.constant 0 : index
    %c0_43 = arith.constant 0 : index
    %136 = vector.load %arg9[%c0_42, %c0_43] : memref<1x2048xf32, #tpu.memory_space<vmem>>, vector<1x2048xf32>
    %137 = vector.broadcast %136 : vector<1x2048xf32> to vector<64x2048xf32>
    %138 = arith.addf %135, %137 : vector<64x2048xf32>
    %cst_44 = arith.constant 0.000000e+00 : f32
    %139 = vector.broadcast %cst_44 : f32 to vector<64x2048xf32>
    %140 = arith.maximumf %138, %139 : vector<64x2048xf32>
    %141 = arith.truncf %140 : vector<64x2048xf32> to vector<64x2048xbf16>
    %c0_45 = arith.constant 0 : index
    %c0_46 = arith.constant 0 : index
    %142 = vector.load %arg10[%c0_45, %c0_46] : memref<2048x32xbf16, #tpu.memory_space<vmem>>, vector<2048x32xbf16>
    %cst_47 = arith.constant dense<0.000000e+00> : vector<64x32xf32>
    %143 = tpu.matmul %141, %142, %cst_47 {dimension_numbers = #tpu.dot_dimension_numbers<[1], [0], [0], [1], [0, 0, 1, 1], [], []>} : vector<64x2048xbf16>, vector<2048x32xbf16>, vector<64x32xf32> -> vector<64x32xf32>
    %c0_48 = arith.constant 0 : index
    %c0_49 = arith.constant 0 : index
    %144 = vector.load %arg11[%c0_48, %c0_49] : memref<1x32xf32, #tpu.memory_space<vmem>>, vector<1x32xf32>
    %145 = vector.broadcast %144 : vector<1x32xf32> to vector<64x32xf32>
    %146 = arith.addf %143, %145 : vector<64x32xf32>
    %147 = arith.addf %132, %146 : vector<64x32xf32>
    %c0_50 = arith.constant 0 : index
    %c0_51 = arith.constant 0 : index
    %148 = vector.load %arg12[%c0_50, %c0_51] : memref<1x32xf32, #tpu.memory_space<vmem>>, vector<1x32xf32>
    %c0_52 = arith.constant 0 : index
    %c0_53 = arith.constant 0 : index
    %149 = vector.load %arg13[%c0_52, %c0_53] : memref<1x32xf32, #tpu.memory_space<vmem>>, vector<1x32xf32>
    %cst_54 = arith.constant dense<0.000000e+00> : vector<64xf32>
    %150 = vector.multi_reduction <add>, %147, %cst_54 [1] : vector<64x32xf32> to vector<64xf32>
    %151 = vector.shape_cast %150 : vector<64xf32> to vector<64x1xf32>
    %cst_55 = arith.constant 3.200000e+01 : f32
    %152 = vector.broadcast %cst_55 : f32 to vector<64x1xf32>
    %153 = arith.divf %151, %152 : vector<64x1xf32>
    %154 = vector.broadcast %153 : vector<64x1xf32> to vector<64x32xf32>
    %155 = arith.subf %147, %154 : vector<64x32xf32>
    %156 = arith.mulf %155, %155 : vector<64x32xf32>
    %cst_56 = arith.constant dense<0.000000e+00> : vector<64xf32>
    %157 = vector.multi_reduction <add>, %156, %cst_56 [1] : vector<64x32xf32> to vector<64xf32>
    %158 = vector.shape_cast %157 : vector<64xf32> to vector<64x1xf32>
    %cst_57 = arith.constant 3.200000e+01 : f32
    %159 = vector.broadcast %cst_57 : f32 to vector<64x1xf32>
    %160 = arith.divf %158, %159 : vector<64x1xf32>
    %cst_58 = arith.constant 9.99999974E-6 : f32
    %161 = vector.broadcast %cst_58 : f32 to vector<64x1xf32>
    %162 = arith.addf %160, %161 : vector<64x1xf32>
    %163 = math.rsqrt %162 : vector<64x1xf32>
    %164 = vector.broadcast %163 : vector<64x1xf32> to vector<64x32xf32>
    %165 = arith.mulf %155, %164 : vector<64x32xf32>
    %166 = vector.broadcast %148 : vector<1x32xf32> to vector<64x32xf32>
    %167 = arith.mulf %165, %166 : vector<64x32xf32>
    %168 = vector.broadcast %149 : vector<1x32xf32> to vector<64x32xf32>
    %169 = arith.addf %167, %168 : vector<64x32xf32>
    %c0_59 = arith.constant 0 : index
    %c0_60 = arith.constant 0 : index
    %170 = vector.load %arg14[%c0_59, %c0_60] : memref<64x32xf32, #tpu.memory_space<vmem>>, vector<64x32xf32>
    tpu.vector_store %arg14[%c0_59, %c0_60], %169 {strides = array<i32>} : memref<64x32xf32, #tpu.memory_space<vmem>>, vector<64x32xf32>,
    return
  }
  func.func @transform_0(%arg0: i32) -> (i32, i32) {
    %c0_i32 = arith.constant 0 : i32
    %c0_i32_0 = arith.constant 0 : i32
    return %arg0, %c0_i32 : i32, i32
  }
  func.func @transform_1(%arg0: i32) -> (i32, i32) {
    %c0_i32 = arith.constant 0 : i32
    %c0_i32_0 = arith.constant 0 : i32
    %c0_i32_1 = arith.constant 0 : i32
    return %c0_i32, %c0_i32_0 : i32, i32
  }
  func.func @transform_2(%arg0: i32) -> (i32, i32) {
    %c0_i32 = arith.constant 0 : i32
    %c0_i32_0 = arith.constant 0 : i32
    %c0_i32_1 = arith.constant 0 : i32
    return %c0_i32, %c0_i32_0 : i32, i32
  }
  func.func @transform_3(%arg0: i32) -> (i32, i32) {
    %c0_i32 = arith.constant 0 : i32
    %c0_i32_0 = arith.constant 0 : i32
    %c0_i32_1 = arith.constant 0 : i32
    return %c0_i32, %c0_i32_0 : i32, i32
  }
  func.func @transform_4(%arg0: i32) -> (i32, i32) {
    %c0_i32 = arith.constant 0 : i32
    %c0_i32_0 = arith.constant 0 : i32
    %c0_i32_1 = arith.constant 0 : i32
    return %c0_i32, %c0_i32_0 : i32, i32
  }
  func.func @transform_5(%arg0: i32) -> (i32, i32) {
    %c0_i32 = arith.constant 0 : i32
    %c0_i32_0 = arith.constant 0 : i32
    %c0_i32_1 = arith.constant 0 : i32
    return %c0_i32, %c0_i32_0 : i32, i32
  }
  func.func @transform_6(%arg0: i32) -> (i32, i32) {
    %c0_i32 = arith.constant 0 : i32
    %c0_i32_0 = arith.constant 0 : i32
    %c0_i32_1 = arith.constant 0 : i32
    return %c0_i32, %c0_i32_0 : i32, i32
  }
  func.func @transform_7(%arg0: i32) -> (i32, i32) {
    %c0_i32 = arith.constant 0 : i32
    %c0_i32_0 = arith.constant 0 : i32
    %c0_i32_1 = arith.constant 0 : i32
    return %c0_i32, %c0_i32_0 : i32, i32
  }
  func.func @transform_8(%arg0: i32) -> (i32, i32) {
    %c0_i32 = arith.constant 0 : i32
    %c0_i32_0 = arith.constant 0 : i32
    %c0_i32_1 = arith.constant 0 : i32
    return %c0_i32, %c0_i32_0 : i32, i32
  }
  func.func @transform_9(%arg0: i32) -> (i32, i32) {
    %c0_i32 = arith.constant 0 : i32
    %c0_i32_0 = arith.constant 0 : i32
    %c0_i32_1 = arith.constant 0 : i32
    return %c0_i32, %c0_i32_0 : i32, i32
  }
  func.func @transform_10(%arg0: i32) -> (i32, i32) {
    %c0_i32 = arith.constant 0 : i32
    %c0_i32_0 = arith.constant 0 : i32
    %c0_i32_1 = arith.constant 0 : i32
    return %c0_i32, %c0_i32_0 : i32, i32
  }
  func.func @transform_11(%arg0: i32) -> (i32, i32) {
    %c0_i32 = arith.constant 0 : i32
    %c0_i32_0 = arith.constant 0 : i32
    %c0_i32_1 = arith.constant 0 : i32
    return %c0_i32, %c0_i32_0 : i32, i32
  }
  func.func @transform_12(%arg0: i32) -> (i32, i32) {
    %c0_i32 = arith.constant 0 : i32
    %c0_i32_0 = arith.constant 0 : i32
    %c0_i32_1 = arith.constant 0 : i32
    return %c0_i32, %c0_i32_0 : i32, i32
  }
  func.func @transform_13(%arg0: i32) -> (i32, i32) {
    %c0_i32 = arith.constant 0 : i32
    %c0_i32_0 = arith.constant 0 : i32
    return %arg0, %c0_i32 : i32, i32
  }
}

module attributes {stable_mosaic.version = 11 : i64} {
  func.func @_gn_head_kernel(%arg0: i32, %arg1: memref<1x64x32xf32, #tpu.memory_space<vmem>>, %arg2: memref<1x64x32xf32, #tpu.memory_space<vmem>>, %arg3: memref<1x64x32xf32, #tpu.memory_space<vmem>>, %arg4: memref<1x1x32xf32, #tpu.memory_space<vmem>>, %arg5: memref<1x1x32xf32, #tpu.memory_space<vmem>>, %arg6: memref<1x1x32xf32, #tpu.memory_space<vmem>>, %arg7: memref<1x1x32xf32, #tpu.memory_space<vmem>>, %arg8: memref<2xf32, #tpu.memory_space<smem>>, %arg9: memref<1xf32, #tpu.memory_space<smem>>, %arg10: memref<32x64xbf16, #tpu.memory_space<vmem>>, %arg11: memref<1x64xf32, #tpu.memory_space<vmem>>, %arg12: memref<1x64x32xf32, #tpu.memory_space<vmem>>, %arg13: memref<1x64x64xf32, #tpu.memory_space<vmem>>) attributes {dimension_semantics = [#tpu.dimension_semantics<parallel>], iteration_bounds = array<i64: 2>, scalar_prefetch = 0 : i64, scratch_operands = 0 : i64, tpu.core_type = #tpu.core_type<tc>, window_params = [{transform_indices = @transform_0, window_bounds = array<i64: 1, 64, 32>}, {transform_indices = @transform_1, window_bounds = array<i64: 1, 64, 32>}, {transform_indices = @transform_2, window_bounds = array<i64: 1, 64, 32>}, {pipeline_mode = #tpu.pipeline_mode<synchronous>, transform_indices = @transform_3, window_bounds = array<i64: 1, 1, 32>}, {pipeline_mode = #tpu.pipeline_mode<synchronous>, transform_indices = @transform_4, window_bounds = array<i64: 1, 1, 32>}, {pipeline_mode = #tpu.pipeline_mode<synchronous>, transform_indices = @transform_5, window_bounds = array<i64: 1, 1, 32>}, {pipeline_mode = #tpu.pipeline_mode<synchronous>, transform_indices = @transform_6, window_bounds = array<i64: 1, 1, 32>}, {transform_indices = @transform_7, window_bounds = array<i64: 2>}, {transform_indices = @transform_8, window_bounds = array<i64: 1>}, {pipeline_mode = #tpu.pipeline_mode<synchronous>, transform_indices = @transform_9, window_bounds = array<i64: 32, 64>}, {pipeline_mode = #tpu.pipeline_mode<synchronous>, transform_indices = @transform_10, window_bounds = array<i64: 1, 64>}, {transform_indices = @transform_11, window_bounds = array<i64: 1, 64, 32>}, {transform_indices = @transform_12, window_bounds = array<i64: 1, 64, 64>}]} {
    %c0 = arith.constant 0 : index
    %c0_0 = arith.constant 0 : index
    %c0_1 = arith.constant 0 : index
    %0 = vector.load %arg2[%c0, %c0_0, %c0_1] : memref<1x64x32xf32, #tpu.memory_space<vmem>>, vector<1x64x32xf32>
    %c0_2 = arith.constant 0 : index
    %c0_3 = arith.constant 0 : index
    %c0_4 = arith.constant 0 : index
    %1 = vector.load %arg4[%c0_2, %c0_3, %c0_4] : memref<1x1x32xf32, #tpu.memory_space<vmem>>, vector<1x1x32xf32>
    %c0_5 = arith.constant 0 : index
    %c0_6 = arith.constant 0 : index
    %c0_7 = arith.constant 0 : index
    %2 = vector.load %arg5[%c0_5, %c0_6, %c0_7] : memref<1x1x32xf32, #tpu.memory_space<vmem>>, vector<1x1x32xf32>
    %cst = arith.constant dense<0.000000e+00> : vector<1x64xf32>
    %3 = vector.multi_reduction <add>, %0, %cst [2] : vector<1x64x32xf32> to vector<1x64xf32>
    %4 = vector.shape_cast %3 : vector<1x64xf32> to vector<1x64x1xf32>
    %cst_8 = arith.constant 3.200000e+01 : f32
    %5 = vector.broadcast %cst_8 : f32 to vector<1x64x1xf32>
    %6 = arith.divf %4, %5 : vector<1x64x1xf32>
    %cst_9 = arith.constant dense<0.000000e+00> : vector<1x1xf32>
    %7 = vector.multi_reduction <add>, %6, %cst_9 [1] : vector<1x64x1xf32> to vector<1x1xf32>
    %8 = vector.shape_cast %7 : vector<1x1xf32> to vector<1x1x1xf32>
    %cst_10 = arith.constant 6.400000e+01 : f32
    %9 = vector.broadcast %cst_10 : f32 to vector<1x1x1xf32>
    %10 = arith.divf %8, %9 : vector<1x1x1xf32>
    %11 = vector.broadcast %10 : vector<1x1x1xf32> to vector<1x64x32xf32>
    %12 = arith.subf %0, %11 : vector<1x64x32xf32>
    %13 = arith.mulf %12, %12 : vector<1x64x32xf32>
    %cst_11 = arith.constant dense<0.000000e+00> : vector<1x64xf32>
    %14 = vector.multi_reduction <add>, %13, %cst_11 [2] : vector<1x64x32xf32> to vector<1x64xf32>
    %15 = vector.shape_cast %14 : vector<1x64xf32> to vector<1x64x1xf32>
    %cst_12 = arith.constant 3.200000e+01 : f32
    %16 = vector.broadcast %cst_12 : f32 to vector<1x64x1xf32>
    %17 = arith.divf %15, %16 : vector<1x64x1xf32>
    %cst_13 = arith.constant dense<0.000000e+00> : vector<1x1xf32>
    %18 = vector.multi_reduction <add>, %17, %cst_13 [1] : vector<1x64x1xf32> to vector<1x1xf32>
    %19 = vector.shape_cast %18 : vector<1x1xf32> to vector<1x1x1xf32>
    %cst_14 = arith.constant 6.400000e+01 : f32
    %20 = vector.broadcast %cst_14 : f32 to vector<1x1x1xf32>
    %21 = arith.divf %19, %20 : vector<1x1x1xf32>
    %cst_15 = arith.constant 9.99999993E-9 : f32
    %22 = vector.broadcast %cst_15 : f32 to vector<1x1x1xf32>
    %23 = arith.addf %21, %22 : vector<1x1x1xf32>
    %24 = math.rsqrt %23 : vector<1x1x1xf32>
    %25 = vector.broadcast %24 : vector<1x1x1xf32> to vector<1x64x32xf32>
    %26 = arith.mulf %12, %25 : vector<1x64x32xf32>
    %27 = vector.broadcast %1 : vector<1x1x32xf32> to vector<1x64x32xf32>
    %28 = arith.mulf %26, %27 : vector<1x64x32xf32>
    %29 = vector.broadcast %2 : vector<1x1x32xf32> to vector<1x64x32xf32>
    %30 = arith.addf %28, %29 : vector<1x64x32xf32>
    %c0_16 = arith.constant 0 : index
    %c0_17 = arith.constant 0 : index
    %c0_18 = arith.constant 0 : index
    %31 = vector.load %arg3[%c0_16, %c0_17, %c0_18] : memref<1x64x32xf32, #tpu.memory_space<vmem>>, vector<1x64x32xf32>
    %c0_19 = arith.constant 0 : index
    %c0_20 = arith.constant 0 : index
    %c0_21 = arith.constant 0 : index
    %32 = vector.load %arg6[%c0_19, %c0_20, %c0_21] : memref<1x1x32xf32, #tpu.memory_space<vmem>>, vector<1x1x32xf32>
    %c0_22 = arith.constant 0 : index
    %c0_23 = arith.constant 0 : index
    %c0_24 = arith.constant 0 : index
    %33 = vector.load %arg7[%c0_22, %c0_23, %c0_24] : memref<1x1x32xf32, #tpu.memory_space<vmem>>, vector<1x1x32xf32>
    %cst_25 = arith.constant dense<0.000000e+00> : vector<1x64xf32>
    %34 = vector.multi_reduction <add>, %31, %cst_25 [2] : vector<1x64x32xf32> to vector<1x64xf32>
    %35 = vector.shape_cast %34 : vector<1x64xf32> to vector<1x64x1xf32>
    %cst_26 = arith.constant 3.200000e+01 : f32
    %36 = vector.broadcast %cst_26 : f32 to vector<1x64x1xf32>
    %37 = arith.divf %35, %36 : vector<1x64x1xf32>
    %cst_27 = arith.constant dense<0.000000e+00> : vector<1x1xf32>
    %38 = vector.multi_reduction <add>, %37, %cst_27 [1] : vector<1x64x1xf32> to vector<1x1xf32>
    %39 = vector.shape_cast %38 : vector<1x1xf32> to vector<1x1x1xf32>
    %cst_28 = arith.constant 6.400000e+01 : f32
    %40 = vector.broadcast %cst_28 : f32 to vector<1x1x1xf32>
    %41 = arith.divf %39, %40 : vector<1x1x1xf32>
    %42 = vector.broadcast %41 : vector<1x1x1xf32> to vector<1x64x32xf32>
    %43 = arith.subf %31, %42 : vector<1x64x32xf32>
    %44 = arith.mulf %43, %43 : vector<1x64x32xf32>
    %cst_29 = arith.constant dense<0.000000e+00> : vector<1x64xf32>
    %45 = vector.multi_reduction <add>, %44, %cst_29 [2] : vector<1x64x32xf32> to vector<1x64xf32>
    %46 = vector.shape_cast %45 : vector<1x64xf32> to vector<1x64x1xf32>
    %cst_30 = arith.constant 3.200000e+01 : f32
    %47 = vector.broadcast %cst_30 : f32 to vector<1x64x1xf32>
    %48 = arith.divf %46, %47 : vector<1x64x1xf32>
    %cst_31 = arith.constant dense<0.000000e+00> : vector<1x1xf32>
    %49 = vector.multi_reduction <add>, %48, %cst_31 [1] : vector<1x64x1xf32> to vector<1x1xf32>
    %50 = vector.shape_cast %49 : vector<1x1xf32> to vector<1x1x1xf32>
    %cst_32 = arith.constant 6.400000e+01 : f32
    %51 = vector.broadcast %cst_32 : f32 to vector<1x1x1xf32>
    %52 = arith.divf %50, %51 : vector<1x1x1xf32>
    %cst_33 = arith.constant 9.99999993E-9 : f32
    %53 = vector.broadcast %cst_33 : f32 to vector<1x1x1xf32>
    %54 = arith.addf %52, %53 : vector<1x1x1xf32>
    %55 = math.rsqrt %54 : vector<1x1x1xf32>
    %56 = vector.broadcast %55 : vector<1x1x1xf32> to vector<1x64x32xf32>
    %57 = arith.mulf %43, %56 : vector<1x64x32xf32>
    %58 = vector.broadcast %32 : vector<1x1x32xf32> to vector<1x64x32xf32>
    %59 = arith.mulf %57, %58 : vector<1x64x32xf32>
    %60 = vector.broadcast %33 : vector<1x1x32xf32> to vector<1x64x32xf32>
    %61 = arith.addf %59, %60 : vector<1x64x32xf32>
    %c0_34 = arith.constant 0 : index
    %c0_35 = arith.constant 0 : index
    %c0_36 = arith.constant 0 : index
    %62 = vector.load %arg1[%c0_34, %c0_35, %c0_36] : memref<1x64x32xf32, #tpu.memory_space<vmem>>, vector<1x64x32xf32>
    %c0_37 = arith.constant 0 : index
    %63 = memref.load %arg8[%c0_37] : memref<2xf32, #tpu.memory_space<smem>>
    %64 = vector.broadcast %63 : f32 to vector<1x64x32xf32>
    %65 = arith.mulf %64, %30 : vector<1x64x32xf32>
    %66 = arith.addf %62, %65 : vector<1x64x32xf32>
    %c1 = arith.constant 1 : index
    %67 = memref.load %arg8[%c1] : memref<2xf32, #tpu.memory_space<smem>>
    %68 = vector.broadcast %67 : f32 to vector<1x64x32xf32>
    %69 = arith.mulf %68, %61 : vector<1x64x32xf32>
    %70 = arith.addf %66, %69 : vector<1x64x32xf32>
    %c0_38 = arith.constant 0 : index
    %c0_39 = arith.constant 0 : index
    %c0_40 = arith.constant 0 : index
    %71 = vector.load %arg12[%c0_38, %c0_39, %c0_40] : memref<1x64x32xf32, #tpu.memory_space<vmem>>, vector<1x64x32xf32>
    tpu.vector_store %arg12[%c0_38, %c0_39, %c0_40], %70 {strides = array<i32>} : memref<1x64x32xf32, #tpu.memory_space<vmem>>, vector<1x64x32xf32>,
    %c0_41 = arith.constant 0 : index
    %72 = memref.load %arg9[%c0_41] : memref<1xf32, #tpu.memory_space<smem>>
    %cst_42 = arith.constant 0.000000e+00 : f32
    %73 = vector.broadcast %cst_42 : f32 to vector<1x64x32xf32>
    %74 = arith.cmpf oge, %70, %73 : vector<1x64x32xf32>
    %75 = vector.broadcast %72 : f32 to vector<1x64x32xf32>
    %76 = arith.mulf %75, %70 : vector<1x64x32xf32>
    %77 = arith.select %74, %70, %76 : vector<1x64x32xi1>, vector<1x64x32xf32>
    %78 = vector.shape_cast %77 : vector<1x64x32xf32> to vector<64x32xf32>
    %79 = arith.truncf %78 : vector<64x32xf32> to vector<64x32xbf16>
    %c0_43 = arith.constant 0 : index
    %c0_44 = arith.constant 0 : index
    %80 = vector.load %arg10[%c0_43, %c0_44] : memref<32x64xbf16, #tpu.memory_space<vmem>>, vector<32x64xbf16>
    %cst_45 = arith.constant dense<0.000000e+00> : vector<64x64xf32>
    %81 = tpu.matmul %79, %80, %cst_45 {dimension_numbers = #tpu.dot_dimension_numbers<[1], [0], [0], [1], [0, 0, 1, 1], [], []>} : vector<64x32xbf16>, vector<32x64xbf16>, vector<64x64xf32> -> vector<64x64xf32>
    %c0_46 = arith.constant 0 : index
    %c0_47 = arith.constant 0 : index
    %82 = vector.load %arg11[%c0_46, %c0_47] : memref<1x64xf32, #tpu.memory_space<vmem>>, vector<1x64xf32>
    %83 = vector.broadcast %82 : vector<1x64xf32> to vector<64x64xf32>
    %84 = arith.addf %81, %83 : vector<64x64xf32>
    %85 = vector.shape_cast %84 : vector<64x64xf32> to vector<1x64x64xf32>
    %c0_48 = arith.constant 0 : index
    %c0_49 = arith.constant 0 : index
    %c0_50 = arith.constant 0 : index
    %86 = vector.load %arg13[%c0_48, %c0_49, %c0_50] : memref<1x64x64xf32, #tpu.memory_space<vmem>>, vector<1x64x64xf32>
    tpu.vector_store %arg13[%c0_48, %c0_49, %c0_50], %85 {strides = array<i32>} : memref<1x64x64xf32, #tpu.memory_space<vmem>>, vector<1x64x64xf32>,
    return
  }
  func.func @transform_0(%arg0: i32) -> (i32, i32, i32) {
    %c0_i32 = arith.constant 0 : i32
    %c0_i32_0 = arith.constant 0 : i32
    %c0_i32_1 = arith.constant 0 : i32
    return %arg0, %c0_i32, %c0_i32_0 : i32, i32, i32
  }
  func.func @transform_1(%arg0: i32) -> (i32, i32, i32) {
    %c0_i32 = arith.constant 0 : i32
    %c0_i32_0 = arith.constant 0 : i32
    %c0_i32_1 = arith.constant 0 : i32
    return %arg0, %c0_i32, %c0_i32_0 : i32, i32, i32
  }
  func.func @transform_2(%arg0: i32) -> (i32, i32, i32) {
    %c0_i32 = arith.constant 0 : i32
    %c0_i32_0 = arith.constant 0 : i32
    %c0_i32_1 = arith.constant 0 : i32
    return %arg0, %c0_i32, %c0_i32_0 : i32, i32, i32
  }
  func.func @transform_3(%arg0: i32) -> (i32, i32, i32) {
    %c0_i32 = arith.constant 0 : i32
    %c0_i32_0 = arith.constant 0 : i32
    %c0_i32_1 = arith.constant 0 : i32
    %c0_i32_2 = arith.constant 0 : i32
    return %c0_i32, %c0_i32_0, %c0_i32_1 : i32, i32, i32
  }
  func.func @transform_4(%arg0: i32) -> (i32, i32, i32) {
    %c0_i32 = arith.constant 0 : i32
    %c0_i32_0 = arith.constant 0 : i32
    %c0_i32_1 = arith.constant 0 : i32
    %c0_i32_2 = arith.constant 0 : i32
    return %c0_i32, %c0_i32_0, %c0_i32_1 : i32, i32, i32
  }
  func.func @transform_5(%arg0: i32) -> (i32, i32, i32) {
    %c0_i32 = arith.constant 0 : i32
    %c0_i32_0 = arith.constant 0 : i32
    %c0_i32_1 = arith.constant 0 : i32
    %c0_i32_2 = arith.constant 0 : i32
    return %c0_i32, %c0_i32_0, %c0_i32_1 : i32, i32, i32
  }
  func.func @transform_6(%arg0: i32) -> (i32, i32, i32) {
    %c0_i32 = arith.constant 0 : i32
    %c0_i32_0 = arith.constant 0 : i32
    %c0_i32_1 = arith.constant 0 : i32
    %c0_i32_2 = arith.constant 0 : i32
    return %c0_i32, %c0_i32_0, %c0_i32_1 : i32, i32, i32
  }
  func.func @transform_7(%arg0: i32) -> i32 {
    %c0_i32 = arith.constant 0 : i32
    %c0_i32_0 = arith.constant 0 : i32
    return %c0_i32 : i32
  }
  func.func @transform_8(%arg0: i32) -> i32 {
    %c0_i32 = arith.constant 0 : i32
    %c0_i32_0 = arith.constant 0 : i32
    return %c0_i32 : i32
  }
  func.func @transform_9(%arg0: i32) -> (i32, i32) {
    %c0_i32 = arith.constant 0 : i32
    %c0_i32_0 = arith.constant 0 : i32
    %c0_i32_1 = arith.constant 0 : i32
    return %c0_i32, %c0_i32_0 : i32, i32
  }
  func.func @transform_10(%arg0: i32) -> (i32, i32) {
    %c0_i32 = arith.constant 0 : i32
    %c0_i32_0 = arith.constant 0 : i32
    %c0_i32_1 = arith.constant 0 : i32
    return %c0_i32, %c0_i32_0 : i32, i32
  }
  func.func @transform_11(%arg0: i32) -> (i32, i32, i32) {
    %c0_i32 = arith.constant 0 : i32
    %c0_i32_0 = arith.constant 0 : i32
    %c0_i32_1 = arith.constant 0 : i32
    return %arg0, %c0_i32, %c0_i32_0 : i32, i32, i32
  }
  func.func @transform_12(%arg0: i32) -> (i32, i32, i32) {
    %c0_i32 = arith.constant 0 : i32
    %c0_i32_0 = arith.constant 0 : i32
    %c0_i32_1 = arith.constant 0 : i32
    return %arg0, %c0_i32, %c0_i32_0 : i32, i32, i32
  }
}

</mosaic_0001>

<llo_original>
// kernel: aa_forward.4
$region0: #{aa_forward.4}
  #allocation0 [shape = 'u32[]', space=smem, size = 0x4, offset = 0x4, fixed_abs, tag = 'smem constant byte address 0x4 - core index']
  #allocation1 [shape = 'u32[144,128]{1,0:T(1,128)}', space=vmem, size = 0x12000, scoped, tag = 'internal scratch']
  #allocation2 [shape = 'f32[1]{0:T(128)S(6)}', space=smem, size = 0x200, scoped, tag = 'scoped memory for aa_forward.4']
  %s0 = inlined_call_operand.vmem [shape: f32[128,64], index: 0, kind: input, shape index: {}]
  %s1 = inlined_call_operand.vmem [shape: bf16[64,32], index: 1, kind: input, shape index: {}]
  %s2 = inlined_call_operand.vmem [shape: f32[1,32], index: 2, kind: input, shape index: {}]
  %s3 = inlined_call_operand.<no memory space> [shape: f32[1], index: 3, kind: input, shape index: {}]
  %s4 = inlined_call_operand.vmem [shape: f32[128,32], index: 4, kind: output, shape index: {}]
  %s5 = sld [smem:[#allocation0]]
  $region49: #{aa_forward.4} parent=0
    _
  %s7 = ssub.s32 1, %s5
  %s8 = scalar_select 0, %s7, %s5
  %9 = sst [smem:[#allocation2]] %s3
  loop: start=0, step=1, limit=4
  $region2: #{aa_forward.4} parent=0 // loop_pre_header
    _
  $region3: #{aa_forward.4} parent=0 // loop_header
    %s11 = sphi 0, %s15
    %p12 = scmp.ge.s32.totalorder %s11, 4
    %s21 = sphi 0, %s23
    %s24 = sphi 0, %s21
    %s25 = sphi 0, %s24
    %s41 = sphi 0, %s25
    %s45 = sphi 0, %s45
    %s47 = sphi 0, %s45
    %s48 = sphi 0, %s47
    %s62 = sphi 0, %s48
    %s66 = sphi 0, %s66
    %s68 = sphi 0, %s66
    %s69 = sphi 0, %s68
    %s83 = sphi 0, %s69
    %s87 = sphi 0, %s87
    %s89 = sphi 0, %s87
    %s90 = sphi 0, %s89
    %s104 = sphi 0, %s90
    %s110 = sphi 0, %s112
    %s113 = sphi 0, %s110
    %s114 = sphi 0, %s113
    %s130 = sphi 0, %s114
  $region4: #{aa_forward.4} parent=0 // loop_header_branch
    %14 = sbr.rel (%p12) target = $region8
  $region5: #{aa_forward.4} parent=0 // loop_body
    %s16 = ssub.s32 %s11, 1
    %s17 = ssub.s32 %s11, 2
    %s18 = sadd.s32 %s11, 1
    %s19 = ssub.s32 %s11, %s18
    %p20 = scmp.eq.s32.totalorder %s19, 0
    %s22 = sadd.s32 %s21, 1
    %s23 = scalar_select %p20, %s21, %s22
    %p26 = pneg %p20
    %p27 = scmp.eq.s32.totalorder %s11, 1
    %p28 = por %p26, %p27
    %p29 = scmp.ne.s32.totalorder %s21, %s24
    %p30 = scmp.eq.s32.totalorder %s11, 0
    %p31 = por %p29, %p30
    %p32 = scmp.ne.s32.totalorder %s21, %s24
    %p33 = scmp.eq.s32.totalorder %s16, 1
    %p34 = por %p32, %p33
    %p35 = scmp.ne.s32.totalorder %s24, %s25
    %p36 = scmp.eq.s32.totalorder %s16, 0
    %p37 = por %p35, %p36
    %p38 = scmp.ne.s32.totalorder %s24, %s25
    %p39 = scmp.eq.s32.totalorder %s17, 1
    %p40 = por %p38, %p39
    %p42 = scmp.ne.s32.totalorder %s25, %s41
    %p43 = scmp.eq.s32.totalorder %s17, 0
    %p44 = por %p42, %p43
    %s46 = sadd.s32 %s45, 1
    %p49 = scmp.eq.s32.totalorder %s11, 1
    %p50 = scmp.ne.s32.totalorder %s45, %s47
    %p51 = scmp.eq.s32.totalorder %s11, 0
    %p52 = por %p50, %p51
    %p53 = scmp.ne.s32.totalorder %s45, %s47
    %p54 = scmp.eq.s32.totalorder %s16, 1
    %p55 = por %p53, %p54
    %p56 = scmp.ne.s32.totalorder %s47, %s48
    %p57 = scmp.eq.s32.totalorder %s16, 0
    %p58 = por %p56, %p57
    %p59 = scmp.ne.s32.totalorder %s47, %s48
    %p60 = scmp.eq.s32.totalorder %s17, 1
    %p61 = por %p59, %p60
    %p63 = scmp.ne.s32.totalorder %s48, %s62
    %p64 = scmp.eq.s32.totalorder %s17, 0
    %p65 = por %p63, %p64
    %s67 = sadd.s32 %s66, 1
    %p70 = scmp.eq.s32.totalorder %s11, 1
    %p71 = scmp.ne.s32.totalorder %s66, %s68
    %p72 = scmp.eq.s32.totalorder %s11, 0
    %p73 = por %p71, %p72
    %p74 = scmp.ne.s32.totalorder %s66, %s68
    %p75 = scmp.eq.s32.totalorder %s16, 1
    %p76 = por %p74, %p75
    %p77 = scmp.ne.s32.totalorder %s68, %s69
    %p78 = scmp.eq.s32.totalorder %s16, 0
    %p79 = por %p77, %p78
    %p80 = scmp.ne.s32.totalorder %s68, %s69
    %p81 = scmp.eq.s32.totalorder %s17, 1
    %p82 = por %p80, %p81
    %p84 = scmp.ne.s32.totalorder %s69, %s83
    %p85 = scmp.eq.s32.totalorder %s17, 0
    %p86 = por %p84, %p85
    %s88 = sadd.s32 %s87, 1
    %p91 = scmp.eq.s32.totalorder %s11, 1
    %p92 = scmp.ne.s32.totalorder %s87, %s89
    %p93 = scmp.eq.s32.totalorder %s11, 0
    %p94 = por %p92, %p93
    %p95 = scmp.ne.s32.totalorder %s87, %s89
    %p96 = scmp.eq.s32.totalorder %s16, 1
    %p97 = por %p95, %p96
    %p98 = scmp.ne.s32.totalorder %s89, %s90
    %p99 = scmp.eq.s32.totalorder %s16, 0
    %p100 = por %p98, %p99
    %p101 = scmp.ne.s32.totalorder %s89, %s90
    %p102 = scmp.eq.s32.totalorder %s17, 1
    %p103 = por %p101, %p102
    %p105 = scmp.ne.s32.totalorder %s90, %s104
    %p106 = scmp.eq.s32.totalorder %s17, 0
    %p107 = por %p105, %p106
    %s108 = ssub.s32 %s11, %s18
    %p109 = scmp.eq.s32.totalorder %s108, 0
    %s111 = sadd.s32 %s110, 1
    %s112 = scalar_select %p109, %s110, %s111
    %p115 = pneg %p109
    %p116 = scmp.eq.s32.totalorder %s11, 1
    %p117 = por %p115, %p116
    %p118 = scmp.ne.s32.totalorder %s110, %s113
    %p119 = scmp.eq.s32.totalorder %s11, 0
    %p120 = por %p118, %p119
    %p121 = scmp.ne.s32.totalorder %s110, %s113
    %p122 = scmp.eq.s32.totalorder %s16, 1
    %p123 = por %p121, %p122
    %p124 = scmp.ne.s32.totalorder %s113, %s114
    %p125 = scmp.eq.s32.totalorder %s16, 0
    %p126 = por %p124, %p125
    %p127 = scmp.ne.s32.totalorder %s113, %s114
    %p128 = scmp.eq.s32.totalorder %s17, 1
    %p129 = por %p127, %p128
    %p131 = scmp.ne.s32.totalorder %s114, %s130
    %p132 = scmp.eq.s32.totalorder %s17, 0
    %p133 = por %p131, %p132
    %p134 = scmp.le.s32.totalorder 1, %s11
    %p135 = scmp.lt.s32.totalorder %s11, 3
    %p136 = pnand %p134, %p135
    %p137 = pneg %p136
    // Predicated region
    $region9: #{aa_forward.4} parent=5 // pred_check
      _
    $region10: #{aa_forward.4} parent=5 // pred_check_branch
      %139 = sbr.rel (%p136) target = $region12
    $region11: #{aa_forward.4} parent=5 // pred_region
      %s140 = ssub.s32 %s11, 1
      // Predicated region
      $region13: #{aa_forward.4} parent=11 // pred_check
        %p141 = pneg %p58
      $region14: #{aa_forward.4} parent=11 // pred_check_branch
        %143 = sbr.rel (%p141) target = $region16
      $region15: #{aa_forward.4} parent=11 // pred_region
        _
      $region16: #{aa_forward.4} parent=11 // pred_fallthru
        _
      // Predicated region
      $region17: #{aa_forward.4} parent=11 // pred_check
        %p144 = pneg %p79
      $region18: #{aa_forward.4} parent=11 // pred_check_branch
        %146 = sbr.rel (%p144) target = $region20
      $region19: #{aa_forward.4} parent=11 // pred_region
        _
      $region20: #{aa_forward.4} parent=11 // pred_fallthru
        _
      // Predicated region
      $region21: #{aa_forward.4} parent=11 // pred_check
        %p147 = pneg %p100
      $region22: #{aa_forward.4} parent=11 // pred_check_branch
        %149 = sbr.rel (%p147) target = $region24
      $region23: #{aa_forward.4} parent=11 // pred_region
        _
      $region24: #{aa_forward.4} parent=11 // pred_fallthru
        _
    $region12: #{aa_forward.4} parent=5 // pred_fallthru
      _
    %p150 = scmp.lt.s32.totalorder %s11, 2
    // Predicated region
    $region25: #{aa_forward.4} parent=5 // pred_check
      %p151 = pneg %p150
    $region26: #{aa_forward.4} parent=5 // pred_check_branch
      %153 = sbr.rel (%p151) target = $region28
    $region27: #{aa_forward.4} parent=5 // pred_region
      // Predicated region
      $region29: #{aa_forward.4} parent=27 // pred_check
        %p154 = pneg %p31
      $region30: #{aa_forward.4} parent=27 // pred_check_branch
        %156 = sbr.rel (%p154) target = $region32
      $region31: #{aa_forward.4} parent=27 // pred_region
        %s157 = smul.u32 8, %s11
        %p158 = scmp.lt.s32.totalorder %s157, 15
        %s159 = scalar_select %p158, %s157, 15
        %s160 = smul.addr %s159, 8
        %s161 = scalar_lea.vmem %s0, %s160
        %s162 = smul.u32 8, %s11
      $region32: #{aa_forward.4} parent=27 // pred_fallthru
        _
    $region28: #{aa_forward.4} parent=5 // pred_fallthru
      _
    %p163 = scmp.le.s32.totalorder 1, %s11
    %p164 = scmp.lt.s32.totalorder %s11, 3
    %p165 = pnand %p163, %p164
    %p166 = pneg %p165
    // Predicated region
    $region33: #{aa_forward.4} parent=5 // pred_check
      _
    $region34: #{aa_forward.4} parent=5 // pred_check_branch
      %168 = sbr.rel (%p165) target = $region36
    $region35: #{aa_forward.4} parent=5 // pred_region
      %s169 = ssub.s32 %s11, 1
      %s170 = smul.u32 8, %s16
      %p171 = scmp.lt.s32.totalorder %s170, 15
      %s172 = scalar_select %p171, %s170, 15
      %s173 = smul.addr %s172, 8
      %s174 = scalar_lea.vmem %s0, %s173
      %p175 = pneg %p37
      %p176 = pneg %p34
      %p177 = pneg %p58
      %p178 = pneg %p55
      %p179 = pneg %p79
      %p180 = pneg %p76
      %p181 = pneg %p100
      %p182 = pneg %p97
      %p183 = pneg %p126
      %p184 = pneg %p123
      %s185 = smul.u32 8, %s16
      %p186 = scmp.lt.s32.totalorder %s185, 15
      %s187 = scalar_select %p186, %s185, 15
      %s188 = smul.addr %s187, 8
      %s189 = scalar_lea.vmem %s4, %s188
      %s190 = smul.u32 8, %s16
      %p191 = scmp.lt.s32.totalorder %s190, 15
      %s192 = scalar_select %p191, %s190, 15
      %s193 = smul.addr %s192, 8
      %s194 = scalar_lea.vmem %s0, %s193
      %s195 = smul.u32 8, %s16
      %s196 = smul.u32 8, %s16
      %p197 = scmp.lt.s32.totalorder %s196, 15
      %s198 = scalar_select %p197, %s196, 15
      %s199 = smul.addr %s198, 8
      %s200 = scalar_lea.vmem %s4, %s199
      %s201 = smul.u32 8, %s16
      %v203 = vld [vmem:[%s194] sm:$0xff]
      %v204 = vld [vmem:[%s194 + $0x8] sm:$0xff]
      %v205 = vld [vmem:[%s194 + $0x10] sm:$0xff]
      %v206 = vld [vmem:[%s194 + $0x18] sm:$0xff]
      %v207 = vld [vmem:[%s194 + $0x20] sm:$0xff]
      %v208 = vld [vmem:[%s194 + $0x28] sm:$0xff]
      %v209 = vld [vmem:[%s194 + $0x30] sm:$0xff]
      %v210 = vld [vmem:[%s194 + $0x38] sm:$0xff]
      %v211 = vpack.c.bf16 %v204, %v203
      %v212 = vpack.c.bf16 %v206, %v205
      %v213 = vpack.c.bf16 %v208, %v207
      %v214 = vpack.c.bf16 %v210, %v209
      %v215 = vld [vmem:[%s1] sm:$0xf]
      %v216 = vld [vmem:[%s1 + $0x4] sm:$0xf]
      %v217 = vld [vmem:[%s1 + $0x8] sm:$0xf]
      %v218 = vld [vmem:[%s1 + $0xc] sm:$0xf]
      %v219 = vld [vmem:[%s1 + $0x10] sm:$0xf]
      %v220 = vld [vmem:[%s1 + $0x14] sm:$0xf]
      %v221 = vld [vmem:[%s1 + $0x18] sm:$0xf]
      %v222 = vld [vmem:[%s1 + $0x1c] sm:$0xf]
      %v223 = vld [vmem:[%s2] sm:$0x1]
      %v225 = vlaneseq
      %v226 = vshrl.u32 %v225, 7
      %v227 = vsub.s32 0, %v226
      %v228 = vrot.slane %v223, %v227
      %v238 = vunpack.c.l.b16 %v215
      %v239 = vunpack.c.l.b16 %v216
      %v240 = vunpack.c.l.b16 %v217
      %v241 = vunpack.c.l.b16 %v218
      %v242 = vunpack.c.l.b16 %v219
      %v243 = vunpack.c.l.b16 %v220
      %v244 = vunpack.c.l.b16 %v221
      %v245 = vunpack.c.l.b16 %v222
      %v246 = vpack.c.b16 %v239, %v238
      %v247 = vpack.c.b16 %v241, %v240
      %v248 = vpack.c.b16 %v243, %v242
      %v249 = vpack.c.b16 %v245, %v244
      %vm254 = vcmask 523264
      %v256 = vsel %vm254, %v211, 0
      %v259 = vsel %vm254, %v212, 0
      %v262 = vsel %vm254, %v213, 0
      %v265 = vsel %vm254, %v214, 0
      %267 = vmatprep.subr.bf16.mxu0 0
      %268 = vmatpush1.bf16.msra.mxu0 %v246
      %269 = vmatprep.subr.bf16.mxu0 0
      %270 = vmatpush1.bf16.msra.mxu0 %v247
      %271 = vmatprep.subr.bf16.mxu0 0
      %272 = vmatpush1.bf16.msra.mxu0 %v248
      %273 = vmatprep.subr.bf16.mxu0 0
      %274 = vmatpush1.bf16.msra.mxu0 %v249
      %275 = vmatprep.subr.bf16.mxu0 0
      %276 = vmatpush1.bf16.msra.mxu0 0
      %277 = vmatprep.subr.bf16.mxu0 0
      %278 = vmatpush1.bf16.msra.mxu0 0
      %279 = vmatprep.subr.bf16.mxu0 0
      %280 = vmatpush1.bf16.msra.mxu0 0
      %281 = vmatprep.subr.bf16.mxu0 0
      %282 = vmatpush1.bf16.msra.mxu0 0
      %283 = vmatprep.subr.bf16.mxu0 0
      %284 = vmatpush1.bf16.msra.mxu0 0
      %285 = vmatprep.subr.bf16.mxu0 0
      %286 = vmatpush1.bf16.msra.mxu0 0
      %287 = vmatprep.subr.bf16.mxu0 0
      %288 = vmatpush1.bf16.msra.mxu0 0
      %289 = vmatprep.subr.bf16.mxu0 0
      %290 = vmatpush1.bf16.msra.mxu0 0
      %291 = vmatprep.subr.bf16.mxu0 0
      %292 = vmatpush1.bf16.msra.mxu0 0
      %293 = vmatprep.subr.bf16.mxu0 0
      %294 = vmatpush1.bf16.msra.mxu0 0
      %295 = vmatprep.subr.bf16.mxu0 0
      %296 = vmatpush1.bf16.msra.mxu0 0
      %297 = vmatprep.subr.bf16.mxu0 0
      %298 = vmatpush1.bf16.msra.mxu0 0
      %299 = vmatprep.mubr.bf16.mxu0 0
      %300 = vmatmul.mubr.bf16.gmra.mrb[0].mxu0 %v256
      %v301 = vpop.f32.mrb[0].mxu0
      %v302 = vadd.f32 %v228, %v301
      %v303 = vpop.f32.mrb[0].mxu0
      %v304 = vpop.f32.mrb[0].mxu0
      %v305 = vadd.f32 %v228, %v304
      %v306 = vpop.f32.mrb[0].mxu0
      %307 = vmatprep.mubr.bf16.mxu0 0
      %308 = vmatmul.mubr.bf16.gmra.mrb[0].mxu0 %v259
      %v309 = vpop.f32.mrb[0].mxu0
      %v310 = vadd.f32 %v228, %v309
      %v311 = vpop.f32.mrb[0].mxu0
      %v312 = vpop.f32.mrb[0].mxu0
      %v313 = vadd.f32 %v228, %v312
      %v314 = vpop.f32.mrb[0].mxu0
      %315 = vmatprep.mubr.bf16.mxu0 0
      %316 = vmatmul.mubr.bf16.gmra.mrb[0].mxu0 %v262
      %v317 = vpop.f32.mrb[0].mxu0
      %v318 = vadd.f32 %v228, %v317
      %v319 = vpop.f32.mrb[0].mxu0
      %v320 = vpop.f32.mrb[0].mxu0
      %v321 = vadd.f32 %v228, %v320
      %v322 = vpop.f32.mrb[0].mxu0
      %323 = vmatprep.mubr.bf16.mxu0 0
      %324 = vmatmul.mubr.bf16.gmra.mrb[0].mxu0 %v265
      %v325 = vpop.f32.mrb[0].mxu0
      %v326 = vadd.f32 %v228, %v325
      %v327 = vpop.f32.mrb[0].mxu0
      %v328 = vpop.f32.mrb[0].mxu0
      %v329 = vadd.f32 %v228, %v328
      %v330 = vpop.f32.mrb[0].mxu0
      %331 = vdwg.mxu0
      %s332 = sld [smem:[#allocation2]]
      %vm333 = vcmp.ge.f32.partialorder %v302, 0.0
      %vm334 = vcmp.ge.f32.partialorder %v305, 0.0
      %vm335 = vcmp.ge.f32.partialorder %v310, 0.0
      %vm336 = vcmp.ge.f32.partialorder %v313, 0.0
      %vm337 = vcmp.ge.f32.partialorder %v318, 0.0
      %vm338 = vcmp.ge.f32.partialorder %v321, 0.0
      %vm339 = vcmp.ge.f32.partialorder %v326, 0.0
      %vm340 = vcmp.ge.f32.partialorder %v329, 0.0
      %v341 = vstv %s332
      %v342 = vmul.f32 %v341, %v302
      %v343 = vmul.f32 %v341, %v305
      %v344 = vmul.f32 %v341, %v310
      %v345 = vmul.f32 %v341, %v313
      %v346 = vmul.f32 %v341, %v318
      %v347 = vmul.f32 %v341, %v321
      %v348 = vmul.f32 %v341, %v326
      %v349 = vmul.f32 %v341, %v329
      %v350 = vsel %vm333, %v302, %v342
      %v351 = vsel %vm334, %v305, %v343
      %v352 = vsel %vm335, %v310, %v344
      %v353 = vsel %vm336, %v313, %v345
      %v354 = vsel %vm337, %v318, %v346
      %v355 = vsel %vm338, %v321, %v347
      %v356 = vsel %vm339, %v326, %v348
      %v357 = vsel %vm340, %v329, %v349
      %vm358 = vcmask 261120
      %359 = vst.msk [vmem:[%s200] sm:$0xff] %vm358, %v350
      %360 = vst.msk [vmem:[%s200 + $0x8] sm:$0xff] %vm358, %v351
      %361 = vst.msk [vmem:[%s200 + $0x10] sm:$0xff] %vm358, %v352
      %362 = vst.msk [vmem:[%s200 + $0x18] sm:$0xff] %vm358, %v353
      %363 = vst.msk [vmem:[%s200 + $0x20] sm:$0xff] %vm358, %v354
      %364 = vst.msk [vmem:[%s200 + $0x28] sm:$0xff] %vm358, %v355
      %365 = vst.msk [vmem:[%s200 + $0x30] sm:$0xff] %vm358, %v356
      %366 = vst.msk [vmem:[%s200 + $0x38] sm:$0xff] %vm358, %v357
      %s367 = smul.u32 8, %s16
      %p368 = scmp.lt.s32.totalorder %s367, 15
      %s369 = scalar_select %p368, %s367, 15
      %s370 = smul.addr %s369, 8
      %s371 = scalar_lea.vmem %s4, %s370
      // Predicated region
      $region37: #{aa_forward.4} parent=35 // pred_check
        %p372 = pneg %p123
      $region38: #{aa_forward.4} parent=35 // pred_check_branch
        %374 = sbr.rel (%p372) target = $region40
      $region39: #{aa_forward.4} parent=35 // pred_region
        %s375 = smul.u32 8, %s16
      $region40: #{aa_forward.4} parent=35 // pred_fallthru
        _
    $region36: #{aa_forward.4} parent=5 // pred_fallthru
      _
    %p376 = scmp.le.s32.totalorder 2, %s11
    // Predicated region
    $region41: #{aa_forward.4} parent=5 // pred_check
      %p377 = pneg %p376
    $region42: #{aa_forward.4} parent=5 // pred_check_branch
      %379 = sbr.rel (%p377) target = $region44
    $region43: #{aa_forward.4} parent=5 // pred_region
      %s380 = ssub.s32 %s11, 2
      // Predicated region
      $region45: #{aa_forward.4} parent=43 // pred_check
        %p381 = pneg %p129
      $region46: #{aa_forward.4} parent=43 // pred_check_branch
        %383 = sbr.rel (%p381) target = $region48
      $region47: #{aa_forward.4} parent=43 // pred_region
        %s384 = smul.u32 8, %s17
        %p385 = scmp.lt.s32.totalorder %s384, 15
        %s386 = scalar_select %p385, %s384, 15
        %s387 = smul.addr %s386, 8
        %s388 = scalar_lea.vmem %s4, %s387
      $region48: #{aa_forward.4} parent=43 // pred_fallthru
        _
    $region44: #{aa_forward.4} parent=5 // pred_fallthru
      _
  $region6: #{aa_forward.4} parent=0 // loop_footer
    %s15 = sadd.s32 1, %s11
  $region7: #{aa_forward.4} parent=0 // loop_footer_branch
    %10 = sbr.rel target = $region3
  $region8: #{aa_forward.4} parent=0 // loop_exit
    _

// kernel: aa_forward.7
$region0: #{aa_forward.7}
  #allocation0 [shape = 'u32[]', space=smem, size = 0x4, offset = 0x4, fixed_abs, tag = 'smem constant byte address 0x4 - core index']
  #allocation1 [shape = 'u32[144,128]{1,0:T(1,128)}', space=vmem, size = 0x12000, scoped, tag = 'internal scratch']
  #allocation2 [shape = 'f32[1]{0:T(128)S(6)}', space=smem, size = 0x200, scoped, tag = 'scoped memory for aa_forward.7']
  %s0 = inlined_call_operand.vmem [shape: f32[2,64,32], index: 0, kind: input, shape index: {}]
  %s1 = inlined_call_operand.vmem [shape: f32[2,64,32], index: 1, kind: input, shape index: {}]
  %s2 = inlined_call_operand.vmem [shape: f32[2,64,32], index: 2, kind: input, shape index: {}]
  %s3 = inlined_call_operand.vmem [shape: f32[1,1,32], index: 3, kind: input, shape index: {}]
  %s4 = inlined_call_operand.vmem [shape: f32[1,1,32], index: 4, kind: input, shape index: {}]
  %s5 = inlined_call_operand.vmem [shape: f32[1,1,32], index: 5, kind: input, shape index: {}]
  %s6 = inlined_call_operand.vmem [shape: f32[1,1,32], index: 6, kind: input, shape index: {}]
  %s7 = inlined_call_operand.vmem [shape: f32[2], index: 7, kind: input, shape index: {}]
  %s8 = inlined_call_operand.<no memory space> [shape: f32[1], index: 8, kind: input, shape index: {}]
  %s9 = inlined_call_operand.vmem [shape: bf16[32,64], index: 9, kind: input, shape index: {}]
  %s10 = inlined_call_operand.vmem [shape: f32[1,64], index: 10, kind: input, shape index: {}]
  %s11 = inlined_call_operand.hbm [shape: f32[2,64,32], index: 11, kind: output, shape index: {0}]
  %s12 = inlined_call_operand.hbm [shape: f32[2,64,64], index: 12, kind: output, shape index: {1}]
  %13 = xla_tuple %s11, %s12
  %s14 = sld [smem:[#allocation0]]
  $region89: #{aa_forward.7} parent=0
    _
  %s16 = ssub.s32 1, %s14
  %s17 = scalar_select 0, %s16, %s14
  %18 = sst [smem:[#allocation2]] %s8
  $region1: #{aa_forward.7} parent=0
    #allocation3 [shape = 'u8[512]{0}', space=smem, size = 0x200, scoped, tag = 'input window, operand 7, single buffered']
    #allocation4 [shape = 's32[2]{0}', space=sflag, size = 0x8, scoped, tag = 'scoped memory for aa_forward.7']
    #allocation5 [shape = 's32[2]{0}', space=sflag, size = 0x8, scoped, tag = 'scoped memory for aa_forward.7']
    #allocation6 [shape = 'u8[65536]{0}', space=vmem, size = 0x10000, scoped, tag = 'output window, operand 0']
    #allocation7 [shape = 'u8[65536]{0}', space=vmem, size = 0x10000, scoped, tag = 'output window, operand 1']
    #allocation8 [shape = 's32[2]{0}', space=sflag, size = 0x8, scoped, tag = 'scoped memory for aa_forward.7']
    %19 = vsyncpa [#allocation5], 0
    %20 = vsyncpa [#allocation4], 0
    %s21 = scalar_lea.sflag [#allocation4], 1
    %22 = vsyncpa %s21, 0
    %23 = vsyncpa [#allocation8], 0
    %s24 = scalar_lea.sflag [#allocation8], 1
    %25 = vsyncpa %s24, 0
    loop: start=0, step=1, limit=4
    $region2: #{aa_forward.7} parent=1 // loop_pre_header
      _
    $region3: #{aa_forward.7} parent=1 // loop_header
      %s27 = sphi 0, %s31
      %p28 = scmp.ge.s32.totalorder %s27, 4
      %s37 = sphi 0, %s39
      %s40 = sphi 0, %s37
      %s41 = sphi 0, %s40
      %s57 = sphi 0, %s41
      %s63 = sphi 0, %s65
      %s66 = sphi 0, %s63
      %s67 = sphi 0, %s66
      %s83 = sphi 0, %s67
      %s89 = sphi 0, %s91
      %s92 = sphi 0, %s89
      %s93 = sphi 0, %s92
      %s109 = sphi 0, %s93
      %s113 = sphi 0, %s113
      %s115 = sphi 0, %s113
      %s116 = sphi 0, %s115
      %s130 = sphi 0, %s116
      %s134 = sphi 0, %s134
      %s136 = sphi 0, %s134
      %s137 = sphi 0, %s136
      %s151 = sphi 0, %s137
      %s155 = sphi 0, %s155
      %s157 = sphi 0, %s155
      %s158 = sphi 0, %s157
      %s172 = sphi 0, %s158
      %s176 = sphi 0, %s176
      %s178 = sphi 0, %s176
      %s179 = sphi 0, %s178
      %s193 = sphi 0, %s179
      %s197 = sphi 0, %s197
      %s199 = sphi 0, %s197
      %s200 = sphi 0, %s199
      %s214 = sphi 0, %s200
      %s218 = sphi 0, %s218
      %s220 = sphi 0, %s218
      %s221 = sphi 0, %s220
      %s235 = sphi 0, %s221
      %s239 = sphi 0, %s239
      %s241 = sphi 0, %s239
      %s242 = sphi 0, %s241
      %s256 = sphi 0, %s242
      %s260 = sphi 0, %s260
      %s262 = sphi 0, %s260
      %s263 = sphi 0, %s262
      %s277 = sphi 0, %s263
      %s283 = sphi 0, %s285
      %s286 = sphi 0, %s283
      %s287 = sphi 0, %s286
      %s303 = sphi 0, %s287
      %s309 = sphi 0, %s311
      %s312 = sphi 0, %s309
      %s313 = sphi 0, %s312
      %s329 = sphi 0, %s313
    $region4: #{aa_forward.7} parent=1 // loop_header_branch
      %30 = sbr.rel (%p28) target = $region8
    $region5: #{aa_forward.7} parent=1 // loop_body
      %s32 = ssub.s32 %s27, 1
      %s33 = ssub.s32 %s27, 2
      %s34 = sadd.s32 %s27, 1
      %s35 = ssub.s32 %s27, %s34
      %p36 = scmp.eq.s32.totalorder %s35, 0
      %s38 = sadd.s32 %s37, 1
      %s39 = scalar_select %p36, %s37, %s38
      %p42 = pneg %p36
      %p43 = scmp.eq.s32.totalorder %s27, 1
      %p44 = por %p42, %p43
      %p45 = scmp.ne.s32.totalorder %s37, %s40
      %p46 = scmp.eq.s32.totalorder %s27, 0
      %p47 = por %p45, %p46
      %p48 = scmp.ne.s32.totalorder %s37, %s40
      %p49 = scmp.eq.s32.totalorder %s32, 1
      %p50 = por %p48, %p49
      %p51 = scmp.ne.s32.totalorder %s40, %s41
      %p52 = scmp.eq.s32.totalorder %s32, 0
      %p53 = por %p51, %p52
      %p54 = scmp.ne.s32.totalorder %s40, %s41
      %p55 = scmp.eq.s32.totalorder %s33, 1
      %p56 = por %p54, %p55
      %p58 = scmp.ne.s32.totalorder %s41, %s57
      %p59 = scmp.eq.s32.totalorder %s33, 0
      %p60 = por %p58, %p59
      %s61 = ssub.s32 %s27, %s34
      %p62 = scmp.eq.s32.totalorder %s61, 0
      %s64 = sadd.s32 %s63, 1
      %s65 = scalar_select %p62, %s63, %s64
      %p68 = pneg %p62
      %p69 = scmp.eq.s32.totalorder %s27, 1
      %p70 = por %p68, %p69
      %p71 = scmp.ne.s32.totalorder %s63, %s66
      %p72 = scmp.eq.s32.totalorder %s27, 0
      %p73 = por %p71, %p72
      %p74 = scmp.ne.s32.totalorder %s63, %s66
      %p75 = scmp.eq.s32.totalorder %s32, 1
      %p76 = por %p74, %p75
      %p77 = scmp.ne.s32.totalorder %s66, %s67
      %p78 = scmp.eq.s32.totalorder %s32, 0
      %p79 = por %p77, %p78
      %p80 = scmp.ne.s32.totalorder %s66, %s67
      %p81 = scmp.eq.s32.totalorder %s33, 1
      %p82 = por %p80, %p81
      %p84 = scmp.ne.s32.totalorder %s67, %s83
      %p85 = scmp.eq.s32.totalorder %s33, 0
      %p86 = por %p84, %p85
      %s87 = ssub.s32 %s27, %s34
      %p88 = scmp.eq.s32.totalorder %s87, 0
      %s90 = sadd.s32 %s89, 1
      %s91 = scalar_select %p88, %s89, %s90
      %p94 = pneg %p88
      %p95 = scmp.eq.s32.totalorder %s27, 1
      %p96 = por %p94, %p95
      %p97 = scmp.ne.s32.totalorder %s89, %s92
      %p98 = scmp.eq.s32.totalorder %s27, 0
      %p99 = por %p97, %p98
      %p100 = scmp.ne.s32.totalorder %s89, %s92
      %p101 = scmp.eq.s32.totalorder %s32, 1
      %p102 = por %p100, %p101
      %p103 = scmp.ne.s32.totalorder %s92, %s93
      %p104 = scmp.eq.s32.totalorder %s32, 0
      %p105 = por %p103, %p104
      %p106 = scmp.ne.s32.totalorder %s92, %s93
      %p107 = scmp.eq.s32.totalorder %s33, 1
      %p108 = por %p106, %p107
      %p110 = scmp.ne.s32.totalorder %s93, %s109
      %p111 = scmp.eq.s32.totalorder %s33, 0
      %p112 = por %p110, %p111
      %s114 = sadd.s32 %s113, 1
      %p117 = scmp.eq.s32.totalorder %s27, 1
      %p118 = scmp.ne.s32.totalorder %s113, %s115
      %p119 = scmp.eq.s32.totalorder %s27, 0
      %p120 = por %p118, %p119
      %p121 = scmp.ne.s32.totalorder %s113, %s115
      %p122 = scmp.eq.s32.totalorder %s32, 1
      %p123 = por %p121, %p122
      %p124 = scmp.ne.s32.totalorder %s115, %s116
      %p125 = scmp.eq.s32.totalorder %s32, 0
      %p126 = por %p124, %p125
      %p127 = scmp.ne.s32.totalorder %s115, %s116
      %p128 = scmp.eq.s32.totalorder %s33, 1
      %p129 = por %p127, %p128
      %p131 = scmp.ne.s32.totalorder %s116, %s130
      %p132 = scmp.eq.s32.totalorder %s33, 0
      %p133 = por %p131, %p132
      %s135 = sadd.s32 %s134, 1
      %p138 = scmp.eq.s32.totalorder %s27, 1
      %p139 = scmp.ne.s32.totalorder %s134, %s136
      %p140 = scmp.eq.s32.totalorder %s27, 0
      %p141 = por %p139, %p140
      %p142 = scmp.ne.s32.totalorder %s134, %s136
      %p143 = scmp.eq.s32.totalorder %s32, 1
      %p144 = por %p142, %p143
      %p145 = scmp.ne.s32.totalorder %s136, %s137
      %p146 = scmp.eq.s32.totalorder %s32, 0
      %p147 = por %p145, %p146
      %p148 = scmp.ne.s32.totalorder %s136, %s137
      %p149 = scmp.eq.s32.totalorder %s33, 1
      %p150 = por %p148, %p149
      %p152 = scmp.ne.s32.totalorder %s137, %s151
      %p153 = scmp.eq.s32.totalorder %s33, 0
      %p154 = por %p152, %p153
      %s156 = sadd.s32 %s155, 1
      %p159 = scmp.eq.s32.totalorder %s27, 1
      %p160 = scmp.ne.s32.totalorder %s155, %s157
      %p161 = scmp.eq.s32.totalorder %s27, 0
      %p162 = por %p160, %p161
      %p163 = scmp.ne.s32.totalorder %s155, %s157
      %p164 = scmp.eq.s32.totalorder %s32, 1
      %p165 = por %p163, %p164
      %p166 = scmp.ne.s32.totalorder %s157, %s158
      %p167 = scmp.eq.s32.totalorder %s32, 0
      %p168 = por %p166, %p167
      %p169 = scmp.ne.s32.totalorder %s157, %s158
      %p170 = scmp.eq.s32.totalorder %s33, 1
      %p171 = por %p169, %p170
      %p173 = scmp.ne.s32.totalorder %s158, %s172
      %p174 = scmp.eq.s32.totalorder %s33, 0
      %p175 = por %p173, %p174
      %s177 = sadd.s32 %s176, 1
      %p180 = scmp.eq.s32.totalorder %s27, 1
      %p181 = scmp.ne.s32.totalorder %s176, %s178
      %p182 = scmp.eq.s32.totalorder %s27, 0
      %p183 = por %p181, %p182
      %p184 = scmp.ne.s32.totalorder %s176, %s178
      %p185 = scmp.eq.s32.totalorder %s32, 1
      %p186 = por %p184, %p185
      %p187 = scmp.ne.s32.totalorder %s178, %s179
      %p188 = scmp.eq.s32.totalorder %s32, 0
      %p189 = por %p187, %p188
      %p190 = scmp.ne.s32.totalorder %s178, %s179
      %p191 = scmp.eq.s32.totalorder %s33, 1
      %p192 = por %p190, %p191
      %p194 = scmp.ne.s32.totalorder %s179, %s193
      %p195 = scmp.eq.s32.totalorder %s33, 0
      %p196 = por %p194, %p195
      %s198 = sadd.s32 %s197, 1
      %p201 = scmp.eq.s32.totalorder %s27, 1
      %p202 = scmp.ne.s32.totalorder %s197, %s199
      %p203 = scmp.eq.s32.totalorder %s27, 0
      %p204 = por %p202, %p203
      %p205 = scmp.ne.s32.totalorder %s197, %s199
      %p206 = scmp.eq.s32.totalorder %s32, 1
      %p207 = por %p205, %p206
      %p208 = scmp.ne.s32.totalorder %s199, %s200
      %p209 = scmp.eq.s32.totalorder %s32, 0
      %p210 = por %p208, %p209
      %p211 = scmp.ne.s32.totalorder %s199, %s200
      %p212 = scmp.eq.s32.totalorder %s33, 1
      %p213 = por %p211, %p212
      %p215 = scmp.ne.s32.totalorder %s200, %s214
      %p216 = scmp.eq.s32.totalorder %s33, 0
      %p217 = por %p215, %p216
      %s219 = sadd.s32 %s218, 1
      %p222 = scmp.eq.s32.totalorder %s27, 1
      %p223 = scmp.ne.s32.totalorder %s218, %s220
      %p224 = scmp.eq.s32.totalorder %s27, 0
      %p225 = por %p223, %p224
      %p226 = scmp.ne.s32.totalorder %s218, %s220
      %p227 = scmp.eq.s32.totalorder %s32, 1
      %p228 = por %p226, %p227
      %p229 = scmp.ne.s32.totalorder %s220, %s221
      %p230 = scmp.eq.s32.totalorder %s32, 0
      %p231 = por %p229, %p230
      %p232 = scmp.ne.s32.totalorder %s220, %s221
      %p233 = scmp.eq.s32.totalorder %s33, 1
      %p234 = por %p232, %p233
      %p236 = scmp.ne.s32.totalorder %s221, %s235
      %p237 = scmp.eq.s32.totalorder %s33, 0
      %p238 = por %p236, %p237
      %s240 = sadd.s32 %s239, 1
      %p243 = scmp.eq.s32.totalorder %s27, 1
      %p244 = scmp.ne.s32.totalorder %s239, %s241
      %p245 = scmp.eq.s32.totalorder %s27, 0
      %p246 = por %p244, %p245
      %p247 = scmp.ne.s32.totalorder %s239, %s241
      %p248 = scmp.eq.s32.totalorder %s32, 1
      %p249 = por %p247, %p248
      %p250 = scmp.ne.s32.totalorder %s241, %s242
      %p251 = scmp.eq.s32.totalorder %s32, 0
      %p252 = por %p250, %p251
      %p253 = scmp.ne.s32.totalorder %s241, %s242
      %p254 = scmp.eq.s32.totalorder %s33, 1
      %p255 = por %p253, %p254
      %p257 = scmp.ne.s32.totalorder %s242, %s256
      %p258 = scmp.eq.s32.totalorder %s33, 0
      %p259 = por %p257, %p258
      %s261 = sadd.s32 %s260, 1
      %p264 = scmp.eq.s32.totalorder %s27, 1
      %p265 = scmp.ne.s32.totalorder %s260, %s262
      %p266 = scmp.eq.s32.totalorder %s27, 0
      %p267 = por %p265, %p266
      %p268 = scmp.ne.s32.totalorder %s260, %s262
      %p269 = scmp.eq.s32.totalorder %s32, 1
      %p270 = por %p268, %p269
      %p271 = scmp.ne.s32.totalorder %s262, %s263
      %p272 = scmp.eq.s32.totalorder %s32, 0
      %p273 = por %p271, %p272
      %p274 = scmp.ne.s32.totalorder %s262, %s263
      %p275 = scmp.eq.s32.totalorder %s33, 1
      %p276 = por %p274, %p275
      %p278 = scmp.ne.s32.totalorder %s263, %s277
      %p279 = scmp.eq.s32.totalorder %s33, 0
      %p280 = por %p278, %p279
      %s281 = ssub.s32 %s27, %s34
      %p282 = scmp.eq.s32.totalorder %s281, 0
      %s284 = sadd.s32 %s283, 1
      %s285 = scalar_select %p282, %s283, %s284
      %p288 = pneg %p282
      %p289 = scmp.eq.s32.totalorder %s27, 1
      %p290 = por %p288, %p289
      %p291 = scmp.ne.s32.totalorder %s283, %s286
      %p292 = scmp.eq.s32.totalorder %s27, 0
      %p293 = por %p291, %p292
      %p294 = scmp.ne.s32.totalorder %s283, %s286
      %p295 = scmp.eq.s32.totalorder %s32, 1
      %p296 = por %p294, %p295
      %p297 = scmp.ne.s32.totalorder %s286, %s287
      %p298 = scmp.eq.s32.totalorder %s32, 0
      %p299 = por %p297, %p298
      %p300 = scmp.ne.s32.totalorder %s286, %s287
      %p301 = scmp.eq.s32.totalorder %s33, 1
      %p302 = por %p300, %p301
      %p304 = scmp.ne.s32.totalorder %s287, %s303
      %p305 = scmp.eq.s32.totalorder %s33, 0
      %p306 = por %p304, %p305
      %s307 = ssub.s32 %s27, %s34
      %p308 = scmp.eq.s32.totalorder %s307, 0
      %s310 = sadd.s32 %s309, 1
      %s311 = scalar_select %p308, %s309, %s310
      %p314 = pneg %p308
      %p315 = scmp.eq.s32.totalorder %s27, 1
      %p316 = por %p314, %p315
      %p317 = scmp.ne.s32.totalorder %s309, %s312
      %p318 = scmp.eq.s32.totalorder %s27, 0
      %p319 = por %p317, %p318
      %p320 = scmp.ne.s32.totalorder %s309, %s312
      %p321 = scmp.eq.s32.totalorder %s32, 1
      %p322 = por %p320, %p321
      %p323 = scmp.ne.s32.totalorder %s312, %s313
      %p324 = scmp.eq.s32.totalorder %s32, 0
      %p325 = por %p323, %p324
      %p326 = scmp.ne.s32.totalorder %s312, %s313
      %p327 = scmp.eq.s32.totalorder %s33, 1
      %p328 = por %p326, %p327
      %p330 = scmp.ne.s32.totalorder %s313, %s329
      %p331 = scmp.eq.s32.totalorder %s33, 0
      %p332 = por %p330, %p331
      %p333 = scmp.le.s32.totalorder 1, %s27
      %p334 = scmp.lt.s32.totalorder %s27, 3
      %p335 = pnand %p333, %p334
      %p336 = pneg %p335
      // Predicated region
      $region9: #{aa_forward.7} parent=5 // pred_check
        _
      $region10: #{aa_forward.7} parent=5 // pred_check_branch
        %338 = sbr.rel (%p335) target = $region12
      $region11: #{aa_forward.7} parent=5 // pred_region
        %s339 = ssub.s32 %s27, 1
        // Predicated region
        $region13: #{aa_forward.7} parent=11 // pred_check
          %p340 = pneg %p126
        $region14: #{aa_forward.7} parent=11 // pred_check_branch
          %342 = sbr.rel (%p340) target = $region16
        $region15: #{aa_forward.7} parent=11 // pred_region
          _
        $region16: #{aa_forward.7} parent=11 // pred_fallthru
          _
        // Predicated region
        $region17: #{aa_forward.7} parent=11 // pred_check
          %p343 = pneg %p147
        $region18: #{aa_forward.7} parent=11 // pred_check_branch
          %345 = sbr.rel (%p343) target = $region20
        $region19: #{aa_forward.7} parent=11 // pred_region
          _
        $region20: #{aa_forward.7} parent=11 // pred_fallthru
          _
        // Predicated region
        $region21: #{aa_forward.7} parent=11 // pred_check
          %p346 = pneg %p168
        $region22: #{aa_forward.7} parent=11 // pred_check_branch
          %348 = sbr.rel (%p346) target = $region24
        $region23: #{aa_forward.7} parent=11 // pred_region
          _
        $region24: #{aa_forward.7} parent=11 // pred_fallthru
          _
        // Predicated region
        $region25: #{aa_forward.7} parent=11 // pred_check
          %p349 = pneg %p189
        $region26: #{aa_forward.7} parent=11 // pred_check_branch
          %351 = sbr.rel (%p349) target = $region28
        $region27: #{aa_forward.7} parent=11 // pred_region
          _
        $region28: #{aa_forward.7} parent=11 // pred_fallthru
          _
        // Predicated region
        $region29: #{aa_forward.7} parent=11 // pred_check
          %p352 = pneg %p210
        $region30: #{aa_forward.7} parent=11 // pred_check_branch
          %354 = sbr.rel (%p352) target = $region32
        $region31: #{aa_forward.7} parent=11 // pred_region
          %s356 = ssub.s32 16, 16
          %357 = vsyncadd [#allocation5], %s356
          %s359 = sshll.u32 %s7, 4
          %s360 = int_to_ptr.vmem [resolvable:$true] %s359
          %362 = dma.vmem_to_smem %s360, 16, [#allocation3], [#allocation5]
        $region32: #{aa_forward.7} parent=11 // pred_fallthru
          _
        // Predicated region
        $region33: #{aa_forward.7} parent=11 // pred_check
          %p363 = pneg %p231
        $region34: #{aa_forward.7} parent=11 // pred_check_branch
          %365 = sbr.rel (%p363) target = $region36
        $region35: #{aa_forward.7} parent=11 // pred_region
          _
        $region36: #{aa_forward.7} parent=11 // pred_fallthru
          _
        // Predicated region
        $region37: #{aa_forward.7} parent=11 // pred_check
          %p366 = pneg %p252
        $region38: #{aa_forward.7} parent=11 // pred_check_branch
          %368 = sbr.rel (%p366) target = $region40
        $region39: #{aa_forward.7} parent=11 // pred_region
          _
        $region40: #{aa_forward.7} parent=11 // pred_fallthru
          _
        // Predicated region
        $region41: #{aa_forward.7} parent=11 // pred_check
          %p369 = pneg %p273
        $region42: #{aa_forward.7} parent=11 // pred_check_branch
          %371 = sbr.rel (%p369) target = $region44
        $region43: #{aa_forward.7} parent=11 // pred_region
          _
        $region44: #{aa_forward.7} parent=11 // pred_fallthru
          _
      $region12: #{aa_forward.7} parent=5 // pred_fallthru
        _
      %p372 = scmp.lt.s32.totalorder %s27, 2
      // Predicated region
      $region45: #{aa_forward.7} parent=5 // pred_check
        %p373 = pneg %p372
      $region46: #{aa_forward.7} parent=5 // pred_check_branch
        %375 = sbr.rel (%p373) target = $region48
      $region47: #{aa_forward.7} parent=5 // pred_region
        // Predicated region
        $region49: #{aa_forward.7} parent=47 // pred_check
          %p376 = pneg %p47
        $region50: #{aa_forward.7} parent=47 // pred_check_branch
          %378 = sbr.rel (%p376) target = $region52
        $region51: #{aa_forward.7} parent=47 // pred_region
          %p379 = scmp.lt.s32.totalorder %s27, 1
          %s380 = scalar_select %p379, %s27, 1
          %s381 = smul.addr %s380, 8
          %s382 = smul.addr %s381, 8
          %s383 = scalar_lea.vmem %s0, %s382
        $region52: #{aa_forward.7} parent=47 // pred_fallthru
          _
        // Predicated region
        $region53: #{aa_forward.7} parent=47 // pred_check
          %p384 = pneg %p73
        $region54: #{aa_forward.7} parent=47 // pred_check_branch
          %386 = sbr.rel (%p384) target = $region56
        $region55: #{aa_forward.7} parent=47 // pred_region
          %p387 = scmp.lt.s32.totalorder %s27, 1
          %s388 = scalar_select %p387, %s27, 1
          %s389 = smul.addr %s388, 8
          %s390 = smul.addr %s389, 8
          %s391 = scalar_lea.vmem %s1, %s390
        $region56: #{aa_forward.7} parent=47 // pred_fallthru
          _
        // Predicated region
        $region57: #{aa_forward.7} parent=47 // pred_check
          %p392 = pneg %p99
        $region58: #{aa_forward.7} parent=47 // pred_check_branch
          %394 = sbr.rel (%p392) target = $region60
        $region59: #{aa_forward.7} parent=47 // pred_region
          %p395 = scmp.lt.s32.totalorder %s27, 1
          %s396 = scalar_select %p395, %s27, 1
          %s397 = smul.addr %s396, 8
          %s398 = smul.addr %s397, 8
          %s399 = scalar_lea.vmem %s2, %s398
        $region60: #{aa_forward.7} parent=47 // pred_fallthru
          _
      $region48: #{aa_forward.7} parent=5 // pred_fallthru
        _
      %p400 = scmp.le.s32.totalorder 1, %s27
      %p401 = scmp.lt.s32.totalorder %s27, 3
      %p402 = pnand %p400, %p401
      %p403 = pneg %p402
      // Predicated region
      $region61: #{aa_forward.7} parent=5 // pred_check
        _
      $region62: #{aa_forward.7} parent=5 // pred_check_branch
        %405 = sbr.rel (%p402) target = $region64
      $region63: #{aa_forward.7} parent=5 // pred_region
        %s406 = ssub.s32 %s27, 1
        // Predicated region
        $region65: #{aa_forward.7} parent=63 // pred_check
          %p407 = pneg %p210
        $region66: #{aa_forward.7} parent=63 // pred_check_branch
          %409 = sbr.rel (%p407) target = $region68
        $region67: #{aa_forward.7} parent=63 // pred_region
          %410 = dma.done [#allocation5], 16
        $region68: #{aa_forward.7} parent=63 // pred_fallthru
          _
        %411 = sfence
        %p412 = scmp.lt.s32.totalorder %s32, 1
        %s413 = scalar_select %p412, %s32, 1
        %s414 = smul.addr %s413, 8
        %s415 = smul.addr %s414, 8
        %s416 = scalar_lea.vmem %s0, %s415
        %p417 = pneg %p53
        %p418 = pneg %p50
        %p419 = scmp.lt.s32.totalorder %s32, 1
        %s420 = scalar_select %p419, %s32, 1
        %s421 = smul.addr %s420, 8
        %s422 = smul.addr %s421, 8
        %s423 = scalar_lea.vmem %s1, %s422
        %p424 = pneg %p79
        %p425 = pneg %p76
        %p426 = scmp.lt.s32.totalorder %s32, 1
        %s427 = scalar_select %p426, %s32, 1
        %s428 = smul.addr %s427, 8
        %s429 = smul.addr %s428, 8
        %s430 = scalar_lea.vmem %s2, %s429
        %p431 = pneg %p105
        %p432 = pneg %p102
        %p433 = pneg %p126
        %p434 = pneg %p123
        %p435 = pneg %p147
        %p436 = pneg %p144
        %p437 = pneg %p168
        %p438 = pneg %p165
        %p439 = pneg %p189
        %p440 = pneg %p186
        %p441 = pneg %p210
        %p442 = pneg %p207
        %p443 = pneg %p231
        %p444 = pneg %p228
        %p445 = pneg %p252
        %p446 = pneg %p249
        %p447 = pneg %p273
        %p448 = pneg %p270
        %p449 = pneg %p299
        %p450 = pneg %p296
        %s451 = sand.u32 %s286, 1
        %s452 = scalar_lea.sflag [#allocation4], %s451
        %s453 = sand.u32 %s286, 1
        %s454 = smul.addr %s453, 64
        %s455 = scalar_lea.vmem [#allocation6], %s454
        %p456 = pneg %p325
        %p457 = pneg %p322
        %s458 = sand.u32 %s312, 1
        %s459 = scalar_lea.sflag [#allocation8], %s458
        %s460 = sand.u32 %s312, 1
        %s461 = smul.addr %s460, 64
        %s462 = scalar_lea.vmem [#allocation7], %s461
        %p463 = scmp.lt.s32.totalorder %s32, 1
        %s464 = scalar_select %p463, %s32, 1
        %s465 = smul.addr %s464, 8
        %s466 = smul.addr %s465, 8
        %s467 = scalar_lea.vmem %s0, %s466
        %p468 = scmp.lt.s32.totalorder %s32, 1
        %s469 = scalar_select %p468, %s32, 1
        %s470 = smul.addr %s469, 8
        %s471 = smul.addr %s470, 8
        %s472 = scalar_lea.vmem %s1, %s471
        %p473 = scmp.lt.s32.totalorder %s32, 1
        %s474 = scalar_select %p473, %s32, 1
        %s475 = smul.addr %s474, 8
        %s476 = smul.addr %s475, 8
        %s477 = scalar_lea.vmem %s2, %s476
        %v479 = vld [vmem:[%s472] sm:$0xff]
        %v480 = vld [vmem:[%s472 + $0x8] sm:$0xff]
        %v481 = vld [vmem:[%s472 + $0x10] sm:$0xff]
        %v482 = vld [vmem:[%s472 + $0x18] sm:$0xff]
        %v483 = vld [vmem:[%s472 + $0x20] sm:$0xff]
        %v484 = vld [vmem:[%s472 + $0x28] sm:$0xff]
        %v485 = vld [vmem:[%s472 + $0x30] sm:$0xff]
        %v486 = vld [vmem:[%s472 + $0x38] sm:$0xff]
        %v487 = vld [vmem:[%s3] sm:$0x1]
        %v488 = vld [vmem:[%s4] sm:$0x1]
        %vm489 = vcmask 261120
        %v490 = vsel %vm489, %v479, 0.0
        %491 = vadd.xlane.f32.xlu0 %v490
        %v492 = vpop.xlane.xlu0 %491
        %v493 = vsel %vm489, %v480, 0.0
        %494 = vadd.xlane.f32.xlu0 %v493
        %v495 = vpop.xlane.xlu0 %494
        %v496 = vsel %vm489, %v481, 0.0
        %497 = vadd.xlane.f32.xlu0 %v496
        %v498 = vpop.xlane.xlu0 %497
        %v499 = vsel %vm489, %v482, 0.0
        %500 = vadd.xlane.f32.xlu0 %v499
        %v501 = vpop.xlane.xlu0 %500
        %v502 = vsel %vm489, %v483, 0.0
        %503 = vadd.xlane.f32.xlu0 %v502
        %v504 = vpop.xlane.xlu0 %503
        %v505 = vsel %vm489, %v484, 0.0
        %506 = vadd.xlane.f32.xlu0 %v505
        %v507 = vpop.xlane.xlu0 %506
        %v508 = vsel %vm489, %v485, 0.0
        %509 = vadd.xlane.f32.xlu0 %v508
        %v510 = vpop.xlane.xlu0 %509
        %v511 = vsel %vm489, %v486, 0.0
        %512 = vadd.xlane.f32.xlu0 %v511
        %v513 = vpop.xlane.xlu0 %512
        %v514 = vrcp.pop 32.0
        %v515 = vmul.f32 %v492, %v514
        %v516 = vmul.f32 %v495, %v514
        %v517 = vmul.f32 %v498, %v514
        %v518 = vmul.f32 %v501, %v514
        %v519 = vmul.f32 %v504, %v514
        %v520 = vmul.f32 %v507, %v514
        %v521 = vmul.f32 %v510, %v514
        %v522 = vmul.f32 %v513, %v514
        %v523 = vadd.f32 %v515, %v516
        %v524 = vadd.f32 %v523, %v517
        %v525 = vadd.f32 %v524, %v518
        %v526 = vadd.f32 %v525, %v519
        %v527 = vadd.f32 %v526, %v520
        %v528 = vadd.f32 %v527, %v521
        %v529 = vadd.f32 %v528, %v522
        %v530 = vrot.slane %v529, 4
        %v531 = vadd.f32 %v529, %v530
        %v532 = vrot.slane %v531, 2
        %v533 = vadd.f32 %v531, %v532
        %v534 = vrot.slane %v533, 1
        %v535 = vadd.f32 %v533, %v534
        %v536 = vrcp.pop 64.0
        %v537 = vmul.f32 %v535, %v536
        %v538 = vsub.f32 %v479, %v537
        %v539 = vsub.f32 %v480, %v537
        %v540 = vsub.f32 %v481, %v537
        %v541 = vsub.f32 %v482, %v537
        %v542 = vsub.f32 %v483, %v537
        %v543 = vsub.f32 %v484, %v537
        %v544 = vsub.f32 %v485, %v537
        %v545 = vsub.f32 %v486, %v537
        %v546 = vmul.f32 %v538, %v538
        %v547 = vmul.f32 %v539, %v539
        %v548 = vmul.f32 %v540, %v540
        %v549 = vmul.f32 %v541, %v541
        %v550 = vmul.f32 %v542, %v542
        %v551 = vmul.f32 %v543, %v543
        %v552 = vmul.f32 %v544, %v544
        %v553 = vmul.f32 %v545, %v545
        %v554 = vsel %vm489, %v546, 0.0
        %555 = vadd.xlane.f32.xlu0 %v554
        %v556 = vpop.xlane.xlu0 %555
        %v557 = vsel %vm489, %v547, 0.0
        %558 = vadd.xlane.f32.xlu0 %v557
        %v559 = vpop.xlane.xlu0 %558
        %v560 = vsel %vm489, %v548, 0.0
        %561 = vadd.xlane.f32.xlu0 %v560
        %v562 = vpop.xlane.xlu0 %561
        %v563 = vsel %vm489, %v549, 0.0
        %564 = vadd.xlane.f32.xlu0 %v563
        %v565 = vpop.xlane.xlu0 %564
        %v566 = vsel %vm489, %v550, 0.0
        %567 = vadd.xlane.f32.xlu0 %v566
        %v568 = vpop.xlane.xlu0 %567
        %v569 = vsel %vm489, %v551, 0.0
        %570 = vadd.xlane.f32.xlu0 %v569
        %v571 = vpop.xlane.xlu0 %570
        %v572 = vsel %vm489, %v552, 0.0
        %573 = vadd.xlane.f32.xlu0 %v572
        %v574 = vpop.xlane.xlu0 %573
        %v575 = vsel %vm489, %v553, 0.0
        %576 = vadd.xlane.f32.xlu0 %v575
        %v577 = vpop.xlane.xlu0 %576
        %v578 = vmul.f32 %v556, %v514
        %v579 = vmul.f32 %v559, %v514
        %v580 = vmul.f32 %v562, %v514
        %v581 = vmul.f32 %v565, %v514
        %v582 = vmul.f32 %v568, %v514
        %v583 = vmul.f32 %v571, %v514
        %v584 = vmul.f32 %v574, %v514
        %v585 = vmul.f32 %v577, %v514
        %v586 = vadd.f32 %v578, %v579
        %v587 = vadd.f32 %v586, %v580
        %v588 = vadd.f32 %v587, %v581
        %v589 = vadd.f32 %v588, %v582
        %v590 = vadd.f32 %v589, %v583
        %v591 = vadd.f32 %v590, %v584
        %v592 = vadd.f32 %v591, %v585
        %v593 = vrot.slane %v592, 4
        %v594 = vadd.f32 %v592, %v593
        %v595 = vrot.slane %v594, 2
        %v596 = vadd.f32 %v594, %v595
        %v597 = vrot.slane %v596, 1
        %v598 = vadd.f32 %v596, %v597
        %v599 = vmul.f32 %v598, %v536
        %v600 = vadd.f32 %v599, 1e-08
        %v601 = vrsqrt.pop %v600
        %v602 = vmul.f32 %v538, %v601
        %v603 = vmul.f32 %v539, %v601
        %v604 = vmul.f32 %v540, %v601
        %v605 = vmul.f32 %v541, %v601
        %v606 = vmul.f32 %v542, %v601
        %v607 = vmul.f32 %v543, %v601
        %v608 = vmul.f32 %v544, %v601
        %v609 = vmul.f32 %v545, %v601
        %v611 = vlaneseq
        %v612 = vshrl.u32 %v611, 7
        %v613 = vsub.s32 0, %v612
        %v614 = vrot.slane %v487, %v613
        %v616 = vmul.f32 %v602, %v614
        %v617 = vmul.f32 %v603, %v614
        %v618 = vmul.f32 %v604, %v614
        %v619 = vmul.f32 %v605, %v614
        %v620 = vmul.f32 %v606, %v614
        %v621 = vmul.f32 %v607, %v614
        %v622 = vmul.f32 %v608, %v614
        %v623 = vmul.f32 %v609, %v614
        %v625 = vlaneseq
        %v626 = vshrl.u32 %v625, 7
        %v627 = vsub.s32 0, %v626
        %v628 = vrot.slane %v488, %v627
        %v630 = vadd.f32 %v616, %v628
        %v631 = vadd.f32 %v617, %v628
        %v632 = vadd.f32 %v618, %v628
        %v633 = vadd.f32 %v619, %v628
        %v634 = vadd.f32 %v620, %v628
        %v635 = vadd.f32 %v621, %v628
        %v636 = vadd.f32 %v622, %v628
        %v637 = vadd.f32 %v623, %v628
        %v638 = vld [vmem:[%s477] sm:$0xff]
        %v639 = vld [vmem:[%s477 + $0x8] sm:$0xff]
        %v640 = vld [vmem:[%s477 + $0x10] sm:$0xff]
        %v641 = vld [vmem:[%s477 + $0x18] sm:$0xff]
        %v642 = vld [vmem:[%s477 + $0x20] sm:$0xff]
        %v643 = vld [vmem:[%s477 + $0x28] sm:$0xff]
        %v644 = vld [vmem:[%s477 + $0x30] sm:$0xff]
        %v645 = vld [vmem:[%s477 + $0x38] sm:$0xff]
        %v646 = vld [vmem:[%s5] sm:$0x1]
        %v647 = vld [vmem:[%s6] sm:$0x1]
        %v648 = vsel %vm489, %v638, 0.0
        %649 = vadd.xlane.f32.xlu0 %v648
        %v650 = vpop.xlane.xlu0 %649
        %v651 = vsel %vm489, %v639, 0.0
        %652 = vadd.xlane.f32.xlu0 %v651
        %v653 = vpop.xlane.xlu0 %652
        %v654 = vsel %vm489, %v640, 0.0
        %655 = vadd.xlane.f32.xlu0 %v654
        %v656 = vpop.xlane.xlu0 %655
        %v657 = vsel %vm489, %v641, 0.0
        %658 = vadd.xlane.f32.xlu0 %v657
        %v659 = vpop.xlane.xlu0 %658
        %v660 = vsel %vm489, %v642, 0.0
        %661 = vadd.xlane.f32.xlu0 %v660
        %v662 = vpop.xlane.xlu0 %661
        %v663 = vsel %vm489, %v643, 0.0
        %664 = vadd.xlane.f32.xlu0 %v663
        %v665 = vpop.xlane.xlu0 %664
        %v666 = vsel %vm489, %v644, 0.0
        %667 = vadd.xlane.f32.xlu0 %v666
        %v668 = vpop.xlane.xlu0 %667
        %v669 = vsel %vm489, %v645, 0.0
        %670 = vadd.xlane.f32.xlu0 %v669
        %v671 = vpop.xlane.xlu0 %670
        %v672 = vmul.f32 %v650, %v514
        %v673 = vmul.f32 %v653, %v514
        %v674 = vmul.f32 %v656, %v514
        %v675 = vmul.f32 %v659, %v514
        %v676 = vmul.f32 %v662, %v514
        %v677 = vmul.f32 %v665, %v514
        %v678 = vmul.f32 %v668, %v514
        %v679 = vmul.f32 %v671, %v514
        %v680 = vadd.f32 %v672, %v673
        %v681 = vadd.f32 %v680, %v674
        %v682 = vadd.f32 %v681, %v675
        %v683 = vadd.f32 %v682, %v676
        %v684 = vadd.f32 %v683, %v677
        %v685 = vadd.f32 %v684, %v678
        %v686 = vadd.f32 %v685, %v679
        %v687 = vrot.slane %v686, 4
        %v688 = vadd.f32 %v686, %v687
        %v689 = vrot.slane %v688, 2
        %v690 = vadd.f32 %v688, %v689
        %v691 = vrot.slane %v690, 1
        %v692 = vadd.f32 %v690, %v691
        %v693 = vmul.f32 %v692, %v536
        %v694 = vsub.f32 %v638, %v693
        %v695 = vsub.f32 %v639, %v693
        %v696 = vsub.f32 %v640, %v693
        %v697 = vsub.f32 %v641, %v693
        %v698 = vsub.f32 %v642, %v693
        %v699 = vsub.f32 %v643, %v693
        %v700 = vsub.f32 %v644, %v693
        %v701 = vsub.f32 %v645, %v693
        %v702 = vmul.f32 %v694, %v694
        %v703 = vmul.f32 %v695, %v695
        %v704 = vmul.f32 %v696, %v696
        %v705 = vmul.f32 %v697, %v697
        %v706 = vmul.f32 %v698, %v698
        %v707 = vmul.f32 %v699, %v699
        %v708 = vmul.f32 %v700, %v700
        %v709 = vmul.f32 %v701, %v701
        %v710 = vsel %vm489, %v702, 0.0
        %711 = vadd.xlane.f32.xlu0 %v710
        %v712 = vpop.xlane.xlu0 %711
        %v713 = vsel %vm489, %v703, 0.0
        %714 = vadd.xlane.f32.xlu0 %v713
        %v715 = vpop.xlane.xlu0 %714
        %v716 = vsel %vm489, %v704, 0.0
        %717 = vadd.xlane.f32.xlu0 %v716
        %v718 = vpop.xlane.xlu0 %717
        %v719 = vsel %vm489, %v705, 0.0
        %720 = vadd.xlane.f32.xlu0 %v719
        %v721 = vpop.xlane.xlu0 %720
        %v722 = vsel %vm489, %v706, 0.0
        %723 = vadd.xlane.f32.xlu0 %v722
        %v724 = vpop.xlane.xlu0 %723
        %v725 = vsel %vm489, %v707, 0.0
        %726 = vadd.xlane.f32.xlu0 %v725
        %v727 = vpop.xlane.xlu0 %726
        %v728 = vsel %vm489, %v708, 0.0
        %729 = vadd.xlane.f32.xlu0 %v728
        %v730 = vpop.xlane.xlu0 %729
        %v731 = vsel %vm489, %v709, 0.0
        %732 = vadd.xlane.f32.xlu0 %v731
        %v733 = vpop.xlane.xlu0 %732
        %v734 = vmul.f32 %v712, %v514
        %v735 = vmul.f32 %v715, %v514
        %v736 = vmul.f32 %v718, %v514
        %v737 = vmul.f32 %v721, %v514
        %v738 = vmul.f32 %v724, %v514
        %v739 = vmul.f32 %v727, %v514
        %v740 = vmul.f32 %v730, %v514
        %v741 = vmul.f32 %v733, %v514
        %v742 = vadd.f32 %v734, %v735
        %v743 = vadd.f32 %v742, %v736
        %v744 = vadd.f32 %v743, %v737
        %v745 = vadd.f32 %v744, %v738
        %v746 = vadd.f32 %v745, %v739
        %v747 = vadd.f32 %v746, %v740
        %v748 = vadd.f32 %v747, %v741
        %v749 = vrot.slane %v748, 4
        %v750 = vadd.f32 %v748, %v749
        %v751 = vrot.slane %v750, 2
        %v752 = vadd.f32 %v750, %v751
        %v753 = vrot.slane %v752, 1
        %v754 = vadd.f32 %v752, %v753
        %v755 = vmul.f32 %v754, %v536
        %v756 = vadd.f32 %v755, 1e-08
        %v757 = vrsqrt.pop %v756
        %v758 = vmul.f32 %v694, %v757
        %v759 = vmul.f32 %v695, %v757
        %v760 = vmul.f32 %v696, %v757
        %v761 = vmul.f32 %v697, %v757
        %v762 = vmul.f32 %v698, %v757
        %v763 = vmul.f32 %v699, %v757
        %v764 = vmul.f32 %v700, %v757
        %v765 = vmul.f32 %v701, %v757
        %v767 = vlaneseq
        %v768 = vshrl.u32 %v767, 7
        %v769 = vsub.s32 0, %v768
        %v770 = vrot.slane %v646, %v769
        %v772 = vmul.f32 %v758, %v770
        %v773 = vmul.f32 %v759, %v770
        %v774 = vmul.f32 %v760, %v770
        %v775 = vmul.f32 %v761, %v770
        %v776 = vmul.f32 %v762, %v770
        %v777 = vmul.f32 %v763, %v770
        %v778 = vmul.f32 %v764, %v770
        %v779 = vmul.f32 %v765, %v770
        %v781 = vlaneseq
        %v782 = vshrl.u32 %v781, 7
        %v783 = vsub.s32 0, %v782
        %v784 = vrot.slane %v647, %v783
        %v786 = vadd.f32 %v772, %v784
        %v787 = vadd.f32 %v773, %v784
        %v788 = vadd.f32 %v774, %v784
        %v789 = vadd.f32 %v775, %v784
        %v790 = vadd.f32 %v776, %v784
        %v791 = vadd.f32 %v777, %v784
        %v792 = vadd.f32 %v778, %v784
        %v793 = vadd.f32 %v779, %v784
        %v794 = vld [vmem:[%s467] sm:$0xff]
        %v795 = vld [vmem:[%s467 + $0x8] sm:$0xff]
        %v796 = vld [vmem:[%s467 + $0x10] sm:$0xff]
        %v797 = vld [vmem:[%s467 + $0x18] sm:$0xff]
        %v798 = vld [vmem:[%s467 + $0x20] sm:$0xff]
        %v799 = vld [vmem:[%s467 + $0x28] sm:$0xff]
        %v800 = vld [vmem:[%s467 + $0x30] sm:$0xff]
        %v801 = vld [vmem:[%s467 + $0x38] sm:$0xff]
        %s802 = sld [smem:[#allocation3]]
        %v803 = vstv %s802
        %v804 = vmul.f32 %v803, %v630
        %v805 = vmul.f32 %v803, %v631
        %v806 = vmul.f32 %v803, %v632
        %v807 = vmul.f32 %v803, %v633
        %v808 = vmul.f32 %v803, %v634
        %v809 = vmul.f32 %v803, %v635
        %v810 = vmul.f32 %v803, %v636
        %v811 = vmul.f32 %v803, %v637
        %v812 = vadd.f32 %v794, %v804
        %v813 = vadd.f32 %v795, %v805
        %v814 = vadd.f32 %v796, %v806
        %v815 = vadd.f32 %v797, %v807
        %v816 = vadd.f32 %v798, %v808
        %v817 = vadd.f32 %v799, %v809
        %v818 = vadd.f32 %v800, %v810
        %v819 = vadd.f32 %v801, %v811
        %s820 = sld [smem:[#allocation3 + $0x1]]
        %v821 = vstv %s820
        %v822 = vmul.f32 %v821, %v786
        %v823 = vmul.f32 %v821, %v787
        %v824 = vmul.f32 %v821, %v788
        %v825 = vmul.f32 %v821, %v789
        %v826 = vmul.f32 %v821, %v790
        %v827 = vmul.f32 %v821, %v791
        %v828 = vmul.f32 %v821, %v792
        %v829 = vmul.f32 %v821, %v793
        %v830 = vadd.f32 %v812, %v822
        %v831 = vadd.f32 %v813, %v823
        %v832 = vadd.f32 %v814, %v824
        %v833 = vadd.f32 %v815, %v825
        %v834 = vadd.f32 %v816, %v826
        %v835 = vadd.f32 %v817, %v827
        %v836 = vadd.f32 %v818, %v828
        %v837 = vadd.f32 %v819, %v829
        %838 = vst.msk [vmem:[%s455] sm:$0xff] %vm489, %v830
        %839 = vst.msk [vmem:[%s455 + $0x8] sm:$0xff] %vm489, %v831
        %840 = vst.msk [vmem:[%s455 + $0x10] sm:$0xff] %vm489, %v832
        %841 = vst.msk [vmem:[%s455 + $0x18] sm:$0xff] %vm489, %v833
        %842 = vst.msk [vmem:[%s455 + $0x20] sm:$0xff] %vm489, %v834
        %843 = vst.msk [vmem:[%s455 + $0x28] sm:$0xff] %vm489, %v835
        %844 = vst.msk [vmem:[%s455 + $0x30] sm:$0xff] %vm489, %v836
        %845 = vst.msk [vmem:[%s455 + $0x38] sm:$0xff] %vm489, %v837
        %s846 = sld [smem:[#allocation2]]
        %vm847 = vcmp.ge.f32.partialorder %v830, 0.0
        %vm848 = vcmp.ge.f32.partialorder %v831, 0.0
        %vm849 = vcmp.ge.f32.partialorder %v832, 0.0
        %vm850 = vcmp.ge.f32.partialorder %v833, 0.0
        %vm851 = vcmp.ge.f32.partialorder %v834, 0.0
        %vm852 = vcmp.ge.f32.partialorder %v835, 0.0
        %vm853 = vcmp.ge.f32.partialorder %v836, 0.0
        %vm854 = vcmp.ge.f32.partialorder %v837, 0.0
        %v855 = vstv %s846
        %v856 = vmul.f32 %v855, %v830
        %v857 = vmul.f32 %v855, %v831
        %v858 = vmul.f32 %v855, %v832
        %v859 = vmul.f32 %v855, %v833
        %v860 = vmul.f32 %v855, %v834
        %v861 = vmul.f32 %v855, %v835
        %v862 = vmul.f32 %v855, %v836
        %v863 = vmul.f32 %v855, %v837
        %v864 = vsel %vm847, %v830, %v856
        %v865 = vsel %vm848, %v831, %v857
        %v866 = vsel %vm849, %v832, %v858
        %v867 = vsel %vm850, %v833, %v859
        %v868 = vsel %vm851, %v834, %v860
        %v869 = vsel %vm852, %v835, %v861
        %v870 = vsel %vm853, %v836, %v862
        %v871 = vsel %vm854, %v837, %v863
        %v872 = vpack.c.bf16 %v865, %v864
        %v873 = vpack.c.bf16 %v867, %v866
        %v874 = vpack.c.bf16 %v869, %v868
        %v875 = vpack.c.bf16 %v871, %v870
        %v876 = vld [vmem:[%s9] sm:$0xf]
        %v877 = vld [vmem:[%s9 + $0x4] sm:$0xf]
        %v878 = vld [vmem:[%s9 + $0x8] sm:$0xf]
        %v879 = vld [vmem:[%s9 + $0xc] sm:$0xf]
        %v880 = vld [vmem:[%s10] sm:$0x1]
        %v882 = vlaneseq
        %v883 = vshrl.u32 %v882, 7
        %v884 = vsub.s32 0, %v883
        %v885 = vrot.slane %v880, %v884
        %v891 = vunpack.c.l.b16 %v876
        %v892 = vunpack.c.l.b16 %v877
        %v893 = vunpack.c.l.b16 %v878
        %v894 = vunpack.c.l.b16 %v879
        %v895 = vpack.c.b16 %v892, %v891
        %v896 = vpack.c.b16 %v894, %v893
        %v900 = vsel %vm489, %v872, 0
        %v903 = vsel %vm489, %v873, 0
        %v906 = vsel %vm489, %v874, 0
        %v909 = vsel %vm489, %v875, 0
        %911 = vmatprep.subr.bf16.mxu0 0
        %912 = vmatpush1.bf16.msra.mxu0 %v895
        %913 = vmatprep.subr.bf16.mxu0 0
        %914 = vmatpush1.bf16.msra.mxu0 %v896
        %915 = vmatprep.subr.bf16.mxu0 0
        %916 = vmatpush1.bf16.msra.mxu0 0
        %917 = vmatprep.subr.bf16.mxu0 0
        %918 = vmatpush1.bf16.msra.mxu0 0
        %919 = vmatprep.subr.bf16.mxu0 0
        %920 = vmatpush1.bf16.msra.mxu0 0
        %921 = vmatprep.subr.bf16.mxu0 0
        %922 = vmatpush1.bf16.msra.mxu0 0
        %923 = vmatprep.subr.bf16.mxu0 0
        %924 = vmatpush1.bf16.msra.mxu0 0
        %925 = vmatprep.subr.bf16.mxu0 0
        %926 = vmatpush1.bf16.msra.mxu0 0
        %927 = vmatprep.subr.bf16.mxu0 0
        %928 = vmatpush1.bf16.msra.mxu0 0
        %929 = vmatprep.subr.bf16.mxu0 0
        %930 = vmatpush1.bf16.msra.mxu0 0
        %931 = vmatprep.subr.bf16.mxu0 0
        %932 = vmatpush1.bf16.msra.mxu0 0
        %933 = vmatprep.subr.bf16.mxu0 0
        %934 = vmatpush1.bf16.msra.mxu0 0
        %935 = vmatprep.subr.bf16.mxu0 0
        %936 = vmatpush1.bf16.msra.mxu0 0
        %937 = vmatprep.subr.bf16.mxu0 0
        %938 = vmatpush1.bf16.msra.mxu0 0
        %939 = vmatprep.subr.bf16.mxu0 0
        %940 = vmatpush1.bf16.msra.mxu0 0
        %941 = vmatprep.subr.bf16.mxu0 0
        %942 = vmatpush1.bf16.msra.mxu0 0
        %943 = vmatprep.mubr.bf16.mxu0 0
        %944 = vmatmul.mubr.bf16.gmra.mrb[0].mxu0 %v900
        %v945 = vpop.f32.mrb[0].mxu0
        %v946 = vadd.f32 %v885, %v945
        %v947 = vpop.f32.mrb[0].mxu0
        %v948 = vpop.f32.mrb[0].mxu0
        %v949 = vadd.f32 %v885, %v948
        %v950 = vpop.f32.mrb[0].mxu0
        %951 = vmatprep.mubr.bf16.mxu0 0
        %952 = vmatmul.mubr.bf16.gmra.mrb[0].mxu0 %v903
        %v953 = vpop.f32.mrb[0].mxu0
        %v954 = vadd.f32 %v885, %v953
        %v955 = vpop.f32.mrb[0].mxu0
        %v956 = vpop.f32.mrb[0].mxu0
        %v957 = vadd.f32 %v885, %v956
        %v958 = vpop.f32.mrb[0].mxu0
        %959 = vmatprep.mubr.bf16.mxu0 0
        %960 = vmatmul.mubr.bf16.gmra.mrb[0].mxu0 %v906
        %v961 = vpop.f32.mrb[0].mxu0
        %v962 = vadd.f32 %v885, %v961
        %v963 = vpop.f32.mrb[0].mxu0
        %v964 = vpop.f32.mrb[0].mxu0
        %v965 = vadd.f32 %v885, %v964
        %v966 = vpop.f32.mrb[0].mxu0
        %967 = vmatprep.mubr.bf16.mxu0 0
        %968 = vmatmul.mubr.bf16.gmra.mrb[0].mxu0 %v909
        %v969 = vpop.f32.mrb[0].mxu0
        %v970 = vadd.f32 %v885, %v969
        %v971 = vpop.f32.mrb[0].mxu0
        %v972 = vpop.f32.mrb[0].mxu0
        %v973 = vadd.f32 %v885, %v972
        %v974 = vpop.f32.mrb[0].mxu0
        %975 = vdwg.mxu0
        %vm976 = vcmask 523264
        %977 = vst.msk [vmem:[%s462] sm:$0xff] %vm976, %v946
        %978 = vst.msk [vmem:[%s462 + $0x8] sm:$0xff] %vm976, %v949
        %979 = vst.msk [vmem:[%s462 + $0x10] sm:$0xff] %vm976, %v954
        %980 = vst.msk [vmem:[%s462 + $0x18] sm:$0xff] %vm976, %v957
        %981 = vst.msk [vmem:[%s462 + $0x20] sm:$0xff] %vm976, %v962
        %982 = vst.msk [vmem:[%s462 + $0x28] sm:$0xff] %vm976, %v965
        %983 = vst.msk [vmem:[%s462 + $0x30] sm:$0xff] %vm976, %v970
        %984 = vst.msk [vmem:[%s462 + $0x38] sm:$0xff] %vm976, %v973
        %s985 = sand.u32 %s286, 1
        %s986 = scalar_lea.sflag [#allocation4], %s985
        %s987 = sand.u32 %s286, 1
        %s988 = smul.addr %s987, 64
        %s989 = scalar_lea.vmem [#allocation6], %s988
        %s990 = sand.u32 %s312, 1
        %s991 = scalar_lea.sflag [#allocation8], %s990
        %s992 = sand.u32 %s312, 1
        %s993 = smul.addr %s992, 64
        %s994 = scalar_lea.vmem [#allocation7], %s993
        // Predicated region
        $region69: #{aa_forward.7} parent=63 // pred_check
          %p995 = pneg %p296
        $region70: #{aa_forward.7} parent=63 // pred_check_branch
          %997 = sbr.rel (%p995) target = $region72
        $region71: #{aa_forward.7} parent=63 // pred_region
          %s999 = ssub.s32 1024, 1024
          %1000 = vsyncadd %s986, %s999
          %s1001 = smul.addr %s32, 8
          %s1002 = smul.addr %s1001, 128
          %s1003 = scalar_lea.hbm %s11, %s1002
          %s1004 = sshll.u32 %s989, 4
          %s1005 = int_to_ptr.vmem [resolvable:$true] %s1004
          %1010 = dma.vmem_to_hbm [thread:$0]  %s1005, 1024, %s1003, %s986, 128, 128, 8
        $region72: #{aa_forward.7} parent=63 // pred_fallthru
          _
        // Predicated region
        $region73: #{aa_forward.7} parent=63 // pred_check
          %p1011 = pneg %p322
        $region74: #{aa_forward.7} parent=63 // pred_check_branch
          %1013 = sbr.rel (%p1011) target = $region76
        $region75: #{aa_forward.7} parent=63 // pred_region
          %s1015 = ssub.s32 1024, 1024
          %1016 = vsyncadd %s991, %s1015
          %s1017 = smul.addr %s32, 8
          %s1018 = smul.addr %s1017, 128
          %s1019 = scalar_lea.hbm %s12, %s1018
          %s1020 = sshll.u32 %s994, 4
          %s1021 = int_to_ptr.vmem [resolvable:$true] %s1020
          %1026 = dma.vmem_to_hbm [thread:$0]  %s1021, 1024, %s1019, %s991, 128, 128, 8
        $region76: #{aa_forward.7} parent=63 // pred_fallthru
          _
      $region64: #{aa_forward.7} parent=5 // pred_fallthru
        _
      %p1027 = scmp.le.s32.totalorder 2, %s27
      // Predicated region
      $region77: #{aa_forward.7} parent=5 // pred_check
        %p1028 = pneg %p1027
      $region78: #{aa_forward.7} parent=5 // pred_check_branch
        %1030 = sbr.rel (%p1028) target = $region80
      $region79: #{aa_forward.7} parent=5 // pred_region
        %s1031 = ssub.s32 %s27, 2
        // Predicated region
        $region81: #{aa_forward.7} parent=79 // pred_check
          %p1032 = pneg %p302
        $region82: #{aa_forward.7} parent=79 // pred_check_branch
          %1034 = sbr.rel (%p1032) target = $region84
        $region83: #{aa_forward.7} parent=79 // pred_region
          %s1035 = sand.u32 %s287, 1
          %s1036 = scalar_lea.sflag [#allocation4], %s1035
          %s1037 = sand.u32 %s287, 1
          %s1038 = smul.addr %s1037, 64
          %s1039 = scalar_lea.vmem [#allocation6], %s1038
          %1040 = dma.done %s1036, 1024
        $region84: #{aa_forward.7} parent=79 // pred_fallthru
          _
        // Predicated region
        $region85: #{aa_forward.7} parent=79 // pred_check
          %p1041 = pneg %p328
        $region86: #{aa_forward.7} parent=79 // pred_check_branch
          %1043 = sbr.rel (%p1041) target = $region88
        $region87: #{aa_forward.7} parent=79 // pred_region
          %s1044 = sand.u32 %s313, 1
          %s1045 = scalar_lea.sflag [#allocation8], %s1044
          %s1046 = sand.u32 %s313, 1
          %s1047 = smul.addr %s1046, 64
          %s1048 = scalar_lea.vmem [#allocation7], %s1047
          %1049 = dma.done %s1045, 1024
        $region88: #{aa_forward.7} parent=79 // pred_fallthru
          _
      $region80: #{aa_forward.7} parent=5 // pred_fallthru
        _
    $region6: #{aa_forward.7} parent=1 // loop_footer
      %s31 = sadd.s32 1, %s27
    $region7: #{aa_forward.7} parent=1 // loop_footer_branch
      %26 = sbr.rel target = $region3
    $region8: #{aa_forward.7} parent=1 // loop_exit
      _
    %1050 = vsyncpa [#allocation4], 1
    %s1051 = scalar_lea.sflag [#allocation4], 1
    %1052 = vsyncpa %s1051, 1
    %1053 = vsyncpa [#allocation8], 1
    %s1054 = scalar_lea.sflag [#allocation8], 1
    %1055 = vsyncpa %s1054, 1
    %1056 = vsyncpa [#allocation5], 1
    %s1057 = scalar_lea.sflag [#allocation5], 1
    %1058 = vsyncpa %s1057, 1

// kernel: aa_forward.6
$region0: #{aa_forward.6}
  #allocation0 [shape = 'u32[]', space=smem, size = 0x4, offset = 0x4, fixed_abs, tag = 'smem constant byte address 0x4 - core index']
  #allocation1 [shape = 'u32[144,128]{1,0:T(1,128)}', space=vmem, size = 0x12000, scoped, tag = 'internal scratch']
  %s0 = inlined_call_operand.vmem [shape: f32[128,32], index: 0, kind: input, shape index: {}]
  %s1 = inlined_call_operand.vmem [shape: bf16[32,96], index: 1, kind: input, shape index: {}]
  %s2 = inlined_call_operand.vmem [shape: f32[1,96], index: 2, kind: input, shape index: {}]
  %s3 = inlined_call_operand.vmem [shape: bf16[32,32], index: 3, kind: input, shape index: {}]
  %s4 = inlined_call_operand.vmem [shape: f32[1,32], index: 4, kind: input, shape index: {}]
  %s5 = inlined_call_operand.vmem [shape: f32[1,32], index: 5, kind: input, shape index: {}]
  %s6 = inlined_call_operand.vmem [shape: f32[1,32], index: 6, kind: input, shape index: {}]
  %s7 = inlined_call_operand.vmem [shape: bf16[32,2048], index: 7, kind: input, shape index: {}]
  %s8 = inlined_call_operand.vmem [shape: f32[1,2048], index: 8, kind: input, shape index: {}]
  %s9 = inlined_call_operand.vmem [shape: bf16[2048,32], index: 9, kind: input, shape index: {}]
  %s10 = inlined_call_operand.vmem [shape: f32[1,32], index: 10, kind: input, shape index: {}]
  %s11 = inlined_call_operand.vmem [shape: f32[1,32], index: 11, kind: input, shape index: {}]
  %s12 = inlined_call_operand.vmem [shape: f32[1,32], index: 12, kind: input, shape index: {}]
  %s13 = inlined_call_operand.vmem [shape: f32[128,32], index: 13, kind: output, shape index: {}]
  %s14 = sld [smem:[#allocation0]]
  $region85: #{aa_forward.6} parent=0
    _
  %s16 = ssub.s32 1, %s14
  %s17 = scalar_select 0, %s16, %s14
  loop: start=0, step=1, limit=4
  $region2: #{aa_forward.6} parent=0 // loop_pre_header
    _
  $region3: #{aa_forward.6} parent=0 // loop_header
    %s19 = sphi 0, %s23
    %p20 = scmp.ge.s32.totalorder %s19, 4
    %s29 = sphi 0, %s31
    %s32 = sphi 0, %s29
    %s33 = sphi 0, %s32
    %s49 = sphi 0, %s33
    %s53 = sphi 0, %s53
    %s55 = sphi 0, %s53
    %s56 = sphi 0, %s55
    %s70 = sphi 0, %s56
    %s74 = sphi 0, %s74
    %s76 = sphi 0, %s74
    %s77 = sphi 0, %s76
    %s91 = sphi 0, %s77
    %s95 = sphi 0, %s95
    %s97 = sphi 0, %s95
    %s98 = sphi 0, %s97
    %s112 = sphi 0, %s98
    %s116 = sphi 0, %s116
    %s118 = sphi 0, %s116
    %s119 = sphi 0, %s118
    %s133 = sphi 0, %s119
    %s137 = sphi 0, %s137
    %s139 = sphi 0, %s137
    %s140 = sphi 0, %s139
    %s154 = sphi 0, %s140
    %s158 = sphi 0, %s158
    %s160 = sphi 0, %s158
    %s161 = sphi 0, %s160
    %s175 = sphi 0, %s161
    %s179 = sphi 0, %s179
    %s181 = sphi 0, %s179
    %s182 = sphi 0, %s181
    %s196 = sphi 0, %s182
    %s200 = sphi 0, %s200
    %s202 = sphi 0, %s200
    %s203 = sphi 0, %s202
    %s217 = sphi 0, %s203
    %s221 = sphi 0, %s221
    %s223 = sphi 0, %s221
    %s224 = sphi 0, %s223
    %s238 = sphi 0, %s224
    %s242 = sphi 0, %s242
    %s244 = sphi 0, %s242
    %s245 = sphi 0, %s244
    %s259 = sphi 0, %s245
    %s263 = sphi 0, %s263
    %s265 = sphi 0, %s263
    %s266 = sphi 0, %s265
    %s280 = sphi 0, %s266
    %s284 = sphi 0, %s284
    %s286 = sphi 0, %s284
    %s287 = sphi 0, %s286
    %s301 = sphi 0, %s287
    %s307 = sphi 0, %s309
    %s310 = sphi 0, %s307
    %s311 = sphi 0, %s310
    %s327 = sphi 0, %s311
  $region4: #{aa_forward.6} parent=0 // loop_header_branch
    %22 = sbr.rel (%p20) target = $region8
  $region5: #{aa_forward.6} parent=0 // loop_body
    %s24 = ssub.s32 %s19, 1
    %s25 = ssub.s32 %s19, 2
    %s26 = sadd.s32 %s19, 1
    %s27 = ssub.s32 %s19, %s26
    %p28 = scmp.eq.s32.totalorder %s27, 0
    %s30 = sadd.s32 %s29, 1
    %s31 = scalar_select %p28, %s29, %s30
    %p34 = pneg %p28
    %p35 = scmp.eq.s32.totalorder %s19, 1
    %p36 = por %p34, %p35
    %p37 = scmp.ne.s32.totalorder %s29, %s32
    %p38 = scmp.eq.s32.totalorder %s19, 0
    %p39 = por %p37, %p38
    %p40 = scmp.ne.s32.totalorder %s29, %s32
    %p41 = scmp.eq.s32.totalorder %s24, 1
    %p42 = por %p40, %p41
    %p43 = scmp.ne.s32.totalorder %s32, %s33
    %p44 = scmp.eq.s32.totalorder %s24, 0
    %p45 = por %p43, %p44
    %p46 = scmp.ne.s32.totalorder %s32, %s33
    %p47 = scmp.eq.s32.totalorder %s25, 1
    %p48 = por %p46, %p47
    %p50 = scmp.ne.s32.totalorder %s33, %s49
    %p51 = scmp.eq.s32.totalorder %s25, 0
    %p52 = por %p50, %p51
    %s54 = sadd.s32 %s53, 1
    %p57 = scmp.eq.s32.totalorder %s19, 1
    %p58 = scmp.ne.s32.totalorder %s53, %s55
    %p59 = scmp.eq.s32.totalorder %s19, 0
    %p60 = por %p58, %p59
    %p61 = scmp.ne.s32.totalorder %s53, %s55
    %p62 = scmp.eq.s32.totalorder %s24, 1
    %p63 = por %p61, %p62
    %p64 = scmp.ne.s32.totalorder %s55, %s56
    %p65 = scmp.eq.s32.totalorder %s24, 0
    %p66 = por %p64, %p65
    %p67 = scmp.ne.s32.totalorder %s55, %s56
    %p68 = scmp.eq.s32.totalorder %s25, 1
    %p69 = por %p67, %p68
    %p71 = scmp.ne.s32.totalorder %s56, %s70
    %p72 = scmp.eq.s32.totalorder %s25, 0
    %p73 = por %p71, %p72
    %s75 = sadd.s32 %s74, 1
    %p78 = scmp.eq.s32.totalorder %s19, 1
    %p79 = scmp.ne.s32.totalorder %s74, %s76
    %p80 = scmp.eq.s32.totalorder %s19, 0
    %p81 = por %p79, %p80
    %p82 = scmp.ne.s32.totalorder %s74, %s76
    %p83 = scmp.eq.s32.totalorder %s24, 1
    %p84 = por %p82, %p83
    %p85 = scmp.ne.s32.totalorder %s76, %s77
    %p86 = scmp.eq.s32.totalorder %s24, 0
    %p87 = por %p85, %p86
    %p88 = scmp.ne.s32.totalorder %s76, %s77
    %p89 = scmp.eq.s32.totalorder %s25, 1
    %p90 = por %p88, %p89
    %p92 = scmp.ne.s32.totalorder %s77, %s91
    %p93 = scmp.eq.s32.totalorder %s25, 0
    %p94 = por %p92, %p93
    %s96 = sadd.s32 %s95, 1
    %p99 = scmp.eq.s32.totalorder %s19, 1
    %p100 = scmp.ne.s32.totalorder %s95, %s97
    %p101 = scmp.eq.s32.totalorder %s19, 0
    %p102 = por %p100, %p101
    %p103 = scmp.ne.s32.totalorder %s95, %s97
    %p104 = scmp.eq.s32.totalorder %s24, 1
    %p105 = por %p103, %p104
    %p106 = scmp.ne.s32.totalorder %s97, %s98
    %p107 = scmp.eq.s32.totalorder %s24, 0
    %p108 = por %p106, %p107
    %p109 = scmp.ne.s32.totalorder %s97, %s98
    %p110 = scmp.eq.s32.totalorder %s25, 1
    %p111 = por %p109, %p110
    %p113 = scmp.ne.s32.totalorder %s98, %s112
    %p114 = scmp.eq.s32.totalorder %s25, 0
    %p115 = por %p113, %p114
    %s117 = sadd.s32 %s116, 1
    %p120 = scmp.eq.s32.totalorder %s19, 1
    %p121 = scmp.ne.s32.totalorder %s116, %s118
    %p122 = scmp.eq.s32.totalorder %s19, 0
    %p123 = por %p121, %p122
    %p124 = scmp.ne.s32.totalorder %s116, %s118
    %p125 = scmp.eq.s32.totalorder %s24, 1
    %p126 = por %p124, %p125
    %p127 = scmp.ne.s32.totalorder %s118, %s119
    %p128 = scmp.eq.s32.totalorder %s24, 0
    %p129 = por %p127, %p128
    %p130 = scmp.ne.s32.totalorder %s118, %s119
    %p131 = scmp.eq.s32.totalorder %s25, 1
    %p132 = por %p130, %p131
    %p134 = scmp.ne.s32.totalorder %s119, %s133
    %p135 = scmp.eq.s32.totalorder %s25, 0
    %p136 = por %p134, %p135
    %s138 = sadd.s32 %s137, 1
    %p141 = scmp.eq.s32.totalorder %s19, 1
    %p142 = scmp.ne.s32.totalorder %s137, %s139
    %p143 = scmp.eq.s32.totalorder %s19, 0
    %p144 = por %p142, %p143
    %p145 = scmp.ne.s32.totalorder %s137, %s139
    %p146 = scmp.eq.s32.totalorder %s24, 1
    %p147 = por %p145, %p146
    %p148 = scmp.ne.s32.totalorder %s139, %s140
    %p149 = scmp.eq.s32.totalorder %s24, 0
    %p150 = por %p148, %p149
    %p151 = scmp.ne.s32.totalorder %s139, %s140
    %p152 = scmp.eq.s32.totalorder %s25, 1
    %p153 = por %p151, %p152
    %p155 = scmp.ne.s32.totalorder %s140, %s154
    %p156 = scmp.eq.s32.totalorder %s25, 0
    %p157 = por %p155, %p156
    %s159 = sadd.s32 %s158, 1
    %p162 = scmp.eq.s32.totalorder %s19, 1
    %p163 = scmp.ne.s32.totalorder %s158, %s160
    %p164 = scmp.eq.s32.totalorder %s19, 0
    %p165 = por %p163, %p164
    %p166 = scmp.ne.s32.totalorder %s158, %s160
    %p167 = scmp.eq.s32.totalorder %s24, 1
    %p168 = por %p166, %p167
    %p169 = scmp.ne.s32.totalorder %s160, %s161
    %p170 = scmp.eq.s32.totalorder %s24, 0
    %p171 = por %p169, %p170
    %p172 = scmp.ne.s32.totalorder %s160, %s161
    %p173 = scmp.eq.s32.totalorder %s25, 1
    %p174 = por %p172, %p173
    %p176 = scmp.ne.s32.totalorder %s161, %s175
    %p177 = scmp.eq.s32.totalorder %s25, 0
    %p178 = por %p176, %p177
    %s180 = sadd.s32 %s179, 1
    %p183 = scmp.eq.s32.totalorder %s19, 1
    %p184 = scmp.ne.s32.totalorder %s179, %s181
    %p185 = scmp.eq.s32.totalorder %s19, 0
    %p186 = por %p184, %p185
    %p187 = scmp.ne.s32.totalorder %s179, %s181
    %p188 = scmp.eq.s32.totalorder %s24, 1
    %p189 = por %p187, %p188
    %p190 = scmp.ne.s32.totalorder %s181, %s182
    %p191 = scmp.eq.s32.totalorder %s24, 0
    %p192 = por %p190, %p191
    %p193 = scmp.ne.s32.totalorder %s181, %s182
    %p194 = scmp.eq.s32.totalorder %s25, 1
    %p195 = por %p193, %p194
    %p197 = scmp.ne.s32.totalorder %s182, %s196
    %p198 = scmp.eq.s32.totalorder %s25, 0
    %p199 = por %p197, %p198
    %s201 = sadd.s32 %s200, 1
    %p204 = scmp.eq.s32.totalorder %s19, 1
    %p205 = scmp.ne.s32.totalorder %s200, %s202
    %p206 = scmp.eq.s32.totalorder %s19, 0
    %p207 = por %p205, %p206
    %p208 = scmp.ne.s32.totalorder %s200, %s202
    %p209 = scmp.eq.s32.totalorder %s24, 1
    %p210 = por %p208, %p209
    %p211 = scmp.ne.s32.totalorder %s202, %s203
    %p212 = scmp.eq.s32.totalorder %s24, 0
    %p213 = por %p211, %p212
    %p214 = scmp.ne.s32.totalorder %s202, %s203
    %p215 = scmp.eq.s32.totalorder %s25, 1
    %p216 = por %p214, %p215
    %p218 = scmp.ne.s32.totalorder %s203, %s217
    %p219 = scmp.eq.s32.totalorder %s25, 0
    %p220 = por %p218, %p219
    %s222 = sadd.s32 %s221, 1
    %p225 = scmp.eq.s32.totalorder %s19, 1
    %p226 = scmp.ne.s32.totalorder %s221, %s223
    %p227 = scmp.eq.s32.totalorder %s19, 0
    %p228 = por %p226, %p227
    %p229 = scmp.ne.s32.totalorder %s221, %s223
    %p230 = scmp.eq.s32.totalorder %s24, 1
    %p231 = por %p229, %p230
    %p232 = scmp.ne.s32.totalorder %s223, %s224
    %p233 = scmp.eq.s32.totalorder %s24, 0
    %p234 = por %p232, %p233
    %p235 = scmp.ne.s32.totalorder %s223, %s224
    %p236 = scmp.eq.s32.totalorder %s25, 1
    %p237 = por %p235, %p236
    %p239 = scmp.ne.s32.totalorder %s224, %s238
    %p240 = scmp.eq.s32.totalorder %s25, 0
    %p241 = por %p239, %p240
    %s243 = sadd.s32 %s242, 1
    %p246 = scmp.eq.s32.totalorder %s19, 1
    %p247 = scmp.ne.s32.totalorder %s242, %s244
    %p248 = scmp.eq.s32.totalorder %s19, 0
    %p249 = por %p247, %p248
    %p250 = scmp.ne.s32.totalorder %s242, %s244
    %p251 = scmp.eq.s32.totalorder %s24, 1
    %p252 = por %p250, %p251
    %p253 = scmp.ne.s32.totalorder %s244, %s245
    %p254 = scmp.eq.s32.totalorder %s24, 0
    %p255 = por %p253, %p254
    %p256 = scmp.ne.s32.totalorder %s244, %s245
    %p257 = scmp.eq.s32.totalorder %s25, 1
    %p258 = por %p256, %p257
    %p260 = scmp.ne.s32.totalorder %s245, %s259
    %p261 = scmp.eq.s32.totalorder %s25, 0
    %p262 = por %p260, %p261
    %s264 = sadd.s32 %s263, 1
    %p267 = scmp.eq.s32.totalorder %s19, 1
    %p268 = scmp.ne.s32.totalorder %s263, %s265
    %p269 = scmp.eq.s32.totalorder %s19, 0
    %p270 = por %p268, %p269
    %p271 = scmp.ne.s32.totalorder %s263, %s265
    %p272 = scmp.eq.s32.totalorder %s24, 1
    %p273 = por %p271, %p272
    %p274 = scmp.ne.s32.totalorder %s265, %s266
    %p275 = scmp.eq.s32.totalorder %s24, 0
    %p276 = por %p274, %p275
    %p277 = scmp.ne.s32.totalorder %s265, %s266
    %p278 = scmp.eq.s32.totalorder %s25, 1
    %p279 = por %p277, %p278
    %p281 = scmp.ne.s32.totalorder %s266, %s280
    %p282 = scmp.eq.s32.totalorder %s25, 0
    %p283 = por %p281, %p282
    %s285 = sadd.s32 %s284, 1
    %p288 = scmp.eq.s32.totalorder %s19, 1
    %p289 = scmp.ne.s32.totalorder %s284, %s286
    %p290 = scmp.eq.s32.totalorder %s19, 0
    %p291 = por %p289, %p290
    %p292 = scmp.ne.s32.totalorder %s284, %s286
    %p293 = scmp.eq.s32.totalorder %s24, 1
    %p294 = por %p292, %p293
    %p295 = scmp.ne.s32.totalorder %s286, %s287
    %p296 = scmp.eq.s32.totalorder %s24, 0
    %p297 = por %p295, %p296
    %p298 = scmp.ne.s32.totalorder %s286, %s287
    %p299 = scmp.eq.s32.totalorder %s25, 1
    %p300 = por %p298, %p299
    %p302 = scmp.ne.s32.totalorder %s287, %s301
    %p303 = scmp.eq.s32.totalorder %s25, 0
    %p304 = por %p302, %p303
    %s305 = ssub.s32 %s19, %s26
    %p306 = scmp.eq.s32.totalorder %s305, 0
    %s308 = sadd.s32 %s307, 1
    %s309 = scalar_select %p306, %s307, %s308
    %p312 = pneg %p306
    %p313 = scmp.eq.s32.totalorder %s19, 1
    %p314 = por %p312, %p313
    %p315 = scmp.ne.s32.totalorder %s307, %s310
    %p316 = scmp.eq.s32.totalorder %s19, 0
    %p317 = por %p315, %p316
    %p318 = scmp.ne.s32.totalorder %s307, %s310
    %p319 = scmp.eq.s32.totalorder %s24, 1
    %p320 = por %p318, %p319
    %p321 = scmp.ne.s32.totalorder %s310, %s311
    %p322 = scmp.eq.s32.totalorder %s24, 0
    %p323 = por %p321, %p322
    %p324 = scmp.ne.s32.totalorder %s310, %s311
    %p325 = scmp.eq.s32.totalorder %s25, 1
    %p326 = por %p324, %p325
    %p328 = scmp.ne.s32.totalorder %s311, %s327
    %p329 = scmp.eq.s32.totalorder %s25, 0
    %p330 = por %p328, %p329
    %p331 = scmp.le.s32.totalorder 1, %s19
    %p332 = scmp.lt.s32.totalorder %s19, 3
    %p333 = pnand %p331, %p332
    %p334 = pneg %p333
    // Predicated region
    $region9: #{aa_forward.6} parent=5 // pred_check
      _
    $region10: #{aa_forward.6} parent=5 // pred_check_branch
      %336 = sbr.rel (%p333) target = $region12
    $region11: #{aa_forward.6} parent=5 // pred_region
      %s337 = ssub.s32 %s19, 1
      // Predicated region
      $region13: #{aa_forward.6} parent=11 // pred_check
        %p338 = pneg %p66
      $region14: #{aa_forward.6} parent=11 // pred_check_branch
        %340 = sbr.rel (%p338) target = $region16
      $region15: #{aa_forward.6} parent=11 // pred_region
        _
      $region16: #{aa_forward.6} parent=11 // pred_fallthru
        _
      // Predicated region
      $region17: #{aa_forward.6} parent=11 // pred_check
        %p341 = pneg %p87
      $region18: #{aa_forward.6} parent=11 // pred_check_branch
        %343 = sbr.rel (%p341) target = $region20
      $region19: #{aa_forward.6} parent=11 // pred_region
        _
      $region20: #{aa_forward.6} parent=11 // pred_fallthru
        _
      // Predicated region
      $region21: #{aa_forward.6} parent=11 // pred_check
        %p344 = pneg %p108
      $region22: #{aa_forward.6} parent=11 // pred_check_branch
        %346 = sbr.rel (%p344) target = $region24
      $region23: #{aa_forward.6} parent=11 // pred_region
        _
      $region24: #{aa_forward.6} parent=11 // pred_fallthru
        _
      // Predicated region
      $region25: #{aa_forward.6} parent=11 // pred_check
        %p347 = pneg %p129
      $region26: #{aa_forward.6} parent=11 // pred_check_branch
        %349 = sbr.rel (%p347) target = $region28
      $region27: #{aa_forward.6} parent=11 // pred_region
        _
      $region28: #{aa_forward.6} parent=11 // pred_fallthru
        _
      // Predicated region
      $region29: #{aa_forward.6} parent=11 // pred_check
        %p350 = pneg %p150
      $region30: #{aa_forward.6} parent=11 // pred_check_branch
        %352 = sbr.rel (%p350) target = $region32
      $region31: #{aa_forward.6} parent=11 // pred_region
        _
      $region32: #{aa_forward.6} parent=11 // pred_fallthru
        _
      // Predicated region
      $region33: #{aa_forward.6} parent=11 // pred_check
        %p353 = pneg %p171
      $region34: #{aa_forward.6} parent=11 // pred_check_branch
        %355 = sbr.rel (%p353) target = $region36
      $region35: #{aa_forward.6} parent=11 // pred_region
        _
      $region36: #{aa_forward.6} parent=11 // pred_fallthru
        _
      // Predicated region
      $region37: #{aa_forward.6} parent=11 // pred_check
        %p356 = pneg %p192
      $region38: #{aa_forward.6} parent=11 // pred_check_branch
        %358 = sbr.rel (%p356) target = $region40
      $region39: #{aa_forward.6} parent=11 // pred_region
        _
      $region40: #{aa_forward.6} parent=11 // pred_fallthru
        _
      // Predicated region
      $region41: #{aa_forward.6} parent=11 // pred_check
        %p359 = pneg %p213
      $region42: #{aa_forward.6} parent=11 // pred_check_branch
        %361 = sbr.rel (%p359) target = $region44
      $region43: #{aa_forward.6} parent=11 // pred_region
        _
      $region44: #{aa_forward.6} parent=11 // pred_fallthru
        _
      // Predicated region
      $region45: #{aa_forward.6} parent=11 // pred_check
        %p362 = pneg %p234
      $region46: #{aa_forward.6} parent=11 // pred_check_branch
        %364 = sbr.rel (%p362) target = $region48
      $region47: #{aa_forward.6} parent=11 // pred_region
        _
      $region48: #{aa_forward.6} parent=11 // pred_fallthru
        _
      // Predicated region
      $region49: #{aa_forward.6} parent=11 // pred_check
        %p365 = pneg %p255
      $region50: #{aa_forward.6} parent=11 // pred_check_branch
        %367 = sbr.rel (%p365) target = $region52
      $region51: #{aa_forward.6} parent=11 // pred_region
        _
      $region52: #{aa_forward.6} parent=11 // pred_fallthru
        _
      // Predicated region
      $region53: #{aa_forward.6} parent=11 // pred_check
        %p368 = pneg %p276
      $region54: #{aa_forward.6} parent=11 // pred_check_branch
        %370 = sbr.rel (%p368) target = $region56
      $region55: #{aa_forward.6} parent=11 // pred_region
        _
      $region56: #{aa_forward.6} parent=11 // pred_fallthru
        _
      // Predicated region
      $region57: #{aa_forward.6} parent=11 // pred_check
        %p371 = pneg %p297
      $region58: #{aa_forward.6} parent=11 // pred_check_branch
        %373 = sbr.rel (%p371) target = $region60
      $region59: #{aa_forward.6} parent=11 // pred_region
        _
      $region60: #{aa_forward.6} parent=11 // pred_fallthru
        _
    $region12: #{aa_forward.6} parent=5 // pred_fallthru
      _
    %p374 = scmp.lt.s32.totalorder %s19, 2
    // Predicated region
    $region61: #{aa_forward.6} parent=5 // pred_check
      %p375 = pneg %p374
    $region62: #{aa_forward.6} parent=5 // pred_check_branch
      %377 = sbr.rel (%p375) target = $region64
    $region63: #{aa_forward.6} parent=5 // pred_region
      // Predicated region
      $region65: #{aa_forward.6} parent=63 // pred_check
        %p378 = pneg %p39
      $region66: #{aa_forward.6} parent=63 // pred_check_branch
        %380 = sbr.rel (%p378) target = $region68
      $region67: #{aa_forward.6} parent=63 // pred_region
        %s381 = smul.u32 8, %s19
        %p382 = scmp.lt.s32.totalorder %s381, 15
        %s383 = scalar_select %p382, %s381, 15
        %s384 = smul.addr %s383, 8
        %s385 = scalar_lea.vmem %s0, %s384
        %s386 = smul.u32 8, %s19
      $region68: #{aa_forward.6} parent=63 // pred_fallthru
        _
    $region64: #{aa_forward.6} parent=5 // pred_fallthru
      _
    %p387 = scmp.le.s32.totalorder 1, %s19
    %p388 = scmp.lt.s32.totalorder %s19, 3
    %p389 = pnand %p387, %p388
    %p390 = pneg %p389
    // Predicated region
    $region69: #{aa_forward.6} parent=5 // pred_check
      _
    $region70: #{aa_forward.6} parent=5 // pred_check_branch
      %392 = sbr.rel (%p389) target = $region72
    $region71: #{aa_forward.6} parent=5 // pred_region
      %s393 = ssub.s32 %s19, 1
      %s394 = smul.u32 8, %s24
      %p395 = scmp.lt.s32.totalorder %s394, 15
      %s396 = scalar_select %p395, %s394, 15
      %s397 = smul.addr %s396, 8
      %s398 = scalar_lea.vmem %s0, %s397
      %p399 = pneg %p45
      %p400 = pneg %p42
      %p401 = pneg %p66
      %p402 = pneg %p63
      %p403 = pneg %p87
      %p404 = pneg %p84
      %p405 = pneg %p108
      %p406 = pneg %p105
      %p407 = pneg %p129
      %p408 = pneg %p126
      %p409 = pneg %p150
      %p410 = pneg %p147
      %p411 = pneg %p171
      %p412 = pneg %p168
      %p413 = pneg %p192
      %p414 = pneg %p189
      %p415 = pneg %p213
      %p416 = pneg %p210
      %p417 = pneg %p234
      %p418 = pneg %p231
      %p419 = pneg %p255
      %p420 = pneg %p252
      %p421 = pneg %p276
      %p422 = pneg %p273
      %p423 = pneg %p297
      %p424 = pneg %p294
      %p425 = pneg %p323
      %p426 = pneg %p320
      %s427 = smul.u32 8, %s24
      %p428 = scmp.lt.s32.totalorder %s427, 15
      %s429 = scalar_select %p428, %s427, 15
      %s430 = smul.addr %s429, 8
      %s431 = scalar_lea.vmem %s13, %s430
      %s432 = smul.u32 8, %s24
      %p433 = scmp.lt.s32.totalorder %s432, 15
      %s434 = scalar_select %p433, %s432, 15
      %s435 = smul.addr %s434, 8
      %s436 = scalar_lea.vmem %s0, %s435
      %s437 = smul.u32 8, %s24
      %s438 = smul.u32 8, %s24
      %p439 = scmp.lt.s32.totalorder %s438, 15
      %s440 = scalar_select %p439, %s438, 15
      %s441 = smul.addr %s440, 8
      %s442 = scalar_lea.vmem %s13, %s441
      %s443 = smul.u32 8, %s24
      %v445 = vld [vmem:[%s436] sm:$0xff]
      %v446 = vld [vmem:[%s436 + $0x8] sm:$0xff]
      %v447 = vld [vmem:[%s436 + $0x10] sm:$0xff]
      %v448 = vld [vmem:[%s436 + $0x18] sm:$0xff]
      %v449 = vld [vmem:[%s436 + $0x20] sm:$0xff]
      %v450 = vld [vmem:[%s436 + $0x28] sm:$0xff]
      %v451 = vld [vmem:[%s436 + $0x30] sm:$0xff]
      %v452 = vld [vmem:[%s436 + $0x38] sm:$0xff]
      %v453 = vpack.c.bf16 %v446, %v445
      %v454 = vpack.c.bf16 %v448, %v447
      %v455 = vpack.c.bf16 %v450, %v449
      %v456 = vpack.c.bf16 %v452, %v451
      %v457 = vld [vmem:[%s1] sm:$0xf]
      %v458 = vld [vmem:[%s1 + $0x4] sm:$0xf]
      %v459 = vld [vmem:[%s1 + $0x8] sm:$0xf]
      %v460 = vld [vmem:[%s1 + $0xc] sm:$0xf]
      %v461 = vld [vmem:[%s2] sm:$0x1]
      %v463 = vlaneseq
      %v464 = vshrl.u32 %v463, 7
      %v465 = vsub.s32 0, %v464
      %v466 = vrot.slane %v461, %v465
      %v472 = vunpack.c.l.b16 %v457
      %v473 = vunpack.c.l.b16 %v458
      %v474 = vunpack.c.l.b16 %v459
      %v475 = vunpack.c.l.b16 %v460
      %v476 = vpack.c.b16 %v473, %v472
      %v477 = vpack.c.b16 %v475, %v474
      %vm480 = vcmask 261120
      %v482 = vsel %vm480, %v453, 0
      %v485 = vsel %vm480, %v454, 0
      %v488 = vsel %vm480, %v455, 0
      %v491 = vsel %vm480, %v456, 0
      %493 = vmatprep.subr.bf16.mxu0 0
      %494 = vmatpush1.bf16.msra.mxu0 %v476
      %495 = vmatprep.subr.bf16.mxu0 0
      %496 = vmatpush1.bf16.msra.mxu0 %v477
      %497 = vmatprep.subr.bf16.mxu0 0
      %498 = vmatpush1.bf16.msra.mxu0 0
      %499 = vmatprep.subr.bf16.mxu0 0
      %500 = vmatpush1.bf16.msra.mxu0 0
      %501 = vmatprep.subr.bf16.mxu0 0
      %502 = vmatpush1.bf16.msra.mxu0 0
      %503 = vmatprep.subr.bf16.mxu0 0
      %504 = vmatpush1.bf16.msra.mxu0 0
      %505 = vmatprep.subr.bf16.mxu0 0
      %506 = vmatpush1.bf16.msra.mxu0 0
      %507 = vmatprep.subr.bf16.mxu0 0
      %508 = vmatpush1.bf16.msra.mxu0 0
      %509 = vmatprep.subr.bf16.mxu0 0
      %510 = vmatpush1.bf16.msra.mxu0 0
      %511 = vmatprep.subr.bf16.mxu0 0
      %512 = vmatpush1.bf16.msra.mxu0 0
      %513 = vmatprep.subr.bf16.mxu0 0
      %514 = vmatpush1.bf16.msra.mxu0 0
      %515 = vmatprep.subr.bf16.mxu0 0
      %516 = vmatpush1.bf16.msra.mxu0 0
      %517 = vmatprep.subr.bf16.mxu0 0
      %518 = vmatpush1.bf16.msra.mxu0 0
      %519 = vmatprep.subr.bf16.mxu0 0
      %520 = vmatpush1.bf16.msra.mxu0 0
      %521 = vmatprep.subr.bf16.mxu0 0
      %522 = vmatpush1.bf16.msra.mxu0 0
      %523 = vmatprep.subr.bf16.mxu0 0
      %524 = vmatpush1.bf16.msra.mxu0 0
      %525 = vmatprep.mubr.bf16.mxu0 0
      %526 = vmatmul.mubr.bf16.gmra.mrb[0].mxu0 %v482
      %v527 = vpop.f32.mrb[0].mxu0
      %v528 = vadd.f32 %v466, %v527
      %v529 = vpop.f32.mrb[0].mxu0
      %v530 = vpop.f32.mrb[0].mxu0
      %v531 = vadd.f32 %v466, %v530
      %v532 = vpop.f32.mrb[0].mxu0
      %533 = vmatprep.mubr.bf16.mxu0 0
      %534 = vmatmul.mubr.bf16.gmra.mrb[0].mxu0 %v485
      %v535 = vpop.f32.mrb[0].mxu0
      %v536 = vadd.f32 %v466, %v535
      %v537 = vpop.f32.mrb[0].mxu0
      %v538 = vpop.f32.mrb[0].mxu0
      %v539 = vadd.f32 %v466, %v538
      %v540 = vpop.f32.mrb[0].mxu0
      %541 = vmatprep.mubr.bf16.mxu0 0
      %542 = vmatmul.mubr.bf16.gmra.mrb[0].mxu0 %v488
      %v543 = vpop.f32.mrb[0].mxu0
      %v544 = vadd.f32 %v466, %v543
      %v545 = vpop.f32.mrb[0].mxu0
      %v546 = vpop.f32.mrb[0].mxu0
      %v547 = vadd.f32 %v466, %v546
      %v548 = vpop.f32.mrb[0].mxu0
      %549 = vmatprep.mubr.bf16.mxu0 0
      %550 = vmatmul.mubr.bf16.gmra.mrb[0].mxu0 %v491
      %v551 = vpop.f32.mrb[0].mxu0
      %v552 = vadd.f32 %v466, %v551
      %v553 = vpop.f32.mrb[0].mxu0
      %v554 = vpop.f32.mrb[0].mxu0
      %v555 = vadd.f32 %v466, %v554
      %v556 = vpop.f32.mrb[0].mxu0
      %557 = vdwg.mxu0
      %v558 = vpack.c.bf16 %v528, %v528
      %v559 = vpack.c.bf16 %v531, %v531
      %v560 = vpack.c.bf16 %v536, %v536
      %v561 = vpack.c.bf16 %v539, %v539
      %v562 = vpack.c.bf16 %v544, %v544
      %v563 = vpack.c.bf16 %v547, %v547
      %v564 = vpack.c.bf16 %v552, %v552
      %v565 = vpack.c.bf16 %v555, %v555
      %567 = vrot.lane.b32.xlu0 %v558, 96
      %v568 = vpop.permute.xlu0 %567
      %vm569 = vcmask 64512
      %v571 = vsel %vm569, %v558, 0
      %v574 = vsel %vm569, %v568, 0
      %576 = vmatprep.subr.bf16.mxu0 0
      %577 = vmatpush1.bf16.xpose.msra.mxu0 %v574
      %578 = vmatprep.subr.bf16.mxu0 0
      %579 = vmatpush1.bf16.xpose.msra.mxu0 0
      %580 = vmatprep.subr.bf16.mxu0 0
      %581 = vmatpush1.bf16.xpose.msra.mxu0 0
      %582 = vmatprep.subr.bf16.mxu0 0
      %583 = vmatpush1.bf16.xpose.msra.mxu0 0
      %584 = vmatprep.subr.bf16.mxu0 0
      %585 = vmatpush1.bf16.xpose.msra.mxu0 0
      %586 = vmatprep.subr.bf16.mxu0 0
      %587 = vmatpush1.bf16.xpose.msra.mxu0 0
      %588 = vmatprep.subr.bf16.mxu0 0
      %589 = vmatpush1.bf16.xpose.msra.mxu0 0
      %590 = vmatprep.subr.bf16.mxu0 0
      %591 = vmatpush1.bf16.xpose.msra.mxu0 0
      %592 = vmatprep.subr.bf16.mxu0 0
      %593 = vmatpush1.bf16.xpose.msra.mxu0 0
      %594 = vmatprep.subr.bf16.mxu0 0
      %595 = vmatpush1.bf16.xpose.msra.mxu0 0
      %596 = vmatprep.subr.bf16.mxu0 0
      %597 = vmatpush1.bf16.xpose.msra.mxu0 0
      %598 = vmatprep.subr.bf16.mxu0 0
      %599 = vmatpush1.bf16.xpose.msra.mxu0 0
      %600 = vmatprep.subr.bf16.mxu0 0
      %601 = vmatpush1.bf16.xpose.msra.mxu0 0
      %602 = vmatprep.subr.bf16.mxu0 0
      %603 = vmatpush1.bf16.xpose.msra.mxu0 0
      %604 = vmatprep.subr.bf16.mxu0 0
      %605 = vmatpush1.bf16.xpose.msra.mxu0 0
      %606 = vmatprep.subr.bf16.mxu0 0
      %607 = vmatpush1.bf16.xpose.msra.mxu0 0
      %608 = vmatprep.mubr.bf16.mxu0 0
      %609 = vmatmul.mubr.bf16.gmra.mrb[0].mxu0 %v571
      %v610 = vpop.f32.mrb[0].mxu0
      %v611 = vadd.f32 0.0, %v610
      %v612 = vpop.f32.mrb[0].mxu0
      %v613 = vpop.f32.mrb[0].mxu0
      %v614 = vpop.f32.mrb[0].mxu0
      %615 = vdwg.mxu0
      %617 = vrot.lane.b32.xlu0 %v559, 96
      %v618 = vpop.permute.xlu0 %617
      %v620 = vsel %vm569, %v559, 0
      %v623 = vsel %vm569, %v618, 0
      %625 = vmatprep.subr.bf16.mxu0 0
      %626 = vmatpush1.bf16.xpose.msra.mxu0 %v623
      %627 = vmatprep.subr.bf16.mxu0 0
      %628 = vmatpush1.bf16.xpose.msra.mxu0 0
      %629 = vmatprep.subr.bf16.mxu0 0
      %630 = vmatpush1.bf16.xpose.msra.mxu0 0
      %631 = vmatprep.subr.bf16.mxu0 0
      %632 = vmatpush1.bf16.xpose.msra.mxu0 0
      %633 = vmatprep.subr.bf16.mxu0 0
      %634 = vmatpush1.bf16.xpose.msra.mxu0 0
      %635 = vmatprep.subr.bf16.mxu0 0
      %636 = vmatpush1.bf16.xpose.msra.mxu0 0
      %637 = vmatprep.subr.bf16.mxu0 0
      %638 = vmatpush1.bf16.xpose.msra.mxu0 0
      %639 = vmatprep.subr.bf16.mxu0 0
      %640 = vmatpush1.bf16.xpose.msra.mxu0 0
      %641 = vmatprep.subr.bf16.mxu0 0
      %642 = vmatpush1.bf16.xpose.msra.mxu0 0
      %643 = vmatprep.subr.bf16.mxu0 0
      %644 = vmatpush1.bf16.xpose.msra.mxu0 0
      %645 = vmatprep.subr.bf16.mxu0 0
      %646 = vmatpush1.bf16.xpose.msra.mxu0 0
      %647 = vmatprep.subr.bf16.mxu0 0
      %648 = vmatpush1.bf16.xpose.msra.mxu0 0
      %649 = vmatprep.subr.bf16.mxu0 0
      %650 = vmatpush1.bf16.xpose.msra.mxu0 0
      %651 = vmatprep.subr.bf16.mxu0 0
      %652 = vmatpush1.bf16.xpose.msra.mxu0 0
      %653 = vmatprep.subr.bf16.mxu0 0
      %654 = vmatpush1.bf16.xpose.msra.mxu0 0
      %655 = vmatprep.subr.bf16.mxu0 0
      %656 = vmatpush1.bf16.xpose.msra.mxu0 0
      %657 = vmatprep.mubr.bf16.mxu0 0
      %658 = vmatmul.mubr.bf16.gmra.mrb[0].mxu0 %v620
      %v659 = vpop.f32.mrb[0].mxu0
      %v660 = vadd.f32 0.0, %v659
      %v661 = vpop.f32.mrb[0].mxu0
      %v662 = vpop.f32.mrb[0].mxu0
      %v663 = vpop.f32.mrb[0].mxu0
      %664 = vdwg.mxu0
      %666 = vrot.lane.b32.xlu0 %v560, 96
      %v667 = vpop.permute.xlu0 %666
      %v669 = vsel %vm569, %v560, 0
      %v672 = vsel %vm569, %v667, 0
      %674 = vmatprep.subr.bf16.mxu0 0
      %675 = vmatpush1.bf16.xpose.msra.mxu0 %v672
      %676 = vmatprep.subr.bf16.mxu0 0
      %677 = vmatpush1.bf16.xpose.msra.mxu0 0
      %678 = vmatprep.subr.bf16.mxu0 0
      %679 = vmatpush1.bf16.xpose.msra.mxu0 0
      %680 = vmatprep.subr.bf16.mxu0 0
      %681 = vmatpush1.bf16.xpose.msra.mxu0 0
      %682 = vmatprep.subr.bf16.mxu0 0
      %683 = vmatpush1.bf16.xpose.msra.mxu0 0
      %684 = vmatprep.subr.bf16.mxu0 0
      %685 = vmatpush1.bf16.xpose.msra.mxu0 0
      %686 = vmatprep.subr.bf16.mxu0 0
      %687 = vmatpush1.bf16.xpose.msra.mxu0 0
      %688 = vmatprep.subr.bf16.mxu0 0
      %689 = vmatpush1.bf16.xpose.msra.mxu0 0
      %690 = vmatprep.subr.bf16.mxu0 0
      %691 = vmatpush1.bf16.xpose.msra.mxu0 0
      %692 = vmatprep.subr.bf16.mxu0 0
      %693 = vmatpush1.bf16.xpose.msra.mxu0 0
      %694 = vmatprep.subr.bf16.mxu0 0
      %695 = vmatpush1.bf16.xpose.msra.mxu0 0
      %696 = vmatprep.subr.bf16.mxu0 0
      %697 = vmatpush1.bf16.xpose.msra.mxu0 0
      %698 = vmatprep.subr.bf16.mxu0 0
      %699 = vmatpush1.bf16.xpose.msra.mxu0 0
      %700 = vmatprep.subr.bf16.mxu0 0
      %701 = vmatpush1.bf16.xpose.msra.mxu0 0
      %702 = vmatprep.subr.bf16.mxu0 0
      %703 = vmatpush1.bf16.xpose.msra.mxu0 0
      %704 = vmatprep.subr.bf16.mxu0 0
      %705 = vmatpush1.bf16.xpose.msra.mxu0 0
      %706 = vmatprep.mubr.bf16.mxu0 0
      %707 = vmatmul.mubr.bf16.gmra.mrb[0].mxu0 %v669
      %v708 = vpop.f32.mrb[0].mxu0
      %v709 = vadd.f32 0.0, %v708
      %v710 = vpop.f32.mrb[0].mxu0
      %v711 = vpop.f32.mrb[0].mxu0
      %v712 = vpop.f32.mrb[0].mxu0
      %713 = vdwg.mxu0
      %715 = vrot.lane.b32.xlu0 %v561, 96
      %v716 = vpop.permute.xlu0 %715
      %v718 = vsel %vm569, %v561, 0
      %v721 = vsel %vm569, %v716, 0
      %723 = vmatprep.subr.bf16.mxu0 0
      %724 = vmatpush1.bf16.xpose.msra.mxu0 %v721
      %725 = vmatprep.subr.bf16.mxu0 0
      %726 = vmatpush1.bf16.xpose.msra.mxu0 0
      %727 = vmatprep.subr.bf16.mxu0 0
      %728 = vmatpush1.bf16.xpose.msra.mxu0 0
      %729 = vmatprep.subr.bf16.mxu0 0
      %730 = vmatpush1.bf16.xpose.msra.mxu0 0
      %731 = vmatprep.subr.bf16.mxu0 0
      %732 = vmatpush1.bf16.xpose.msra.mxu0 0
      %733 = vmatprep.subr.bf16.mxu0 0
      %734 = vmatpush1.bf16.xpose.msra.mxu0 0
      %735 = vmatprep.subr.bf16.mxu0 0
      %736 = vmatpush1.bf16.xpose.msra.mxu0 0
      %737 = vmatprep.subr.bf16.mxu0 0
      %738 = vmatpush1.bf16.xpose.msra.mxu0 0
      %739 = vmatprep.subr.bf16.mxu0 0
      %740 = vmatpush1.bf16.xpose.msra.mxu0 0
      %741 = vmatprep.subr.bf16.mxu0 0
      %742 = vmatpush1.bf16.xpose.msra.mxu0 0
      %743 = vmatprep.subr.bf16.mxu0 0
      %744 = vmatpush1.bf16.xpose.msra.mxu0 0
      %745 = vmatprep.subr.bf16.mxu0 0
      %746 = vmatpush1.bf16.xpose.msra.mxu0 0
      %747 = vmatprep.subr.bf16.mxu0 0
      %748 = vmatpush1.bf16.xpose.msra.mxu0 0
      %749 = vmatprep.subr.bf16.mxu0 0
      %750 = vmatpush1.bf16.xpose.msra.mxu0 0
      %751 = vmatprep.subr.bf16.mxu0 0
      %752 = vmatpush1.bf16.xpose.msra.mxu0 0
      %753 = vmatprep.subr.bf16.mxu0 0
      %754 = vmatpush1.bf16.xpose.msra.mxu0 0
      %755 = vmatprep.mubr.bf16.mxu0 0
      %756 = vmatmul.mubr.bf16.gmra.mrb[0].mxu0 %v718
      %v757 = vpop.f32.mrb[0].mxu0
      %v758 = vadd.f32 0.0, %v757
      %v759 = vpop.f32.mrb[0].mxu0
      %v760 = vpop.f32.mrb[0].mxu0
      %v761 = vpop.f32.mrb[0].mxu0
      %762 = vdwg.mxu0
      %764 = vrot.lane.b32.xlu0 %v562, 96
      %v765 = vpop.permute.xlu0 %764
      %v767 = vsel %vm569, %v562, 0
      %v770 = vsel %vm569, %v765, 0
      %772 = vmatprep.subr.bf16.mxu0 0
      %773 = vmatpush1.bf16.xpose.msra.mxu0 %v770
      %774 = vmatprep.subr.bf16.mxu0 0
      %775 = vmatpush1.bf16.xpose.msra.mxu0 0
      %776 = vmatprep.subr.bf16.mxu0 0
      %777 = vmatpush1.bf16.xpose.msra.mxu0 0
      %778 = vmatprep.subr.bf16.mxu0 0
      %779 = vmatpush1.bf16.xpose.msra.mxu0 0
      %780 = vmatprep.subr.bf16.mxu0 0
      %781 = vmatpush1.bf16.xpose.msra.mxu0 0
      %782 = vmatprep.subr.bf16.mxu0 0
      %783 = vmatpush1.bf16.xpose.msra.mxu0 0
      %784 = vmatprep.subr.bf16.mxu0 0
      %785 = vmatpush1.bf16.xpose.msra.mxu0 0
      %786 = vmatprep.subr.bf16.mxu0 0
      %787 = vmatpush1.bf16.xpose.msra.mxu0 0
      %788 = vmatprep.subr.bf16.mxu0 0
      %789 = vmatpush1.bf16.xpose.msra.mxu0 0
      %790 = vmatprep.subr.bf16.mxu0 0
      %791 = vmatpush1.bf16.xpose.msra.mxu0 0
      %792 = vmatprep.subr.bf16.mxu0 0
      %793 = vmatpush1.bf16.xpose.msra.mxu0 0
      %794 = vmatprep.subr.bf16.mxu0 0
      %795 = vmatpush1.bf16.xpose.msra.mxu0 0
      %796 = vmatprep.subr.bf16.mxu0 0
      %797 = vmatpush1.bf16.xpose.msra.mxu0 0
      %798 = vmatprep.subr.bf16.mxu0 0
      %799 = vmatpush1.bf16.xpose.msra.mxu0 0
      %800 = vmatprep.subr.bf16.mxu0 0
      %801 = vmatpush1.bf16.xpose.msra.mxu0 0
      %802 = vmatprep.subr.bf16.mxu0 0
      %803 = vmatpush1.bf16.xpose.msra.mxu0 0
      %804 = vmatprep.mubr.bf16.mxu0 0
      %805 = vmatmul.mubr.bf16.gmra.mrb[0].mxu0 %v767
      %v806 = vpop.f32.mrb[0].mxu0
      %v807 = vadd.f32 0.0, %v806
      %v808 = vpop.f32.mrb[0].mxu0
      %v809 = vpop.f32.mrb[0].mxu0
      %v810 = vpop.f32.mrb[0].mxu0
      %811 = vdwg.mxu0
      %813 = vrot.lane.b32.xlu0 %v563, 96
      %v814 = vpop.permute.xlu0 %813
      %v816 = vsel %vm569, %v563, 0
      %v819 = vsel %vm569, %v814, 0
      %821 = vmatprep.subr.bf16.mxu0 0
      %822 = vmatpush1.bf16.xpose.msra.mxu0 %v819
      %823 = vmatprep.subr.bf16.mxu0 0
      %824 = vmatpush1.bf16.xpose.msra.mxu0 0
      %825 = vmatprep.subr.bf16.mxu0 0
      %826 = vmatpush1.bf16.xpose.msra.mxu0 0
      %827 = vmatprep.subr.bf16.mxu0 0
      %828 = vmatpush1.bf16.xpose.msra.mxu0 0
      %829 = vmatprep.subr.bf16.mxu0 0
      %830 = vmatpush1.bf16.xpose.msra.mxu0 0
      %831 = vmatprep.subr.bf16.mxu0 0
      %832 = vmatpush1.bf16.xpose.msra.mxu0 0
      %833 = vmatprep.subr.bf16.mxu0 0
      %834 = vmatpush1.bf16.xpose.msra.mxu0 0
      %835 = vmatprep.subr.bf16.mxu0 0
      %836 = vmatpush1.bf16.xpose.msra.mxu0 0
      %837 = vmatprep.subr.bf16.mxu0 0
      %838 = vmatpush1.bf16.xpose.msra.mxu0 0
      %839 = vmatprep.subr.bf16.mxu0 0
      %840 = vmatpush1.bf16.xpose.msra.mxu0 0
      %841 = vmatprep.subr.bf16.mxu0 0
      %842 = vmatpush1.bf16.xpose.msra.mxu0 0
      %843 = vmatprep.subr.bf16.mxu0 0
      %844 = vmatpush1.bf16.xpose.msra.mxu0 0
      %845 = vmatprep.subr.bf16.mxu0 0
      %846 = vmatpush1.bf16.xpose.msra.mxu0 0
      %847 = vmatprep.subr.bf16.mxu0 0
      %848 = vmatpush1.bf16.xpose.msra.mxu0 0
      %849 = vmatprep.subr.bf16.mxu0 0
      %850 = vmatpush1.bf16.xpose.msra.mxu0 0
      %851 = vmatprep.subr.bf16.mxu0 0
      %852 = vmatpush1.bf16.xpose.msra.mxu0 0
      %853 = vmatprep.mubr.bf16.mxu0 0
      %854 = vmatmul.mubr.bf16.gmra.mrb[0].mxu0 %v816
      %v855 = vpop.f32.mrb[0].mxu0
      %v856 = vadd.f32 0.0, %v855
      %v857 = vpop.f32.mrb[0].mxu0
      %v858 = vpop.f32.mrb[0].mxu0
      %v859 = vpop.f32.mrb[0].mxu0
      %860 = vdwg.mxu0
      %862 = vrot.lane.b32.xlu0 %v564, 96
      %v863 = vpop.permute.xlu0 %862
      %v865 = vsel %vm569, %v564, 0
      %v868 = vsel %vm569, %v863, 0
      %870 = vmatprep.subr.bf16.mxu0 0
      %871 = vmatpush1.bf16.xpose.msra.mxu0 %v868
      %872 = vmatprep.subr.bf16.mxu0 0
      %873 = vmatpush1.bf16.xpose.msra.mxu0 0
      %874 = vmatprep.subr.bf16.mxu0 0
      %875 = vmatpush1.bf16.xpose.msra.mxu0 0
      %876 = vmatprep.subr.bf16.mxu0 0
      %877 = vmatpush1.bf16.xpose.msra.mxu0 0
      %878 = vmatprep.subr.bf16.mxu0 0
      %879 = vmatpush1.bf16.xpose.msra.mxu0 0
      %880 = vmatprep.subr.bf16.mxu0 0
      %881 = vmatpush1.bf16.xpose.msra.mxu0 0
      %882 = vmatprep.subr.bf16.mxu0 0
      %883 = vmatpush1.bf16.xpose.msra.mxu0 0
      %884 = vmatprep.subr.bf16.mxu0 0
      %885 = vmatpush1.bf16.xpose.msra.mxu0 0
      %886 = vmatprep.subr.bf16.mxu0 0
      %887 = vmatpush1.bf16.xpose.msra.mxu0 0
      %888 = vmatprep.subr.bf16.mxu0 0
      %889 = vmatpush1.bf16.xpose.msra.mxu0 0
      %890 = vmatprep.subr.bf16.mxu0 0
      %891 = vmatpush1.bf16.xpose.msra.mxu0 0
      %892 = vmatprep.subr.bf16.mxu0 0
      %893 = vmatpush1.bf16.xpose.msra.mxu0 0
      %894 = vmatprep.subr.bf16.mxu0 0
      %895 = vmatpush1.bf16.xpose.msra.mxu0 0
      %896 = vmatprep.subr.bf16.mxu0 0
      %897 = vmatpush1.bf16.xpose.msra.mxu0 0
      %898 = vmatprep.subr.bf16.mxu0 0
      %899 = vmatpush1.bf16.xpose.msra.mxu0 0
      %900 = vmatprep.subr.bf16.mxu0 0
      %901 = vmatpush1.bf16.xpose.msra.mxu0 0
      %902 = vmatprep.mubr.bf16.mxu0 0
      %903 = vmatmul.mubr.bf16.gmra.mrb[0].mxu0 %v865
      %v904 = vpop.f32.mrb[0].mxu0
      %v905 = vadd.f32 0.0, %v904
      %v906 = vpop.f32.mrb[0].mxu0
      %v907 = vpop.f32.mrb[0].mxu0
      %v908 = vpop.f32.mrb[0].mxu0
      %909 = vdwg.mxu0
      %911 = vrot.lane.b32.xlu0 %v565, 96
      %v912 = vpop.permute.xlu0 %911
      %v914 = vsel %vm569, %v565, 0
      %v917 = vsel %vm569, %v912, 0
      %919 = vmatprep.subr.bf16.mxu0 0
      %920 = vmatpush1.bf16.xpose.msra.mxu0 %v917
      %921 = vmatprep.subr.bf16.mxu0 0
      %922 = vmatpush1.bf16.xpose.msra.mxu0 0
      %923 = vmatprep.subr.bf16.mxu0 0
      %924 = vmatpush1.bf16.xpose.msra.mxu0 0
      %925 = vmatprep.subr.bf16.mxu0 0
      %926 = vmatpush1.bf16.xpose.msra.mxu0 0
      %927 = vmatprep.subr.bf16.mxu0 0
      %928 = vmatpush1.bf16.xpose.msra.mxu0 0
      %929 = vmatprep.subr.bf16.mxu0 0
      %930 = vmatpush1.bf16.xpose.msra.mxu0 0
      %931 = vmatprep.subr.bf16.mxu0 0
      %932 = vmatpush1.bf16.xpose.msra.mxu0 0
      %933 = vmatprep.subr.bf16.mxu0 0
      %934 = vmatpush1.bf16.xpose.msra.mxu0 0
      %935 = vmatprep.subr.bf16.mxu0 0
      %936 = vmatpush1.bf16.xpose.msra.mxu0 0
      %937 = vmatprep.subr.bf16.mxu0 0
      %938 = vmatpush1.bf16.xpose.msra.mxu0 0
      %939 = vmatprep.subr.bf16.mxu0 0
      %940 = vmatpush1.bf16.xpose.msra.mxu0 0
      %941 = vmatprep.subr.bf16.mxu0 0
      %942 = vmatpush1.bf16.xpose.msra.mxu0 0
      %943 = vmatprep.subr.bf16.mxu0 0
      %944 = vmatpush1.bf16.xpose.msra.mxu0 0
      %945 = vmatprep.subr.bf16.mxu0 0
      %946 = vmatpush1.bf16.xpose.msra.mxu0 0
      %947 = vmatprep.subr.bf16.mxu0 0
      %948 = vmatpush1.bf16.xpose.msra.mxu0 0
      %949 = vmatprep.subr.bf16.mxu0 0
      %950 = vmatpush1.bf16.xpose.msra.mxu0 0
      %951 = vmatprep.mubr.bf16.mxu0 0
      %952 = vmatmul.mubr.bf16.gmra.mrb[0].mxu0 %v914
      %v953 = vpop.f32.mrb[0].mxu0
      %v954 = vadd.f32 0.0, %v953
      %v955 = vpop.f32.mrb[0].mxu0
      %v956 = vpop.f32.mrb[0].mxu0
      %v957 = vpop.f32.mrb[0].mxu0
      %958 = vdwg.mxu0
      %v959 = vmul.f32 %v611, 0.35355338
      %v960 = vmul.f32 %v660, 0.35355338
      %v961 = vmul.f32 %v709, 0.35355338
      %v962 = vmul.f32 %v758, 0.35355338
      %v963 = vmul.f32 %v807, 0.35355338
      %v964 = vmul.f32 %v856, 0.35355338
      %v965 = vmul.f32 %v905, 0.35355338
      %v966 = vmul.f32 %v954, 0.35355338
      %v967 = vsel %vm569, %v959, -inf
      %968 = vmax.xlane.f32.xlu0 %v967
      %v969 = vpop.xlane.xlu0 %968
      %v970 = vsel %vm569, %v960, -inf
      %971 = vmax.xlane.f32.xlu0 %v970
      %v972 = vpop.xlane.xlu0 %971
      %v973 = vsel %vm569, %v961, -inf
      %974 = vmax.xlane.f32.xlu0 %v973
      %v975 = vpop.xlane.xlu0 %974
      %v976 = vsel %vm569, %v962, -inf
      %977 = vmax.xlane.f32.xlu0 %v976
      %v978 = vpop.xlane.xlu0 %977
      %v979 = vsel %vm569, %v963, -inf
      %980 = vmax.xlane.f32.xlu0 %v979
      %v981 = vpop.xlane.xlu0 %980
      %v982 = vsel %vm569, %v964, -inf
      %983 = vmax.xlane.f32.xlu0 %v982
      %v984 = vpop.xlane.xlu0 %983
      %v985 = vsel %vm569, %v965, -inf
      %986 = vmax.xlane.f32.xlu0 %v985
      %v987 = vpop.xlane.xlu0 %986
      %v988 = vsel %vm569, %v966, -inf
      %989 = vmax.xlane.f32.xlu0 %v988
      %v990 = vpop.xlane.xlu0 %989
      %v991 = vsub.f32 %v959, %v969
      %v992 = vsub.f32 %v960, %v972
      %v993 = vsub.f32 %v961, %v975
      %v994 = vsub.f32 %v962, %v978
      %v995 = vsub.f32 %v963, %v981
      %v996 = vsub.f32 %v964, %v984
      %v997 = vsub.f32 %v965, %v987
      %v998 = vsub.f32 %v966, %v990
      %v999 = vmul.f32 %v991, 1.442695
      %v1000 = vpow.pop %v999
      %v1001 = vmul.f32 %v992, 1.442695
      %v1002 = vpow.pop %v1001
      %v1003 = vmul.f32 %v993, 1.442695
      %v1004 = vpow.pop %v1003
      %v1005 = vmul.f32 %v994, 1.442695
      %v1006 = vpow.pop %v1005
      %v1007 = vmul.f32 %v995, 1.442695
      %v1008 = vpow.pop %v1007
      %v1009 = vmul.f32 %v996, 1.442695
      %v1010 = vpow.pop %v1009
      %v1011 = vmul.f32 %v997, 1.442695
      %v1012 = vpow.pop %v1011
      %v1013 = vmul.f32 %v998, 1.442695
      %v1014 = vpow.pop %v1013
      %v1015 = vsel %vm569, %v1000, 0.0
      %1016 = vadd.xlane.f32.xlu0 %v1015
      %v1017 = vpop.xlane.xlu0 %1016
      %v1018 = vsel %vm569, %v1002, 0.0
      %1019 = vadd.xlane.f32.xlu0 %v1018
      %v1020 = vpop.xlane.xlu0 %1019
      %v1021 = vsel %vm569, %v1004, 0.0
      %1022 = vadd.xlane.f32.xlu0 %v1021
      %v1023 = vpop.xlane.xlu0 %1022
      %v1024 = vsel %vm569, %v1006, 0.0
      %1025 = vadd.xlane.f32.xlu0 %v1024
      %v1026 = vpop.xlane.xlu0 %1025
      %v1027 = vsel %vm569, %v1008, 0.0
      %1028 = vadd.xlane.f32.xlu0 %v1027
      %v1029 = vpop.xlane.xlu0 %1028
      %v1030 = vsel %vm569, %v1010, 0.0
      %1031 = vadd.xlane.f32.xlu0 %v1030
      %v1032 = vpop.xlane.xlu0 %1031
      %v1033 = vsel %vm569, %v1012, 0.0
      %1034 = vadd.xlane.f32.xlu0 %v1033
      %v1035 = vpop.xlane.xlu0 %1034
      %v1036 = vsel %vm569, %v1014, 0.0
      %1037 = vadd.xlane.f32.xlu0 %v1036
      %v1038 = vpop.xlane.xlu0 %1037
      %v1039 = vrcp.pop %v1017
      %v1040 = vmul.f32 %v1000, %v1039
      %v1041 = vrcp.pop %v1020
      %v1042 = vmul.f32 %v1002, %v1041
      %v1043 = vrcp.pop %v1023
      %v1044 = vmul.f32 %v1004, %v1043
      %v1045 = vrcp.pop %v1026
      %v1046 = vmul.f32 %v1006, %v1045
      %v1047 = vrcp.pop %v1029
      %v1048 = vmul.f32 %v1008, %v1047
      %v1049 = vrcp.pop %v1032
      %v1050 = vmul.f32 %v1010, %v1049
      %v1051 = vrcp.pop %v1035
      %v1052 = vmul.f32 %v1012, %v1051
      %v1053 = vrcp.pop %v1038
      %v1054 = vmul.f32 %v1014, %v1053
      %v1055 = vpack.c.bf16 %v1040, %v1040
      %v1056 = vpack.c.bf16 %v1042, %v1042
      %v1057 = vpack.c.bf16 %v1044, %v1044
      %v1058 = vpack.c.bf16 %v1046, %v1046
      %v1059 = vpack.c.bf16 %v1048, %v1048
      %v1060 = vpack.c.bf16 %v1050, %v1050
      %v1061 = vpack.c.bf16 %v1052, %v1052
      %v1062 = vpack.c.bf16 %v1054, %v1054
      %1063 = vrot.lane.b32.xlu0 %v558, 64
      %v1064 = vpop.permute.xlu0 %1063
      %v1066 = vsel %vm569, %v1055, 0
      %vm1068 = vcmask 1043456
      %v1070 = vsel %vm1068, %v1064, 0
      %1072 = vmatprep.subr.bf16.mxu0 0
      %1073 = vmatpush1.bf16.msra.mxu0 %v1070
      %1074 = vmatprep.subr.bf16.mxu0 0
      %1075 = vmatpush1.bf16.msra.mxu0 0
      %1076 = vmatprep.subr.bf16.mxu0 0
      %1077 = vmatpush1.bf16.msra.mxu0 0
      %1078 = vmatprep.subr.bf16.mxu0 0
      %1079 = vmatpush1.bf16.msra.mxu0 0
      %1080 = vmatprep.subr.bf16.mxu0 0
      %1081 = vmatpush1.bf16.msra.mxu0 0
      %1082 = vmatprep.subr.bf16.mxu0 0
      %1083 = vmatpush1.bf16.msra.mxu0 0
      %1084 = vmatprep.subr.bf16.mxu0 0
      %1085 = vmatpush1.bf16.msra.mxu0 0
      %1086 = vmatprep.subr.bf16.mxu0 0
      %1087 = vmatpush1.bf16.msra.mxu0 0
      %1088 = vmatprep.subr.bf16.mxu0 0
      %1089 = vmatpush1.bf16.msra.mxu0 0
      %1090 = vmatprep.subr.bf16.mxu0 0
      %1091 = vmatpush1.bf16.msra.mxu0 0
      %1092 = vmatprep.subr.bf16.mxu0 0
      %1093 = vmatpush1.bf16.msra.mxu0 0
      %1094 = vmatprep.subr.bf16.mxu0 0
      %1095 = vmatpush1.bf16.msra.mxu0 0
      %1096 = vmatprep.subr.bf16.mxu0 0
      %1097 = vmatpush1.bf16.msra.mxu0 0
      %1098 = vmatprep.subr.bf16.mxu0 0
      %1099 = vmatpush1.bf16.msra.mxu0 0
      %1100 = vmatprep.subr.bf16.mxu0 0
      %1101 = vmatpush1.bf16.msra.mxu0 0
      %1102 = vmatprep.subr.bf16.mxu0 0
      %1103 = vmatpush1.bf16.msra.mxu0 0
      %1104 = vmatprep.mubr.bf16.mxu0 0
      %1105 = vmatmul.mubr.bf16.gmra.mrb[0].mxu0 %v1066
      %v1106 = vpop.f32.mrb[0].mxu0
      %v1107 = vadd.f32 0.0, %v1106
      %v1108 = vpop.f32.mrb[0].mxu0
      %v1109 = vpop.f32.mrb[0].mxu0
      %v1110 = vpop.f32.mrb[0].mxu0
      %1111 = vdwg.mxu0
      %1112 = vrot.lane.b32.xlu0 %v559, 64
      %v1113 = vpop.permute.xlu0 %1112
      %v1115 = vsel %vm569, %v1056, 0
      %v1118 = vsel %vm1068, %v1113, 0
      %1120 = vmatprep.subr.bf16.mxu0 0
      %1121 = vmatpush1.bf16.msra.mxu0 %v1118
      %1122 = vmatprep.subr.bf16.mxu0 0
      %1123 = vmatpush1.bf16.msra.mxu0 0
      %1124 = vmatprep.subr.bf16.mxu0 0
      %1125 = vmatpush1.bf16.msra.mxu0 0
      %1126 = vmatprep.subr.bf16.mxu0 0
      %1127 = vmatpush1.bf16.msra.mxu0 0
      %1128 = vmatprep.subr.bf16.mxu0 0
      %1129 = vmatpush1.bf16.msra.mxu0 0
      %1130 = vmatprep.subr.bf16.mxu0 0
      %1131 = vmatpush1.bf16.msra.mxu0 0
      %1132 = vmatprep.subr.bf16.mxu0 0
      %1133 = vmatpush1.bf16.msra.mxu0 0
      %1134 = vmatprep.subr.bf16.mxu0 0
      %1135 = vmatpush1.bf16.msra.mxu0 0
      %1136 = vmatprep.subr.bf16.mxu0 0
      %1137 = vmatpush1.bf16.msra.mxu0 0
      %1138 = vmatprep.subr.bf16.mxu0 0
      %1139 = vmatpush1.bf16.msra.mxu0 0
      %1140 = vmatprep.subr.bf16.mxu0 0
      %1141 = vmatpush1.bf16.msra.mxu0 0
      %1142 = vmatprep.subr.bf16.mxu0 0
      %1143 = vmatpush1.bf16.msra.mxu0 0
      %1144 = vmatprep.subr.bf16.mxu0 0
      %1145 = vmatpush1.bf16.msra.mxu0 0
      %1146 = vmatprep.subr.bf16.mxu0 0
      %1147 = vmatpush1.bf16.msra.mxu0 0
      %1148 = vmatprep.subr.bf16.mxu0 0
      %1149 = vmatpush1.bf16.msra.mxu0 0
      %1150 = vmatprep.subr.bf16.mxu0 0
      %1151 = vmatpush1.bf16.msra.mxu0 0
      %1152 = vmatprep.mubr.bf16.mxu0 0
      %1153 = vmatmul.mubr.bf16.gmra.mrb[0].mxu0 %v1115
      %v1154 = vpop.f32.mrb[0].mxu0
      %v1155 = vadd.f32 0.0, %v1154
      %v1156 = vpop.f32.mrb[0].mxu0
      %v1157 = vpop.f32.mrb[0].mxu0
      %v1158 = vpop.f32.mrb[0].mxu0
      %1159 = vdwg.mxu0
      %1160 = vrot.lane.b32.xlu0 %v560, 64
      %v1161 = vpop.permute.xlu0 %1160
      %v1163 = vsel %vm569, %v1057, 0
      %v1166 = vsel %vm1068, %v1161, 0
      %1168 = vmatprep.subr.bf16.mxu0 0
      %1169 = vmatpush1.bf16.msra.mxu0 %v1166
      %1170 = vmatprep.subr.bf16.mxu0 0
      %1171 = vmatpush1.bf16.msra.mxu0 0
      %1172 = vmatprep.subr.bf16.mxu0 0
      %1173 = vmatpush1.bf16.msra.mxu0 0
      %1174 = vmatprep.subr.bf16.mxu0 0
      %1175 = vmatpush1.bf16.msra.mxu0 0
      %1176 = vmatprep.subr.bf16.mxu0 0
      %1177 = vmatpush1.bf16.msra.mxu0 0
      %1178 = vmatprep.subr.bf16.mxu0 0
      %1179 = vmatpush1.bf16.msra.mxu0 0
      %1180 = vmatprep.subr.bf16.mxu0 0
      %1181 = vmatpush1.bf16.msra.mxu0 0
      %1182 = vmatprep.subr.bf16.mxu0 0
      %1183 = vmatpush1.bf16.msra.mxu0 0
      %1184 = vmatprep.subr.bf16.mxu0 0
      %1185 = vmatpush1.bf16.msra.mxu0 0
      %1186 = vmatprep.subr.bf16.mxu0 0
      %1187 = vmatpush1.bf16.msra.mxu0 0
      %1188 = vmatprep.subr.bf16.mxu0 0
      %1189 = vmatpush1.bf16.msra.mxu0 0
      %1190 = vmatprep.subr.bf16.mxu0 0
      %1191 = vmatpush1.bf16.msra.mxu0 0
      %1192 = vmatprep.subr.bf16.mxu0 0
      %1193 = vmatpush1.bf16.msra.mxu0 0
      %1194 = vmatprep.subr.bf16.mxu0 0
      %1195 = vmatpush1.bf16.msra.mxu0 0
      %1196 = vmatprep.subr.bf16.mxu0 0
      %1197 = vmatpush1.bf16.msra.mxu0 0
      %1198 = vmatprep.subr.bf16.mxu0 0
      %1199 = vmatpush1.bf16.msra.mxu0 0
      %1200 = vmatprep.mubr.bf16.mxu0 0
      %1201 = vmatmul.mubr.bf16.gmra.mrb[0].mxu0 %v1163
      %v1202 = vpop.f32.mrb[0].mxu0
      %v1203 = vadd.f32 0.0, %v1202
      %v1204 = vpop.f32.mrb[0].mxu0
      %v1205 = vpop.f32.mrb[0].mxu0
      %v1206 = vpop.f32.mrb[0].mxu0
      %1207 = vdwg.mxu0
      %1208 = vrot.lane.b32.xlu0 %v561, 64
      %v1209 = vpop.permute.xlu0 %1208
      %v1211 = vsel %vm569, %v1058, 0
      %v1214 = vsel %vm1068, %v1209, 0
      %1216 = vmatprep.subr.bf16.mxu0 0
      %1217 = vmatpush1.bf16.msra.mxu0 %v1214
      %1218 = vmatprep.subr.bf16.mxu0 0
      %1219 = vmatpush1.bf16.msra.mxu0 0
      %1220 = vmatprep.subr.bf16.mxu0 0
      %1221 = vmatpush1.bf16.msra.mxu0 0
      %1222 = vmatprep.subr.bf16.mxu0 0
      %1223 = vmatpush1.bf16.msra.mxu0 0
      %1224 = vmatprep.subr.bf16.mxu0 0
      %1225 = vmatpush1.bf16.msra.mxu0 0
      %1226 = vmatprep.subr.bf16.mxu0 0
      %1227 = vmatpush1.bf16.msra.mxu0 0
      %1228 = vmatprep.subr.bf16.mxu0 0
      %1229 = vmatpush1.bf16.msra.mxu0 0
      %1230 = vmatprep.subr.bf16.mxu0 0
      %1231 = vmatpush1.bf16.msra.mxu0 0
      %1232 = vmatprep.subr.bf16.mxu0 0
      %1233 = vmatpush1.bf16.msra.mxu0 0
      %1234 = vmatprep.subr.bf16.mxu0 0
      %1235 = vmatpush1.bf16.msra.mxu0 0
      %1236 = vmatprep.subr.bf16.mxu0 0
      %1237 = vmatpush1.bf16.msra.mxu0 0
      %1238 = vmatprep.subr.bf16.mxu0 0
      %1239 = vmatpush1.bf16.msra.mxu0 0
      %1240 = vmatprep.subr.bf16.mxu0 0
      %1241 = vmatpush1.bf16.msra.mxu0 0
      %1242 = vmatprep.subr.bf16.mxu0 0
      %1243 = vmatpush1.bf16.msra.mxu0 0
      %1244 = vmatprep.subr.bf16.mxu0 0
      %1245 = vmatpush1.bf16.msra.mxu0 0
      %1246 = vmatprep.subr.bf16.mxu0 0
      %1247 = vmatpush1.bf16.msra.mxu0 0
      %1248 = vmatprep.mubr.bf16.mxu0 0
      %1249 = vmatmul.mubr.bf16.gmra.mrb[0].mxu0 %v1211
      %v1250 = vpop.f32.mrb[0].mxu0
      %v1251 = vadd.f32 0.0, %v1250
      %v1252 = vpop.f32.mrb[0].mxu0
      %v1253 = vpop.f32.mrb[0].mxu0
      %v1254 = vpop.f32.mrb[0].mxu0
      %1255 = vdwg.mxu0
      %1256 = vrot.lane.b32.xlu0 %v562, 64
      %v1257 = vpop.permute.xlu0 %1256
      %v1259 = vsel %vm569, %v1059, 0
      %v1262 = vsel %vm1068, %v1257, 0
      %1264 = vmatprep.subr.bf16.mxu0 0
      %1265 = vmatpush1.bf16.msra.mxu0 %v1262
      %1266 = vmatprep.subr.bf16.mxu0 0
      %1267 = vmatpush1.bf16.msra.mxu0 0
      %1268 = vmatprep.subr.bf16.mxu0 0
      %1269 = vmatpush1.bf16.msra.mxu0 0
      %1270 = vmatprep.subr.bf16.mxu0 0
      %1271 = vmatpush1.bf16.msra.mxu0 0
      %1272 = vmatprep.subr.bf16.mxu0 0
      %1273 = vmatpush1.bf16.msra.mxu0 0
      %1274 = vmatprep.subr.bf16.mxu0 0
      %1275 = vmatpush1.bf16.msra.mxu0 0
      %1276 = vmatprep.subr.bf16.mxu0 0
      %1277 = vmatpush1.bf16.msra.mxu0 0
      %1278 = vmatprep.subr.bf16.mxu0 0
      %1279 = vmatpush1.bf16.msra.mxu0 0
      %1280 = vmatprep.subr.bf16.mxu0 0
      %1281 = vmatpush1.bf16.msra.mxu0 0
      %1282 = vmatprep.subr.bf16.mxu0 0
      %1283 = vmatpush1.bf16.msra.mxu0 0
      %1284 = vmatprep.subr.bf16.mxu0 0
      %1285 = vmatpush1.bf16.msra.mxu0 0
      %1286 = vmatprep.subr.bf16.mxu0 0
      %1287 = vmatpush1.bf16.msra.mxu0 0
      %1288 = vmatprep.subr.bf16.mxu0 0
      %1289 = vmatpush1.bf16.msra.mxu0 0
      %1290 = vmatprep.subr.bf16.mxu0 0
      %1291 = vmatpush1.bf16.msra.mxu0 0
      %1292 = vmatprep.subr.bf16.mxu0 0
      %1293 = vmatpush1.bf16.msra.mxu0 0
      %1294 = vmatprep.subr.bf16.mxu0 0
      %1295 = vmatpush1.bf16.msra.mxu0 0
      %1296 = vmatprep.mubr.bf16.mxu0 0
      %1297 = vmatmul.mubr.bf16.gmra.mrb[0].mxu0 %v1259
      %v1298 = vpop.f32.mrb[0].mxu0
      %v1299 = vadd.f32 0.0, %v1298
      %v1300 = vpop.f32.mrb[0].mxu0
      %v1301 = vpop.f32.mrb[0].mxu0
      %v1302 = vpop.f32.mrb[0].mxu0
      %1303 = vdwg.mxu0
      %1304 = vrot.lane.b32.xlu0 %v563, 64
      %v1305 = vpop.permute.xlu0 %1304
      %v1307 = vsel %vm569, %v1060, 0
      %v1310 = vsel %vm1068, %v1305, 0
      %1312 = vmatprep.subr.bf16.mxu0 0
      %1313 = vmatpush1.bf16.msra.mxu0 %v1310
      %1314 = vmatprep.subr.bf16.mxu0 0
      %1315 = vmatpush1.bf16.msra.mxu0 0
      %1316 = vmatprep.subr.bf16.mxu0 0
      %1317 = vmatpush1.bf16.msra.mxu0 0
      %1318 = vmatprep.subr.bf16.mxu0 0
      %1319 = vmatpush1.bf16.msra.mxu0 0
      %1320 = vmatprep.subr.bf16.mxu0 0
      %1321 = vmatpush1.bf16.msra.mxu0 0
      %1322 = vmatprep.subr.bf16.mxu0 0
      %1323 = vmatpush1.bf16.msra.mxu0 0
      %1324 = vmatprep.subr.bf16.mxu0 0
      %1325 = vmatpush1.bf16.msra.mxu0 0
      %1326 = vmatprep.subr.bf16.mxu0 0
      %1327 = vmatpush1.bf16.msra.mxu0 0
      %1328 = vmatprep.subr.bf16.mxu0 0
      %1329 = vmatpush1.bf16.msra.mxu0 0
      %1330 = vmatprep.subr.bf16.mxu0 0
      %1331 = vmatpush1.bf16.msra.mxu0 0
      %1332 = vmatprep.subr.bf16.mxu0 0
      %1333 = vmatpush1.bf16.msra.mxu0 0
      %1334 = vmatprep.subr.bf16.mxu0 0
      %1335 = vmatpush1.bf16.msra.mxu0 0
      %1336 = vmatprep.subr.bf16.mxu0 0
      %1337 = vmatpush1.bf16.msra.mxu0 0
      %1338 = vmatprep.subr.bf16.mxu0 0
      %1339 = vmatpush1.bf16.msra.mxu0 0
      %1340 = vmatprep.subr.bf16.mxu0 0
      %1341 = vmatpush1.bf16.msra.mxu0 0
      %1342 = vmatprep.subr.bf16.mxu0 0
      %1343 = vmatpush1.bf16.msra.mxu0 0
      %1344 = vmatprep.mubr.bf16.mxu0 0
      %1345 = vmatmul.mubr.bf16.gmra.mrb[0].mxu0 %v1307
      %v1346 = vpop.f32.mrb[0].mxu0
      %v1347 = vadd.f32 0.0, %v1346
      %v1348 = vpop.f32.mrb[0].mxu0
      %v1349 = vpop.f32.mrb[0].mxu0
      %v1350 = vpop.f32.mrb[0].mxu0
      %1351 = vdwg.mxu0
      %1352 = vrot.lane.b32.xlu0 %v564, 64
      %v1353 = vpop.permute.xlu0 %1352
      %v1355 = vsel %vm569, %v1061, 0
      %v1358 = vsel %vm1068, %v1353, 0
      %1360 = vmatprep.subr.bf16.mxu0 0
      %1361 = vmatpush1.bf16.msra.mxu0 %v1358
      %1362 = vmatprep.subr.bf16.mxu0 0
      %1363 = vmatpush1.bf16.msra.mxu0 0
      %1364 = vmatprep.subr.bf16.mxu0 0
      %1365 = vmatpush1.bf16.msra.mxu0 0
      %1366 = vmatprep.subr.bf16.mxu0 0
      %1367 = vmatpush1.bf16.msra.mxu0 0
      %1368 = vmatprep.subr.bf16.mxu0 0
      %1369 = vmatpush1.bf16.msra.mxu0 0
      %1370 = vmatprep.subr.bf16.mxu0 0
      %1371 = vmatpush1.bf16.msra.mxu0 0
      %1372 = vmatprep.subr.bf16.mxu0 0
      %1373 = vmatpush1.bf16.msra.mxu0 0
      %1374 = vmatprep.subr.bf16.mxu0 0
      %1375 = vmatpush1.bf16.msra.mxu0 0
      %1376 = vmatprep.subr.bf16.mxu0 0
      %1377 = vmatpush1.bf16.msra.mxu0 0
      %1378 = vmatprep.subr.bf16.mxu0 0
      %1379 = vmatpush1.bf16.msra.mxu0 0
      %1380 = vmatprep.subr.bf16.mxu0 0
      %1381 = vmatpush1.bf16.msra.mxu0 0
      %1382 = vmatprep.subr.bf16.mxu0 0
      %1383 = vmatpush1.bf16.msra.mxu0 0
      %1384 = vmatprep.subr.bf16.mxu0 0
      %1385 = vmatpush1.bf16.msra.mxu0 0
      %1386 = vmatprep.subr.bf16.mxu0 0
      %1387 = vmatpush1.bf16.msra.mxu0 0
      %1388 = vmatprep.subr.bf16.mxu0 0
      %1389 = vmatpush1.bf16.msra.mxu0 0
      %1390 = vmatprep.subr.bf16.mxu0 0
      %1391 = vmatpush1.bf16.msra.mxu0 0
      %1392 = vmatprep.mubr.bf16.mxu0 0
      %1393 = vmatmul.mubr.bf16.gmra.mrb[0].mxu0 %v1355
      %v1394 = vpop.f32.mrb[0].mxu0
      %v1395 = vadd.f32 0.0, %v1394
      %v1396 = vpop.f32.mrb[0].mxu0
      %v1397 = vpop.f32.mrb[0].mxu0
      %v1398 = vpop.f32.mrb[0].mxu0
      %1399 = vdwg.mxu0
      %1400 = vrot.lane.b32.xlu0 %v565, 64
      %v1401 = vpop.permute.xlu0 %1400
      %v1403 = vsel %vm569, %v1062, 0
      %v1406 = vsel %vm1068, %v1401, 0
      %1408 = vmatprep.subr.bf16.mxu0 0
      %1409 = vmatpush1.bf16.msra.mxu0 %v1406
      %1410 = vmatprep.subr.bf16.mxu0 0
      %1411 = vmatpush1.bf16.msra.mxu0 0
      %1412 = vmatprep.subr.bf16.mxu0 0
      %1413 = vmatpush1.bf16.msra.mxu0 0
      %1414 = vmatprep.subr.bf16.mxu0 0
      %1415 = vmatpush1.bf16.msra.mxu0 0
      %1416 = vmatprep.subr.bf16.mxu0 0
      %1417 = vmatpush1.bf16.msra.mxu0 0
      %1418 = vmatprep.subr.bf16.mxu0 0
      %1419 = vmatpush1.bf16.msra.mxu0 0
      %1420 = vmatprep.subr.bf16.mxu0 0
      %1421 = vmatpush1.bf16.msra.mxu0 0
      %1422 = vmatprep.subr.bf16.mxu0 0
      %1423 = vmatpush1.bf16.msra.mxu0 0
      %1424 = vmatprep.subr.bf16.mxu0 0
      %1425 = vmatpush1.bf16.msra.mxu0 0
      %1426 = vmatprep.subr.bf16.mxu0 0
      %1427 = vmatpush1.bf16.msra.mxu0 0
      %1428 = vmatprep.subr.bf16.mxu0 0
      %1429 = vmatpush1.bf16.msra.mxu0 0
      %1430 = vmatprep.subr.bf16.mxu0 0
      %1431 = vmatpush1.bf16.msra.mxu0 0
      %1432 = vmatprep.subr.bf16.mxu0 0
      %1433 = vmatpush1.bf16.msra.mxu0 0
      %1434 = vmatprep.subr.bf16.mxu0 0
      %1435 = vmatpush1.bf16.msra.mxu0 0
      %1436 = vmatprep.subr.bf16.mxu0 0
      %1437 = vmatpush1.bf16.msra.mxu0 0
      %1438 = vmatprep.subr.bf16.mxu0 0
      %1439 = vmatpush1.bf16.msra.mxu0 0
      %1440 = vmatprep.mubr.bf16.mxu0 0
      %1441 = vmatmul.mubr.bf16.gmra.mrb[0].mxu0 %v1403
      %v1442 = vpop.f32.mrb[0].mxu0
      %v1443 = vadd.f32 0.0, %v1442
      %v1444 = vpop.f32.mrb[0].mxu0
      %v1445 = vpop.f32.mrb[0].mxu0
      %v1446 = vpop.f32.mrb[0].mxu0
      %1447 = vdwg.mxu0
      %1448 = vrot.lane.b32.xlu0 %v558, 120
      %v1449 = vpop.permute.xlu0 %1448
      %1450 = vrot.lane.b32.xlu0 %v558, 88
      %v1451 = vpop.permute.xlu0 %1450
      %v1453 = vsel %vm569, %v1449, 0
      %v1456 = vsel %vm569, %v1451, 0
      %1458 = vmatprep.subr.bf16.mxu0 0
      %1459 = vmatpush1.bf16.xpose.msra.mxu0 %v1456
      %1460 = vmatprep.subr.bf16.mxu0 0
      %1461 = vmatpush1.bf16.xpose.msra.mxu0 0
      %1462 = vmatprep.subr.bf16.mxu0 0
      %1463 = vmatpush1.bf16.xpose.msra.mxu0 0
      %1464 = vmatprep.subr.bf16.mxu0 0
      %1465 = vmatpush1.bf16.xpose.msra.mxu0 0
      %1466 = vmatprep.subr.bf16.mxu0 0
      %1467 = vmatpush1.bf16.xpose.msra.mxu0 0
      %1468 = vmatprep.subr.bf16.mxu0 0
      %1469 = vmatpush1.bf16.xpose.msra.mxu0 0
      %1470 = vmatprep.subr.bf16.mxu0 0
      %1471 = vmatpush1.bf16.xpose.msra.mxu0 0
      %1472 = vmatprep.subr.bf16.mxu0 0
      %1473 = vmatpush1.bf16.xpose.msra.mxu0 0
      %1474 = vmatprep.subr.bf16.mxu0 0
      %1475 = vmatpush1.bf16.xpose.msra.mxu0 0
      %1476 = vmatprep.subr.bf16.mxu0 0
      %1477 = vmatpush1.bf16.xpose.msra.mxu0 0
      %1478 = vmatprep.subr.bf16.mxu0 0
      %1479 = vmatpush1.bf16.xpose.msra.mxu0 0
      %1480 = vmatprep.subr.bf16.mxu0 0
      %1481 = vmatpush1.bf16.xpose.msra.mxu0 0
      %1482 = vmatprep.subr.bf16.mxu0 0
      %1483 = vmatpush1.bf16.xpose.msra.mxu0 0
      %1484 = vmatprep.subr.bf16.mxu0 0
      %1485 = vmatpush1.bf16.xpose.msra.mxu0 0
      %1486 = vmatprep.subr.bf16.mxu0 0
      %1487 = vmatpush1.bf16.xpose.msra.mxu0 0
      %1488 = vmatprep.subr.bf16.mxu0 0
      %1489 = vmatpush1.bf16.xpose.msra.mxu0 0
      %1490 = vmatprep.mubr.bf16.mxu0 0
      %1491 = vmatmul.mubr.bf16.gmra.mrb[0].mxu0 %v1453
      %v1492 = vpop.f32.mrb[0].mxu0
      %v1493 = vadd.f32 0.0, %v1492
      %v1494 = vpop.f32.mrb[0].mxu0
      %v1495 = vpop.f32.mrb[0].mxu0
      %v1496 = vpop.f32.mrb[0].mxu0
      %1497 = vdwg.mxu0
      %1498 = vrot.lane.b32.xlu0 %v559, 120
      %v1499 = vpop.permute.xlu0 %1498
      %1500 = vrot.lane.b32.xlu0 %v559, 88
      %v1501 = vpop.permute.xlu0 %1500
      %v1503 = vsel %vm569, %v1499, 0
      %v1506 = vsel %vm569, %v1501, 0
      %1508 = vmatprep.subr.bf16.mxu0 0
      %1509 = vmatpush1.bf16.xpose.msra.mxu0 %v1506
      %1510 = vmatprep.subr.bf16.mxu0 0
      %1511 = vmatpush1.bf16.xpose.msra.mxu0 0
      %1512 = vmatprep.subr.bf16.mxu0 0
      %1513 = vmatpush1.bf16.xpose.msra.mxu0 0
      %1514 = vmatprep.subr.bf16.mxu0 0
      %1515 = vmatpush1.bf16.xpose.msra.mxu0 0
      %1516 = vmatprep.subr.bf16.mxu0 0
      %1517 = vmatpush1.bf16.xpose.msra.mxu0 0
      %1518 = vmatprep.subr.bf16.mxu0 0
      %1519 = vmatpush1.bf16.xpose.msra.mxu0 0
      %1520 = vmatprep.subr.bf16.mxu0 0
      %1521 = vmatpush1.bf16.xpose.msra.mxu0 0
      %1522 = vmatprep.subr.bf16.mxu0 0
      %1523 = vmatpush1.bf16.xpose.msra.mxu0 0
      %1524 = vmatprep.subr.bf16.mxu0 0
      %1525 = vmatpush1.bf16.xpose.msra.mxu0 0
      %1526 = vmatprep.subr.bf16.mxu0 0
      %1527 = vmatpush1.bf16.xpose.msra.mxu0 0
      %1528 = vmatprep.subr.bf16.mxu0 0
      %1529 = vmatpush1.bf16.xpose.msra.mxu0 0
      %1530 = vmatprep.subr.bf16.mxu0 0
      %1531 = vmatpush1.bf16.xpose.msra.mxu0 0
      %1532 = vmatprep.subr.bf16.mxu0 0
      %1533 = vmatpush1.bf16.xpose.msra.mxu0 0
      %1534 = vmatprep.subr.bf16.mxu0 0
      %1535 = vmatpush1.bf16.xpose.msra.mxu0 0
      %1536 = vmatprep.subr.bf16.mxu0 0
      %1537 = vmatpush1.bf16.xpose.msra.mxu0 0
      %1538 = vmatprep.subr.bf16.mxu0 0
      %1539 = vmatpush1.bf16.xpose.msra.mxu0 0
      %1540 = vmatprep.mubr.bf16.mxu0 0
      %1541 = vmatmul.mubr.bf16.gmra.mrb[0].mxu0 %v1503
      %v1542 = vpop.f32.mrb[0].mxu0
      %v1543 = vadd.f32 0.0, %v1542
      %v1544 = vpop.f32.mrb[0].mxu0
      %v1545 = vpop.f32.mrb[0].mxu0
      %v1546 = vpop.f32.mrb[0].mxu0
      %1547 = vdwg.mxu0
      %1548 = vrot.lane.b32.xlu0 %v560, 120
      %v1549 = vpop.permute.xlu0 %1548
      %1550 = vrot.lane.b32.xlu0 %v560, 88
      %v1551 = vpop.permute.xlu0 %1550
      %v1553 = vsel %vm569, %v1549, 0
      %v1556 = vsel %vm569, %v1551, 0
      %1558 = vmatprep.subr.bf16.mxu0 0
      %1559 = vmatpush1.bf16.xpose.msra.mxu0 %v1556
      %1560 = vmatprep.subr.bf16.mxu0 0
      %1561 = vmatpush1.bf16.xpose.msra.mxu0 0
      %1562 = vmatprep.subr.bf16.mxu0 0
      %1563 = vmatpush1.bf16.xpose.msra.mxu0 0
      %1564 = vmatprep.subr.bf16.mxu0 0
      %1565 = vmatpush1.bf16.xpose.msra.mxu0 0
      %1566 = vmatprep.subr.bf16.mxu0 0
      %1567 = vmatpush1.bf16.xpose.msra.mxu0 0
      %1568 = vmatprep.subr.bf16.mxu0 0
      %1569 = vmatpush1.bf16.xpose.msra.mxu0 0
      %1570 = vmatprep.subr.bf16.mxu0 0
      %1571 = vmatpush1.bf16.xpose.msra.mxu0 0
      %1572 = vmatprep.subr.bf16.mxu0 0
      %1573 = vmatpush1.bf16.xpose.msra.mxu0 0
      %1574 = vmatprep.subr.bf16.mxu0 0
      %1575 = vmatpush1.bf16.xpose.msra.mxu0 0
      %1576 = vmatprep.subr.bf16.mxu0 0
      %1577 = vmatpush1.bf16.xpose.msra.mxu0 0
      %1578 = vmatprep.subr.bf16.mxu0 0
      %1579 = vmatpush1.bf16.xpose.msra.mxu0 0
      %1580 = vmatprep.subr.bf16.mxu0 0
      %1581 = vmatpush1.bf16.xpose.msra.mxu0 0
      %1582 = vmatprep.subr.bf16.mxu0 0
      %1583 = vmatpush1.bf16.xpose.msra.mxu0 0
      %1584 = vmatprep.subr.bf16.mxu0 0
      %1585 = vmatpush1.bf16.xpose.msra.mxu0 0
      %1586 = vmatprep.subr.bf16.mxu0 0
      %1587 = vmatpush1.bf16.xpose.msra.mxu0 0
      %1588 = vmatprep.subr.bf16.mxu0 0
      %1589 = vmatpush1.bf16.xpose.msra.mxu0 0
      %1590 = vmatprep.mubr.bf16.mxu0 0
      %1591 = vmatmul.mubr.bf16.gmra.mrb[0].mxu0 %v1553
      %v1592 = vpop.f32.mrb[0].mxu0
      %v1593 = vadd.f32 0.0, %v1592
      %v1594 = vpop.f32.mrb[0].mxu0
      %v1595 = vpop.f32.mrb[0].mxu0
      %v1596 = vpop.f32.mrb[0].mxu0
      %1597 = vdwg.mxu0
      %1598 = vrot.lane.b32.xlu0 %v561, 120
      %v1599 = vpop.permute.xlu0 %1598
      %1600 = vrot.lane.b32.xlu0 %v561, 88
      %v1601 = vpop.permute.xlu0 %1600
      %v1603 = vsel %vm569, %v1599, 0
      %v1606 = vsel %vm569, %v1601, 0
      %1608 = vmatprep.subr.bf16.mxu0 0
      %1609 = vmatpush1.bf16.xpose.msra.mxu0 %v1606
      %1610 = vmatprep.subr.bf16.mxu0 0
      %1611 = vmatpush1.bf16.xpose.msra.mxu0 0
      %1612 = vmatprep.subr.bf16.mxu0 0
      %1613 = vmatpush1.bf16.xpose.msra.mxu0 0
      %1614 = vmatprep.subr.bf16.mxu0 0
      %1615 = vmatpush1.bf16.xpose.msra.mxu0 0
      %1616 = vmatprep.subr.bf16.mxu0 0
      %1617 = vmatpush1.bf16.xpose.msra.mxu0 0
      %1618 = vmatprep.subr.bf16.mxu0 0
      %1619 = vmatpush1.bf16.xpose.msra.mxu0 0
      %1620 = vmatprep.subr.bf16.mxu0 0
      %1621 = vmatpush1.bf16.xpose.msra.mxu0 0
      %1622 = vmatprep.subr.bf16.mxu0 0
      %1623 = vmatpush1.bf16.xpose.msra.mxu0 0
      %1624 = vmatprep.subr.bf16.mxu0 0
      %1625 = vmatpush1.bf16.xpose.msra.mxu0 0
      %1626 = vmatprep.subr.bf16.mxu0 0
      %1627 = vmatpush1.bf16.xpose.msra.mxu0 0
      %1628 = vmatprep.subr.bf16.mxu0 0
      %1629 = vmatpush1.bf16.xpose.msra.mxu0 0
      %1630 = vmatprep.subr.bf16.mxu0 0
      %1631 = vmatpush1.bf16.xpose.msra.mxu0 0
      %1632 = vmatprep.subr.bf16.mxu0 0
      %1633 = vmatpush1.bf16.xpose.msra.mxu0 0
      %1634 = vmatprep.subr.bf16.mxu0 0
      %1635 = vmatpush1.bf16.xpose.msra.mxu0 0
      %1636 = vmatprep.subr.bf16.mxu0 0
      %1637 = vmatpush1.bf16.xpose.msra.mxu0 0
      %1638 = vmatprep.subr.bf16.mxu0 0
      %1639 = vmatpush1.bf16.xpose.msra.mxu0 0
      %1640 = vmatprep.mubr.bf16.mxu0 0
      %1641 = vmatmul.mubr.bf16.gmra.mrb[0].mxu0 %v1603
      %v1642 = vpop.f32.mrb[0].mxu0
      %v1643 = vadd.f32 0.0, %v1642
      %v1644 = vpop.f32.mrb[0].mxu0
      %v1645 = vpop.f32.mrb[0].mxu0
      %v1646 = vpop.f32.mrb[0].mxu0
      %1647 = vdwg.mxu0
      %1648 = vrot.lane.b32.xlu0 %v562, 120
      %v1649 = vpop.permute.xlu0 %1648
      %1650 = vrot.lane.b32.xlu0 %v562, 88
      %v1651 = vpop.permute.xlu0 %1650
      %v1653 = vsel %vm569, %v1649, 0
      %v1656 = vsel %vm569, %v1651, 0
      %1658 = vmatprep.subr.bf16.mxu0 0
      %1659 = vmatpush1.bf16.xpose.msra.mxu0 %v1656
      %1660 = vmatprep.subr.bf16.mxu0 0
      %1661 = vmatpush1.bf16.xpose.msra.mxu0 0
      %1662 = vmatprep.subr.bf16.mxu0 0
      %1663 = vmatpush1.bf16.xpose.msra.mxu0 0
      %1664 = vmatprep.subr.bf16.mxu0 0
      %1665 = vmatpush1.bf16.xpose.msra.mxu0 0
      %1666 = vmatprep.subr.bf16.mxu0 0
      %1667 = vmatpush1.bf16.xpose.msra.mxu0 0
      %1668 = vmatprep.subr.bf16.mxu0 0
      %1669 = vmatpush1.bf16.xpose.msra.mxu0 0
      %1670 = vmatprep.subr.bf16.mxu0 0
      %1671 = vmatpush1.bf16.xpose.msra.mxu0 0
      %1672 = vmatprep.subr.bf16.mxu0 0
      %1673 = vmatpush1.bf16.xpose.msra.mxu0 0
      %1674 = vmatprep.subr.bf16.mxu0 0
      %1675 = vmatpush1.bf16.xpose.msra.mxu0 0
      %1676 = vmatprep.subr.bf16.mxu0 0
      %1677 = vmatpush1.bf16.xpose.msra.mxu0 0
      %1678 = vmatprep.subr.bf16.mxu0 0
      %1679 = vmatpush1.bf16.xpose.msra.mxu0 0
      %1680 = vmatprep.subr.bf16.mxu0 0
      %1681 = vmatpush1.bf16.xpose.msra.mxu0 0
      %1682 = vmatprep.subr.bf16.mxu0 0
      %1683 = vmatpush1.bf16.xpose.msra.mxu0 0
      %1684 = vmatprep.subr.bf16.mxu0 0
      %1685 = vmatpush1.bf16.xpose.msra.mxu0 0
      %1686 = vmatprep.subr.bf16.mxu0 0
      %1687 = vmatpush1.bf16.xpose.msra.mxu0 0
      %1688 = vmatprep.subr.bf16.mxu0 0
      %1689 = vmatpush1.bf16.xpose.msra.mxu0 0
      %1690 = vmatprep.mubr.bf16.mxu0 0
      %1691 = vmatmul.mubr.bf16.gmra.mrb[0].mxu0 %v1653
      %v1692 = vpop.f32.mrb[0].mxu0
      %v1693 = vadd.f32 0.0, %v1692
      %v1694 = vpop.f32.mrb[0].mxu0
      %v1695 = vpop.f32.mrb[0].mxu0
      %v1696 = vpop.f32.mrb[0].mxu0
      %1697 = vdwg.mxu0
      %1698 = vrot.lane.b32.xlu0 %v563, 120
      %v1699 = vpop.permute.xlu0 %1698
      %1700 = vrot.lane.b32.xlu0 %v563, 88
      %v1701 = vpop.permute.xlu0 %1700
      %v1703 = vsel %vm569, %v1699, 0
      %v1706 = vsel %vm569, %v1701, 0
      %1708 = vmatprep.subr.bf16.mxu0 0
      %1709 = vmatpush1.bf16.xpose.msra.mxu0 %v1706
      %1710 = vmatprep.subr.bf16.mxu0 0
      %1711 = vmatpush1.bf16.xpose.msra.mxu0 0
      %1712 = vmatprep.subr.bf16.mxu0 0
      %1713 = vmatpush1.bf16.xpose.msra.mxu0 0
      %1714 = vmatprep.subr.bf16.mxu0 0
      %1715 = vmatpush1.bf16.xpose.msra.mxu0 0
      %1716 = vmatprep.subr.bf16.mxu0 0
      %1717 = vmatpush1.bf16.xpose.msra.mxu0 0
      %1718 = vmatprep.subr.bf16.mxu0 0
      %1719 = vmatpush1.bf16.xpose.msra.mxu0 0
      %1720 = vmatprep.subr.bf16.mxu0 0
      %1721 = vmatpush1.bf16.xpose.msra.mxu0 0
      %1722 = vmatprep.subr.bf16.mxu0 0
      %1723 = vmatpush1.bf16.xpose.msra.mxu0 0
      %1724 = vmatprep.subr.bf16.mxu0 0
      %1725 = vmatpush1.bf16.xpose.msra.mxu0 0
      %1726 = vmatprep.subr.bf16.mxu0 0
      %1727 = vmatpush1.bf16.xpose.msra.mxu0 0
      %1728 = vmatprep.subr.bf16.mxu0 0
      %1729 = vmatpush1.bf16.xpose.msra.mxu0 0
      %1730 = vmatprep.subr.bf16.mxu0 0
      %1731 = vmatpush1.bf16.xpose.msra.mxu0 0
      %1732 = vmatprep.subr.bf16.mxu0 0
      %1733 = vmatpush1.bf16.xpose.msra.mxu0 0
      %1734 = vmatprep.subr.bf16.mxu0 0
      %1735 = vmatpush1.bf16.xpose.msra.mxu0 0
      %1736 = vmatprep.subr.bf16.mxu0 0
      %1737 = vmatpush1.bf16.xpose.msra.mxu0 0
      %1738 = vmatprep.subr.bf16.mxu0 0
      %1739 = vmatpush1.bf16.xpose.msra.mxu0 0
      %1740 = vmatprep.mubr.bf16.mxu0 0
      %1741 = vmatmul.mubr.bf16.gmra.mrb[0].mxu0 %v1703
      %v1742 = vpop.f32.mrb[0].mxu0
      %v1743 = vadd.f32 0.0, %v1742
      %v1744 = vpop.f32.mrb[0].mxu0
      %v1745 = vpop.f32.mrb[0].mxu0
      %v1746 = vpop.f32.mrb[0].mxu0
      %1747 = vdwg.mxu0
      %1748 = vrot.lane.b32.xlu0 %v564, 120
      %v1749 = vpop.permute.xlu0 %1748
      %1750 = vrot.lane.b32.xlu0 %v564, 88
      %v1751 = vpop.permute.xlu0 %1750
      %v1753 = vsel %vm569, %v1749, 0
      %v1756 = vsel %vm569, %v1751, 0
      %1758 = vmatprep.subr.bf16.mxu0 0
      %1759 = vmatpush1.bf16.xpose.msra.mxu0 %v1756
      %1760 = vmatprep.subr.bf16.mxu0 0
      %1761 = vmatpush1.bf16.xpose.msra.mxu0 0
      %1762 = vmatprep.subr.bf16.mxu0 0
      %1763 = vmatpush1.bf16.xpose.msra.mxu0 0
      %1764 = vmatprep.subr.bf16.mxu0 0
      %1765 = vmatpush1.bf16.xpose.msra.mxu0 0
      %1766 = vmatprep.subr.bf16.mxu0 0
      %1767 = vmatpush1.bf16.xpose.msra.mxu0 0
      %1768 = vmatprep.subr.bf16.mxu0 0
      %1769 = vmatpush1.bf16.xpose.msra.mxu0 0
      %1770 = vmatprep.subr.bf16.mxu0 0
      %1771 = vmatpush1.bf16.xpose.msra.mxu0 0
      %1772 = vmatprep.subr.bf16.mxu0 0
      %1773 = vmatpush1.bf16.xpose.msra.mxu0 0
      %1774 = vmatprep.subr.bf16.mxu0 0
      %1775 = vmatpush1.bf16.xpose.msra.mxu0 0
      %1776 = vmatprep.subr.bf16.mxu0 0
      %1777 = vmatpush1.bf16.xpose.msra.mxu0 0
      %1778 = vmatprep.subr.bf16.mxu0 0
      %1779 = vmatpush1.bf16.xpose.msra.mxu0 0
      %1780 = vmatprep.subr.bf16.mxu0 0
      %1781 = vmatpush1.bf16.xpose.msra.mxu0 0
      %1782 = vmatprep.subr.bf16.mxu0 0
      %1783 = vmatpush1.bf16.xpose.msra.mxu0 0
      %1784 = vmatprep.subr.bf16.mxu0 0
      %1785 = vmatpush1.bf16.xpose.msra.mxu0 0
      %1786 = vmatprep.subr.bf16.mxu0 0
      %1787 = vmatpush1.bf16.xpose.msra.mxu0 0
      %1788 = vmatprep.subr.bf16.mxu0 0
      %1789 = vmatpush1.bf16.xpose.msra.mxu0 0
      %1790 = vmatprep.mubr.bf16.mxu0 0
      %1791 = vmatmul.mubr.bf16.gmra.mrb[0].mxu0 %v1753
      %v1792 = vpop.f32.mrb[0].mxu0
      %v1793 = vadd.f32 0.0, %v1792
      %v1794 = vpop.f32.mrb[0].mxu0
      %v1795 = vpop.f32.mrb[0].mxu0
      %v1796 = vpop.f32.mrb[0].mxu0
      %1797 = vdwg.mxu0
      %1798 = vrot.lane.b32.xlu0 %v565, 120
      %v1799 = vpop.permute.xlu0 %1798
      %1800 = vrot.lane.b32.xlu0 %v565, 88
      %v1801 = vpop.permute.xlu0 %1800
      %v1803 = vsel %vm569, %v1799, 0
      %v1806 = vsel %vm569, %v1801, 0
      %1808 = vmatprep.subr.bf16.mxu0 0
      %1809 = vmatpush1.bf16.xpose.msra.mxu0 %v1806
      %1810 = vmatprep.subr.bf16.mxu0 0
      %1811 = vmatpush1.bf16.xpose.msra.mxu0 0
      %1812 = vmatprep.subr.bf16.mxu0 0
      %1813 = vmatpush1.bf16.xpose.msra.mxu0 0
      %1814 = vmatprep.subr.bf16.mxu0 0
      %1815 = vmatpush1.bf16.xpose.msra.mxu0 0
      %1816 = vmatprep.subr.bf16.mxu0 0
      %1817 = vmatpush1.bf16.xpose.msra.mxu0 0
      %1818 = vmatprep.subr.bf16.mxu0 0
      %1819 = vmatpush1.bf16.xpose.msra.mxu0 0
      %1820 = vmatprep.subr.bf16.mxu0 0
      %1821 = vmatpush1.bf16.xpose.msra.mxu0 0
      %1822 = vmatprep.subr.bf16.mxu0 0
      %1823 = vmatpush1.bf16.xpose.msra.mxu0 0
      %1824 = vmatprep.subr.bf16.mxu0 0
      %1825 = vmatpush1.bf16.xpose.msra.mxu0 0
      %1826 = vmatprep.subr.bf16.mxu0 0
      %1827 = vmatpush1.bf16.xpose.msra.mxu0 0
      %1828 = vmatprep.subr.bf16.mxu0 0
      %1829 = vmatpush1.bf16.xpose.msra.mxu0 0
      %1830 = vmatprep.subr.bf16.mxu0 0
      %1831 = vmatpush1.bf16.xpose.msra.mxu0 0
      %1832 = vmatprep.subr.bf16.mxu0 0
      %1833 = vmatpush1.bf16.xpose.msra.mxu0 0
      %1834 = vmatprep.subr.bf16.mxu0 0
      %1835 = vmatpush1.bf16.xpose.msra.mxu0 0
      %1836 = vmatprep.subr.bf16.mxu0 0
      %1837 = vmatpush1.bf16.xpose.msra.mxu0 0
      %1838 = vmatprep.subr.bf16.mxu0 0
      %1839 = vmatpush1.bf16.xpose.msra.mxu0 0
      %1840 = vmatprep.mubr.bf16.mxu0 0
      %1841 = vmatmul.mubr.bf16.gmra.mrb[0].mxu0 %v1803
      %v1842 = vpop.f32.mrb[0].mxu0
      %v1843 = vadd.f32 0.0, %v1842
      %v1844 = vpop.f32.mrb[0].mxu0
      %v1845 = vpop.f32.mrb[0].mxu0
      %v1846 = vpop.f32.mrb[0].mxu0
      %1847 = vdwg.mxu0
      %v1848 = vmul.f32 %v1493, 0.35355338
      %v1849 = vmul.f32 %v1543, 0.35355338
      %v1850 = vmul.f32 %v1593, 0.35355338
      %v1851 = vmul.f32 %v1643, 0.35355338
      %v1852 = vmul.f32 %v1693, 0.35355338
      %v1853 = vmul.f32 %v1743, 0.35355338
      %v1854 = vmul.f32 %v1793, 0.35355338
      %v1855 = vmul.f32 %v1843, 0.35355338
      %v1856 = vsel %vm569, %v1848, -inf
      %1857 = vmax.xlane.f32.xlu0 %v1856
      %v1858 = vpop.xlane.xlu0 %1857
      %v1859 = vsel %vm569, %v1849, -inf
      %1860 = vmax.xlane.f32.xlu0 %v1859
      %v1861 = vpop.xlane.xlu0 %1860
      %v1862 = vsel %vm569, %v1850, -inf
      %1863 = vmax.xlane.f32.xlu0 %v1862
      %v1864 = vpop.xlane.xlu0 %1863
      %v1865 = vsel %vm569, %v1851, -inf
      %1866 = vmax.xlane.f32.xlu0 %v1865
      %v1867 = vpop.xlane.xlu0 %1866
      %v1868 = vsel %vm569, %v1852, -inf
      %1869 = vmax.xlane.f32.xlu0 %v1868
      %v1870 = vpop.xlane.xlu0 %1869
      %v1871 = vsel %vm569, %v1853, -inf
      %1872 = vmax.xlane.f32.xlu0 %v1871
      %v1873 = vpop.xlane.xlu0 %1872
      %v1874 = vsel %vm569, %v1854, -inf
      %1875 = vmax.xlane.f32.xlu0 %v1874
      %v1876 = vpop.xlane.xlu0 %1875
      %v1877 = vsel %vm569, %v1855, -inf
      %1878 = vmax.xlane.f32.xlu0 %v1877
      %v1879 = vpop.xlane.xlu0 %1878
      %v1880 = vsub.f32 %v1848, %v1858
      %v1881 = vsub.f32 %v1849, %v1861
      %v1882 = vsub.f32 %v1850, %v1864
      %v1883 = vsub.f32 %v1851, %v1867
      %v1884 = vsub.f32 %v1852, %v1870
      %v1885 = vsub.f32 %v1853, %v1873
      %v1886 = vsub.f32 %v1854, %v1876
      %v1887 = vsub.f32 %v1855, %v1879
      %v1888 = vmul.f32 %v1880, 1.442695
      %v1889 = vpow.pop %v1888
      %v1890 = vmul.f32 %v1881, 1.442695
      %v1891 = vpow.pop %v1890
      %v1892 = vmul.f32 %v1882, 1.442695
      %v1893 = vpow.pop %v1892
      %v1894 = vmul.f32 %v1883, 1.442695
      %v1895 = vpow.pop %v1894
      %v1896 = vmul.f32 %v1884, 1.442695
      %v1897 = vpow.pop %v1896
      %v1898 = vmul.f32 %v1885, 1.442695
      %v1899 = vpow.pop %v1898
      %v1900 = vmul.f32 %v1886, 1.442695
      %v1901 = vpow.pop %v1900
      %v1902 = vmul.f32 %v1887, 1.442695
      %v1903 = vpow.pop %v1902
      %v1904 = vsel %vm569, %v1889, 0.0
      %1905 = vadd.xlane.f32.xlu0 %v1904
      %v1906 = vpop.xlane.xlu0 %1905
      %v1907 = vsel %vm569, %v1891, 0.0
      %1908 = vadd.xlane.f32.xlu0 %v1907
      %v1909 = vpop.xlane.xlu0 %1908
      %v1910 = vsel %vm569, %v1893, 0.0
      %1911 = vadd.xlane.f32.xlu0 %v1910
      %v1912 = vpop.xlane.xlu0 %1911
      %v1913 = vsel %vm569, %v1895, 0.0
      %1914 = vadd.xlane.f32.xlu0 %v1913
      %v1915 = vpop.xlane.xlu0 %1914
      %v1916 = vsel %vm569, %v1897, 0.0
      %1917 = vadd.xlane.f32.xlu0 %v1916
      %v1918 = vpop.xlane.xlu0 %1917
      %v1919 = vsel %vm569, %v1899, 0.0
      %1920 = vadd.xlane.f32.xlu0 %v1919
      %v1921 = vpop.xlane.xlu0 %1920
      %v1922 = vsel %vm569, %v1901, 0.0
      %1923 = vadd.xlane.f32.xlu0 %v1922
      %v1924 = vpop.xlane.xlu0 %1923
      %v1925 = vsel %vm569, %v1903, 0.0
      %1926 = vadd.xlane.f32.xlu0 %v1925
      %v1927 = vpop.xlane.xlu0 %1926
      %v1928 = vrcp.pop %v1906
      %v1929 = vmul.f32 %v1889, %v1928
      %v1930 = vrcp.pop %v1909
      %v1931 = vmul.f32 %v1891, %v1930
      %v1932 = vrcp.pop %v1912
      %v1933 = vmul.f32 %v1893, %v1932
      %v1934 = vrcp.pop %v1915
      %v1935 = vmul.f32 %v1895, %v1934
      %v1936 = vrcp.pop %v1918
      %v1937 = vmul.f32 %v1897, %v1936
      %v1938 = vrcp.pop %v1921
      %v1939 = vmul.f32 %v1899, %v1938
      %v1940 = vrcp.pop %v1924
      %v1941 = vmul.f32 %v1901, %v1940
      %v1942 = vrcp.pop %v1927
      %v1943 = vmul.f32 %v1903, %v1942
      %v1944 = vpack.c.bf16 %v1929, %v1929
      %v1945 = vpack.c.bf16 %v1931, %v1931
      %v1946 = vpack.c.bf16 %v1933, %v1933
      %v1947 = vpack.c.bf16 %v1935, %v1935
      %v1948 = vpack.c.bf16 %v1937, %v1937
      %v1949 = vpack.c.bf16 %v1939, %v1939
      %v1950 = vpack.c.bf16 %v1941, %v1941
      %v1951 = vpack.c.bf16 %v1943, %v1943
      %1952 = vrot.lane.b32.xlu0 %v558, 56
      %v1953 = vpop.permute.xlu0 %1952
      %v1955 = vsel %vm569, %v1944, 0
      %v1958 = vsel %vm1068, %v1953, 0
      %1960 = vmatprep.subr.bf16.mxu0 0
      %1961 = vmatpush1.bf16.msra.mxu0 %v1958
      %1962 = vmatprep.subr.bf16.mxu0 0
      %1963 = vmatpush1.bf16.msra.mxu0 0
      %1964 = vmatprep.subr.bf16.mxu0 0
      %1965 = vmatpush1.bf16.msra.mxu0 0
      %1966 = vmatprep.subr.bf16.mxu0 0
      %1967 = vmatpush1.bf16.msra.mxu0 0
      %1968 = vmatprep.subr.bf16.mxu0 0
      %1969 = vmatpush1.bf16.msra.mxu0 0
      %1970 = vmatprep.subr.bf16.mxu0 0
      %1971 = vmatpush1.bf16.msra.mxu0 0
      %1972 = vmatprep.subr.bf16.mxu0 0
      %1973 = vmatpush1.bf16.msra.mxu0 0
      %1974 = vmatprep.subr.bf16.mxu0 0
      %1975 = vmatpush1.bf16.msra.mxu0 0
      %1976 = vmatprep.subr.bf16.mxu0 0
      %1977 = vmatpush1.bf16.msra.mxu0 0
      %1978 = vmatprep.subr.bf16.mxu0 0
      %1979 = vmatpush1.bf16.msra.mxu0 0
      %1980 = vmatprep.subr.bf16.mxu0 0
      %1981 = vmatpush1.bf16.msra.mxu0 0
      %1982 = vmatprep.subr.bf16.mxu0 0
      %1983 = vmatpush1.bf16.msra.mxu0 0
      %1984 = vmatprep.subr.bf16.mxu0 0
      %1985 = vmatpush1.bf16.msra.mxu0 0
      %1986 = vmatprep.subr.bf16.mxu0 0
      %1987 = vmatpush1.bf16.msra.mxu0 0
      %1988 = vmatprep.subr.bf16.mxu0 0
      %1989 = vmatpush1.bf16.msra.mxu0 0
      %1990 = vmatprep.subr.bf16.mxu0 0
      %1991 = vmatpush1.bf16.msra.mxu0 0
      %1992 = vmatprep.mubr.bf16.mxu0 0
      %1993 = vmatmul.mubr.bf16.gmra.mrb[0].mxu0 %v1955
      %v1994 = vpop.f32.mrb[0].mxu0
      %v1995 = vadd.f32 0.0, %v1994
      %v1996 = vpop.f32.mrb[0].mxu0
      %v1997 = vpop.f32.mrb[0].mxu0
      %v1998 = vpop.f32.mrb[0].mxu0
      %1999 = vdwg.mxu0
      %2000 = vrot.lane.b32.xlu0 %v559, 56
      %v2001 = vpop.permute.xlu0 %2000
      %v2003 = vsel %vm569, %v1945, 0
      %v2006 = vsel %vm1068, %v2001, 0
      %2008 = vmatprep.subr.bf16.mxu0 0
      %2009 = vmatpush1.bf16.msra.mxu0 %v2006
      %2010 = vmatprep.subr.bf16.mxu0 0
      %2011 = vmatpush1.bf16.msra.mxu0 0
      %2012 = vmatprep.subr.bf16.mxu0 0
      %2013 = vmatpush1.bf16.msra.mxu0 0
      %2014 = vmatprep.subr.bf16.mxu0 0
      %2015 = vmatpush1.bf16.msra.mxu0 0
      %2016 = vmatprep.subr.bf16.mxu0 0
      %2017 = vmatpush1.bf16.msra.mxu0 0
      %2018 = vmatprep.subr.bf16.mxu0 0
      %2019 = vmatpush1.bf16.msra.mxu0 0
      %2020 = vmatprep.subr.bf16.mxu0 0
      %2021 = vmatpush1.bf16.msra.mxu0 0
      %2022 = vmatprep.subr.bf16.mxu0 0
      %2023 = vmatpush1.bf16.msra.mxu0 0
      %2024 = vmatprep.subr.bf16.mxu0 0
      %2025 = vmatpush1.bf16.msra.mxu0 0
      %2026 = vmatprep.subr.bf16.mxu0 0
      %2027 = vmatpush1.bf16.msra.mxu0 0
      %2028 = vmatprep.subr.bf16.mxu0 0
      %2029 = vmatpush1.bf16.msra.mxu0 0
      %2030 = vmatprep.subr.bf16.mxu0 0
      %2031 = vmatpush1.bf16.msra.mxu0 0
      %2032 = vmatprep.subr.bf16.mxu0 0
      %2033 = vmatpush1.bf16.msra.mxu0 0
      %2034 = vmatprep.subr.bf16.mxu0 0
      %2035 = vmatpush1.bf16.msra.mxu0 0
      %2036 = vmatprep.subr.bf16.mxu0 0
      %2037 = vmatpush1.bf16.msra.mxu0 0
      %2038 = vmatprep.subr.bf16.mxu0 0
      %2039 = vmatpush1.bf16.msra.mxu0 0
      %2040 = vmatprep.mubr.bf16.mxu0 0
      %2041 = vmatmul.mubr.bf16.gmra.mrb[0].mxu0 %v2003
      %v2042 = vpop.f32.mrb[0].mxu0
      %v2043 = vadd.f32 0.0, %v2042
      %v2044 = vpop.f32.mrb[0].mxu0
      %v2045 = vpop.f32.mrb[0].mxu0
      %v2046 = vpop.f32.mrb[0].mxu0
      %2047 = vdwg.mxu0
      %2048 = vrot.lane.b32.xlu0 %v560, 56
      %v2049 = vpop.permute.xlu0 %2048
      %v2051 = vsel %vm569, %v1946, 0
      %v2054 = vsel %vm1068, %v2049, 0
      %2056 = vmatprep.subr.bf16.mxu0 0
      %2057 = vmatpush1.bf16.msra.mxu0 %v2054
      %2058 = vmatprep.subr.bf16.mxu0 0
      %2059 = vmatpush1.bf16.msra.mxu0 0
      %2060 = vmatprep.subr.bf16.mxu0 0
      %2061 = vmatpush1.bf16.msra.mxu0 0
      %2062 = vmatprep.subr.bf16.mxu0 0
      %2063 = vmatpush1.bf16.msra.mxu0 0
      %2064 = vmatprep.subr.bf16.mxu0 0
      %2065 = vmatpush1.bf16.msra.mxu0 0
      %2066 = vmatprep.subr.bf16.mxu0 0
      %2067 = vmatpush1.bf16.msra.mxu0 0
      %2068 = vmatprep.subr.bf16.mxu0 0
      %2069 = vmatpush1.bf16.msra.mxu0 0
      %2070 = vmatprep.subr.bf16.mxu0 0
      %2071 = vmatpush1.bf16.msra.mxu0 0
      %2072 = vmatprep.subr.bf16.mxu0 0
      %2073 = vmatpush1.bf16.msra.mxu0 0
      %2074 = vmatprep.subr.bf16.mxu0 0
      %2075 = vmatpush1.bf16.msra.mxu0 0
      %2076 = vmatprep.subr.bf16.mxu0 0
      %2077 = vmatpush1.bf16.msra.mxu0 0
      %2078 = vmatprep.subr.bf16.mxu0 0
      %2079 = vmatpush1.bf16.msra.mxu0 0
      %2080 = vmatprep.subr.bf16.mxu0 0
      %2081 = vmatpush1.bf16.msra.mxu0 0
      %2082 = vmatprep.subr.bf16.mxu0 0
      %2083 = vmatpush1.bf16.msra.mxu0 0
      %2084 = vmatprep.subr.bf16.mxu0 0
      %2085 = vmatpush1.bf16.msra.mxu0 0
      %2086 = vmatprep.subr.bf16.mxu0 0
      %2087 = vmatpush1.bf16.msra.mxu0 0
      %2088 = vmatprep.mubr.bf16.mxu0 0
      %2089 = vmatmul.mubr.bf16.gmra.mrb[0].mxu0 %v2051
      %v2090 = vpop.f32.mrb[0].mxu0
      %v2091 = vadd.f32 0.0, %v2090
      %v2092 = vpop.f32.mrb[0].mxu0
      %v2093 = vpop.f32.mrb[0].mxu0
      %v2094 = vpop.f32.mrb[0].mxu0
      %2095 = vdwg.mxu0
      %2096 = vrot.lane.b32.xlu0 %v561, 56
      %v2097 = vpop.permute.xlu0 %2096
      %v2099 = vsel %vm569, %v1947, 0
      %v2102 = vsel %vm1068, %v2097, 0
      %2104 = vmatprep.subr.bf16.mxu0 0
      %2105 = vmatpush1.bf16.msra.mxu0 %v2102
      %2106 = vmatprep.subr.bf16.mxu0 0
      %2107 = vmatpush1.bf16.msra.mxu0 0
      %2108 = vmatprep.subr.bf16.mxu0 0
      %2109 = vmatpush1.bf16.msra.mxu0 0
      %2110 = vmatprep.subr.bf16.mxu0 0
      %2111 = vmatpush1.bf16.msra.mxu0 0
      %2112 = vmatprep.subr.bf16.mxu0 0
      %2113 = vmatpush1.bf16.msra.mxu0 0
      %2114 = vmatprep.subr.bf16.mxu0 0
      %2115 = vmatpush1.bf16.msra.mxu0 0
      %2116 = vmatprep.subr.bf16.mxu0 0
      %2117 = vmatpush1.bf16.msra.mxu0 0
      %2118 = vmatprep.subr.bf16.mxu0 0
      %2119 = vmatpush1.bf16.msra.mxu0 0
      %2120 = vmatprep.subr.bf16.mxu0 0
      %2121 = vmatpush1.bf16.msra.mxu0 0
      %2122 = vmatprep.subr.bf16.mxu0 0
      %2123 = vmatpush1.bf16.msra.mxu0 0
      %2124 = vmatprep.subr.bf16.mxu0 0
      %2125 = vmatpush1.bf16.msra.mxu0 0
      %2126 = vmatprep.subr.bf16.mxu0 0
      %2127 = vmatpush1.bf16.msra.mxu0 0
      %2128 = vmatprep.subr.bf16.mxu0 0
      %2129 = vmatpush1.bf16.msra.mxu0 0
      %2130 = vmatprep.subr.bf16.mxu0 0
      %2131 = vmatpush1.bf16.msra.mxu0 0
      %2132 = vmatprep.subr.bf16.mxu0 0
      %2133 = vmatpush1.bf16.msra.mxu0 0
      %2134 = vmatprep.subr.bf16.mxu0 0
      %2135 = vmatpush1.bf16.msra.mxu0 0
      %2136 = vmatprep.mubr.bf16.mxu0 0
      %2137 = vmatmul.mubr.bf16.gmra.mrb[0].mxu0 %v2099
      %v2138 = vpop.f32.mrb[0].mxu0
      %v2139 = vadd.f32 0.0, %v2138
      %v2140 = vpop.f32.mrb[0].mxu0
      %v2141 = vpop.f32.mrb[0].mxu0
      %v2142 = vpop.f32.mrb[0].mxu0
      %2143 = vdwg.mxu0
      %2144 = vrot.lane.b32.xlu0 %v562, 56
      %v2145 = vpop.permute.xlu0 %2144
      %v2147 = vsel %vm569, %v1948, 0
      %v2150 = vsel %vm1068, %v2145, 0
      %2152 = vmatprep.subr.bf16.mxu0 0
      %2153 = vmatpush1.bf16.msra.mxu0 %v2150
      %2154 = vmatprep.subr.bf16.mxu0 0
      %2155 = vmatpush1.bf16.msra.mxu0 0
      %2156 = vmatprep.subr.bf16.mxu0 0
      %2157 = vmatpush1.bf16.msra.mxu0 0
      %2158 = vmatprep.subr.bf16.mxu0 0
      %2159 = vmatpush1.bf16.msra.mxu0 0
      %2160 = vmatprep.subr.bf16.mxu0 0
      %2161 = vmatpush1.bf16.msra.mxu0 0
      %2162 = vmatprep.subr.bf16.mxu0 0
      %2163 = vmatpush1.bf16.msra.mxu0 0
      %2164 = vmatprep.subr.bf16.mxu0 0
      %2165 = vmatpush1.bf16.msra.mxu0 0
      %2166 = vmatprep.subr.bf16.mxu0 0
      %2167 = vmatpush1.bf16.msra.mxu0 0
      %2168 = vmatprep.subr.bf16.mxu0 0
      %2169 = vmatpush1.bf16.msra.mxu0 0
      %2170 = vmatprep.subr.bf16.mxu0 0
      %2171 = vmatpush1.bf16.msra.mxu0 0
      %2172 = vmatprep.subr.bf16.mxu0 0
      %2173 = vmatpush1.bf16.msra.mxu0 0
      %2174 = vmatprep.subr.bf16.mxu0 0
      %2175 = vmatpush1.bf16.msra.mxu0 0
      %2176 = vmatprep.subr.bf16.mxu0 0
      %2177 = vmatpush1.bf16.msra.mxu0 0
      %2178 = vmatprep.subr.bf16.mxu0 0
      %2179 = vmatpush1.bf16.msra.mxu0 0
      %2180 = vmatprep.subr.bf16.mxu0 0
      %2181 = vmatpush1.bf16.msra.mxu0 0
      %2182 = vmatprep.subr.bf16.mxu0 0
      %2183 = vmatpush1.bf16.msra.mxu0 0
      %2184 = vmatprep.mubr.bf16.mxu0 0
      %2185 = vmatmul.mubr.bf16.gmra.mrb[0].mxu0 %v2147
      %v2186 = vpop.f32.mrb[0].mxu0
      %v2187 = vadd.f32 0.0, %v2186
      %v2188 = vpop.f32.mrb[0].mxu0
      %v2189 = vpop.f32.mrb[0].mxu0
      %v2190 = vpop.f32.mrb[0].mxu0
      %2191 = vdwg.mxu0
      %2192 = vrot.lane.b32.xlu0 %v563, 56
      %v2193 = vpop.permute.xlu0 %2192
      %v2195 = vsel %vm569, %v1949, 0
      %v2198 = vsel %vm1068, %v2193, 0
      %2200 = vmatprep.subr.bf16.mxu0 0
      %2201 = vmatpush1.bf16.msra.mxu0 %v2198
      %2202 = vmatprep.subr.bf16.mxu0 0
      %2203 = vmatpush1.bf16.msra.mxu0 0
      %2204 = vmatprep.subr.bf16.mxu0 0
      %2205 = vmatpush1.bf16.msra.mxu0 0
      %2206 = vmatprep.subr.bf16.mxu0 0
      %2207 = vmatpush1.bf16.msra.mxu0 0
      %2208 = vmatprep.subr.bf16.mxu0 0
      %2209 = vmatpush1.bf16.msra.mxu0 0
      %2210 = vmatprep.subr.bf16.mxu0 0
      %2211 = vmatpush1.bf16.msra.mxu0 0
      %2212 = vmatprep.subr.bf16.mxu0 0
      %2213 = vmatpush1.bf16.msra.mxu0 0
      %2214 = vmatprep.subr.bf16.mxu0 0
      %2215 = vmatpush1.bf16.msra.mxu0 0
      %2216 = vmatprep.subr.bf16.mxu0 0
      %2217 = vmatpush1.bf16.msra.mxu0 0
      %2218 = vmatprep.subr.bf16.mxu0 0
      %2219 = vmatpush1.bf16.msra.mxu0 0
      %2220 = vmatprep.subr.bf16.mxu0 0
      %2221 = vmatpush1.bf16.msra.mxu0 0
      %2222 = vmatprep.subr.bf16.mxu0 0
      %2223 = vmatpush1.bf16.msra.mxu0 0
      %2224 = vmatprep.subr.bf16.mxu0 0
      %2225 = vmatpush1.bf16.msra.mxu0 0
      %2226 = vmatprep.subr.bf16.mxu0 0
      %2227 = vmatpush1.bf16.msra.mxu0 0
      %2228 = vmatprep.subr.bf16.mxu0 0
      %2229 = vmatpush1.bf16.msra.mxu0 0
      %2230 = vmatprep.subr.bf16.mxu0 0
      %2231 = vmatpush1.bf16.msra.mxu0 0
      %2232 = vmatprep.mubr.bf16.mxu0 0
      %2233 = vmatmul.mubr.bf16.gmra.mrb[0].mxu0 %v2195
      %v2234 = vpop.f32.mrb[0].mxu0
      %v2235 = vadd.f32 0.0, %v2234
      %v2236 = vpop.f32.mrb[0].mxu0
      %v2237 = vpop.f32.mrb[0].mxu0
      %v2238 = vpop.f32.mrb[0].mxu0
      %2239 = vdwg.mxu0
      %2240 = vrot.lane.b32.xlu0 %v564, 56
      %v2241 = vpop.permute.xlu0 %2240
      %v2243 = vsel %vm569, %v1950, 0
      %v2246 = vsel %vm1068, %v2241, 0
      %2248 = vmatprep.subr.bf16.mxu0 0
      %2249 = vmatpush1.bf16.msra.mxu0 %v2246
      %2250 = vmatprep.subr.bf16.mxu0 0
      %2251 = vmatpush1.bf16.msra.mxu0 0
      %2252 = vmatprep.subr.bf16.mxu0 0
      %2253 = vmatpush1.bf16.msra.mxu0 0
      %2254 = vmatprep.subr.bf16.mxu0 0
      %2255 = vmatpush1.bf16.msra.mxu0 0
      %2256 = vmatprep.subr.bf16.mxu0 0
      %2257 = vmatpush1.bf16.msra.mxu0 0
      %2258 = vmatprep.subr.bf16.mxu0 0
      %2259 = vmatpush1.bf16.msra.mxu0 0
      %2260 = vmatprep.subr.bf16.mxu0 0
      %2261 = vmatpush1.bf16.msra.mxu0 0
      %2262 = vmatprep.subr.bf16.mxu0 0
      %2263 = vmatpush1.bf16.msra.mxu0 0
      %2264 = vmatprep.subr.bf16.mxu0 0
      %2265 = vmatpush1.bf16.msra.mxu0 0
      %2266 = vmatprep.subr.bf16.mxu0 0
      %2267 = vmatpush1.bf16.msra.mxu0 0
      %2268 = vmatprep.subr.bf16.mxu0 0
      %2269 = vmatpush1.bf16.msra.mxu0 0
      %2270 = vmatprep.subr.bf16.mxu0 0
      %2271 = vmatpush1.bf16.msra.mxu0 0
      %2272 = vmatprep.subr.bf16.mxu0 0
      %2273 = vmatpush1.bf16.msra.mxu0 0
      %2274 = vmatprep.subr.bf16.mxu0 0
      %2275 = vmatpush1.bf16.msra.mxu0 0
      %2276 = vmatprep.subr.bf16.mxu0 0
      %2277 = vmatpush1.bf16.msra.mxu0 0
      %2278 = vmatprep.subr.bf16.mxu0 0
      %2279 = vmatpush1.bf16.msra.mxu0 0
      %2280 = vmatprep.mubr.bf16.mxu0 0
      %2281 = vmatmul.mubr.bf16.gmra.mrb[0].mxu0 %v2243
      %v2282 = vpop.f32.mrb[0].mxu0
      %v2283 = vadd.f32 0.0, %v2282
      %v2284 = vpop.f32.mrb[0].mxu0
      %v2285 = vpop.f32.mrb[0].mxu0
      %v2286 = vpop.f32.mrb[0].mxu0
      %2287 = vdwg.mxu0
      %2288 = vrot.lane.b32.xlu0 %v565, 56
      %v2289 = vpop.permute.xlu0 %2288
      %v2291 = vsel %vm569, %v1951, 0
      %v2294 = vsel %vm1068, %v2289, 0
      %2296 = vmatprep.subr.bf16.mxu0 0
      %2297 = vmatpush1.bf16.msra.mxu0 %v2294
      %2298 = vmatprep.subr.bf16.mxu0 0
      %2299 = vmatpush1.bf16.msra.mxu0 0
      %2300 = vmatprep.subr.bf16.mxu0 0
      %2301 = vmatpush1.bf16.msra.mxu0 0
      %2302 = vmatprep.subr.bf16.mxu0 0
      %2303 = vmatpush1.bf16.msra.mxu0 0
      %2304 = vmatprep.subr.bf16.mxu0 0
      %2305 = vmatpush1.bf16.msra.mxu0 0
      %2306 = vmatprep.subr.bf16.mxu0 0
      %2307 = vmatpush1.bf16.msra.mxu0 0
      %2308 = vmatprep.subr.bf16.mxu0 0
      %2309 = vmatpush1.bf16.msra.mxu0 0
      %2310 = vmatprep.subr.bf16.mxu0 0
      %2311 = vmatpush1.bf16.msra.mxu0 0
      %2312 = vmatprep.subr.bf16.mxu0 0
      %2313 = vmatpush1.bf16.msra.mxu0 0
      %2314 = vmatprep.subr.bf16.mxu0 0
      %2315 = vmatpush1.bf16.msra.mxu0 0
      %2316 = vmatprep.subr.bf16.mxu0 0
      %2317 = vmatpush1.bf16.msra.mxu0 0
      %2318 = vmatprep.subr.bf16.mxu0 0
      %2319 = vmatpush1.bf16.msra.mxu0 0
      %2320 = vmatprep.subr.bf16.mxu0 0
      %2321 = vmatpush1.bf16.msra.mxu0 0
      %2322 = vmatprep.subr.bf16.mxu0 0
      %2323 = vmatpush1.bf16.msra.mxu0 0
      %2324 = vmatprep.subr.bf16.mxu0 0
      %2325 = vmatpush1.bf16.msra.mxu0 0
      %2326 = vmatprep.subr.bf16.mxu0 0
      %2327 = vmatpush1.bf16.msra.mxu0 0
      %2328 = vmatprep.mubr.bf16.mxu0 0
      %2329 = vmatmul.mubr.bf16.gmra.mrb[0].mxu0 %v2291
      %v2330 = vpop.f32.mrb[0].mxu0
      %v2331 = vadd.f32 0.0, %v2330
      %v2332 = vpop.f32.mrb[0].mxu0
      %v2333 = vpop.f32.mrb[0].mxu0
      %v2334 = vpop.f32.mrb[0].mxu0
      %2335 = vdwg.mxu0
      %2336 = vrot.lane.b32.xlu0 %v558, 112
      %v2337 = vpop.permute.xlu0 %2336
      %2338 = vrot.lane.b32.xlu0 %v558, 80
      %v2339 = vpop.permute.xlu0 %2338
      %v2341 = vsel %vm569, %v2337, 0
      %v2344 = vsel %vm569, %v2339, 0
      %2346 = vmatprep.subr.bf16.mxu0 0
      %2347 = vmatpush1.bf16.xpose.msra.mxu0 %v2344
      %2348 = vmatprep.subr.bf16.mxu0 0
      %2349 = vmatpush1.bf16.xpose.msra.mxu0 0
      %2350 = vmatprep.subr.bf16.mxu0 0
      %2351 = vmatpush1.bf16.xpose.msra.mxu0 0
      %2352 = vmatprep.subr.bf16.mxu0 0
      %2353 = vmatpush1.bf16.xpose.msra.mxu0 0
      %2354 = vmatprep.subr.bf16.mxu0 0
      %2355 = vmatpush1.bf16.xpose.msra.mxu0 0
      %2356 = vmatprep.subr.bf16.mxu0 0
      %2357 = vmatpush1.bf16.xpose.msra.mxu0 0
      %2358 = vmatprep.subr.bf16.mxu0 0
      %2359 = vmatpush1.bf16.xpose.msra.mxu0 0
      %2360 = vmatprep.subr.bf16.mxu0 0
      %2361 = vmatpush1.bf16.xpose.msra.mxu0 0
      %2362 = vmatprep.subr.bf16.mxu0 0
      %2363 = vmatpush1.bf16.xpose.msra.mxu0 0
      %2364 = vmatprep.subr.bf16.mxu0 0
      %2365 = vmatpush1.bf16.xpose.msra.mxu0 0
      %2366 = vmatprep.subr.bf16.mxu0 0
      %2367 = vmatpush1.bf16.xpose.msra.mxu0 0
      %2368 = vmatprep.subr.bf16.mxu0 0
      %2369 = vmatpush1.bf16.xpose.msra.mxu0 0
      %2370 = vmatprep.subr.bf16.mxu0 0
      %2371 = vmatpush1.bf16.xpose.msra.mxu0 0
      %2372 = vmatprep.subr.bf16.mxu0 0
      %2373 = vmatpush1.bf16.xpose.msra.mxu0 0
      %2374 = vmatprep.subr.bf16.mxu0 0
      %2375 = vmatpush1.bf16.xpose.msra.mxu0 0
      %2376 = vmatprep.subr.bf16.mxu0 0
      %2377 = vmatpush1.bf16.xpose.msra.mxu0 0
      %2378 = vmatprep.mubr.bf16.mxu0 0
      %2379 = vmatmul.mubr.bf16.gmra.mrb[0].mxu0 %v2341
      %v2380 = vpop.f32.mrb[0].mxu0
      %v2381 = vadd.f32 0.0, %v2380
      %v2382 = vpop.f32.mrb[0].mxu0
      %v2383 = vpop.f32.mrb[0].mxu0
      %v2384 = vpop.f32.mrb[0].mxu0
      %2385 = vdwg.mxu0
      %2386 = vrot.lane.b32.xlu0 %v559, 112
      %v2387 = vpop.permute.xlu0 %2386
      %2388 = vrot.lane.b32.xlu0 %v559, 80
      %v2389 = vpop.permute.xlu0 %2388
      %v2391 = vsel %vm569, %v2387, 0
      %v2394 = vsel %vm569, %v2389, 0
      %2396 = vmatprep.subr.bf16.mxu0 0
      %2397 = vmatpush1.bf16.xpose.msra.mxu0 %v2394
      %2398 = vmatprep.subr.bf16.mxu0 0
      %2399 = vmatpush1.bf16.xpose.msra.mxu0 0
      %2400 = vmatprep.subr.bf16.mxu0 0
      %2401 = vmatpush1.bf16.xpose.msra.mxu0 0
      %2402 = vmatprep.subr.bf16.mxu0 0
      %2403 = vmatpush1.bf16.xpose.msra.mxu0 0
      %2404 = vmatprep.subr.bf16.mxu0 0
      %2405 = vmatpush1.bf16.xpose.msra.mxu0 0
      %2406 = vmatprep.subr.bf16.mxu0 0
      %2407 = vmatpush1.bf16.xpose.msra.mxu0 0
      %2408 = vmatprep.subr.bf16.mxu0 0
      %2409 = vmatpush1.bf16.xpose.msra.mxu0 0
      %2410 = vmatprep.subr.bf16.mxu0 0
      %2411 = vmatpush1.bf16.xpose.msra.mxu0 0
      %2412 = vmatprep.subr.bf16.mxu0 0
      %2413 = vmatpush1.bf16.xpose.msra.mxu0 0
      %2414 = vmatprep.subr.bf16.mxu0 0
      %2415 = vmatpush1.bf16.xpose.msra.mxu0 0
      %2416 = vmatprep.subr.bf16.mxu0 0
      %2417 = vmatpush1.bf16.xpose.msra.mxu0 0
      %2418 = vmatprep.subr.bf16.mxu0 0
      %2419 = vmatpush1.bf16.xpose.msra.mxu0 0
      %2420 = vmatprep.subr.bf16.mxu0 0
      %2421 = vmatpush1.bf16.xpose.msra.mxu0 0
      %2422 = vmatprep.subr.bf16.mxu0 0
      %2423 = vmatpush1.bf16.xpose.msra.mxu0 0
      %2424 = vmatprep.subr.bf16.mxu0 0
      %2425 = vmatpush1.bf16.xpose.msra.mxu0 0
      %2426 = vmatprep.subr.bf16.mxu0 0
      %2427 = vmatpush1.bf16.xpose.msra.mxu0 0
      %2428 = vmatprep.mubr.bf16.mxu0 0
      %2429 = vmatmul.mubr.bf16.gmra.mrb[0].mxu0 %v2391
      %v2430 = vpop.f32.mrb[0].mxu0
      %v2431 = vadd.f32 0.0, %v2430
      %v2432 = vpop.f32.mrb[0].mxu0
      %v2433 = vpop.f32.mrb[0].mxu0
      %v2434 = vpop.f32.mrb[0].mxu0
      %2435 = vdwg.mxu0
      %2436 = vrot.lane.b32.xlu0 %v560, 112
      %v2437 = vpop.permute.xlu0 %2436
      %2438 = vrot.lane.b32.xlu0 %v560, 80
      %v2439 = vpop.permute.xlu0 %2438
      %v2441 = vsel %vm569, %v2437, 0
      %v2444 = vsel %vm569, %v2439, 0
      %2446 = vmatprep.subr.bf16.mxu0 0
      %2447 = vmatpush1.bf16.xpose.msra.mxu0 %v2444
      %2448 = vmatprep.subr.bf16.mxu0 0
      %2449 = vmatpush1.bf16.xpose.msra.mxu0 0
      %2450 = vmatprep.subr.bf16.mxu0 0
      %2451 = vmatpush1.bf16.xpose.msra.mxu0 0
      %2452 = vmatprep.subr.bf16.mxu0 0
      %2453 = vmatpush1.bf16.xpose.msra.mxu0 0
      %2454 = vmatprep.subr.bf16.mxu0 0
      %2455 = vmatpush1.bf16.xpose.msra.mxu0 0
      %2456 = vmatprep.subr.bf16.mxu0 0
      %2457 = vmatpush1.bf16.xpose.msra.mxu0 0
      %2458 = vmatprep.subr.bf16.mxu0 0
      %2459 = vmatpush1.bf16.xpose.msra.mxu0 0
      %2460 = vmatprep.subr.bf16.mxu0 0
      %2461 = vmatpush1.bf16.xpose.msra.mxu0 0
      %2462 = vmatprep.subr.bf16.mxu0 0
      %2463 = vmatpush1.bf16.xpose.msra.mxu0 0
      %2464 = vmatprep.subr.bf16.mxu0 0
      %2465 = vmatpush1.bf16.xpose.msra.mxu0 0
      %2466 = vmatprep.subr.bf16.mxu0 0
      %2467 = vmatpush1.bf16.xpose.msra.mxu0 0
      %2468 = vmatprep.subr.bf16.mxu0 0
      %2469 = vmatpush1.bf16.xpose.msra.mxu0 0
      %2470 = vmatprep.subr.bf16.mxu0 0
      %2471 = vmatpush1.bf16.xpose.msra.mxu0 0
      %2472 = vmatprep.subr.bf16.mxu0 0
      %2473 = vmatpush1.bf16.xpose.msra.mxu0 0
      %2474 = vmatprep.subr.bf16.mxu0 0
      %2475 = vmatpush1.bf16.xpose.msra.mxu0 0
      %2476 = vmatprep.subr.bf16.mxu0 0
      %2477 = vmatpush1.bf16.xpose.msra.mxu0 0
      %2478 = vmatprep.mubr.bf16.mxu0 0
      %2479 = vmatmul.mubr.bf16.gmra.mrb[0].mxu0 %v2441
      %v2480 = vpop.f32.mrb[0].mxu0
      %v2481 = vadd.f32 0.0, %v2480
      %v2482 = vpop.f32.mrb[0].mxu0
      %v2483 = vpop.f32.mrb[0].mxu0
      %v2484 = vpop.f32.mrb[0].mxu0
      %2485 = vdwg.mxu0
      %2486 = vrot.lane.b32.xlu0 %v561, 112
      %v2487 = vpop.permute.xlu0 %2486
      %2488 = vrot.lane.b32.xlu0 %v561, 80
      %v2489 = vpop.permute.xlu0 %2488
      %v2491 = vsel %vm569, %v2487, 0
      %v2494 = vsel %vm569, %v2489, 0
      %2496 = vmatprep.subr.bf16.mxu0 0
      %2497 = vmatpush1.bf16.xpose.msra.mxu0 %v2494
      %2498 = vmatprep.subr.bf16.mxu0 0
      %2499 = vmatpush1.bf16.xpose.msra.mxu0 0
      %2500 = vmatprep.subr.bf16.mxu0 0
      %2501 = vmatpush1.bf16.xpose.msra.mxu0 0
      %2502 = vmatprep.subr.bf16.mxu0 0
      %2503 = vmatpush1.bf16.xpose.msra.mxu0 0
      %2504 = vmatprep.subr.bf16.mxu0 0
      %2505 = vmatpush1.bf16.xpose.msra.mxu0 0
      %2506 = vmatprep.subr.bf16.mxu0 0
      %2507 = vmatpush1.bf16.xpose.msra.mxu0 0
      %2508 = vmatprep.subr.bf16.mxu0 0
      %2509 = vmatpush1.bf16.xpose.msra.mxu0 0
      %2510 = vmatprep.subr.bf16.mxu0 0
      %2511 = vmatpush1.bf16.xpose.msra.mxu0 0
      %2512 = vmatprep.subr.bf16.mxu0 0
      %2513 = vmatpush1.bf16.xpose.msra.mxu0 0
      %2514 = vmatprep.subr.bf16.mxu0 0
      %2515 = vmatpush1.bf16.xpose.msra.mxu0 0
      %2516 = vmatprep.subr.bf16.mxu0 0
      %2517 = vmatpush1.bf16.xpose.msra.mxu0 0
      %2518 = vmatprep.subr.bf16.mxu0 0
      %2519 = vmatpush1.bf16.xpose.msra.mxu0 0
      %2520 = vmatprep.subr.bf16.mxu0 0
      %2521 = vmatpush1.bf16.xpose.msra.mxu0 0
      %2522 = vmatprep.subr.bf16.mxu0 0
      %2523 = vmatpush1.bf16.xpose.msra.mxu0 0
      %2524 = vmatprep.subr.bf16.mxu0 0
      %2525 = vmatpush1.bf16.xpose.msra.mxu0 0
      %2526 = vmatprep.subr.bf16.mxu0 0
      %2527 = vmatpush1.bf16.xpose.msra.mxu0 0
      %2528 = vmatprep.mubr.bf16.mxu0 0
      %2529 = vmatmul.mubr.bf16.gmra.mrb[0].mxu0 %v2491
      %v2530 = vpop.f32.mrb[0].mxu0
      %v2531 = vadd.f32 0.0, %v2530
      %v2532 = vpop.f32.mrb[0].mxu0
      %v2533 = vpop.f32.mrb[0].mxu0
      %v2534 = vpop.f32.mrb[0].mxu0
      %2535 = vdwg.mxu0
      %2536 = vrot.lane.b32.xlu0 %v562, 112
      %v2537 = vpop.permute.xlu0 %2536
      %2538 = vrot.lane.b32.xlu0 %v562, 80
      %v2539 = vpop.permute.xlu0 %2538
      %v2541 = vsel %vm569, %v2537, 0
      %v2544 = vsel %vm569, %v2539, 0
      %2546 = vmatprep.subr.bf16.mxu0 0
      %2547 = vmatpush1.bf16.xpose.msra.mxu0 %v2544
      %2548 = vmatprep.subr.bf16.mxu0 0
      %2549 = vmatpush1.bf16.xpose.msra.mxu0 0
      %2550 = vmatprep.subr.bf16.mxu0 0
      %2551 = vmatpush1.bf16.xpose.msra.mxu0 0
      %2552 = vmatprep.subr.bf16.mxu0 0
      %2553 = vmatpush1.bf16.xpose.msra.mxu0 0
      %2554 = vmatprep.subr.bf16.mxu0 0
      %2555 = vmatpush1.bf16.xpose.msra.mxu0 0
      %2556 = vmatprep.subr.bf16.mxu0 0
      %2557 = vmatpush1.bf16.xpose.msra.mxu0 0
      %2558 = vmatprep.subr.bf16.mxu0 0
      %2559 = vmatpush1.bf16.xpose.msra.mxu0 0
      %2560 = vmatprep.subr.bf16.mxu0 0
      %2561 = vmatpush1.bf16.xpose.msra.mxu0 0
      %2562 = vmatprep.subr.bf16.mxu0 0
      %2563 = vmatpush1.bf16.xpose.msra.mxu0 0
      %2564 = vmatprep.subr.bf16.mxu0 0
      %2565 = vmatpush1.bf16.xpose.msra.mxu0 0
      %2566 = vmatprep.subr.bf16.mxu0 0
      %2567 = vmatpush1.bf16.xpose.msra.mxu0 0
      %2568 = vmatprep.subr.bf16.mxu0 0
      %2569 = vmatpush1.bf16.xpose.msra.mxu0 0
      %2570 = vmatprep.subr.bf16.mxu0 0
      %2571 = vmatpush1.bf16.xpose.msra.mxu0 0
      %2572 = vmatprep.subr.bf16.mxu0 0
      %2573 = vmatpush1.bf16.xpose.msra.mxu0 0
      %2574 = vmatprep.subr.bf16.mxu0 0
      %2575 = vmatpush1.bf16.xpose.msra.mxu0 0
      %2576 = vmatprep.subr.bf16.mxu0 0
      %2577 = vmatpush1.bf16.xpose.msra.mxu0 0
      %2578 = vmatprep.mubr.bf16.mxu0 0
      %2579 = vmatmul.mubr.bf16.gmra.mrb[0].mxu0 %v2541
      %v2580 = vpop.f32.mrb[0].mxu0
      %v2581 = vadd.f32 0.0, %v2580
      %v2582 = vpop.f32.mrb[0].mxu0
      %v2583 = vpop.f32.mrb[0].mxu0
      %v2584 = vpop.f32.mrb[0].mxu0
      %2585 = vdwg.mxu0
      %2586 = vrot.lane.b32.xlu0 %v563, 112
      %v2587 = vpop.permute.xlu0 %2586
      %2588 = vrot.lane.b32.xlu0 %v563, 80
      %v2589 = vpop.permute.xlu0 %2588
      %v2591 = vsel %vm569, %v2587, 0
      %v2594 = vsel %vm569, %v2589, 0
      %2596 = vmatprep.subr.bf16.mxu0 0
      %2597 = vmatpush1.bf16.xpose.msra.mxu0 %v2594
      %2598 = vmatprep.subr.bf16.mxu0 0
      %2599 = vmatpush1.bf16.xpose.msra.mxu0 0
      %2600 = vmatprep.subr.bf16.mxu0 0
      %2601 = vmatpush1.bf16.xpose.msra.mxu0 0
      %2602 = vmatprep.subr.bf16.mxu0 0
      %2603 = vmatpush1.bf16.xpose.msra.mxu0 0
      %2604 = vmatprep.subr.bf16.mxu0 0
      %2605 = vmatpush1.bf16.xpose.msra.mxu0 0
      %2606 = vmatprep.subr.bf16.mxu0 0
      %2607 = vmatpush1.bf16.xpose.msra.mxu0 0
      %2608 = vmatprep.subr.bf16.mxu0 0
      %2609 = vmatpush1.bf16.xpose.msra.mxu0 0
      %2610 = vmatprep.subr.bf16.mxu0 0
      %2611 = vmatpush1.bf16.xpose.msra.mxu0 0
      %2612 = vmatprep.subr.bf16.mxu0 0
      %2613 = vmatpush1.bf16.xpose.msra.mxu0 0
      %2614 = vmatprep.subr.bf16.mxu0 0
      %2615 = vmatpush1.bf16.xpose.msra.mxu0 0
      %2616 = vmatprep.subr.bf16.mxu0 0
      %2617 = vmatpush1.bf16.xpose.msra.mxu0 0
      %2618 = vmatprep.subr.bf16.mxu0 0
      %2619 = vmatpush1.bf16.xpose.msra.mxu0 0
      %2620 = vmatprep.subr.bf16.mxu0 0
      %2621 = vmatpush1.bf16.xpose.msra.mxu0 0
      %2622 = vmatprep.subr.bf16.mxu0 0
      %2623 = vmatpush1.bf16.xpose.msra.mxu0 0
      %2624 = vmatprep.subr.bf16.mxu0 0
      %2625 = vmatpush1.bf16.xpose.msra.mxu0 0
      %2626 = vmatprep.subr.bf16.mxu0 0
      %2627 = vmatpush1.bf16.xpose.msra.mxu0 0
      %2628 = vmatprep.mubr.bf16.mxu0 0
      %2629 = vmatmul.mubr.bf16.gmra.mrb[0].mxu0 %v2591
      %v2630 = vpop.f32.mrb[0].mxu0
      %v2631 = vadd.f32 0.0, %v2630
      %v2632 = vpop.f32.mrb[0].mxu0
      %v2633 = vpop.f32.mrb[0].mxu0
      %v2634 = vpop.f32.mrb[0].mxu0
      %2635 = vdwg.mxu0
      %2636 = vrot.lane.b32.xlu0 %v564, 112
      %v2637 = vpop.permute.xlu0 %2636
      %2638 = vrot.lane.b32.xlu0 %v564, 80
      %v2639 = vpop.permute.xlu0 %2638
      %v2641 = vsel %vm569, %v2637, 0
      %v2644 = vsel %vm569, %v2639, 0
      %2646 = vmatprep.subr.bf16.mxu0 0
      %2647 = vmatpush1.bf16.xpose.msra.mxu0 %v2644
      %2648 = vmatprep.subr.bf16.mxu0 0
      %2649 = vmatpush1.bf16.xpose.msra.mxu0 0
      %2650 = vmatprep.subr.bf16.mxu0 0
      %2651 = vmatpush1.bf16.xpose.msra.mxu0 0
      %2652 = vmatprep.subr.bf16.mxu0 0
      %2653 = vmatpush1.bf16.xpose.msra.mxu0 0
      %2654 = vmatprep.subr.bf16.mxu0 0
      %2655 = vmatpush1.bf16.xpose.msra.mxu0 0
      %2656 = vmatprep.subr.bf16.mxu0 0
      %2657 = vmatpush1.bf16.xpose.msra.mxu0 0
      %2658 = vmatprep.subr.bf16.mxu0 0
      %2659 = vmatpush1.bf16.xpose.msra.mxu0 0
      %2660 = vmatprep.subr.bf16.mxu0 0
      %2661 = vmatpush1.bf16.xpose.msra.mxu0 0
      %2662 = vmatprep.subr.bf16.mxu0 0
      %2663 = vmatpush1.bf16.xpose.msra.mxu0 0
      %2664 = vmatprep.subr.bf16.mxu0 0
      %2665 = vmatpush1.bf16.xpose.msra.mxu0 0
      %2666 = vmatprep.subr.bf16.mxu0 0
      %2667 = vmatpush1.bf16.xpose.msra.mxu0 0
      %2668 = vmatprep.subr.bf16.mxu0 0
      %2669 = vmatpush1.bf16.xpose.msra.mxu0 0
      %2670 = vmatprep.subr.bf16.mxu0 0
      %2671 = vmatpush1.bf16.xpose.msra.mxu0 0
      %2672 = vmatprep.subr.bf16.mxu0 0
      %2673 = vmatpush1.bf16.xpose.msra.mxu0 0
      %2674 = vmatprep.subr.bf16.mxu0 0
      %2675 = vmatpush1.bf16.xpose.msra.mxu0 0
      %2676 = vmatprep.subr.bf16.mxu0 0
      %2677 = vmatpush1.bf16.xpose.msra.mxu0 0
      %2678 = vmatprep.mubr.bf16.mxu0 0
      %2679 = vmatmul.mubr.bf16.gmra.mrb[0].mxu0 %v2641
      %v2680 = vpop.f32.mrb[0].mxu0
      %v2681 = vadd.f32 0.0, %v2680
      %v2682 = vpop.f32.mrb[0].mxu0
      %v2683 = vpop.f32.mrb[0].mxu0
      %v2684 = vpop.f32.mrb[0].mxu0
      %2685 = vdwg.mxu0
      %2686 = vrot.lane.b32.xlu0 %v565, 112
      %v2687 = vpop.permute.xlu0 %2686
      %2688 = vrot.lane.b32.xlu0 %v565, 80
      %v2689 = vpop.permute.xlu0 %2688
      %v2691 = vsel %vm569, %v2687, 0
      %v2694 = vsel %vm569, %v2689, 0
      %2696 = vmatprep.subr.bf16.mxu0 0
      %2697 = vmatpush1.bf16.xpose.msra.mxu0 %v2694
      %2698 = vmatprep.subr.bf16.mxu0 0
      %2699 = vmatpush1.bf16.xpose.msra.mxu0 0
      %2700 = vmatprep.subr.bf16.mxu0 0
      %2701 = vmatpush1.bf16.xpose.msra.mxu0 0
      %2702 = vmatprep.subr.bf16.mxu0 0
      %2703 = vmatpush1.bf16.xpose.msra.mxu0 0
      %2704 = vmatprep.subr.bf16.mxu0 0
      %2705 = vmatpush1.bf16.xpose.msra.mxu0 0
      %2706 = vmatprep.subr.bf16.mxu0 0
      %2707 = vmatpush1.bf16.xpose.msra.mxu0 0
      %2708 = vmatprep.subr.bf16.mxu0 0
      %2709 = vmatpush1.bf16.xpose.msra.mxu0 0
      %2710 = vmatprep.subr.bf16.mxu0 0
      %2711 = vmatpush1.bf16.xpose.msra.mxu0 0
      %2712 = vmatprep.subr.bf16.mxu0 0
      %2713 = vmatpush1.bf16.xpose.msra.mxu0 0
      %2714 = vmatprep.subr.bf16.mxu0 0
      %2715 = vmatpush1.bf16.xpose.msra.mxu0 0
      %2716 = vmatprep.subr.bf16.mxu0 0
      %2717 = vmatpush1.bf16.xpose.msra.mxu0 0
      %2718 = vmatprep.subr.bf16.mxu0 0
      %2719 = vmatpush1.bf16.xpose.msra.mxu0 0
      %2720 = vmatprep.subr.bf16.mxu0 0
      %2721 = vmatpush1.bf16.xpose.msra.mxu0 0
      %2722 = vmatprep.subr.bf16.mxu0 0
      %2723 = vmatpush1.bf16.xpose.msra.mxu0 0
      %2724 = vmatprep.subr.bf16.mxu0 0
      %2725 = vmatpush1.bf16.xpose.msra.mxu0 0
      %2726 = vmatprep.subr.bf16.mxu0 0
      %2727 = vmatpush1.bf16.xpose.msra.mxu0 0
      %2728 = vmatprep.mubr.bf16.mxu0 0
      %2729 = vmatmul.mubr.bf16.gmra.mrb[0].mxu0 %v2691
      %v2730 = vpop.f32.mrb[0].mxu0
      %v2731 = vadd.f32 0.0, %v2730
      %v2732 = vpop.f32.mrb[0].mxu0
      %v2733 = vpop.f32.mrb[0].mxu0
      %v2734 = vpop.f32.mrb[0].mxu0
      %2735 = vdwg.mxu0
      %v2736 = vmul.f32 %v2381, 0.35355338
      %v2737 = vmul.f32 %v2431, 0.35355338
      %v2738 = vmul.f32 %v2481, 0.35355338
      %v2739 = vmul.f32 %v2531, 0.35355338
      %v2740 = vmul.f32 %v2581, 0.35355338
      %v2741 = vmul.f32 %v2631, 0.35355338
      %v2742 = vmul.f32 %v2681, 0.35355338
      %v2743 = vmul.f32 %v2731, 0.35355338
      %v2744 = vsel %vm569, %v2736, -inf
      %2745 = vmax.xlane.f32.xlu0 %v2744
      %v2746 = vpop.xlane.xlu0 %2745
      %v2747 = vsel %vm569, %v2737, -inf
      %2748 = vmax.xlane.f32.xlu0 %v2747
      %v2749 = vpop.xlane.xlu0 %2748
      %v2750 = vsel %vm569, %v2738, -inf
      %2751 = vmax.xlane.f32.xlu0 %v2750
      %v2752 = vpop.xlane.xlu0 %2751
      %v2753 = vsel %vm569, %v2739, -inf
      %2754 = vmax.xlane.f32.xlu0 %v2753
      %v2755 = vpop.xlane.xlu0 %2754
      %v2756 = vsel %vm569, %v2740, -inf
      %2757 = vmax.xlane.f32.xlu0 %v2756
      %v2758 = vpop.xlane.xlu0 %2757
      %v2759 = vsel %vm569, %v2741, -inf
      %2760 = vmax.xlane.f32.xlu0 %v2759
      %v2761 = vpop.xlane.xlu0 %2760
      %v2762 = vsel %vm569, %v2742, -inf
      %2763 = vmax.xlane.f32.xlu0 %v2762
      %v2764 = vpop.xlane.xlu0 %2763
      %v2765 = vsel %vm569, %v2743, -inf
      %2766 = vmax.xlane.f32.xlu0 %v2765
      %v2767 = vpop.xlane.xlu0 %2766
      %v2768 = vsub.f32 %v2736, %v2746
      %v2769 = vsub.f32 %v2737, %v2749
      %v2770 = vsub.f32 %v2738, %v2752
      %v2771 = vsub.f32 %v2739, %v2755
      %v2772 = vsub.f32 %v2740, %v2758
      %v2773 = vsub.f32 %v2741, %v2761
      %v2774 = vsub.f32 %v2742, %v2764
      %v2775 = vsub.f32 %v2743, %v2767
      %v2776 = vmul.f32 %v2768, 1.442695
      %v2777 = vpow.pop %v2776
      %v2778 = vmul.f32 %v2769, 1.442695
      %v2779 = vpow.pop %v2778
      %v2780 = vmul.f32 %v2770, 1.442695
      %v2781 = vpow.pop %v2780
      %v2782 = vmul.f32 %v2771, 1.442695
      %v2783 = vpow.pop %v2782
      %v2784 = vmul.f32 %v2772, 1.442695
      %v2785 = vpow.pop %v2784
      %v2786 = vmul.f32 %v2773, 1.442695
      %v2787 = vpow.pop %v2786
      %v2788 = vmul.f32 %v2774, 1.442695
      %v2789 = vpow.pop %v2788
      %v2790 = vmul.f32 %v2775, 1.442695
      %v2791 = vpow.pop %v2790
      %v2792 = vsel %vm569, %v2777, 0.0
      %2793 = vadd.xlane.f32.xlu0 %v2792
      %v2794 = vpop.xlane.xlu0 %2793
      %v2795 = vsel %vm569, %v2779, 0.0
      %2796 = vadd.xlane.f32.xlu0 %v2795
      %v2797 = vpop.xlane.xlu0 %2796
      %v2798 = vsel %vm569, %v2781, 0.0
      %2799 = vadd.xlane.f32.xlu0 %v2798
      %v2800 = vpop.xlane.xlu0 %2799
      %v2801 = vsel %vm569, %v2783, 0.0
      %2802 = vadd.xlane.f32.xlu0 %v2801
      %v2803 = vpop.xlane.xlu0 %2802
      %v2804 = vsel %vm569, %v2785, 0.0
      %2805 = vadd.xlane.f32.xlu0 %v2804
      %v2806 = vpop.xlane.xlu0 %2805
      %v2807 = vsel %vm569, %v2787, 0.0
      %2808 = vadd.xlane.f32.xlu0 %v2807
      %v2809 = vpop.xlane.xlu0 %2808
      %v2810 = vsel %vm569, %v2789, 0.0
      %2811 = vadd.xlane.f32.xlu0 %v2810
      %v2812 = vpop.xlane.xlu0 %2811
      %v2813 = vsel %vm569, %v2791, 0.0
      %2814 = vadd.xlane.f32.xlu0 %v2813
      %v2815 = vpop.xlane.xlu0 %2814
      %v2816 = vrcp.pop %v2794
      %v2817 = vmul.f32 %v2777, %v2816
      %v2818 = vrcp.pop %v2797
      %v2819 = vmul.f32 %v2779, %v2818
      %v2820 = vrcp.pop %v2800
      %v2821 = vmul.f32 %v2781, %v2820
      %v2822 = vrcp.pop %v2803
      %v2823 = vmul.f32 %v2783, %v2822
      %v2824 = vrcp.pop %v2806
      %v2825 = vmul.f32 %v2785, %v2824
      %v2826 = vrcp.pop %v2809
      %v2827 = vmul.f32 %v2787, %v2826
      %v2828 = vrcp.pop %v2812
      %v2829 = vmul.f32 %v2789, %v2828
      %v2830 = vrcp.pop %v2815
      %v2831 = vmul.f32 %v2791, %v2830
      %v2832 = vpack.c.bf16 %v2817, %v2817
      %v2833 = vpack.c.bf16 %v2819, %v2819
      %v2834 = vpack.c.bf16 %v2821, %v2821
      %v2835 = vpack.c.bf16 %v2823, %v2823
      %v2836 = vpack.c.bf16 %v2825, %v2825
      %v2837 = vpack.c.bf16 %v2827, %v2827
      %v2838 = vpack.c.bf16 %v2829, %v2829
      %v2839 = vpack.c.bf16 %v2831, %v2831
      %2840 = vrot.lane.b32.xlu0 %v558, 48
      %v2841 = vpop.permute.xlu0 %2840
      %v2843 = vsel %vm569, %v2832, 0
      %v2846 = vsel %vm1068, %v2841, 0
      %2848 = vmatprep.subr.bf16.mxu0 0
      %2849 = vmatpush1.bf16.msra.mxu0 %v2846
      %2850 = vmatprep.subr.bf16.mxu0 0
      %2851 = vmatpush1.bf16.msra.mxu0 0
      %2852 = vmatprep.subr.bf16.mxu0 0
      %2853 = vmatpush1.bf16.msra.mxu0 0
      %2854 = vmatprep.subr.bf16.mxu0 0
      %2855 = vmatpush1.bf16.msra.mxu0 0
      %2856 = vmatprep.subr.bf16.mxu0 0
      %2857 = vmatpush1.bf16.msra.mxu0 0
      %2858 = vmatprep.subr.bf16.mxu0 0
      %2859 = vmatpush1.bf16.msra.mxu0 0
      %2860 = vmatprep.subr.bf16.mxu0 0
      %2861 = vmatpush1.bf16.msra.mxu0 0
      %2862 = vmatprep.subr.bf16.mxu0 0
      %2863 = vmatpush1.bf16.msra.mxu0 0
      %2864 = vmatprep.subr.bf16.mxu0 0
      %2865 = vmatpush1.bf16.msra.mxu0 0
      %2866 = vmatprep.subr.bf16.mxu0 0
      %2867 = vmatpush1.bf16.msra.mxu0 0
      %2868 = vmatprep.subr.bf16.mxu0 0
      %2869 = vmatpush1.bf16.msra.mxu0 0
      %2870 = vmatprep.subr.bf16.mxu0 0
      %2871 = vmatpush1.bf16.msra.mxu0 0
      %2872 = vmatprep.subr.bf16.mxu0 0
      %2873 = vmatpush1.bf16.msra.mxu0 0
      %2874 = vmatprep.subr.bf16.mxu0 0
      %2875 = vmatpush1.bf16.msra.mxu0 0
      %2876 = vmatprep.subr.bf16.mxu0 0
      %2877 = vmatpush1.bf16.msra.mxu0 0
      %2878 = vmatprep.subr.bf16.mxu0 0
      %2879 = vmatpush1.bf16.msra.mxu0 0
      %2880 = vmatprep.mubr.bf16.mxu0 0
      %2881 = vmatmul.mubr.bf16.gmra.mrb[0].mxu0 %v2843
      %v2882 = vpop.f32.mrb[0].mxu0
      %v2883 = vadd.f32 0.0, %v2882
      %v2884 = vpop.f32.mrb[0].mxu0
      %v2885 = vpop.f32.mrb[0].mxu0
      %v2886 = vpop.f32.mrb[0].mxu0
      %2887 = vdwg.mxu0
      %2888 = vrot.lane.b32.xlu0 %v559, 48
      %v2889 = vpop.permute.xlu0 %2888
      %v2891 = vsel %vm569, %v2833, 0
      %v2894 = vsel %vm1068, %v2889, 0
      %2896 = vmatprep.subr.bf16.mxu0 0
      %2897 = vmatpush1.bf16.msra.mxu0 %v2894
      %2898 = vmatprep.subr.bf16.mxu0 0
      %2899 = vmatpush1.bf16.msra.mxu0 0
      %2900 = vmatprep.subr.bf16.mxu0 0
      %2901 = vmatpush1.bf16.msra.mxu0 0
      %2902 = vmatprep.subr.bf16.mxu0 0
      %2903 = vmatpush1.bf16.msra.mxu0 0
      %2904 = vmatprep.subr.bf16.mxu0 0
      %2905 = vmatpush1.bf16.msra.mxu0 0
      %2906 = vmatprep.subr.bf16.mxu0 0
      %2907 = vmatpush1.bf16.msra.mxu0 0
      %2908 = vmatprep.subr.bf16.mxu0 0
      %2909 = vmatpush1.bf16.msra.mxu0 0
      %2910 = vmatprep.subr.bf16.mxu0 0
      %2911 = vmatpush1.bf16.msra.mxu0 0
      %2912 = vmatprep.subr.bf16.mxu0 0
      %2913 = vmatpush1.bf16.msra.mxu0 0
      %2914 = vmatprep.subr.bf16.mxu0 0
      %2915 = vmatpush1.bf16.msra.mxu0 0
      %2916 = vmatprep.subr.bf16.mxu0 0
      %2917 = vmatpush1.bf16.msra.mxu0 0
      %2918 = vmatprep.subr.bf16.mxu0 0
      %2919 = vmatpush1.bf16.msra.mxu0 0
      %2920 = vmatprep.subr.bf16.mxu0 0
      %2921 = vmatpush1.bf16.msra.mxu0 0
      %2922 = vmatprep.subr.bf16.mxu0 0
      %2923 = vmatpush1.bf16.msra.mxu0 0
      %2924 = vmatprep.subr.bf16.mxu0 0
      %2925 = vmatpush1.bf16.msra.mxu0 0
      %2926 = vmatprep.subr.bf16.mxu0 0
      %2927 = vmatpush1.bf16.msra.mxu0 0
      %2928 = vmatprep.mubr.bf16.mxu0 0
      %2929 = vmatmul.mubr.bf16.gmra.mrb[0].mxu0 %v2891
      %v2930 = vpop.f32.mrb[0].mxu0
      %v2931 = vadd.f32 0.0, %v2930
      %v2932 = vpop.f32.mrb[0].mxu0
      %v2933 = vpop.f32.mrb[0].mxu0
      %v2934 = vpop.f32.mrb[0].mxu0
      %2935 = vdwg.mxu0
      %2936 = vrot.lane.b32.xlu0 %v560, 48
      %v2937 = vpop.permute.xlu0 %2936
      %v2939 = vsel %vm569, %v2834, 0
      %v2942 = vsel %vm1068, %v2937, 0
      %2944 = vmatprep.subr.bf16.mxu0 0
      %2945 = vmatpush1.bf16.msra.mxu0 %v2942
      %2946 = vmatprep.subr.bf16.mxu0 0
      %2947 = vmatpush1.bf16.msra.mxu0 0
      %2948 = vmatprep.subr.bf16.mxu0 0
      %2949 = vmatpush1.bf16.msra.mxu0 0
      %2950 = vmatprep.subr.bf16.mxu0 0
      %2951 = vmatpush1.bf16.msra.mxu0 0
      %2952 = vmatprep.subr.bf16.mxu0 0
      %2953 = vmatpush1.bf16.msra.mxu0 0
      %2954 = vmatprep.subr.bf16.mxu0 0
      %2955 = vmatpush1.bf16.msra.mxu0 0
      %2956 = vmatprep.subr.bf16.mxu0 0
      %2957 = vmatpush1.bf16.msra.mxu0 0
      %2958 = vmatprep.subr.bf16.mxu0 0
      %2959 = vmatpush1.bf16.msra.mxu0 0
      %2960 = vmatprep.subr.bf16.mxu0 0
      %2961 = vmatpush1.bf16.msra.mxu0 0
      %2962 = vmatprep.subr.bf16.mxu0 0
      %2963 = vmatpush1.bf16.msra.mxu0 0
      %2964 = vmatprep.subr.bf16.mxu0 0
      %2965 = vmatpush1.bf16.msra.mxu0 0
      %2966 = vmatprep.subr.bf16.mxu0 0
      %2967 = vmatpush1.bf16.msra.mxu0 0
      %2968 = vmatprep.subr.bf16.mxu0 0
      %2969 = vmatpush1.bf16.msra.mxu0 0
      %2970 = vmatprep.subr.bf16.mxu0 0
      %2971 = vmatpush1.bf16.msra.mxu0 0
      %2972 = vmatprep.subr.bf16.mxu0 0
      %2973 = vmatpush1.bf16.msra.mxu0 0
      %2974 = vmatprep.subr.bf16.mxu0 0
      %2975 = vmatpush1.bf16.msra.mxu0 0
      %2976 = vmatprep.mubr.bf16.mxu0 0
      %2977 = vmatmul.mubr.bf16.gmra.mrb[0].mxu0 %v2939
      %v2978 = vpop.f32.mrb[0].mxu0
      %v2979 = vadd.f32 0.0, %v2978
      %v2980 = vpop.f32.mrb[0].mxu0
      %v2981 = vpop.f32.mrb[0].mxu0
      %v2982 = vpop.f32.mrb[0].mxu0
      %2983 = vdwg.mxu0
      %2984 = vrot.lane.b32.xlu0 %v561, 48
      %v2985 = vpop.permute.xlu0 %2984
      %v2987 = vsel %vm569, %v2835, 0
      %v2990 = vsel %vm1068, %v2985, 0
      %2992 = vmatprep.subr.bf16.mxu0 0
      %2993 = vmatpush1.bf16.msra.mxu0 %v2990
      %2994 = vmatprep.subr.bf16.mxu0 0
      %2995 = vmatpush1.bf16.msra.mxu0 0
      %2996 = vmatprep.subr.bf16.mxu0 0
      %2997 = vmatpush1.bf16.msra.mxu0 0
      %2998 = vmatprep.subr.bf16.mxu0 0
      %2999 = vmatpush1.bf16.msra.mxu0 0
      %3000 = vmatprep.subr.bf16.mxu0 0
      %3001 = vmatpush1.bf16.msra.mxu0 0
      %3002 = vmatprep.subr.bf16.mxu0 0
      %3003 = vmatpush1.bf16.msra.mxu0 0
      %3004 = vmatprep.subr.bf16.mxu0 0
      %3005 = vmatpush1.bf16.msra.mxu0 0
      %3006 = vmatprep.subr.bf16.mxu0 0
      %3007 = vmatpush1.bf16.msra.mxu0 0
      %3008 = vmatprep.subr.bf16.mxu0 0
      %3009 = vmatpush1.bf16.msra.mxu0 0
      %3010 = vmatprep.subr.bf16.mxu0 0
      %3011 = vmatpush1.bf16.msra.mxu0 0
      %3012 = vmatprep.subr.bf16.mxu0 0
      %3013 = vmatpush1.bf16.msra.mxu0 0
      %3014 = vmatprep.subr.bf16.mxu0 0
      %3015 = vmatpush1.bf16.msra.mxu0 0
      %3016 = vmatprep.subr.bf16.mxu0 0
      %3017 = vmatpush1.bf16.msra.mxu0 0
      %3018 = vmatprep.subr.bf16.mxu0 0
      %3019 = vmatpush1.bf16.msra.mxu0 0
      %3020 = vmatprep.subr.bf16.mxu0 0
      %3021 = vmatpush1.bf16.msra.mxu0 0
      %3022 = vmatprep.subr.bf16.mxu0 0
      %3023 = vmatpush1.bf16.msra.mxu0 0
      %3024 = vmatprep.mubr.bf16.mxu0 0
      %3025 = vmatmul.mubr.bf16.gmra.mrb[0].mxu0 %v2987
      %v3026 = vpop.f32.mrb[0].mxu0
      %v3027 = vadd.f32 0.0, %v3026
      %v3028 = vpop.f32.mrb[0].mxu0
      %v3029 = vpop.f32.mrb[0].mxu0
      %v3030 = vpop.f32.mrb[0].mxu0
      %3031 = vdwg.mxu0
      %3032 = vrot.lane.b32.xlu0 %v562, 48
      %v3033 = vpop.permute.xlu0 %3032
      %v3035 = vsel %vm569, %v2836, 0
      %v3038 = vsel %vm1068, %v3033, 0
      %3040 = vmatprep.subr.bf16.mxu0 0
      %3041 = vmatpush1.bf16.msra.mxu0 %v3038
      %3042 = vmatprep.subr.bf16.mxu0 0
      %3043 = vmatpush1.bf16.msra.mxu0 0
      %3044 = vmatprep.subr.bf16.mxu0 0
      %3045 = vmatpush1.bf16.msra.mxu0 0
      %3046 = vmatprep.subr.bf16.mxu0 0
      %3047 = vmatpush1.bf16.msra.mxu0 0
      %3048 = vmatprep.subr.bf16.mxu0 0
      %3049 = vmatpush1.bf16.msra.mxu0 0
      %3050 = vmatprep.subr.bf16.mxu0 0
      %3051 = vmatpush1.bf16.msra.mxu0 0
      %3052 = vmatprep.subr.bf16.mxu0 0
      %3053 = vmatpush1.bf16.msra.mxu0 0
      %3054 = vmatprep.subr.bf16.mxu0 0
      %3055 = vmatpush1.bf16.msra.mxu0 0
      %3056 = vmatprep.subr.bf16.mxu0 0
      %3057 = vmatpush1.bf16.msra.mxu0 0
      %3058 = vmatprep.subr.bf16.mxu0 0
      %3059 = vmatpush1.bf16.msra.mxu0 0
      %3060 = vmatprep.subr.bf16.mxu0 0
      %3061 = vmatpush1.bf16.msra.mxu0 0
      %3062 = vmatprep.subr.bf16.mxu0 0
      %3063 = vmatpush1.bf16.msra.mxu0 0
      %3064 = vmatprep.subr.bf16.mxu0 0
      %3065 = vmatpush1.bf16.msra.mxu0 0
      %3066 = vmatprep.subr.bf16.mxu0 0
      %3067 = vmatpush1.bf16.msra.mxu0 0
      %3068 = vmatprep.subr.bf16.mxu0 0
      %3069 = vmatpush1.bf16.msra.mxu0 0
      %3070 = vmatprep.subr.bf16.mxu0 0
      %3071 = vmatpush1.bf16.msra.mxu0 0
      %3072 = vmatprep.mubr.bf16.mxu0 0
      %3073 = vmatmul.mubr.bf16.gmra.mrb[0].mxu0 %v3035
      %v3074 = vpop.f32.mrb[0].mxu0
      %v3075 = vadd.f32 0.0, %v3074
      %v3076 = vpop.f32.mrb[0].mxu0
      %v3077 = vpop.f32.mrb[0].mxu0
      %v3078 = vpop.f32.mrb[0].mxu0
      %3079 = vdwg.mxu0
      %3080 = vrot.lane.b32.xlu0 %v563, 48
      %v3081 = vpop.permute.xlu0 %3080
      %v3083 = vsel %vm569, %v2837, 0
      %v3086 = vsel %vm1068, %v3081, 0
      %3088 = vmatprep.subr.bf16.mxu0 0
      %3089 = vmatpush1.bf16.msra.mxu0 %v3086
      %3090 = vmatprep.subr.bf16.mxu0 0
      %3091 = vmatpush1.bf16.msra.mxu0 0
      %3092 = vmatprep.subr.bf16.mxu0 0
      %3093 = vmatpush1.bf16.msra.mxu0 0
      %3094 = vmatprep.subr.bf16.mxu0 0
      %3095 = vmatpush1.bf16.msra.mxu0 0
      %3096 = vmatprep.subr.bf16.mxu0 0
      %3097 = vmatpush1.bf16.msra.mxu0 0
      %3098 = vmatprep.subr.bf16.mxu0 0
      %3099 = vmatpush1.bf16.msra.mxu0 0
      %3100 = vmatprep.subr.bf16.mxu0 0
      %3101 = vmatpush1.bf16.msra.mxu0 0
      %3102 = vmatprep.subr.bf16.mxu0 0
      %3103 = vmatpush1.bf16.msra.mxu0 0
      %3104 = vmatprep.subr.bf16.mxu0 0
      %3105 = vmatpush1.bf16.msra.mxu0 0
      %3106 = vmatprep.subr.bf16.mxu0 0
      %3107 = vmatpush1.bf16.msra.mxu0 0
      %3108 = vmatprep.subr.bf16.mxu0 0
      %3109 = vmatpush1.bf16.msra.mxu0 0
      %3110 = vmatprep.subr.bf16.mxu0 0
      %3111 = vmatpush1.bf16.msra.mxu0 0
      %3112 = vmatprep.subr.bf16.mxu0 0
      %3113 = vmatpush1.bf16.msra.mxu0 0
      %3114 = vmatprep.subr.bf16.mxu0 0
      %3115 = vmatpush1.bf16.msra.mxu0 0
      %3116 = vmatprep.subr.bf16.mxu0 0
      %3117 = vmatpush1.bf16.msra.mxu0 0
      %3118 = vmatprep.subr.bf16.mxu0 0
      %3119 = vmatpush1.bf16.msra.mxu0 0
      %3120 = vmatprep.mubr.bf16.mxu0 0
      %3121 = vmatmul.mubr.bf16.gmra.mrb[0].mxu0 %v3083
      %v3122 = vpop.f32.mrb[0].mxu0
      %v3123 = vadd.f32 0.0, %v3122
      %v3124 = vpop.f32.mrb[0].mxu0
      %v3125 = vpop.f32.mrb[0].mxu0
      %v3126 = vpop.f32.mrb[0].mxu0
      %3127 = vdwg.mxu0
      %3128 = vrot.lane.b32.xlu0 %v564, 48
      %v3129 = vpop.permute.xlu0 %3128
      %v3131 = vsel %vm569, %v2838, 0
      %v3134 = vsel %vm1068, %v3129, 0
      %3136 = vmatprep.subr.bf16.mxu0 0
      %3137 = vmatpush1.bf16.msra.mxu0 %v3134
      %3138 = vmatprep.subr.bf16.mxu0 0
      %3139 = vmatpush1.bf16.msra.mxu0 0
      %3140 = vmatprep.subr.bf16.mxu0 0
      %3141 = vmatpush1.bf16.msra.mxu0 0
      %3142 = vmatprep.subr.bf16.mxu0 0
      %3143 = vmatpush1.bf16.msra.mxu0 0
      %3144 = vmatprep.subr.bf16.mxu0 0
      %3145 = vmatpush1.bf16.msra.mxu0 0
      %3146 = vmatprep.subr.bf16.mxu0 0
      %3147 = vmatpush1.bf16.msra.mxu0 0
      %3148 = vmatprep.subr.bf16.mxu0 0
      %3149 = vmatpush1.bf16.msra.mxu0 0
      %3150 = vmatprep.subr.bf16.mxu0 0
      %3151 = vmatpush1.bf16.msra.mxu0 0
      %3152 = vmatprep.subr.bf16.mxu0 0
      %3153 = vmatpush1.bf16.msra.mxu0 0
      %3154 = vmatprep.subr.bf16.mxu0 0
      %3155 = vmatpush1.bf16.msra.mxu0 0
      %3156 = vmatprep.subr.bf16.mxu0 0
      %3157 = vmatpush1.bf16.msra.mxu0 0
      %3158 = vmatprep.subr.bf16.mxu0 0
      %3159 = vmatpush1.bf16.msra.mxu0 0
      %3160 = vmatprep.subr.bf16.mxu0 0
      %3161 = vmatpush1.bf16.msra.mxu0 0
      %3162 = vmatprep.subr.bf16.mxu0 0
      %3163 = vmatpush1.bf16.msra.mxu0 0
      %3164 = vmatprep.subr.bf16.mxu0 0
      %3165 = vmatpush1.bf16.msra.mxu0 0
      %3166 = vmatprep.subr.bf16.mxu0 0
      %3167 = vmatpush1.bf16.msra.mxu0 0
      %3168 = vmatprep.mubr.bf16.mxu0 0
      %3169 = vmatmul.mubr.bf16.gmra.mrb[0].mxu0 %v3131
      %v3170 = vpop.f32.mrb[0].mxu0
      %v3171 = vadd.f32 0.0, %v3170
      %v3172 = vpop.f32.mrb[0].mxu0
      %v3173 = vpop.f32.mrb[0].mxu0
      %v3174 = vpop.f32.mrb[0].mxu0
      %3175 = vdwg.mxu0
      %3176 = vrot.lane.b32.xlu0 %v565, 48
      %v3177 = vpop.permute.xlu0 %3176
      %v3179 = vsel %vm569, %v2839, 0
      %v3182 = vsel %vm1068, %v3177, 0
      %3184 = vmatprep.subr.bf16.mxu0 0
      %3185 = vmatpush1.bf16.msra.mxu0 %v3182
      %3186 = vmatprep.subr.bf16.mxu0 0
      %3187 = vmatpush1.bf16.msra.mxu0 0
      %3188 = vmatprep.subr.bf16.mxu0 0
      %3189 = vmatpush1.bf16.msra.mxu0 0
      %3190 = vmatprep.subr.bf16.mxu0 0
      %3191 = vmatpush1.bf16.msra.mxu0 0
      %3192 = vmatprep.subr.bf16.mxu0 0
      %3193 = vmatpush1.bf16.msra.mxu0 0
      %3194 = vmatprep.subr.bf16.mxu0 0
      %3195 = vmatpush1.bf16.msra.mxu0 0
      %3196 = vmatprep.subr.bf16.mxu0 0
      %3197 = vmatpush1.bf16.msra.mxu0 0
      %3198 = vmatprep.subr.bf16.mxu0 0
      %3199 = vmatpush1.bf16.msra.mxu0 0
      %3200 = vmatprep.subr.bf16.mxu0 0
      %3201 = vmatpush1.bf16.msra.mxu0 0
      %3202 = vmatprep.subr.bf16.mxu0 0
      %3203 = vmatpush1.bf16.msra.mxu0 0
      %3204 = vmatprep.subr.bf16.mxu0 0
      %3205 = vmatpush1.bf16.msra.mxu0 0
      %3206 = vmatprep.subr.bf16.mxu0 0
      %3207 = vmatpush1.bf16.msra.mxu0 0
      %3208 = vmatprep.subr.bf16.mxu0 0
      %3209 = vmatpush1.bf16.msra.mxu0 0
      %3210 = vmatprep.subr.bf16.mxu0 0
      %3211 = vmatpush1.bf16.msra.mxu0 0
      %3212 = vmatprep.subr.bf16.mxu0 0
      %3213 = vmatpush1.bf16.msra.mxu0 0
      %3214 = vmatprep.subr.bf16.mxu0 0
      %3215 = vmatpush1.bf16.msra.mxu0 0
      %3216 = vmatprep.mubr.bf16.mxu0 0
      %3217 = vmatmul.mubr.bf16.gmra.mrb[0].mxu0 %v3179
      %v3218 = vpop.f32.mrb[0].mxu0
      %v3219 = vadd.f32 0.0, %v3218
      %v3220 = vpop.f32.mrb[0].mxu0
      %v3221 = vpop.f32.mrb[0].mxu0
      %v3222 = vpop.f32.mrb[0].mxu0
      %3223 = vdwg.mxu0
      %3224 = vrot.lane.b32.xlu0 %v558, 104
      %v3225 = vpop.permute.xlu0 %3224
      %3226 = vrot.lane.b32.xlu0 %v558, 72
      %v3227 = vpop.permute.xlu0 %3226
      %v3229 = vsel %vm569, %v3225, 0
      %v3232 = vsel %vm569, %v3227, 0
      %3234 = vmatprep.subr.bf16.mxu0 0
      %3235 = vmatpush1.bf16.xpose.msra.mxu0 %v3232
      %3236 = vmatprep.subr.bf16.mxu0 0
      %3237 = vmatpush1.bf16.xpose.msra.mxu0 0
      %3238 = vmatprep.subr.bf16.mxu0 0
      %3239 = vmatpush1.bf16.xpose.msra.mxu0 0
      %3240 = vmatprep.subr.bf16.mxu0 0
      %3241 = vmatpush1.bf16.xpose.msra.mxu0 0
      %3242 = vmatprep.subr.bf16.mxu0 0
      %3243 = vmatpush1.bf16.xpose.msra.mxu0 0
      %3244 = vmatprep.subr.bf16.mxu0 0
      %3245 = vmatpush1.bf16.xpose.msra.mxu0 0
      %3246 = vmatprep.subr.bf16.mxu0 0
      %3247 = vmatpush1.bf16.xpose.msra.mxu0 0
      %3248 = vmatprep.subr.bf16.mxu0 0
      %3249 = vmatpush1.bf16.xpose.msra.mxu0 0
      %3250 = vmatprep.subr.bf16.mxu0 0
      %3251 = vmatpush1.bf16.xpose.msra.mxu0 0
      %3252 = vmatprep.subr.bf16.mxu0 0
      %3253 = vmatpush1.bf16.xpose.msra.mxu0 0
      %3254 = vmatprep.subr.bf16.mxu0 0
      %3255 = vmatpush1.bf16.xpose.msra.mxu0 0
      %3256 = vmatprep.subr.bf16.mxu0 0
      %3257 = vmatpush1.bf16.xpose.msra.mxu0 0
      %3258 = vmatprep.subr.bf16.mxu0 0
      %3259 = vmatpush1.bf16.xpose.msra.mxu0 0
      %3260 = vmatprep.subr.bf16.mxu0 0
      %3261 = vmatpush1.bf16.xpose.msra.mxu0 0
      %3262 = vmatprep.subr.bf16.mxu0 0
      %3263 = vmatpush1.bf16.xpose.msra.mxu0 0
      %3264 = vmatprep.subr.bf16.mxu0 0
      %3265 = vmatpush1.bf16.xpose.msra.mxu0 0
      %3266 = vmatprep.mubr.bf16.mxu0 0
      %3267 = vmatmul.mubr.bf16.gmra.mrb[0].mxu0 %v3229
      %v3268 = vpop.f32.mrb[0].mxu0
      %v3269 = vadd.f32 0.0, %v3268
      %v3270 = vpop.f32.mrb[0].mxu0
      %v3271 = vpop.f32.mrb[0].mxu0
      %v3272 = vpop.f32.mrb[0].mxu0
      %3273 = vdwg.mxu0
      %3274 = vrot.lane.b32.xlu0 %v559, 104
      %v3275 = vpop.permute.xlu0 %3274
      %3276 = vrot.lane.b32.xlu0 %v559, 72
      %v3277 = vpop.permute.xlu0 %3276
      %v3279 = vsel %vm569, %v3275, 0
      %v3282 = vsel %vm569, %v3277, 0
      %3284 = vmatprep.subr.bf16.mxu0 0
      %3285 = vmatpush1.bf16.xpose.msra.mxu0 %v3282
      %3286 = vmatprep.subr.bf16.mxu0 0
      %3287 = vmatpush1.bf16.xpose.msra.mxu0 0
      %3288 = vmatprep.subr.bf16.mxu0 0
      %3289 = vmatpush1.bf16.xpose.msra.mxu0 0
      %3290 = vmatprep.subr.bf16.mxu0 0
      %3291 = vmatpush1.bf16.xpose.msra.mxu0 0
      %3292 = vmatprep.subr.bf16.mxu0 0
      %3293 = vmatpush1.bf16.xpose.msra.mxu0 0
      %3294 = vmatprep.subr.bf16.mxu0 0
      %3295 = vmatpush1.bf16.xpose.msra.mxu0 0
      %3296 = vmatprep.subr.bf16.mxu0 0
      %3297 = vmatpush1.bf16.xpose.msra.mxu0 0
      %3298 = vmatprep.subr.bf16.mxu0 0
      %3299 = vmatpush1.bf16.xpose.msra.mxu0 0
      %3300 = vmatprep.subr.bf16.mxu0 0
      %3301 = vmatpush1.bf16.xpose.msra.mxu0 0
      %3302 = vmatprep.subr.bf16.mxu0 0
      %3303 = vmatpush1.bf16.xpose.msra.mxu0 0
      %3304 = vmatprep.subr.bf16.mxu0 0
      %3305 = vmatpush1.bf16.xpose.msra.mxu0 0
      %3306 = vmatprep.subr.bf16.mxu0 0
      %3307 = vmatpush1.bf16.xpose.msra.mxu0 0
      %3308 = vmatprep.subr.bf16.mxu0 0
      %3309 = vmatpush1.bf16.xpose.msra.mxu0 0
      %3310 = vmatprep.subr.bf16.mxu0 0
      %3311 = vmatpush1.bf16.xpose.msra.mxu0 0
      %3312 = vmatprep.subr.bf16.mxu0 0
      %3313 = vmatpush1.bf16.xpose.msra.mxu0 0
      %3314 = vmatprep.subr.bf16.mxu0 0
      %3315 = vmatpush1.bf16.xpose.msra.mxu0 0
      %3316 = vmatprep.mubr.bf16.mxu0 0
      %3317 = vmatmul.mubr.bf16.gmra.mrb[0].mxu0 %v3279
      %v3318 = vpop.f32.mrb[0].mxu0
      %v3319 = vadd.f32 0.0, %v3318
      %v3320 = vpop.f32.mrb[0].mxu0
      %v3321 = vpop.f32.mrb[0].mxu0
      %v3322 = vpop.f32.mrb[0].mxu0
      %3323 = vdwg.mxu0
      %3324 = vrot.lane.b32.xlu0 %v560, 104
      %v3325 = vpop.permute.xlu0 %3324
      %3326 = vrot.lane.b32.xlu0 %v560, 72
      %v3327 = vpop.permute.xlu0 %3326
      %v3329 = vsel %vm569, %v3325, 0
      %v3332 = vsel %vm569, %v3327, 0
      %3334 = vmatprep.subr.bf16.mxu0 0
      %3335 = vmatpush1.bf16.xpose.msra.mxu0 %v3332
      %3336 = vmatprep.subr.bf16.mxu0 0
      %3337 = vmatpush1.bf16.xpose.msra.mxu0 0
      %3338 = vmatprep.subr.bf16.mxu0 0
      %3339 = vmatpush1.bf16.xpose.msra.mxu0 0
      %3340 = vmatprep.subr.bf16.mxu0 0
      %3341 = vmatpush1.bf16.xpose.msra.mxu0 0
      %3342 = vmatprep.subr.bf16.mxu0 0
      %3343 = vmatpush1.bf16.xpose.msra.mxu0 0
      %3344 = vmatprep.subr.bf16.mxu0 0
      %3345 = vmatpush1.bf16.xpose.msra.mxu0 0
      %3346 = vmatprep.subr.bf16.mxu0 0
      %3347 = vmatpush1.bf16.xpose.msra.mxu0 0
      %3348 = vmatprep.subr.bf16.mxu0 0
      %3349 = vmatpush1.bf16.xpose.msra.mxu0 0
      %3350 = vmatprep.subr.bf16.mxu0 0
      %3351 = vmatpush1.bf16.xpose.msra.mxu0 0
      %3352 = vmatprep.subr.bf16.mxu0 0
      %3353 = vmatpush1.bf16.xpose.msra.mxu0 0
      %3354 = vmatprep.subr.bf16.mxu0 0
      %3355 = vmatpush1.bf16.xpose.msra.mxu0 0
      %3356 = vmatprep.subr.bf16.mxu0 0
      %3357 = vmatpush1.bf16.xpose.msra.mxu0 0
      %3358 = vmatprep.subr.bf16.mxu0 0
      %3359 = vmatpush1.bf16.xpose.msra.mxu0 0
      %3360 = vmatprep.subr.bf16.mxu0 0
      %3361 = vmatpush1.bf16.xpose.msra.mxu0 0
      %3362 = vmatprep.subr.bf16.mxu0 0
      %3363 = vmatpush1.bf16.xpose.msra.mxu0 0
      %3364 = vmatprep.subr.bf16.mxu0 0
      %3365 = vmatpush1.bf16.xpose.msra.mxu0 0
      %3366 = vmatprep.mubr.bf16.mxu0 0
      %3367 = vmatmul.mubr.bf16.gmra.mrb[0].mxu0 %v3329
      %v3368 = vpop.f32.mrb[0].mxu0
      %v3369 = vadd.f32 0.0, %v3368
      %v3370 = vpop.f32.mrb[0].mxu0
      %v3371 = vpop.f32.mrb[0].mxu0
      %v3372 = vpop.f32.mrb[0].mxu0
      %3373 = vdwg.mxu0
      %3374 = vrot.lane.b32.xlu0 %v561, 104
      %v3375 = vpop.permute.xlu0 %3374
      %3376 = vrot.lane.b32.xlu0 %v561, 72
      %v3377 = vpop.permute.xlu0 %3376
      %v3379 = vsel %vm569, %v3375, 0
      %v3382 = vsel %vm569, %v3377, 0
      %3384 = vmatprep.subr.bf16.mxu0 0
      %3385 = vmatpush1.bf16.xpose.msra.mxu0 %v3382
      %3386 = vmatprep.subr.bf16.mxu0 0
      %3387 = vmatpush1.bf16.xpose.msra.mxu0 0
      %3388 = vmatprep.subr.bf16.mxu0 0
      %3389 = vmatpush1.bf16.xpose.msra.mxu0 0
      %3390 = vmatprep.subr.bf16.mxu0 0
      %3391 = vmatpush1.bf16.xpose.msra.mxu0 0
      %3392 = vmatprep.subr.bf16.mxu0 0
      %3393 = vmatpush1.bf16.xpose.msra.mxu0 0
      %3394 = vmatprep.subr.bf16.mxu0 0
      %3395 = vmatpush1.bf16.xpose.msra.mxu0 0
      %3396 = vmatprep.subr.bf16.mxu0 0
      %3397 = vmatpush1.bf16.xpose.msra.mxu0 0
      %3398 = vmatprep.subr.bf16.mxu0 0
      %3399 = vmatpush1.bf16.xpose.msra.mxu0 0
      %3400 = vmatprep.subr.bf16.mxu0 0
      %3401 = vmatpush1.bf16.xpose.msra.mxu0 0
      %3402 = vmatprep.subr.bf16.mxu0 0
      %3403 = vmatpush1.bf16.xpose.msra.mxu0 0
      %3404 = vmatprep.subr.bf16.mxu0 0
      %3405 = vmatpush1.bf16.xpose.msra.mxu0 0
      %3406 = vmatprep.subr.bf16.mxu0 0
      %3407 = vmatpush1.bf16.xpose.msra.mxu0 0
      %3408 = vmatprep.subr.bf16.mxu0 0
      %3409 = vmatpush1.bf16.xpose.msra.mxu0 0
      %3410 = vmatprep.subr.bf16.mxu0 0
      %3411 = vmatpush1.bf16.xpose.msra.mxu0 0
      %3412 = vmatprep.subr.bf16.mxu0 0
      %3413 = vmatpush1.bf16.xpose.msra.mxu0 0
      %3414 = vmatprep.subr.bf16.mxu0 0
      %3415 = vmatpush1.bf16.xpose.msra.mxu0 0
      %3416 = vmatprep.mubr.bf16.mxu0 0
      %3417 = vmatmul.mubr.bf16.gmra.mrb[0].mxu0 %v3379
      %v3418 = vpop.f32.mrb[0].mxu0
      %v3419 = vadd.f32 0.0, %v3418
      %v3420 = vpop.f32.mrb[0].mxu0
      %v3421 = vpop.f32.mrb[0].mxu0
      %v3422 = vpop.f32.mrb[0].mxu0
      %3423 = vdwg.mxu0
      %3424 = vrot.lane.b32.xlu0 %v562, 104
      %v3425 = vpop.permute.xlu0 %3424
      %3426 = vrot.lane.b32.xlu0 %v562, 72
      %v3427 = vpop.permute.xlu0 %3426
      %v3429 = vsel %vm569, %v3425, 0
      %v3432 = vsel %vm569, %v3427, 0
      %3434 = vmatprep.subr.bf16.mxu0 0
      %3435 = vmatpush1.bf16.xpose.msra.mxu0 %v3432
      %3436 = vmatprep.subr.bf16.mxu0 0
      %3437 = vmatpush1.bf16.xpose.msra.mxu0 0
      %3438 = vmatprep.subr.bf16.mxu0 0
      %3439 = vmatpush1.bf16.xpose.msra.mxu0 0
      %3440 = vmatprep.subr.bf16.mxu0 0
      %3441 = vmatpush1.bf16.xpose.msra.mxu0 0
      %3442 = vmatprep.subr.bf16.mxu0 0
      %3443 = vmatpush1.bf16.xpose.msra.mxu0 0
      %3444 = vmatprep.subr.bf16.mxu0 0
      %3445 = vmatpush1.bf16.xpose.msra.mxu0 0
      %3446 = vmatprep.subr.bf16.mxu0 0
      %3447 = vmatpush1.bf16.xpose.msra.mxu0 0
      %3448 = vmatprep.subr.bf16.mxu0 0
      %3449 = vmatpush1.bf16.xpose.msra.mxu0 0
      %3450 = vmatprep.subr.bf16.mxu0 0
      %3451 = vmatpush1.bf16.xpose.msra.mxu0 0
      %3452 = vmatprep.subr.bf16.mxu0 0
      %3453 = vmatpush1.bf16.xpose.msra.mxu0 0
      %3454 = vmatprep.subr.bf16.mxu0 0
      %3455 = vmatpush1.bf16.xpose.msra.mxu0 0
      %3456 = vmatprep.subr.bf16.mxu0 0
      %3457 = vmatpush1.bf16.xpose.msra.mxu0 0
      %3458 = vmatprep.subr.bf16.mxu0 0
      %3459 = vmatpush1.bf16.xpose.msra.mxu0 0
      %3460 = vmatprep.subr.bf16.mxu0 0
      %3461 = vmatpush1.bf16.xpose.msra.mxu0 0
      %3462 = vmatprep.subr.bf16.mxu0 0
      %3463 = vmatpush1.bf16.xpose.msra.mxu0 0
      %3464 = vmatprep.subr.bf16.mxu0 0
      %3465 = vmatpush1.bf16.xpose.msra.mxu0 0
      %3466 = vmatprep.mubr.bf16.mxu0 0
      %3467 = vmatmul.mubr.bf16.gmra.mrb[0].mxu0 %v3429
      %v3468 = vpop.f32.mrb[0].mxu0
      %v3469 = vadd.f32 0.0, %v3468
      %v3470 = vpop.f32.mrb[0].mxu0
      %v3471 = vpop.f32.mrb[0].mxu0
      %v3472 = vpop.f32.mrb[0].mxu0
      %3473 = vdwg.mxu0
      %3474 = vrot.lane.b32.xlu0 %v563, 104
      %v3475 = vpop.permute.xlu0 %3474
      %3476 = vrot.lane.b32.xlu0 %v563, 72
      %v3477 = vpop.permute.xlu0 %3476
      %v3479 = vsel %vm569, %v3475, 0
      %v3482 = vsel %vm569, %v3477, 0
      %3484 = vmatprep.subr.bf16.mxu0 0
      %3485 = vmatpush1.bf16.xpose.msra.mxu0 %v3482
      %3486 = vmatprep.subr.bf16.mxu0 0
      %3487 = vmatpush1.bf16.xpose.msra.mxu0 0
      %3488 = vmatprep.subr.bf16.mxu0 0
      %3489 = vmatpush1.bf16.xpose.msra.mxu0 0
      %3490 = vmatprep.subr.bf16.mxu0 0
      %3491 = vmatpush1.bf16.xpose.msra.mxu0 0
      %3492 = vmatprep.subr.bf16.mxu0 0
      %3493 = vmatpush1.bf16.xpose.msra.mxu0 0
      %3494 = vmatprep.subr.bf16.mxu0 0
      %3495 = vmatpush1.bf16.xpose.msra.mxu0 0
      %3496 = vmatprep.subr.bf16.mxu0 0
      %3497 = vmatpush1.bf16.xpose.msra.mxu0 0
      %3498 = vmatprep.subr.bf16.mxu0 0
      %3499 = vmatpush1.bf16.xpose.msra.mxu0 0
      %3500 = vmatprep.subr.bf16.mxu0 0
      %3501 = vmatpush1.bf16.xpose.msra.mxu0 0
      %3502 = vmatprep.subr.bf16.mxu0 0
      %3503 = vmatpush1.bf16.xpose.msra.mxu0 0
      %3504 = vmatprep.subr.bf16.mxu0 0
      %3505 = vmatpush1.bf16.xpose.msra.mxu0 0
      %3506 = vmatprep.subr.bf16.mxu0 0
      %3507 = vmatpush1.bf16.xpose.msra.mxu0 0
      %3508 = vmatprep.subr.bf16.mxu0 0
      %3509 = vmatpush1.bf16.xpose.msra.mxu0 0
      %3510 = vmatprep.subr.bf16.mxu0 0
      %3511 = vmatpush1.bf16.xpose.msra.mxu0 0
      %3512 = vmatprep.subr.bf16.mxu0 0
      %3513 = vmatpush1.bf16.xpose.msra.mxu0 0
      %3514 = vmatprep.subr.bf16.mxu0 0
      %3515 = vmatpush1.bf16.xpose.msra.mxu0 0
      %3516 = vmatprep.mubr.bf16.mxu0 0
      %3517 = vmatmul.mubr.bf16.gmra.mrb[0].mxu0 %v3479
      %v3518 = vpop.f32.mrb[0].mxu0
      %v3519 = vadd.f32 0.0, %v3518
      %v3520 = vpop.f32.mrb[0].mxu0
      %v3521 = vpop.f32.mrb[0].mxu0
      %v3522 = vpop.f32.mrb[0].mxu0
      %3523 = vdwg.mxu0
      %3524 = vrot.lane.b32.xlu0 %v564, 104
      %v3525 = vpop.permute.xlu0 %3524
      %3526 = vrot.lane.b32.xlu0 %v564, 72
      %v3527 = vpop.permute.xlu0 %3526
      %v3529 = vsel %vm569, %v3525, 0
      %v3532 = vsel %vm569, %v3527, 0
      %3534 = vmatprep.subr.bf16.mxu0 0
      %3535 = vmatpush1.bf16.xpose.msra.mxu0 %v3532
      %3536 = vmatprep.subr.bf16.mxu0 0
      %3537 = vmatpush1.bf16.xpose.msra.mxu0 0
      %3538 = vmatprep.subr.bf16.mxu0 0
      %3539 = vmatpush1.bf16.xpose.msra.mxu0 0
      %3540 = vmatprep.subr.bf16.mxu0 0
      %3541 = vmatpush1.bf16.xpose.msra.mxu0 0
      %3542 = vmatprep.subr.bf16.mxu0 0
      %3543 = vmatpush1.bf16.xpose.msra.mxu0 0
      %3544 = vmatprep.subr.bf16.mxu0 0
      %3545 = vmatpush1.bf16.xpose.msra.mxu0 0
      %3546 = vmatprep.subr.bf16.mxu0 0
      %3547 = vmatpush1.bf16.xpose.msra.mxu0 0
      %3548 = vmatprep.subr.bf16.mxu0 0
      %3549 = vmatpush1.bf16.xpose.msra.mxu0 0
      %3550 = vmatprep.subr.bf16.mxu0 0
      %3551 = vmatpush1.bf16.xpose.msra.mxu0 0
      %3552 = vmatprep.subr.bf16.mxu0 0
      %3553 = vmatpush1.bf16.xpose.msra.mxu0 0
      %3554 = vmatprep.subr.bf16.mxu0 0
      %3555 = vmatpush1.bf16.xpose.msra.mxu0 0
      %3556 = vmatprep.subr.bf16.mxu0 0
      %3557 = vmatpush1.bf16.xpose.msra.mxu0 0
      %3558 = vmatprep.subr.bf16.mxu0 0
      %3559 = vmatpush1.bf16.xpose.msra.mxu0 0
      %3560 = vmatprep.subr.bf16.mxu0 0
      %3561 = vmatpush1.bf16.xpose.msra.mxu0 0
      %3562 = vmatprep.subr.bf16.mxu0 0
      %3563 = vmatpush1.bf16.xpose.msra.mxu0 0
      %3564 = vmatprep.subr.bf16.mxu0 0
      %3565 = vmatpush1.bf16.xpose.msra.mxu0 0
      %3566 = vmatprep.mubr.bf16.mxu0 0
      %3567 = vmatmul.mubr.bf16.gmra.mrb[0].mxu0 %v3529
      %v3568 = vpop.f32.mrb[0].mxu0
      %v3569 = vadd.f32 0.0, %v3568
      %v3570 = vpop.f32.mrb[0].mxu0
      %v3571 = vpop.f32.mrb[0].mxu0
      %v3572 = vpop.f32.mrb[0].mxu0
      %3573 = vdwg.mxu0
      %3574 = vrot.lane.b32.xlu0 %v565, 104
      %v3575 = vpop.permute.xlu0 %3574
      %3576 = vrot.lane.b32.xlu0 %v565, 72
      %v3577 = vpop.permute.xlu0 %3576
      %v3579 = vsel %vm569, %v3575, 0
      %v3582 = vsel %vm569, %v3577, 0
      %3584 = vmatprep.subr.bf16.mxu0 0
      %3585 = vmatpush1.bf16.xpose.msra.mxu0 %v3582
      %3586 = vmatprep.subr.bf16.mxu0 0
      %3587 = vmatpush1.bf16.xpose.msra.mxu0 0
      %3588 = vmatprep.subr.bf16.mxu0 0
      %3589 = vmatpush1.bf16.xpose.msra.mxu0 0
      %3590 = vmatprep.subr.bf16.mxu0 0
      %3591 = vmatpush1.bf16.xpose.msra.mxu0 0
      %3592 = vmatprep.subr.bf16.mxu0 0
      %3593 = vmatpush1.bf16.xpose.msra.mxu0 0
      %3594 = vmatprep.subr.bf16.mxu0 0
      %3595 = vmatpush1.bf16.xpose.msra.mxu0 0
      %3596 = vmatprep.subr.bf16.mxu0 0
      %3597 = vmatpush1.bf16.xpose.msra.mxu0 0
      %3598 = vmatprep.subr.bf16.mxu0 0
      %3599 = vmatpush1.bf16.xpose.msra.mxu0 0
      %3600 = vmatprep.subr.bf16.mxu0 0
      %3601 = vmatpush1.bf16.xpose.msra.mxu0 0
      %3602 = vmatprep.subr.bf16.mxu0 0
      %3603 = vmatpush1.bf16.xpose.msra.mxu0 0
      %3604 = vmatprep.subr.bf16.mxu0 0
      %3605 = vmatpush1.bf16.xpose.msra.mxu0 0
      %3606 = vmatprep.subr.bf16.mxu0 0
      %3607 = vmatpush1.bf16.xpose.msra.mxu0 0
      %3608 = vmatprep.subr.bf16.mxu0 0
      %3609 = vmatpush1.bf16.xpose.msra.mxu0 0
      %3610 = vmatprep.subr.bf16.mxu0 0
      %3611 = vmatpush1.bf16.xpose.msra.mxu0 0
      %3612 = vmatprep.subr.bf16.mxu0 0
      %3613 = vmatpush1.bf16.xpose.msra.mxu0 0
      %3614 = vmatprep.subr.bf16.mxu0 0
      %3615 = vmatpush1.bf16.xpose.msra.mxu0 0
      %3616 = vmatprep.mubr.bf16.mxu0 0
      %3617 = vmatmul.mubr.bf16.gmra.mrb[0].mxu0 %v3579
      %v3618 = vpop.f32.mrb[0].mxu0
      %v3619 = vadd.f32 0.0, %v3618
      %v3620 = vpop.f32.mrb[0].mxu0
      %v3621 = vpop.f32.mrb[0].mxu0
      %v3622 = vpop.f32.mrb[0].mxu0
      %3623 = vdwg.mxu0
      %v3624 = vmul.f32 %v3269, 0.35355338
      %v3625 = vmul.f32 %v3319, 0.35355338
      %v3626 = vmul.f32 %v3369, 0.35355338
      %v3627 = vmul.f32 %v3419, 0.35355338
      %v3628 = vmul.f32 %v3469, 0.35355338
      %v3629 = vmul.f32 %v3519, 0.35355338
      %v3630 = vmul.f32 %v3569, 0.35355338
      %v3631 = vmul.f32 %v3619, 0.35355338
      %v3632 = vsel %vm569, %v3624, -inf
      %3633 = vmax.xlane.f32.xlu0 %v3632
      %v3634 = vpop.xlane.xlu0 %3633
      %v3635 = vsel %vm569, %v3625, -inf
      %3636 = vmax.xlane.f32.xlu0 %v3635
      %v3637 = vpop.xlane.xlu0 %3636
      %v3638 = vsel %vm569, %v3626, -inf
      %3639 = vmax.xlane.f32.xlu0 %v3638
      %v3640 = vpop.xlane.xlu0 %3639
      %v3641 = vsel %vm569, %v3627, -inf
      %3642 = vmax.xlane.f32.xlu0 %v3641
      %v3643 = vpop.xlane.xlu0 %3642
      %v3644 = vsel %vm569, %v3628, -inf
      %3645 = vmax.xlane.f32.xlu0 %v3644
      %v3646 = vpop.xlane.xlu0 %3645
      %v3647 = vsel %vm569, %v3629, -inf
      %3648 = vmax.xlane.f32.xlu0 %v3647
      %v3649 = vpop.xlane.xlu0 %3648
      %v3650 = vsel %vm569, %v3630, -inf
      %3651 = vmax.xlane.f32.xlu0 %v3650
      %v3652 = vpop.xlane.xlu0 %3651
      %v3653 = vsel %vm569, %v3631, -inf
      %3654 = vmax.xlane.f32.xlu0 %v3653
      %v3655 = vpop.xlane.xlu0 %3654
      %v3656 = vsub.f32 %v3624, %v3634
      %v3657 = vsub.f32 %v3625, %v3637
      %v3658 = vsub.f32 %v3626, %v3640
      %v3659 = vsub.f32 %v3627, %v3643
      %v3660 = vsub.f32 %v3628, %v3646
      %v3661 = vsub.f32 %v3629, %v3649
      %v3662 = vsub.f32 %v3630, %v3652
      %v3663 = vsub.f32 %v3631, %v3655
      %v3664 = vmul.f32 %v3656, 1.442695
      %v3665 = vpow.pop %v3664
      %v3666 = vmul.f32 %v3657, 1.442695
      %v3667 = vpow.pop %v3666
      %v3668 = vmul.f32 %v3658, 1.442695
      %v3669 = vpow.pop %v3668
      %v3670 = vmul.f32 %v3659, 1.442695
      %v3671 = vpow.pop %v3670
      %v3672 = vmul.f32 %v3660, 1.442695
      %v3673 = vpow.pop %v3672
      %v3674 = vmul.f32 %v3661, 1.442695
      %v3675 = vpow.pop %v3674
      %v3676 = vmul.f32 %v3662, 1.442695
      %v3677 = vpow.pop %v3676
      %v3678 = vmul.f32 %v3663, 1.442695
      %v3679 = vpow.pop %v3678
      %v3680 = vsel %vm569, %v3665, 0.0
      %3681 = vadd.xlane.f32.xlu0 %v3680
      %v3682 = vpop.xlane.xlu0 %3681
      %v3683 = vsel %vm569, %v3667, 0.0
      %3684 = vadd.xlane.f32.xlu0 %v3683
      %v3685 = vpop.xlane.xlu0 %3684
      %v3686 = vsel %vm569, %v3669, 0.0
      %3687 = vadd.xlane.f32.xlu0 %v3686
      %v3688 = vpop.xlane.xlu0 %3687
      %v3689 = vsel %vm569, %v3671, 0.0
      %3690 = vadd.xlane.f32.xlu0 %v3689
      %v3691 = vpop.xlane.xlu0 %3690
      %v3692 = vsel %vm569, %v3673, 0.0
      %3693 = vadd.xlane.f32.xlu0 %v3692
      %v3694 = vpop.xlane.xlu0 %3693
      %v3695 = vsel %vm569, %v3675, 0.0
      %3696 = vadd.xlane.f32.xlu0 %v3695
      %v3697 = vpop.xlane.xlu0 %3696
      %v3698 = vsel %vm569, %v3677, 0.0
      %3699 = vadd.xlane.f32.xlu0 %v3698
      %v3700 = vpop.xlane.xlu0 %3699
      %v3701 = vsel %vm569, %v3679, 0.0
      %3702 = vadd.xlane.f32.xlu0 %v3701
      %v3703 = vpop.xlane.xlu0 %3702
      %v3704 = vrcp.pop %v3682
      %v3705 = vmul.f32 %v3665, %v3704
      %v3706 = vrcp.pop %v3685
      %v3707 = vmul.f32 %v3667, %v3706
      %v3708 = vrcp.pop %v3688
      %v3709 = vmul.f32 %v3669, %v3708
      %v3710 = vrcp.pop %v3691
      %v3711 = vmul.f32 %v3671, %v3710
      %v3712 = vrcp.pop %v3694
      %v3713 = vmul.f32 %v3673, %v3712
      %v3714 = vrcp.pop %v3697
      %v3715 = vmul.f32 %v3675, %v3714
      %v3716 = vrcp.pop %v3700
      %v3717 = vmul.f32 %v3677, %v3716
      %v3718 = vrcp.pop %v3703
      %v3719 = vmul.f32 %v3679, %v3718
      %v3720 = vpack.c.bf16 %v3705, %v3705
      %v3721 = vpack.c.bf16 %v3707, %v3707
      %v3722 = vpack.c.bf16 %v3709, %v3709
      %v3723 = vpack.c.bf16 %v3711, %v3711
      %v3724 = vpack.c.bf16 %v3713, %v3713
      %v3725 = vpack.c.bf16 %v3715, %v3715
      %v3726 = vpack.c.bf16 %v3717, %v3717
      %v3727 = vpack.c.bf16 %v3719, %v3719
      %3728 = vrot.lane.b32.xlu0 %v558, 40
      %v3729 = vpop.permute.xlu0 %3728
      %v3731 = vsel %vm569, %v3720, 0
      %v3734 = vsel %vm1068, %v3729, 0
      %3736 = vmatprep.subr.bf16.mxu0 0
      %3737 = vmatpush1.bf16.msra.mxu0 %v3734
      %3738 = vmatprep.subr.bf16.mxu0 0
      %3739 = vmatpush1.bf16.msra.mxu0 0
      %3740 = vmatprep.subr.bf16.mxu0 0
      %3741 = vmatpush1.bf16.msra.mxu0 0
      %3742 = vmatprep.subr.bf16.mxu0 0
      %3743 = vmatpush1.bf16.msra.mxu0 0
      %3744 = vmatprep.subr.bf16.mxu0 0
      %3745 = vmatpush1.bf16.msra.mxu0 0
      %3746 = vmatprep.subr.bf16.mxu0 0
      %3747 = vmatpush1.bf16.msra.mxu0 0
      %3748 = vmatprep.subr.bf16.mxu0 0
      %3749 = vmatpush1.bf16.msra.mxu0 0
      %3750 = vmatprep.subr.bf16.mxu0 0
      %3751 = vmatpush1.bf16.msra.mxu0 0
      %3752 = vmatprep.subr.bf16.mxu0 0
      %3753 = vmatpush1.bf16.msra.mxu0 0
      %3754 = vmatprep.subr.bf16.mxu0 0
      %3755 = vmatpush1.bf16.msra.mxu0 0
      %3756 = vmatprep.subr.bf16.mxu0 0
      %3757 = vmatpush1.bf16.msra.mxu0 0
      %3758 = vmatprep.subr.bf16.mxu0 0
      %3759 = vmatpush1.bf16.msra.mxu0 0
      %3760 = vmatprep.subr.bf16.mxu0 0
      %3761 = vmatpush1.bf16.msra.mxu0 0
      %3762 = vmatprep.subr.bf16.mxu0 0
      %3763 = vmatpush1.bf16.msra.mxu0 0
      %3764 = vmatprep.subr.bf16.mxu0 0
      %3765 = vmatpush1.bf16.msra.mxu0 0
      %3766 = vmatprep.subr.bf16.mxu0 0
      %3767 = vmatpush1.bf16.msra.mxu0 0
      %3768 = vmatprep.mubr.bf16.mxu0 0
      %3769 = vmatmul.mubr.bf16.gmra.mrb[0].mxu0 %v3731
      %v3770 = vpop.f32.mrb[0].mxu0
      %v3771 = vadd.f32 0.0, %v3770
      %v3772 = vpop.f32.mrb[0].mxu0
      %v3773 = vpop.f32.mrb[0].mxu0
      %v3774 = vpop.f32.mrb[0].mxu0
      %3775 = vdwg.mxu0
      %3776 = vrot.lane.b32.xlu0 %v559, 40
      %v3777 = vpop.permute.xlu0 %3776
      %v3779 = vsel %vm569, %v3721, 0
      %v3782 = vsel %vm1068, %v3777, 0
      %3784 = vmatprep.subr.bf16.mxu0 0
      %3785 = vmatpush1.bf16.msra.mxu0 %v3782
      %3786 = vmatprep.subr.bf16.mxu0 0
      %3787 = vmatpush1.bf16.msra.mxu0 0
      %3788 = vmatprep.subr.bf16.mxu0 0
      %3789 = vmatpush1.bf16.msra.mxu0 0
      %3790 = vmatprep.subr.bf16.mxu0 0
      %3791 = vmatpush1.bf16.msra.mxu0 0
      %3792 = vmatprep.subr.bf16.mxu0 0
      %3793 = vmatpush1.bf16.msra.mxu0 0
      %3794 = vmatprep.subr.bf16.mxu0 0
      %3795 = vmatpush1.bf16.msra.mxu0 0
      %3796 = vmatprep.subr.bf16.mxu0 0
      %3797 = vmatpush1.bf16.msra.mxu0 0
      %3798 = vmatprep.subr.bf16.mxu0 0
      %3799 = vmatpush1.bf16.msra.mxu0 0
      %3800 = vmatprep.subr.bf16.mxu0 0
      %3801 = vmatpush1.bf16.msra.mxu0 0
      %3802 = vmatprep.subr.bf16.mxu0 0
      %3803 = vmatpush1.bf16.msra.mxu0 0
      %3804 = vmatprep.subr.bf16.mxu0 0
      %3805 = vmatpush1.bf16.msra.mxu0 0
      %3806 = vmatprep.subr.bf16.mxu0 0
      %3807 = vmatpush1.bf16.msra.mxu0 0
      %3808 = vmatprep.subr.bf16.mxu0 0
      %3809 = vmatpush1.bf16.msra.mxu0 0
      %3810 = vmatprep.subr.bf16.mxu0 0
      %3811 = vmatpush1.bf16.msra.mxu0 0
      %3812 = vmatprep.subr.bf16.mxu0 0
      %3813 = vmatpush1.bf16.msra.mxu0 0
      %3814 = vmatprep.subr.bf16.mxu0 0
      %3815 = vmatpush1.bf16.msra.mxu0 0
      %3816 = vmatprep.mubr.bf16.mxu0 0
      %3817 = vmatmul.mubr.bf16.gmra.mrb[0].mxu0 %v3779
      %v3818 = vpop.f32.mrb[0].mxu0
      %v3819 = vadd.f32 0.0, %v3818
      %v3820 = vpop.f32.mrb[0].mxu0
      %v3821 = vpop.f32.mrb[0].mxu0
      %v3822 = vpop.f32.mrb[0].mxu0
      %3823 = vdwg.mxu0
      %3824 = vrot.lane.b32.xlu0 %v560, 40
      %v3825 = vpop.permute.xlu0 %3824
      %v3827 = vsel %vm569, %v3722, 0
      %v3830 = vsel %vm1068, %v3825, 0
      %3832 = vmatprep.subr.bf16.mxu0 0
      %3833 = vmatpush1.bf16.msra.mxu0 %v3830
      %3834 = vmatprep.subr.bf16.mxu0 0
      %3835 = vmatpush1.bf16.msra.mxu0 0
      %3836 = vmatprep.subr.bf16.mxu0 0
      %3837 = vmatpush1.bf16.msra.mxu0 0
      %3838 = vmatprep.subr.bf16.mxu0 0
      %3839 = vmatpush1.bf16.msra.mxu0 0
      %3840 = vmatprep.subr.bf16.mxu0 0
      %3841 = vmatpush1.bf16.msra.mxu0 0
      %3842 = vmatprep.subr.bf16.mxu0 0
      %3843 = vmatpush1.bf16.msra.mxu0 0
      %3844 = vmatprep.subr.bf16.mxu0 0
      %3845 = vmatpush1.bf16.msra.mxu0 0
      %3846 = vmatprep.subr.bf16.mxu0 0
      %3847 = vmatpush1.bf16.msra.mxu0 0
      %3848 = vmatprep.subr.bf16.mxu0 0
      %3849 = vmatpush1.bf16.msra.mxu0 0
      %3850 = vmatprep.subr.bf16.mxu0 0
      %3851 = vmatpush1.bf16.msra.mxu0 0
      %3852 = vmatprep.subr.bf16.mxu0 0
      %3853 = vmatpush1.bf16.msra.mxu0 0
      %3854 = vmatprep.subr.bf16.mxu0 0
      %3855 = vmatpush1.bf16.msra.mxu0 0
      %3856 = vmatprep.subr.bf16.mxu0 0
      %3857 = vmatpush1.bf16.msra.mxu0 0
      %3858 = vmatprep.subr.bf16.mxu0 0
      %3859 = vmatpush1.bf16.msra.mxu0 0
      %3860 = vmatprep.subr.bf16.mxu0 0
      %3861 = vmatpush1.bf16.msra.mxu0 0
      %3862 = vmatprep.subr.bf16.mxu0 0
      %3863 = vmatpush1.bf16.msra.mxu0 0
      %3864 = vmatprep.mubr.bf16.mxu0 0
      %3865 = vmatmul.mubr.bf16.gmra.mrb[0].mxu0 %v3827
      %v3866 = vpop.f32.mrb[0].mxu0
      %v3867 = vadd.f32 0.0, %v3866
      %v3868 = vpop.f32.mrb[0].mxu0
      %v3869 = vpop.f32.mrb[0].mxu0
      %v3870 = vpop.f32.mrb[0].mxu0
      %3871 = vdwg.mxu0
      %3872 = vrot.lane.b32.xlu0 %v561, 40
      %v3873 = vpop.permute.xlu0 %3872
      %v3875 = vsel %vm569, %v3723, 0
      %v3878 = vsel %vm1068, %v3873, 0
      %3880 = vmatprep.subr.bf16.mxu0 0
      %3881 = vmatpush1.bf16.msra.mxu0 %v3878
      %3882 = vmatprep.subr.bf16.mxu0 0
      %3883 = vmatpush1.bf16.msra.mxu0 0
      %3884 = vmatprep.subr.bf16.mxu0 0
      %3885 = vmatpush1.bf16.msra.mxu0 0
      %3886 = vmatprep.subr.bf16.mxu0 0
      %3887 = vmatpush1.bf16.msra.mxu0 0
      %3888 = vmatprep.subr.bf16.mxu0 0
      %3889 = vmatpush1.bf16.msra.mxu0 0
      %3890 = vmatprep.subr.bf16.mxu0 0
      %3891 = vmatpush1.bf16.msra.mxu0 0
      %3892 = vmatprep.subr.bf16.mxu0 0
      %3893 = vmatpush1.bf16.msra.mxu0 0
      %3894 = vmatprep.subr.bf16.mxu0 0
      %3895 = vmatpush1.bf16.msra.mxu0 0
      %3896 = vmatprep.subr.bf16.mxu0 0
      %3897 = vmatpush1.bf16.msra.mxu0 0
      %3898 = vmatprep.subr.bf16.mxu0 0
      %3899 = vmatpush1.bf16.msra.mxu0 0
      %3900 = vmatprep.subr.bf16.mxu0 0
      %3901 = vmatpush1.bf16.msra.mxu0 0
      %3902 = vmatprep.subr.bf16.mxu0 0
      %3903 = vmatpush1.bf16.msra.mxu0 0
      %3904 = vmatprep.subr.bf16.mxu0 0
      %3905 = vmatpush1.bf16.msra.mxu0 0
      %3906 = vmatprep.subr.bf16.mxu0 0
      %3907 = vmatpush1.bf16.msra.mxu0 0
      %3908 = vmatprep.subr.bf16.mxu0 0
      %3909 = vmatpush1.bf16.msra.mxu0 0
      %3910 = vmatprep.subr.bf16.mxu0 0
      %3911 = vmatpush1.bf16.msra.mxu0 0
      %3912 = vmatprep.mubr.bf16.mxu0 0
      %3913 = vmatmul.mubr.bf16.gmra.mrb[0].mxu0 %v3875
      %v3914 = vpop.f32.mrb[0].mxu0
      %v3915 = vadd.f32 0.0, %v3914
      %v3916 = vpop.f32.mrb[0].mxu0
      %v3917 = vpop.f32.mrb[0].mxu0
      %v3918 = vpop.f32.mrb[0].mxu0
      %3919 = vdwg.mxu0
      %3920 = vrot.lane.b32.xlu0 %v562, 40
      %v3921 = vpop.permute.xlu0 %3920
      %v3923 = vsel %vm569, %v3724, 0
      %v3926 = vsel %vm1068, %v3921, 0
      %3928 = vmatprep.subr.bf16.mxu0 0
      %3929 = vmatpush1.bf16.msra.mxu0 %v3926
      %3930 = vmatprep.subr.bf16.mxu0 0
      %3931 = vmatpush1.bf16.msra.mxu0 0
      %3932 = vmatprep.subr.bf16.mxu0 0
      %3933 = vmatpush1.bf16.msra.mxu0 0
      %3934 = vmatprep.subr.bf16.mxu0 0
      %3935 = vmatpush1.bf16.msra.mxu0 0
      %3936 = vmatprep.subr.bf16.mxu0 0
      %3937 = vmatpush1.bf16.msra.mxu0 0
      %3938 = vmatprep.subr.bf16.mxu0 0
      %3939 = vmatpush1.bf16.msra.mxu0 0
      %3940 = vmatprep.subr.bf16.mxu0 0
      %3941 = vmatpush1.bf16.msra.mxu0 0
      %3942 = vmatprep.subr.bf16.mxu0 0
      %3943 = vmatpush1.bf16.msra.mxu0 0
      %3944 = vmatprep.subr.bf16.mxu0 0
      %3945 = vmatpush1.bf16.msra.mxu0 0
      %3946 = vmatprep.subr.bf16.mxu0 0
      %3947 = vmatpush1.bf16.msra.mxu0 0
      %3948 = vmatprep.subr.bf16.mxu0 0
      %3949 = vmatpush1.bf16.msra.mxu0 0
      %3950 = vmatprep.subr.bf16.mxu0 0
      %3951 = vmatpush1.bf16.msra.mxu0 0
      %3952 = vmatprep.subr.bf16.mxu0 0
      %3953 = vmatpush1.bf16.msra.mxu0 0
      %3954 = vmatprep.subr.bf16.mxu0 0
      %3955 = vmatpush1.bf16.msra.mxu0 0
      %3956 = vmatprep.subr.bf16.mxu0 0
      %3957 = vmatpush1.bf16.msra.mxu0 0
      %3958 = vmatprep.subr.bf16.mxu0 0
      %3959 = vmatpush1.bf16.msra.mxu0 0
      %3960 = vmatprep.mubr.bf16.mxu0 0
      %3961 = vmatmul.mubr.bf16.gmra.mrb[0].mxu0 %v3923
      %v3962 = vpop.f32.mrb[0].mxu0
      %v3963 = vadd.f32 0.0, %v3962
      %v3964 = vpop.f32.mrb[0].mxu0
      %v3965 = vpop.f32.mrb[0].mxu0
      %v3966 = vpop.f32.mrb[0].mxu0
      %3967 = vdwg.mxu0
      %3968 = vrot.lane.b32.xlu0 %v563, 40
      %v3969 = vpop.permute.xlu0 %3968
      %v3971 = vsel %vm569, %v3725, 0
      %v3974 = vsel %vm1068, %v3969, 0
      %3976 = vmatprep.subr.bf16.mxu0 0
      %3977 = vmatpush1.bf16.msra.mxu0 %v3974
      %3978 = vmatprep.subr.bf16.mxu0 0
      %3979 = vmatpush1.bf16.msra.mxu0 0
      %3980 = vmatprep.subr.bf16.mxu0 0
      %3981 = vmatpush1.bf16.msra.mxu0 0
      %3982 = vmatprep.subr.bf16.mxu0 0
      %3983 = vmatpush1.bf16.msra.mxu0 0
      %3984 = vmatprep.subr.bf16.mxu0 0
      %3985 = vmatpush1.bf16.msra.mxu0 0
      %3986 = vmatprep.subr.bf16.mxu0 0
      %3987 = vmatpush1.bf16.msra.mxu0 0
      %3988 = vmatprep.subr.bf16.mxu0 0
      %3989 = vmatpush1.bf16.msra.mxu0 0
      %3990 = vmatprep.subr.bf16.mxu0 0
      %3991 = vmatpush1.bf16.msra.mxu0 0
      %3992 = vmatprep.subr.bf16.mxu0 0
      %3993 = vmatpush1.bf16.msra.mxu0 0
      %3994 = vmatprep.subr.bf16.mxu0 0
      %3995 = vmatpush1.bf16.msra.mxu0 0
      %3996 = vmatprep.subr.bf16.mxu0 0
      %3997 = vmatpush1.bf16.msra.mxu0 0
      %3998 = vmatprep.subr.bf16.mxu0 0
      %3999 = vmatpush1.bf16.msra.mxu0 0
      %4000 = vmatprep.subr.bf16.mxu0 0
      %4001 = vmatpush1.bf16.msra.mxu0 0
      %4002 = vmatprep.subr.bf16.mxu0 0
      %4003 = vmatpush1.bf16.msra.mxu0 0
      %4004 = vmatprep.subr.bf16.mxu0 0
      %4005 = vmatpush1.bf16.msra.mxu0 0
      %4006 = vmatprep.subr.bf16.mxu0 0
      %4007 = vmatpush1.bf16.msra.mxu0 0
      %4008 = vmatprep.mubr.bf16.mxu0 0
      %4009 = vmatmul.mubr.bf16.gmra.mrb[0].mxu0 %v3971
      %v4010 = vpop.f32.mrb[0].mxu0
      %v4011 = vadd.f32 0.0, %v4010
      %v4012 = vpop.f32.mrb[0].mxu0
      %v4013 = vpop.f32.mrb[0].mxu0
      %v4014 = vpop.f32.mrb[0].mxu0
      %4015 = vdwg.mxu0
      %4016 = vrot.lane.b32.xlu0 %v564, 40
      %v4017 = vpop.permute.xlu0 %4016
      %v4019 = vsel %vm569, %v3726, 0
      %v4022 = vsel %vm1068, %v4017, 0
      %4024 = vmatprep.subr.bf16.mxu0 0
      %4025 = vmatpush1.bf16.msra.mxu0 %v4022
      %4026 = vmatprep.subr.bf16.mxu0 0
      %4027 = vmatpush1.bf16.msra.mxu0 0
      %4028 = vmatprep.subr.bf16.mxu0 0
      %4029 = vmatpush1.bf16.msra.mxu0 0
      %4030 = vmatprep.subr.bf16.mxu0 0
      %4031 = vmatpush1.bf16.msra.mxu0 0
      %4032 = vmatprep.subr.bf16.mxu0 0
      %4033 = vmatpush1.bf16.msra.mxu0 0
      %4034 = vmatprep.subr.bf16.mxu0 0
      %4035 = vmatpush1.bf16.msra.mxu0 0
      %4036 = vmatprep.subr.bf16.mxu0 0
      %4037 = vmatpush1.bf16.msra.mxu0 0
      %4038 = vmatprep.subr.bf16.mxu0 0
      %4039 = vmatpush1.bf16.msra.mxu0 0
      %4040 = vmatprep.subr.bf16.mxu0 0
      %4041 = vmatpush1.bf16.msra.mxu0 0
      %4042 = vmatprep.subr.bf16.mxu0 0
      %4043 = vmatpush1.bf16.msra.mxu0 0
      %4044 = vmatprep.subr.bf16.mxu0 0
      %4045 = vmatpush1.bf16.msra.mxu0 0
      %4046 = vmatprep.subr.bf16.mxu0 0
      %4047 = vmatpush1.bf16.msra.mxu0 0
      %4048 = vmatprep.subr.bf16.mxu0 0
      %4049 = vmatpush1.bf16.msra.mxu0 0
      %4050 = vmatprep.subr.bf16.mxu0 0
      %4051 = vmatpush1.bf16.msra.mxu0 0
      %4052 = vmatprep.subr.bf16.mxu0 0
      %4053 = vmatpush1.bf16.msra.mxu0 0
      %4054 = vmatprep.subr.bf16.mxu0 0
      %4055 = vmatpush1.bf16.msra.mxu0 0
      %4056 = vmatprep.mubr.bf16.mxu0 0
      %4057 = vmatmul.mubr.bf16.gmra.mrb[0].mxu0 %v4019
      %v4058 = vpop.f32.mrb[0].mxu0
      %v4059 = vadd.f32 0.0, %v4058
      %v4060 = vpop.f32.mrb[0].mxu0
      %v4061 = vpop.f32.mrb[0].mxu0
      %v4062 = vpop.f32.mrb[0].mxu0
      %4063 = vdwg.mxu0
      %4064 = vrot.lane.b32.xlu0 %v565, 40
      %v4065 = vpop.permute.xlu0 %4064
      %v4067 = vsel %vm569, %v3727, 0
      %v4070 = vsel %vm1068, %v4065, 0
      %4072 = vmatprep.subr.bf16.mxu0 0
      %4073 = vmatpush1.bf16.msra.mxu0 %v4070
      %4074 = vmatprep.subr.bf16.mxu0 0
      %4075 = vmatpush1.bf16.msra.mxu0 0
      %4076 = vmatprep.subr.bf16.mxu0 0
      %4077 = vmatpush1.bf16.msra.mxu0 0
      %4078 = vmatprep.subr.bf16.mxu0 0
      %4079 = vmatpush1.bf16.msra.mxu0 0
      %4080 = vmatprep.subr.bf16.mxu0 0
      %4081 = vmatpush1.bf16.msra.mxu0 0
      %4082 = vmatprep.subr.bf16.mxu0 0
      %4083 = vmatpush1.bf16.msra.mxu0 0
      %4084 = vmatprep.subr.bf16.mxu0 0
      %4085 = vmatpush1.bf16.msra.mxu0 0
      %4086 = vmatprep.subr.bf16.mxu0 0
      %4087 = vmatpush1.bf16.msra.mxu0 0
      %4088 = vmatprep.subr.bf16.mxu0 0
      %4089 = vmatpush1.bf16.msra.mxu0 0
      %4090 = vmatprep.subr.bf16.mxu0 0
      %4091 = vmatpush1.bf16.msra.mxu0 0
      %4092 = vmatprep.subr.bf16.mxu0 0
      %4093 = vmatpush1.bf16.msra.mxu0 0
      %4094 = vmatprep.subr.bf16.mxu0 0
      %4095 = vmatpush1.bf16.msra.mxu0 0
      %4096 = vmatprep.subr.bf16.mxu0 0
      %4097 = vmatpush1.bf16.msra.mxu0 0
      %4098 = vmatprep.subr.bf16.mxu0 0
      %4099 = vmatpush1.bf16.msra.mxu0 0
      %4100 = vmatprep.subr.bf16.mxu0 0
      %4101 = vmatpush1.bf16.msra.mxu0 0
      %4102 = vmatprep.subr.bf16.mxu0 0
      %4103 = vmatpush1.bf16.msra.mxu0 0
      %4104 = vmatprep.mubr.bf16.mxu0 0
      %4105 = vmatmul.mubr.bf16.gmra.mrb[0].mxu0 %v4067
      %v4106 = vpop.f32.mrb[0].mxu0
      %v4107 = vadd.f32 0.0, %v4106
      %v4108 = vpop.f32.mrb[0].mxu0
      %v4109 = vpop.f32.mrb[0].mxu0
      %v4110 = vpop.f32.mrb[0].mxu0
      %4111 = vdwg.mxu0
      %4120 = vrot.lane.b32.xlu0 %v1995, 8
      %v4121 = vpop.permute.xlu0 %4120
      %4122 = vrot.lane.b32.xlu0 %v2043, 8
      %v4123 = vpop.permute.xlu0 %4122
      %4124 = vrot.lane.b32.xlu0 %v2091, 8
      %v4125 = vpop.permute.xlu0 %4124
      %4126 = vrot.lane.b32.xlu0 %v2139, 8
      %v4127 = vpop.permute.xlu0 %4126
      %4128 = vrot.lane.b32.xlu0 %v2187, 8
      %v4129 = vpop.permute.xlu0 %4128
      %4130 = vrot.lane.b32.xlu0 %v2235, 8
      %v4131 = vpop.permute.xlu0 %4130
      %4132 = vrot.lane.b32.xlu0 %v2283, 8
      %v4133 = vpop.permute.xlu0 %4132
      %4134 = vrot.lane.b32.xlu0 %v2331, 8
      %v4135 = vpop.permute.xlu0 %4134
      %4152 = vrot.lane.b32.xlu0 %v2883, 16
      %v4153 = vpop.permute.xlu0 %4152
      %4154 = vrot.lane.b32.xlu0 %v2931, 16
      %v4155 = vpop.permute.xlu0 %4154
      %4156 = vrot.lane.b32.xlu0 %v2979, 16
      %v4157 = vpop.permute.xlu0 %4156
      %4158 = vrot.lane.b32.xlu0 %v3027, 16
      %v4159 = vpop.permute.xlu0 %4158
      %4160 = vrot.lane.b32.xlu0 %v3075, 16
      %v4161 = vpop.permute.xlu0 %4160
      %4162 = vrot.lane.b32.xlu0 %v3123, 16
      %v4163 = vpop.permute.xlu0 %4162
      %4164 = vrot.lane.b32.xlu0 %v3171, 16
      %v4165 = vpop.permute.xlu0 %4164
      %4166 = vrot.lane.b32.xlu0 %v3219, 16
      %v4167 = vpop.permute.xlu0 %4166
      %4184 = vrot.lane.b32.xlu0 %v3771, 24
      %v4185 = vpop.permute.xlu0 %4184
      %4186 = vrot.lane.b32.xlu0 %v3819, 24
      %v4187 = vpop.permute.xlu0 %4186
      %4188 = vrot.lane.b32.xlu0 %v3867, 24
      %v4189 = vpop.permute.xlu0 %4188
      %4190 = vrot.lane.b32.xlu0 %v3915, 24
      %v4191 = vpop.permute.xlu0 %4190
      %4192 = vrot.lane.b32.xlu0 %v3963, 24
      %v4193 = vpop.permute.xlu0 %4192
      %4194 = vrot.lane.b32.xlu0 %v4011, 24
      %v4195 = vpop.permute.xlu0 %4194
      %4196 = vrot.lane.b32.xlu0 %v4059, 24
      %v4197 = vpop.permute.xlu0 %4196
      %4198 = vrot.lane.b32.xlu0 %v4107, 24
      %v4199 = vpop.permute.xlu0 %4198
      %v4208 = vsel %vm569, %v1107, %v4121
      %v4209 = vsel %vm569, %v1155, %v4123
      %v4210 = vsel %vm569, %v1203, %v4125
      %v4211 = vsel %vm569, %v1251, %v4127
      %v4212 = vsel %vm569, %v1299, %v4129
      %v4213 = vsel %vm569, %v1347, %v4131
      %v4214 = vsel %vm569, %v1395, %v4133
      %v4215 = vsel %vm569, %v1443, %v4135
      %vm4216 = vcmask 130048
      %v4217 = vsel %vm4216, %v4208, %v4153
      %v4218 = vsel %vm4216, %v4209, %v4155
      %v4219 = vsel %vm4216, %v4210, %v4157
      %v4220 = vsel %vm4216, %v4211, %v4159
      %v4221 = vsel %vm4216, %v4212, %v4161
      %v4222 = vsel %vm4216, %v4213, %v4163
      %v4223 = vsel %vm4216, %v4214, %v4165
      %v4224 = vsel %vm4216, %v4215, %v4167
      %vm4225 = vcmask 195584
      %v4226 = vsel %vm4225, %v4217, %v4185
      %v4227 = vsel %vm4225, %v4218, %v4187
      %v4228 = vsel %vm4225, %v4219, %v4189
      %v4229 = vsel %vm4225, %v4220, %v4191
      %v4230 = vsel %vm4225, %v4221, %v4193
      %v4231 = vsel %vm4225, %v4222, %v4195
      %v4232 = vsel %vm4225, %v4223, %v4197
      %v4233 = vsel %vm4225, %v4224, %v4199
      %v4234 = vpack.c.bf16 %v4227, %v4226
      %v4235 = vpack.c.bf16 %v4229, %v4228
      %v4236 = vpack.c.bf16 %v4231, %v4230
      %v4237 = vpack.c.bf16 %v4233, %v4232
      %v4238 = vld [vmem:[%s3] sm:$0xf]
      %v4239 = vld [vmem:[%s3 + $0x4] sm:$0xf]
      %v4240 = vld [vmem:[%s3 + $0x8] sm:$0xf]
      %v4241 = vld [vmem:[%s3 + $0xc] sm:$0xf]
      %v4242 = vld [vmem:[%s4] sm:$0x1]
      %v4244 = vlaneseq
      %v4245 = vshrl.u32 %v4244, 7
      %v4246 = vsub.s32 0, %v4245
      %v4247 = vrot.slane %v4242, %v4246
      %v4253 = vunpack.c.l.b16 %v4238
      %v4254 = vunpack.c.l.b16 %v4239
      %v4255 = vunpack.c.l.b16 %v4240
      %v4256 = vunpack.c.l.b16 %v4241
      %v4257 = vpack.c.b16 %v4254, %v4253
      %v4258 = vpack.c.b16 %v4256, %v4255
      %v4262 = vsel %vm480, %v4234, 0
      %v4265 = vsel %vm480, %v4235, 0
      %v4268 = vsel %vm480, %v4236, 0
      %v4271 = vsel %vm480, %v4237, 0
      %4273 = vmatprep.subr.bf16.mxu0 0
      %4274 = vmatpush1.bf16.msra.mxu0 %v4257
      %4275 = vmatprep.subr.bf16.mxu0 0
      %4276 = vmatpush1.bf16.msra.mxu0 %v4258
      %4277 = vmatprep.subr.bf16.mxu0 0
      %4278 = vmatpush1.bf16.msra.mxu0 0
      %4279 = vmatprep.subr.bf16.mxu0 0
      %4280 = vmatpush1.bf16.msra.mxu0 0
      %4281 = vmatprep.subr.bf16.mxu0 0
      %4282 = vmatpush1.bf16.msra.mxu0 0
      %4283 = vmatprep.subr.bf16.mxu0 0
      %4284 = vmatpush1.bf16.msra.mxu0 0
      %4285 = vmatprep.subr.bf16.mxu0 0
      %4286 = vmatpush1.bf16.msra.mxu0 0
      %4287 = vmatprep.subr.bf16.mxu0 0
      %4288 = vmatpush1.bf16.msra.mxu0 0
      %4289 = vmatprep.subr.bf16.mxu0 0
      %4290 = vmatpush1.bf16.msra.mxu0 0
      %4291 = vmatprep.subr.bf16.mxu0 0
      %4292 = vmatpush1.bf16.msra.mxu0 0
      %4293 = vmatprep.subr.bf16.mxu0 0
      %4294 = vmatpush1.bf16.msra.mxu0 0
      %4295 = vmatprep.subr.bf16.mxu0 0
      %4296 = vmatpush1.bf16.msra.mxu0 0
      %4297 = vmatprep.subr.bf16.mxu0 0
      %4298 = vmatpush1.bf16.msra.mxu0 0
      %4299 = vmatprep.subr.bf16.mxu0 0
      %4300 = vmatpush1.bf16.msra.mxu0 0
      %4301 = vmatprep.subr.bf16.mxu0 0
      %4302 = vmatpush1.bf16.msra.mxu0 0
      %4303 = vmatprep.subr.bf16.mxu0 0
      %4304 = vmatpush1.bf16.msra.mxu0 0
      %4305 = vmatprep.mubr.bf16.mxu0 0
      %4306 = vmatmul.mubr.bf16.gmra.mrb[0].mxu0 %v4262
      %v4307 = vpop.f32.mrb[0].mxu0
      %v4308 = vadd.f32 %v4247, %v4307
      %v4309 = vpop.f32.mrb[0].mxu0
      %v4310 = vpop.f32.mrb[0].mxu0
      %v4311 = vadd.f32 %v4247, %v4310
      %v4312 = vpop.f32.mrb[0].mxu0
      %4313 = vmatprep.mubr.bf16.mxu0 0
      %4314 = vmatmul.mubr.bf16.gmra.mrb[0].mxu0 %v4265
      %v4315 = vpop.f32.mrb[0].mxu0
      %v4316 = vadd.f32 %v4247, %v4315
      %v4317 = vpop.f32.mrb[0].mxu0
      %v4318 = vpop.f32.mrb[0].mxu0
      %v4319 = vadd.f32 %v4247, %v4318
      %v4320 = vpop.f32.mrb[0].mxu0
      %4321 = vmatprep.mubr.bf16.mxu0 0
      %4322 = vmatmul.mubr.bf16.gmra.mrb[0].mxu0 %v4268
      %v4323 = vpop.f32.mrb[0].mxu0
      %v4324 = vadd.f32 %v4247, %v4323
      %v4325 = vpop.f32.mrb[0].mxu0
      %v4326 = vpop.f32.mrb[0].mxu0
      %v4327 = vadd.f32 %v4247, %v4326
      %v4328 = vpop.f32.mrb[0].mxu0
      %4329 = vmatprep.mubr.bf16.mxu0 0
      %4330 = vmatmul.mubr.bf16.gmra.mrb[0].mxu0 %v4271
      %v4331 = vpop.f32.mrb[0].mxu0
      %v4332 = vadd.f32 %v4247, %v4331
      %v4333 = vpop.f32.mrb[0].mxu0
      %v4334 = vpop.f32.mrb[0].mxu0
      %v4335 = vadd.f32 %v4247, %v4334
      %v4336 = vpop.f32.mrb[0].mxu0
      %4337 = vdwg.mxu0
      %v4338 = vadd.f32 %v445, %v4308
      %v4339 = vadd.f32 %v446, %v4311
      %v4340 = vadd.f32 %v447, %v4316
      %v4341 = vadd.f32 %v448, %v4319
      %v4342 = vadd.f32 %v449, %v4324
      %v4343 = vadd.f32 %v450, %v4327
      %v4344 = vadd.f32 %v451, %v4332
      %v4345 = vadd.f32 %v452, %v4335
      %v4346 = vld [vmem:[%s5] sm:$0x1]
      %v4347 = vld [vmem:[%s6] sm:$0x1]
      %v4348 = vsel %vm480, %v4338, 0.0
      %4349 = vadd.xlane.f32.xlu0 %v4348
      %v4350 = vpop.xlane.xlu0 %4349
      %v4351 = vsel %vm480, %v4339, 0.0
      %4352 = vadd.xlane.f32.xlu0 %v4351
      %v4353 = vpop.xlane.xlu0 %4352
      %v4354 = vsel %vm480, %v4340, 0.0
      %4355 = vadd.xlane.f32.xlu0 %v4354
      %v4356 = vpop.xlane.xlu0 %4355
      %v4357 = vsel %vm480, %v4341, 0.0
      %4358 = vadd.xlane.f32.xlu0 %v4357
      %v4359 = vpop.xlane.xlu0 %4358
      %v4360 = vsel %vm480, %v4342, 0.0
      %4361 = vadd.xlane.f32.xlu0 %v4360
      %v4362 = vpop.xlane.xlu0 %4361
      %v4363 = vsel %vm480, %v4343, 0.0
      %4364 = vadd.xlane.f32.xlu0 %v4363
      %v4365 = vpop.xlane.xlu0 %4364
      %v4366 = vsel %vm480, %v4344, 0.0
      %4367 = vadd.xlane.f32.xlu0 %v4366
      %v4368 = vpop.xlane.xlu0 %4367
      %v4369 = vsel %vm480, %v4345, 0.0
      %4370 = vadd.xlane.f32.xlu0 %v4369
      %v4371 = vpop.xlane.xlu0 %4370
      %v4372 = vrcp.pop 32.0
      %v4373 = vmul.f32 %v4350, %v4372
      %v4374 = vmul.f32 %v4353, %v4372
      %v4375 = vmul.f32 %v4356, %v4372
      %v4376 = vmul.f32 %v4359, %v4372
      %v4377 = vmul.f32 %v4362, %v4372
      %v4378 = vmul.f32 %v4365, %v4372
      %v4379 = vmul.f32 %v4368, %v4372
      %v4380 = vmul.f32 %v4371, %v4372
      %v4381 = vsub.f32 %v4338, %v4373
      %v4382 = vsub.f32 %v4339, %v4374
      %v4383 = vsub.f32 %v4340, %v4375
      %v4384 = vsub.f32 %v4341, %v4376
      %v4385 = vsub.f32 %v4342, %v4377
      %v4386 = vsub.f32 %v4343, %v4378
      %v4387 = vsub.f32 %v4344, %v4379
      %v4388 = vsub.f32 %v4345, %v4380
      %v4389 = vmul.f32 %v4381, %v4381
      %v4390 = vmul.f32 %v4382, %v4382
      %v4391 = vmul.f32 %v4383, %v4383
      %v4392 = vmul.f32 %v4384, %v4384
      %v4393 = vmul.f32 %v4385, %v4385
      %v4394 = vmul.f32 %v4386, %v4386
      %v4395 = vmul.f32 %v4387, %v4387
      %v4396 = vmul.f32 %v4388, %v4388
      %v4397 = vsel %vm480, %v4389, 0.0
      %4398 = vadd.xlane.f32.xlu0 %v4397
      %v4399 = vpop.xlane.xlu0 %4398
      %v4400 = vsel %vm480, %v4390, 0.0
      %4401 = vadd.xlane.f32.xlu0 %v4400
      %v4402 = vpop.xlane.xlu0 %4401
      %v4403 = vsel %vm480, %v4391, 0.0
      %4404 = vadd.xlane.f32.xlu0 %v4403
      %v4405 = vpop.xlane.xlu0 %4404
      %v4406 = vsel %vm480, %v4392, 0.0
      %4407 = vadd.xlane.f32.xlu0 %v4406
      %v4408 = vpop.xlane.xlu0 %4407
      %v4409 = vsel %vm480, %v4393, 0.0
      %4410 = vadd.xlane.f32.xlu0 %v4409
      %v4411 = vpop.xlane.xlu0 %4410
      %v4412 = vsel %vm480, %v4394, 0.0
      %4413 = vadd.xlane.f32.xlu0 %v4412
      %v4414 = vpop.xlane.xlu0 %4413
      %v4415 = vsel %vm480, %v4395, 0.0
      %4416 = vadd.xlane.f32.xlu0 %v4415
      %v4417 = vpop.xlane.xlu0 %4416
      %v4418 = vsel %vm480, %v4396, 0.0
      %4419 = vadd.xlane.f32.xlu0 %v4418
      %v4420 = vpop.xlane.xlu0 %4419
      %v4421 = vmul.f32 %v4399, %v4372
      %v4422 = vmul.f32 %v4402, %v4372
      %v4423 = vmul.f32 %v4405, %v4372
      %v4424 = vmul.f32 %v4408, %v4372
      %v4425 = vmul.f32 %v4411, %v4372
      %v4426 = vmul.f32 %v4414, %v4372
      %v4427 = vmul.f32 %v4417, %v4372
      %v4428 = vmul.f32 %v4420, %v4372
      %v4429 = vadd.f32 %v4421, 1e-05
      %v4430 = vadd.f32 %v4422, 1e-05
      %v4431 = vadd.f32 %v4423, 1e-05
      %v4432 = vadd.f32 %v4424, 1e-05
      %v4433 = vadd.f32 %v4425, 1e-05
      %v4434 = vadd.f32 %v4426, 1e-05
      %v4435 = vadd.f32 %v4427, 1e-05
      %v4436 = vadd.f32 %v4428, 1e-05
      %v4437 = vrsqrt.pop %v4429
      %v4438 = vrsqrt.pop %v4430
      %v4439 = vrsqrt.pop %v4431
      %v4440 = vrsqrt.pop %v4432
      %v4441 = vrsqrt.pop %v4433
      %v4442 = vrsqrt.pop %v4434
      %v4443 = vrsqrt.pop %v4435
      %v4444 = vrsqrt.pop %v4436
      %v4445 = vmul.f32 %v4381, %v4437
      %v4446 = vmul.f32 %v4382, %v4438
      %v4447 = vmul.f32 %v4383, %v4439
      %v4448 = vmul.f32 %v4384, %v4440
      %v4449 = vmul.f32 %v4385, %v4441
      %v4450 = vmul.f32 %v4386, %v4442
      %v4451 = vmul.f32 %v4387, %v4443
      %v4452 = vmul.f32 %v4388, %v4444
      %v4454 = vlaneseq
      %v4455 = vshrl.u32 %v4454, 7
      %v4456 = vsub.s32 0, %v4455
      %v4457 = vrot.slane %v4346, %v4456
      %v4459 = vmul.f32 %v4445, %v4457
      %v4460 = vmul.f32 %v4446, %v4457
      %v4461 = vmul.f32 %v4447, %v4457
      %v4462 = vmul.f32 %v4448, %v4457
      %v4463 = vmul.f32 %v4449, %v4457
      %v4464 = vmul.f32 %v4450, %v4457
      %v4465 = vmul.f32 %v4451, %v4457
      %v4466 = vmul.f32 %v4452, %v4457
      %v4468 = vlaneseq
      %v4469 = vshrl.u32 %v4468, 7
      %v4470 = vsub.s32 0, %v4469
      %v4471 = vrot.slane %v4347, %v4470
      %v4473 = vadd.f32 %v4459, %v4471
      %v4474 = vadd.f32 %v4460, %v4471
      %v4475 = vadd.f32 %v4461, %v4471
      %v4476 = vadd.f32 %v4462, %v4471
      %v4477 = vadd.f32 %v4463, %v4471
      %v4478 = vadd.f32 %v4464, %v4471
      %v4479 = vadd.f32 %v4465, %v4471
      %v4480 = vadd.f32 %v4466, %v4471
      %v4481 = vpack.c.bf16 %v4474, %v4473
      %v4482 = vpack.c.bf16 %v4476, %v4475
      %v4483 = vpack.c.bf16 %v4478, %v4477
      %v4484 = vpack.c.bf16 %v4480, %v4479
      %v4485 = vld [vmem:[%s7] sm:$0xff]
      %v4486 = vld [vmem:[%s7 + $0x8] sm:$0xff]
      %v4487 = vld [vmem:[%s7 + $0x10] sm:$0xff]
      %v4488 = vld [vmem:[%s7 + $0x18] sm:$0xff]
      %v4489 = vld [vmem:[%s7 + $0x20] sm:$0xff]
      %v4490 = vld [vmem:[%s7 + $0x28] sm:$0xff]
      %v4491 = vld [vmem:[%s7 + $0x30] sm:$0xff]
      %v4492 = vld [vmem:[%s7 + $0x38] sm:$0xff]
      %v4493 = vld [vmem:[%s7 + $0x40] sm:$0xff]
      %v4494 = vld [vmem:[%s7 + $0x48] sm:$0xff]
      %v4495 = vld [vmem:[%s7 + $0x50] sm:$0xff]
      %v4496 = vld [vmem:[%s7 + $0x58] sm:$0xff]
      %v4497 = vld [vmem:[%s7 + $0x60] sm:$0xff]
      %v4498 = vld [vmem:[%s7 + $0x68] sm:$0xff]
      %v4499 = vld [vmem:[%s7 + $0x70] sm:$0xff]
      %v4500 = vld [vmem:[%s7 + $0x78] sm:$0xff]
      %v4501 = vld [vmem:[%s7 + $0x80] sm:$0xff]
      %v4502 = vld [vmem:[%s7 + $0x88] sm:$0xff]
      %v4503 = vld [vmem:[%s7 + $0x90] sm:$0xff]
      %v4504 = vld [vmem:[%s7 + $0x98] sm:$0xff]
      %v4505 = vld [vmem:[%s7 + $0xa0] sm:$0xff]
      %v4506 = vld [vmem:[%s7 + $0xa8] sm:$0xff]
      %v4507 = vld [vmem:[%s7 + $0xb0] sm:$0xff]
      %v4508 = vld [vmem:[%s7 + $0xb8] sm:$0xff]
      %v4509 = vld [vmem:[%s7 + $0xc0] sm:$0xff]
      %v4510 = vld [vmem:[%s7 + $0xc8] sm:$0xff]
      %v4511 = vld [vmem:[%s7 + $0xd0] sm:$0xff]
      %v4512 = vld [vmem:[%s7 + $0xd8] sm:$0xff]
      %v4513 = vld [vmem:[%s7 + $0xe0] sm:$0xff]
      %v4514 = vld [vmem:[%s7 + $0xe8] sm:$0xff]
      %v4515 = vld [vmem:[%s7 + $0xf0] sm:$0xff]
      %v4516 = vld [vmem:[%s7 + $0xf8] sm:$0xff]
      %v4517 = vld [vmem:[%s8] sm:$0xff]
      %v4518 = vld [vmem:[%s8 + $0x8] sm:$0xff]
      %v4521 = vlaneseq
      %v4522 = vshrl.u32 %v4521, 7
      %v4523 = vsub.s32 0, %v4522
      %v4524 = vrot.slane %v4517, %v4523
      %v4525 = vlaneseq
      %v4526 = vshrl.u32 %v4525, 7
      %v4527 = vsub.s32 1, %v4526
      %v4528 = vrot.slane %v4517, %v4527
      %v4529 = vlaneseq
      %v4530 = vshrl.u32 %v4529, 7
      %v4531 = vsub.s32 2, %v4530
      %v4532 = vrot.slane %v4517, %v4531
      %v4533 = vlaneseq
      %v4534 = vshrl.u32 %v4533, 7
      %v4535 = vsub.s32 3, %v4534
      %v4536 = vrot.slane %v4517, %v4535
      %v4537 = vlaneseq
      %v4538 = vshrl.u32 %v4537, 7
      %v4539 = vsub.s32 4, %v4538
      %v4540 = vrot.slane %v4517, %v4539
      %v4541 = vlaneseq
      %v4542 = vshrl.u32 %v4541, 7
      %v4543 = vsub.s32 5, %v4542
      %v4544 = vrot.slane %v4517, %v4543
      %v4545 = vlaneseq
      %v4546 = vshrl.u32 %v4545, 7
      %v4547 = vsub.s32 6, %v4546
      %v4548 = vrot.slane %v4517, %v4547
      %v4549 = vlaneseq
      %v4550 = vshrl.u32 %v4549, 7
      %v4551 = vsub.s32 7, %v4550
      %v4552 = vrot.slane %v4517, %v4551
      %v4553 = vlaneseq
      %v4554 = vshrl.u32 %v4553, 7
      %v4555 = vsub.s32 0, %v4554
      %v4556 = vrot.slane %v4518, %v4555
      %v4557 = vlaneseq
      %v4558 = vshrl.u32 %v4557, 7
      %v4559 = vsub.s32 1, %v4558
      %v4560 = vrot.slane %v4518, %v4559
      %v4561 = vlaneseq
      %v4562 = vshrl.u32 %v4561, 7
      %v4563 = vsub.s32 2, %v4562
      %v4564 = vrot.slane %v4518, %v4563
      %v4565 = vlaneseq
      %v4566 = vshrl.u32 %v4565, 7
      %v4567 = vsub.s32 3, %v4566
      %v4568 = vrot.slane %v4518, %v4567
      %v4569 = vlaneseq
      %v4570 = vshrl.u32 %v4569, 7
      %v4571 = vsub.s32 4, %v4570
      %v4572 = vrot.slane %v4518, %v4571
      %v4573 = vlaneseq
      %v4574 = vshrl.u32 %v4573, 7
      %v4575 = vsub.s32 5, %v4574
      %v4576 = vrot.slane %v4518, %v4575
      %v4577 = vlaneseq
      %v4578 = vshrl.u32 %v4577, 7
      %v4579 = vsub.s32 6, %v4578
      %v4580 = vrot.slane %v4518, %v4579
      %v4581 = vlaneseq
      %v4582 = vshrl.u32 %v4581, 7
      %v4583 = vsub.s32 7, %v4582
      %v4584 = vrot.slane %v4518, %v4583
      %v4633 = vunpack.c.l.b16 %v4485
      %v4634 = vunpack.c.h.b16 %v4485
      %v4635 = vunpack.c.l.b16 %v4486
      %v4636 = vunpack.c.h.b16 %v4486
      %v4637 = vunpack.c.l.b16 %v4487
      %v4638 = vunpack.c.h.b16 %v4487
      %v4639 = vunpack.c.l.b16 %v4488
      %v4640 = vunpack.c.h.b16 %v4488
      %v4641 = vunpack.c.l.b16 %v4489
      %v4642 = vunpack.c.h.b16 %v4489
      %v4643 = vunpack.c.l.b16 %v4490
      %v4644 = vunpack.c.h.b16 %v4490
      %v4645 = vunpack.c.l.b16 %v4491
      %v4646 = vunpack.c.h.b16 %v4491
      %v4647 = vunpack.c.l.b16 %v4492
      %v4648 = vunpack.c.h.b16 %v4492
      %v4649 = vunpack.c.l.b16 %v4493
      %v4650 = vunpack.c.h.b16 %v4493
      %v4651 = vunpack.c.l.b16 %v4494
      %v4652 = vunpack.c.h.b16 %v4494
      %v4653 = vunpack.c.l.b16 %v4495
      %v4654 = vunpack.c.h.b16 %v4495
      %v4655 = vunpack.c.l.b16 %v4496
      %v4656 = vunpack.c.h.b16 %v4496
      %v4657 = vunpack.c.l.b16 %v4497
      %v4658 = vunpack.c.h.b16 %v4497
      %v4659 = vunpack.c.l.b16 %v4498
      %v4660 = vunpack.c.h.b16 %v4498
      %v4661 = vunpack.c.l.b16 %v4499
      %v4662 = vunpack.c.h.b16 %v4499
      %v4663 = vunpack.c.l.b16 %v4500
      %v4664 = vunpack.c.h.b16 %v4500
      %v4665 = vunpack.c.l.b16 %v4501
      %v4666 = vunpack.c.h.b16 %v4501
      %v4667 = vunpack.c.l.b16 %v4502
      %v4668 = vunpack.c.h.b16 %v4502
      %v4669 = vunpack.c.l.b16 %v4503
      %v4670 = vunpack.c.h.b16 %v4503
      %v4671 = vunpack.c.l.b16 %v4504
      %v4672 = vunpack.c.h.b16 %v4504
      %v4673 = vunpack.c.l.b16 %v4505
      %v4674 = vunpack.c.h.b16 %v4505
      %v4675 = vunpack.c.l.b16 %v4506
      %v4676 = vunpack.c.h.b16 %v4506
      %v4677 = vunpack.c.l.b16 %v4507
      %v4678 = vunpack.c.h.b16 %v4507
      %v4679 = vunpack.c.l.b16 %v4508
      %v4680 = vunpack.c.h.b16 %v4508
      %v4681 = vunpack.c.l.b16 %v4509
      %v4682 = vunpack.c.h.b16 %v4509
      %v4683 = vunpack.c.l.b16 %v4510
      %v4684 = vunpack.c.h.b16 %v4510
      %v4685 = vunpack.c.l.b16 %v4511
      %v4686 = vunpack.c.h.b16 %v4511
      %v4687 = vunpack.c.l.b16 %v4512
      %v4688 = vunpack.c.h.b16 %v4512
      %v4689 = vunpack.c.l.b16 %v4513
      %v4690 = vunpack.c.h.b16 %v4513
      %v4691 = vunpack.c.l.b16 %v4514
      %v4692 = vunpack.c.h.b16 %v4514
      %v4693 = vunpack.c.l.b16 %v4515
      %v4694 = vunpack.c.h.b16 %v4515
      %v4695 = vunpack.c.l.b16 %v4516
      %v4696 = vunpack.c.h.b16 %v4516
      %v4697 = vpack.c.b16 %v4649, %v4633
      %v4698 = vpack.c.b16 %v4650, %v4634
      %v4699 = vpack.c.b16 %v4651, %v4635
      %v4700 = vpack.c.b16 %v4652, %v4636
      %v4701 = vpack.c.b16 %v4653, %v4637
      %v4702 = vpack.c.b16 %v4654, %v4638
      %v4703 = vpack.c.b16 %v4655, %v4639
      %v4704 = vpack.c.b16 %v4656, %v4640
      %v4705 = vpack.c.b16 %v4657, %v4641
      %v4706 = vpack.c.b16 %v4658, %v4642
      %v4707 = vpack.c.b16 %v4659, %v4643
      %v4708 = vpack.c.b16 %v4660, %v4644
      %v4709 = vpack.c.b16 %v4661, %v4645
      %v4710 = vpack.c.b16 %v4662, %v4646
      %v4711 = vpack.c.b16 %v4663, %v4647
      %v4712 = vpack.c.b16 %v4664, %v4648
      %v4713 = vpack.c.b16 %v4681, %v4665
      %v4714 = vpack.c.b16 %v4682, %v4666
      %v4715 = vpack.c.b16 %v4683, %v4667
      %v4716 = vpack.c.b16 %v4684, %v4668
      %v4717 = vpack.c.b16 %v4685, %v4669
      %v4718 = vpack.c.b16 %v4686, %v4670
      %v4719 = vpack.c.b16 %v4687, %v4671
      %v4720 = vpack.c.b16 %v4688, %v4672
      %v4721 = vpack.c.b16 %v4689, %v4673
      %v4722 = vpack.c.b16 %v4690, %v4674
      %v4723 = vpack.c.b16 %v4691, %v4675
      %v4724 = vpack.c.b16 %v4692, %v4676
      %v4725 = vpack.c.b16 %v4693, %v4677
      %v4726 = vpack.c.b16 %v4694, %v4678
      %v4727 = vpack.c.b16 %v4695, %v4679
      %v4728 = vpack.c.b16 %v4696, %v4680
      %v4762 = vsel %vm480, %v4481, 0
      %v4765 = vsel %vm480, %v4482, 0
      %v4768 = vsel %vm480, %v4483, 0
      %v4771 = vsel %vm480, %v4484, 0
      %4773 = vmatprep.subr.bf16.mxu0 %v4698
      %4774 = vmatpush1.bf16.msra.mxu0 %v4697
      %4775 = vmatprep.subr.bf16.mxu0 %v4714
      %4776 = vmatpush1.bf16.msra.mxu0 %v4713
      %4777 = vmatprep.subr.bf16.mxu0 0
      %4778 = vmatpush1.bf16.msra.mxu0 0
      %4779 = vmatprep.subr.bf16.mxu0 0
      %4780 = vmatpush1.bf16.msra.mxu0 0
      %4781 = vmatprep.subr.bf16.mxu0 0
      %4782 = vmatpush1.bf16.msra.mxu0 0
      %4783 = vmatprep.subr.bf16.mxu0 0
      %4784 = vmatpush1.bf16.msra.mxu0 0
      %4785 = vmatprep.subr.bf16.mxu0 0
      %4786 = vmatpush1.bf16.msra.mxu0 0
      %4787 = vmatprep.subr.bf16.mxu0 0
      %4788 = vmatpush1.bf16.msra.mxu0 0
      %4789 = vmatprep.subr.bf16.mxu0 0
      %4790 = vmatpush1.bf16.msra.mxu0 0
      %4791 = vmatprep.subr.bf16.mxu0 0
      %4792 = vmatpush1.bf16.msra.mxu0 0
      %4793 = vmatprep.subr.bf16.mxu0 0
      %4794 = vmatpush1.bf16.msra.mxu0 0
      %4795 = vmatprep.subr.bf16.mxu0 0
      %4796 = vmatpush1.bf16.msra.mxu0 0
      %4797 = vmatprep.subr.bf16.mxu0 0
      %4798 = vmatpush1.bf16.msra.mxu0 0
      %4799 = vmatprep.subr.bf16.mxu0 0
      %4800 = vmatpush1.bf16.msra.mxu0 0
      %4801 = vmatprep.subr.bf16.mxu0 0
      %4802 = vmatpush1.bf16.msra.mxu0 0
      %4803 = vmatprep.subr.bf16.mxu0 0
      %4804 = vmatpush1.bf16.msra.mxu0 0
      %4805 = vmatprep.mubr.bf16.mxu0 0
      %4806 = vmatmul.mubr.bf16.gmra.mrb[0].mxu0 %v4762
      %v4807 = vpop.f32.mrb[0].mxu0
      %v4808 = vadd.f32 %v4524, %v4807
      %v4809 = vpop.f32.mrb[0].mxu0
      %v4810 = vadd.f32 %v4528, %v4809
      %v4811 = vpop.f32.mrb[0].mxu0
      %v4812 = vadd.f32 %v4524, %v4811
      %v4813 = vpop.f32.mrb[0].mxu0
      %v4814 = vadd.f32 %v4528, %v4813
      %4815 = vmatprep.mubr.bf16.mxu0 0
      %4816 = vmatmul.mubr.bf16.gmra.mrb[0].mxu0 %v4765
      %v4817 = vpop.f32.mrb[0].mxu0
      %v4818 = vadd.f32 %v4524, %v4817
      %v4819 = vpop.f32.mrb[0].mxu0
      %v4820 = vadd.f32 %v4528, %v4819
      %v4821 = vpop.f32.mrb[0].mxu0
      %v4822 = vadd.f32 %v4524, %v4821
      %v4823 = vpop.f32.mrb[0].mxu0
      %v4824 = vadd.f32 %v4528, %v4823
      %4825 = vmatprep.mubr.bf16.mxu0 0
      %4826 = vmatmul.mubr.bf16.gmra.mrb[0].mxu0 %v4768
      %v4827 = vpop.f32.mrb[0].mxu0
      %v4828 = vadd.f32 %v4524, %v4827
      %v4829 = vpop.f32.mrb[0].mxu0
      %v4830 = vadd.f32 %v4528, %v4829
      %v4831 = vpop.f32.mrb[0].mxu0
      %v4832 = vadd.f32 %v4524, %v4831
      %v4833 = vpop.f32.mrb[0].mxu0
      %v4834 = vadd.f32 %v4528, %v4833
      %4835 = vmatprep.mubr.bf16.mxu0 0
      %4836 = vmatmul.mubr.bf16.gmra.mrb[0].mxu0 %v4771
      %v4837 = vpop.f32.mrb[0].mxu0
      %v4838 = vadd.f32 %v4524, %v4837
      %v4839 = vpop.f32.mrb[0].mxu0
      %v4840 = vadd.f32 %v4528, %v4839
      %v4841 = vpop.f32.mrb[0].mxu0
      %v4842 = vadd.f32 %v4524, %v4841
      %v4843 = vpop.f32.mrb[0].mxu0
      %v4844 = vadd.f32 %v4528, %v4843
      %4845 = vdwg.mxu0
      %4846 = vmatprep.subr.bf16.mxu0 %v4700
      %4847 = vmatpush1.bf16.msra.mxu0 %v4699
      %4848 = vmatprep.subr.bf16.mxu0 %v4716
      %4849 = vmatpush1.bf16.msra.mxu0 %v4715
      %4850 = vmatprep.subr.bf16.mxu0 0
      %4851 = vmatpush1.bf16.msra.mxu0 0
      %4852 = vmatprep.subr.bf16.mxu0 0
      %4853 = vmatpush1.bf16.msra.mxu0 0
      %4854 = vmatprep.subr.bf16.mxu0 0
      %4855 = vmatpush1.bf16.msra.mxu0 0
      %4856 = vmatprep.subr.bf16.mxu0 0
      %4857 = vmatpush1.bf16.msra.mxu0 0
      %4858 = vmatprep.subr.bf16.mxu0 0
      %4859 = vmatpush1.bf16.msra.mxu0 0
      %4860 = vmatprep.subr.bf16.mxu0 0
      %4861 = vmatpush1.bf16.msra.mxu0 0
      %4862 = vmatprep.subr.bf16.mxu0 0
      %4863 = vmatpush1.bf16.msra.mxu0 0
      %4864 = vmatprep.subr.bf16.mxu0 0
      %4865 = vmatpush1.bf16.msra.mxu0 0
      %4866 = vmatprep.subr.bf16.mxu0 0
      %4867 = vmatpush1.bf16.msra.mxu0 0
      %4868 = vmatprep.subr.bf16.mxu0 0
      %4869 = vmatpush1.bf16.msra.mxu0 0
      %4870 = vmatprep.subr.bf16.mxu0 0
      %4871 = vmatpush1.bf16.msra.mxu0 0
      %4872 = vmatprep.subr.bf16.mxu0 0
      %4873 = vmatpush1.bf16.msra.mxu0 0
      %4874 = vmatprep.subr.bf16.mxu0 0
      %4875 = vmatpush1.bf16.msra.mxu0 0
      %4876 = vmatprep.subr.bf16.mxu0 0
      %4877 = vmatpush1.bf16.msra.mxu0 0
      %4878 = vmatprep.mubr.bf16.mxu0 0
      %4879 = vmatmul.mubr.bf16.gmra.mrb[0].mxu0 %v4762
      %v4880 = vpop.f32.mrb[0].mxu0
      %v4881 = vadd.f32 %v4532, %v4880
      %v4882 = vpop.f32.mrb[0].mxu0
      %v4883 = vadd.f32 %v4536, %v4882
      %v4884 = vpop.f32.mrb[0].mxu0
      %v4885 = vadd.f32 %v4532, %v4884
      %v4886 = vpop.f32.mrb[0].mxu0
      %v4887 = vadd.f32 %v4536, %v4886
      %4888 = vmatprep.mubr.bf16.mxu0 0
      %4889 = vmatmul.mubr.bf16.gmra.mrb[0].mxu0 %v4765
      %v4890 = vpop.f32.mrb[0].mxu0
      %v4891 = vadd.f32 %v4532, %v4890
      %v4892 = vpop.f32.mrb[0].mxu0
      %v4893 = vadd.f32 %v4536, %v4892
      %v4894 = vpop.f32.mrb[0].mxu0
      %v4895 = vadd.f32 %v4532, %v4894
      %v4896 = vpop.f32.mrb[0].mxu0
      %v4897 = vadd.f32 %v4536, %v4896
      %4898 = vmatprep.mubr.bf16.mxu0 0
      %4899 = vmatmul.mubr.bf16.gmra.mrb[0].mxu0 %v4768
      %v4900 = vpop.f32.mrb[0].mxu0
      %v4901 = vadd.f32 %v4532, %v4900
      %v4902 = vpop.f32.mrb[0].mxu0
      %v4903 = vadd.f32 %v4536, %v4902
      %v4904 = vpop.f32.mrb[0].mxu0
      %v4905 = vadd.f32 %v4532, %v4904
      %v4906 = vpop.f32.mrb[0].mxu0
      %v4907 = vadd.f32 %v4536, %v4906
      %4908 = vmatprep.mubr.bf16.mxu0 0
      %4909 = vmatmul.mubr.bf16.gmra.mrb[0].mxu0 %v4771
      %v4910 = vpop.f32.mrb[0].mxu0
      %v4911 = vadd.f32 %v4532, %v4910
      %v4912 = vpop.f32.mrb[0].mxu0
      %v4913 = vadd.f32 %v4536, %v4912
      %v4914 = vpop.f32.mrb[0].mxu0
      %v4915 = vadd.f32 %v4532, %v4914
      %v4916 = vpop.f32.mrb[0].mxu0
      %v4917 = vadd.f32 %v4536, %v4916
      %4918 = vdwg.mxu0
      %4919 = vmatprep.subr.bf16.mxu0 %v4702
      %4920 = vmatpush1.bf16.msra.mxu0 %v4701
      %4921 = vmatprep.subr.bf16.mxu0 %v4718
      %4922 = vmatpush1.bf16.msra.mxu0 %v4717
      %4923 = vmatprep.subr.bf16.mxu0 0
      %4924 = vmatpush1.bf16.msra.mxu0 0
      %4925 = vmatprep.subr.bf16.mxu0 0
      %4926 = vmatpush1.bf16.msra.mxu0 0
      %4927 = vmatprep.subr.bf16.mxu0 0
      %4928 = vmatpush1.bf16.msra.mxu0 0
      %4929 = vmatprep.subr.bf16.mxu0 0
      %4930 = vmatpush1.bf16.msra.mxu0 0
      %4931 = vmatprep.subr.bf16.mxu0 0
      %4932 = vmatpush1.bf16.msra.mxu0 0
      %4933 = vmatprep.subr.bf16.mxu0 0
      %4934 = vmatpush1.bf16.msra.mxu0 0
      %4935 = vmatprep.subr.bf16.mxu0 0
      %4936 = vmatpush1.bf16.msra.mxu0 0
      %4937 = vmatprep.subr.bf16.mxu0 0
      %4938 = vmatpush1.bf16.msra.mxu0 0
      %4939 = vmatprep.subr.bf16.mxu0 0
      %4940 = vmatpush1.bf16.msra.mxu0 0
      %4941 = vmatprep.subr.bf16.mxu0 0
      %4942 = vmatpush1.bf16.msra.mxu0 0
      %4943 = vmatprep.subr.bf16.mxu0 0
      %4944 = vmatpush1.bf16.msra.mxu0 0
      %4945 = vmatprep.subr.bf16.mxu0 0
      %4946 = vmatpush1.bf16.msra.mxu0 0
      %4947 = vmatprep.subr.bf16.mxu0 0
      %4948 = vmatpush1.bf16.msra.mxu0 0
      %4949 = vmatprep.subr.bf16.mxu0 0
      %4950 = vmatpush1.bf16.msra.mxu0 0
      %4951 = vmatprep.mubr.bf16.mxu0 0
      %4952 = vmatmul.mubr.bf16.gmra.mrb[0].mxu0 %v4762
      %v4953 = vpop.f32.mrb[0].mxu0
      %v4954 = vadd.f32 %v4540, %v4953
      %v4955 = vpop.f32.mrb[0].mxu0
      %v4956 = vadd.f32 %v4544, %v4955
      %v4957 = vpop.f32.mrb[0].mxu0
      %v4958 = vadd.f32 %v4540, %v4957
      %v4959 = vpop.f32.mrb[0].mxu0
      %v4960 = vadd.f32 %v4544, %v4959
      %4961 = vmatprep.mubr.bf16.mxu0 0
      %4962 = vmatmul.mubr.bf16.gmra.mrb[0].mxu0 %v4765
      %v4963 = vpop.f32.mrb[0].mxu0
      %v4964 = vadd.f32 %v4540, %v4963
      %v4965 = vpop.f32.mrb[0].mxu0
      %v4966 = vadd.f32 %v4544, %v4965
      %v4967 = vpop.f32.mrb[0].mxu0
      %v4968 = vadd.f32 %v4540, %v4967
      %v4969 = vpop.f32.mrb[0].mxu0
      %v4970 = vadd.f32 %v4544, %v4969
      %4971 = vmatprep.mubr.bf16.mxu0 0
      %4972 = vmatmul.mubr.bf16.gmra.mrb[0].mxu0 %v4768
      %v4973 = vpop.f32.mrb[0].mxu0
      %v4974 = vadd.f32 %v4540, %v4973
      %v4975 = vpop.f32.mrb[0].mxu0
      %v4976 = vadd.f32 %v4544, %v4975
      %v4977 = vpop.f32.mrb[0].mxu0
      %v4978 = vadd.f32 %v4540, %v4977
      %v4979 = vpop.f32.mrb[0].mxu0
      %v4980 = vadd.f32 %v4544, %v4979
      %4981 = vmatprep.mubr.bf16.mxu0 0
      %4982 = vmatmul.mubr.bf16.gmra.mrb[0].mxu0 %v4771
      %v4983 = vpop.f32.mrb[0].mxu0
      %v4984 = vadd.f32 %v4540, %v4983
      %v4985 = vpop.f32.mrb[0].mxu0
      %v4986 = vadd.f32 %v4544, %v4985
      %v4987 = vpop.f32.mrb[0].mxu0
      %v4988 = vadd.f32 %v4540, %v4987
      %v4989 = vpop.f32.mrb[0].mxu0
      %v4990 = vadd.f32 %v4544, %v4989
      %4991 = vdwg.mxu0
      %4992 = vmatprep.subr.bf16.mxu0 %v4704
      %4993 = vmatpush1.bf16.msra.mxu0 %v4703
      %4994 = vmatprep.subr.bf16.mxu0 %v4720
      %4995 = vmatpush1.bf16.msra.mxu0 %v4719
      %4996 = vmatprep.subr.bf16.mxu0 0
      %4997 = vmatpush1.bf16.msra.mxu0 0
      %4998 = vmatprep.subr.bf16.mxu0 0
      %4999 = vmatpush1.bf16.msra.mxu0 0
      %5000 = vmatprep.subr.bf16.mxu0 0
      %5001 = vmatpush1.bf16.msra.mxu0 0
      %5002 = vmatprep.subr.bf16.mxu0 0
      %5003 = vmatpush1.bf16.msra.mxu0 0
      %5004 = vmatprep.subr.bf16.mxu0 0
      %5005 = vmatpush1.bf16.msra.mxu0 0
      %5006 = vmatprep.subr.bf16.mxu0 0
      %5007 = vmatpush1.bf16.msra.mxu0 0
      %5008 = vmatprep.subr.bf16.mxu0 0
      %5009 = vmatpush1.bf16.msra.mxu0 0
      %5010 = vmatprep.subr.bf16.mxu0 0
      %5011 = vmatpush1.bf16.msra.mxu0 0
      %5012 = vmatprep.subr.bf16.mxu0 0
      %5013 = vmatpush1.bf16.msra.mxu0 0
      %5014 = vmatprep.subr.bf16.mxu0 0
      %5015 = vmatpush1.bf16.msra.mxu0 0
      %5016 = vmatprep.subr.bf16.mxu0 0
      %5017 = vmatpush1.bf16.msra.mxu0 0
      %5018 = vmatprep.subr.bf16.mxu0 0
      %5019 = vmatpush1.bf16.msra.mxu0 0
      %5020 = vmatprep.subr.bf16.mxu0 0
      %5021 = vmatpush1.bf16.msra.mxu0 0
      %5022 = vmatprep.subr.bf16.mxu0 0
      %5023 = vmatpush1.bf16.msra.mxu0 0
      %5024 = vmatprep.mubr.bf16.mxu0 0
      %5025 = vmatmul.mubr.bf16.gmra.mrb[0].mxu0 %v4762
      %v5026 = vpop.f32.mrb[0].mxu0
      %v5027 = vadd.f32 %v4548, %v5026
      %v5028 = vpop.f32.mrb[0].mxu0
      %v5029 = vadd.f32 %v4552, %v5028
      %v5030 = vpop.f32.mrb[0].mxu0
      %v5031 = vadd.f32 %v4548, %v5030
      %v5032 = vpop.f32.mrb[0].mxu0
      %v5033 = vadd.f32 %v4552, %v5032
      %5034 = vmatprep.mubr.bf16.mxu0 0
      %5035 = vmatmul.mubr.bf16.gmra.mrb[0].mxu0 %v4765
      %v5036 = vpop.f32.mrb[0].mxu0
      %v5037 = vadd.f32 %v4548, %v5036
      %v5038 = vpop.f32.mrb[0].mxu0
      %v5039 = vadd.f32 %v4552, %v5038
      %v5040 = vpop.f32.mrb[0].mxu0
      %v5041 = vadd.f32 %v4548, %v5040
      %v5042 = vpop.f32.mrb[0].mxu0
      %v5043 = vadd.f32 %v4552, %v5042
      %5044 = vmatprep.mubr.bf16.mxu0 0
      %5045 = vmatmul.mubr.bf16.gmra.mrb[0].mxu0 %v4768
      %v5046 = vpop.f32.mrb[0].mxu0
      %v5047 = vadd.f32 %v4548, %v5046
      %v5048 = vpop.f32.mrb[0].mxu0
      %v5049 = vadd.f32 %v4552, %v5048
      %v5050 = vpop.f32.mrb[0].mxu0
      %v5051 = vadd.f32 %v4548, %v5050
      %v5052 = vpop.f32.mrb[0].mxu0
      %v5053 = vadd.f32 %v4552, %v5052
      %5054 = vmatprep.mubr.bf16.mxu0 0
      %5055 = vmatmul.mubr.bf16.gmra.mrb[0].mxu0 %v4771
      %v5056 = vpop.f32.mrb[0].mxu0
      %v5057 = vadd.f32 %v4548, %v5056
      %v5058 = vpop.f32.mrb[0].mxu0
      %v5059 = vadd.f32 %v4552, %v5058
      %v5060 = vpop.f32.mrb[0].mxu0
      %v5061 = vadd.f32 %v4548, %v5060
      %v5062 = vpop.f32.mrb[0].mxu0
      %v5063 = vadd.f32 %v4552, %v5062
      %5064 = vdwg.mxu0
      %5065 = vmatprep.subr.bf16.mxu0 %v4706
      %5066 = vmatpush1.bf16.msra.mxu0 %v4705
      %5067 = vmatprep.subr.bf16.mxu0 %v4722
      %5068 = vmatpush1.bf16.msra.mxu0 %v4721
      %5069 = vmatprep.subr.bf16.mxu0 0
      %5070 = vmatpush1.bf16.msra.mxu0 0
      %5071 = vmatprep.subr.bf16.mxu0 0
      %5072 = vmatpush1.bf16.msra.mxu0 0
      %5073 = vmatprep.subr.bf16.mxu0 0
      %5074 = vmatpush1.bf16.msra.mxu0 0
      %5075 = vmatprep.subr.bf16.mxu0 0
      %5076 = vmatpush1.bf16.msra.mxu0 0
      %5077 = vmatprep.subr.bf16.mxu0 0
      %5078 = vmatpush1.bf16.msra.mxu0 0
      %5079 = vmatprep.subr.bf16.mxu0 0
      %5080 = vmatpush1.bf16.msra.mxu0 0
      %5081 = vmatprep.subr.bf16.mxu0 0
      %5082 = vmatpush1.bf16.msra.mxu0 0
      %5083 = vmatprep.subr.bf16.mxu0 0
      %5084 = vmatpush1.bf16.msra.mxu0 0
      %5085 = vmatprep.subr.bf16.mxu0 0
      %5086 = vmatpush1.bf16.msra.mxu0 0
      %5087 = vmatprep.subr.bf16.mxu0 0
      %5088 = vmatpush1.bf16.msra.mxu0 0
      %5089 = vmatprep.subr.bf16.mxu0 0
      %5090 = vmatpush1.bf16.msra.mxu0 0
      %5091 = vmatprep.subr.bf16.mxu0 0
      %5092 = vmatpush1.bf16.msra.mxu0 0
      %5093 = vmatprep.subr.bf16.mxu0 0
      %5094 = vmatpush1.bf16.msra.mxu0 0
      %5095 = vmatprep.subr.bf16.mxu0 0
      %5096 = vmatpush1.bf16.msra.mxu0 0
      %5097 = vmatprep.mubr.bf16.mxu0 0
      %5098 = vmatmul.mubr.bf16.gmra.mrb[0].mxu0 %v4762
      %v5099 = vpop.f32.mrb[0].mxu0
      %v5100 = vadd.f32 %v4556, %v5099
      %v5101 = vpop.f32.mrb[0].mxu0
      %v5102 = vadd.f32 %v4560, %v5101
      %v5103 = vpop.f32.mrb[0].mxu0
      %v5104 = vadd.f32 %v4556, %v5103
      %v5105 = vpop.f32.mrb[0].mxu0
      %v5106 = vadd.f32 %v4560, %v5105
      %5107 = vmatprep.mubr.bf16.mxu0 0
      %5108 = vmatmul.mubr.bf16.gmra.mrb[0].mxu0 %v4765
      %v5109 = vpop.f32.mrb[0].mxu0
      %v5110 = vadd.f32 %v4556, %v5109
      %v5111 = vpop.f32.mrb[0].mxu0
      %v5112 = vadd.f32 %v4560, %v5111
      %v5113 = vpop.f32.mrb[0].mxu0
      %v5114 = vadd.f32 %v4556, %v5113
      %v5115 = vpop.f32.mrb[0].mxu0
      %v5116 = vadd.f32 %v4560, %v5115
      %5117 = vmatprep.mubr.bf16.mxu0 0
      %5118 = vmatmul.mubr.bf16.gmra.mrb[0].mxu0 %v4768
      %v5119 = vpop.f32.mrb[0].mxu0
      %v5120 = vadd.f32 %v4556, %v5119
      %v5121 = vpop.f32.mrb[0].mxu0
      %v5122 = vadd.f32 %v4560, %v5121
      %v5123 = vpop.f32.mrb[0].mxu0
      %v5124 = vadd.f32 %v4556, %v5123
      %v5125 = vpop.f32.mrb[0].mxu0
      %v5126 = vadd.f32 %v4560, %v5125
      %5127 = vmatprep.mubr.bf16.mxu0 0
      %5128 = vmatmul.mubr.bf16.gmra.mrb[0].mxu0 %v4771
      %v5129 = vpop.f32.mrb[0].mxu0
      %v5130 = vadd.f32 %v4556, %v5129
      %v5131 = vpop.f32.mrb[0].mxu0
      %v5132 = vadd.f32 %v4560, %v5131
      %v5133 = vpop.f32.mrb[0].mxu0
      %v5134 = vadd.f32 %v4556, %v5133
      %v5135 = vpop.f32.mrb[0].mxu0
      %v5136 = vadd.f32 %v4560, %v5135
      %5137 = vdwg.mxu0
      %5138 = vmatprep.subr.bf16.mxu0 %v4708
      %5139 = vmatpush1.bf16.msra.mxu0 %v4707
      %5140 = vmatprep.subr.bf16.mxu0 %v4724
      %5141 = vmatpush1.bf16.msra.mxu0 %v4723
      %5142 = vmatprep.subr.bf16.mxu0 0
      %5143 = vmatpush1.bf16.msra.mxu0 0
      %5144 = vmatprep.subr.bf16.mxu0 0
      %5145 = vmatpush1.bf16.msra.mxu0 0
      %5146 = vmatprep.subr.bf16.mxu0 0
      %5147 = vmatpush1.bf16.msra.mxu0 0
      %5148 = vmatprep.subr.bf16.mxu0 0
      %5149 = vmatpush1.bf16.msra.mxu0 0
      %5150 = vmatprep.subr.bf16.mxu0 0
      %5151 = vmatpush1.bf16.msra.mxu0 0
      %5152 = vmatprep.subr.bf16.mxu0 0
      %5153 = vmatpush1.bf16.msra.mxu0 0
      %5154 = vmatprep.subr.bf16.mxu0 0
      %5155 = vmatpush1.bf16.msra.mxu0 0
      %5156 = vmatprep.subr.bf16.mxu0 0
      %5157 = vmatpush1.bf16.msra.mxu0 0
      %5158 = vmatprep.subr.bf16.mxu0 0
      %5159 = vmatpush1.bf16.msra.mxu0 0
      %5160 = vmatprep.subr.bf16.mxu0 0
      %5161 = vmatpush1.bf16.msra.mxu0 0
      %5162 = vmatprep.subr.bf16.mxu0 0
      %5163 = vmatpush1.bf16.msra.mxu0 0
      %5164 = vmatprep.subr.bf16.mxu0 0
      %5165 = vmatpush1.bf16.msra.mxu0 0
      %5166 = vmatprep.subr.bf16.mxu0 0
      %5167 = vmatpush1.bf16.msra.mxu0 0
      %5168 = vmatprep.subr.bf16.mxu0 0
      %5169 = vmatpush1.bf16.msra.mxu0 0
      %5170 = vmatprep.mubr.bf16.mxu0 0
      %5171 = vmatmul.mubr.bf16.gmra.mrb[0].mxu0 %v4762
      %v5172 = vpop.f32.mrb[0].mxu0
      %v5173 = vadd.f32 %v4564, %v5172
      %v5174 = vpop.f32.mrb[0].mxu0
      %v5175 = vadd.f32 %v4568, %v5174
      %v5176 = vpop.f32.mrb[0].mxu0
      %v5177 = vadd.f32 %v4564, %v5176
      %v5178 = vpop.f32.mrb[0].mxu0
      %v5179 = vadd.f32 %v4568, %v5178
      %5180 = vmatprep.mubr.bf16.mxu0 0
      %5181 = vmatmul.mubr.bf16.gmra.mrb[0].mxu0 %v4765
      %v5182 = vpop.f32.mrb[0].mxu0
      %v5183 = vadd.f32 %v4564, %v5182
      %v5184 = vpop.f32.mrb[0].mxu0
      %v5185 = vadd.f32 %v4568, %v5184
      %v5186 = vpop.f32.mrb[0].mxu0
      %v5187 = vadd.f32 %v4564, %v5186
      %v5188 = vpop.f32.mrb[0].mxu0
      %v5189 = vadd.f32 %v4568, %v5188
      %5190 = vmatprep.mubr.bf16.mxu0 0
      %5191 = vmatmul.mubr.bf16.gmra.mrb[0].mxu0 %v4768
      %v5192 = vpop.f32.mrb[0].mxu0
      %v5193 = vadd.f32 %v4564, %v5192
      %v5194 = vpop.f32.mrb[0].mxu0
      %v5195 = vadd.f32 %v4568, %v5194
      %v5196 = vpop.f32.mrb[0].mxu0
      %v5197 = vadd.f32 %v4564, %v5196
      %v5198 = vpop.f32.mrb[0].mxu0
      %v5199 = vadd.f32 %v4568, %v5198
      %5200 = vmatprep.mubr.bf16.mxu0 0
      %5201 = vmatmul.mubr.bf16.gmra.mrb[0].mxu0 %v4771
      %v5202 = vpop.f32.mrb[0].mxu0
      %v5203 = vadd.f32 %v4564, %v5202
      %v5204 = vpop.f32.mrb[0].mxu0
      %v5205 = vadd.f32 %v4568, %v5204
      %v5206 = vpop.f32.mrb[0].mxu0
      %v5207 = vadd.f32 %v4564, %v5206
      %v5208 = vpop.f32.mrb[0].mxu0
      %v5209 = vadd.f32 %v4568, %v5208
      %5210 = vdwg.mxu0
      %5211 = vmatprep.subr.bf16.mxu0 %v4710
      %5212 = vmatpush1.bf16.msra.mxu0 %v4709
      %5213 = vmatprep.subr.bf16.mxu0 %v4726
      %5214 = vmatpush1.bf16.msra.mxu0 %v4725
      %5215 = vmatprep.subr.bf16.mxu0 0
      %5216 = vmatpush1.bf16.msra.mxu0 0
      %5217 = vmatprep.subr.bf16.mxu0 0
      %5218 = vmatpush1.bf16.msra.mxu0 0
      %5219 = vmatprep.subr.bf16.mxu0 0
      %5220 = vmatpush1.bf16.msra.mxu0 0
      %5221 = vmatprep.subr.bf16.mxu0 0
      %5222 = vmatpush1.bf16.msra.mxu0 0
      %5223 = vmatprep.subr.bf16.mxu0 0
      %5224 = vmatpush1.bf16.msra.mxu0 0
      %5225 = vmatprep.subr.bf16.mxu0 0
      %5226 = vmatpush1.bf16.msra.mxu0 0
      %5227 = vmatprep.subr.bf16.mxu0 0
      %5228 = vmatpush1.bf16.msra.mxu0 0
      %5229 = vmatprep.subr.bf16.mxu0 0
      %5230 = vmatpush1.bf16.msra.mxu0 0
      %5231 = vmatprep.subr.bf16.mxu0 0
      %5232 = vmatpush1.bf16.msra.mxu0 0
      %5233 = vmatprep.subr.bf16.mxu0 0
      %5234 = vmatpush1.bf16.msra.mxu0 0
      %5235 = vmatprep.subr.bf16.mxu0 0
      %5236 = vmatpush1.bf16.msra.mxu0 0
      %5237 = vmatprep.subr.bf16.mxu0 0
      %5238 = vmatpush1.bf16.msra.mxu0 0
      %5239 = vmatprep.subr.bf16.mxu0 0
      %5240 = vmatpush1.bf16.msra.mxu0 0
      %5241 = vmatprep.subr.bf16.mxu0 0
      %5242 = vmatpush1.bf16.msra.mxu0 0
      %5243 = vmatprep.mubr.bf16.mxu0 0
      %5244 = vmatmul.mubr.bf16.gmra.mrb[0].mxu0 %v4762
      %v5245 = vpop.f32.mrb[0].mxu0
      %v5246 = vadd.f32 %v4572, %v5245
      %v5247 = vpop.f32.mrb[0].mxu0
      %v5248 = vadd.f32 %v4576, %v5247
      %v5249 = vpop.f32.mrb[0].mxu0
      %v5250 = vadd.f32 %v4572, %v5249
      %v5251 = vpop.f32.mrb[0].mxu0
      %v5252 = vadd.f32 %v4576, %v5251
      %5253 = vmatprep.mubr.bf16.mxu0 0
      %5254 = vmatmul.mubr.bf16.gmra.mrb[0].mxu0 %v4765
      %v5255 = vpop.f32.mrb[0].mxu0
      %v5256 = vadd.f32 %v4572, %v5255
      %v5257 = vpop.f32.mrb[0].mxu0
      %v5258 = vadd.f32 %v4576, %v5257
      %v5259 = vpop.f32.mrb[0].mxu0
      %v5260 = vadd.f32 %v4572, %v5259
      %v5261 = vpop.f32.mrb[0].mxu0
      %v5262 = vadd.f32 %v4576, %v5261
      %5263 = vmatprep.mubr.bf16.mxu0 0
      %5264 = vmatmul.mubr.bf16.gmra.mrb[0].mxu0 %v4768
      %v5265 = vpop.f32.mrb[0].mxu0
      %v5266 = vadd.f32 %v4572, %v5265
      %v5267 = vpop.f32.mrb[0].mxu0
      %v5268 = vadd.f32 %v4576, %v5267
      %v5269 = vpop.f32.mrb[0].mxu0
      %v5270 = vadd.f32 %v4572, %v5269
      %v5271 = vpop.f32.mrb[0].mxu0
      %v5272 = vadd.f32 %v4576, %v5271
      %5273 = vmatprep.mubr.bf16.mxu0 0
      %5274 = vmatmul.mubr.bf16.gmra.mrb[0].mxu0 %v4771
      %v5275 = vpop.f32.mrb[0].mxu0
      %v5276 = vadd.f32 %v4572, %v5275
      %v5277 = vpop.f32.mrb[0].mxu0
      %v5278 = vadd.f32 %v4576, %v5277
      %v5279 = vpop.f32.mrb[0].mxu0
      %v5280 = vadd.f32 %v4572, %v5279
      %v5281 = vpop.f32.mrb[0].mxu0
      %v5282 = vadd.f32 %v4576, %v5281
      %5283 = vdwg.mxu0
      %5284 = vmatprep.subr.bf16.mxu0 %v4712
      %5285 = vmatpush1.bf16.msra.mxu0 %v4711
      %5286 = vmatprep.subr.bf16.mxu0 %v4728
      %5287 = vmatpush1.bf16.msra.mxu0 %v4727
      %5288 = vmatprep.subr.bf16.mxu0 0
      %5289 = vmatpush1.bf16.msra.mxu0 0
      %5290 = vmatprep.subr.bf16.mxu0 0
      %5291 = vmatpush1.bf16.msra.mxu0 0
      %5292 = vmatprep.subr.bf16.mxu0 0
      %5293 = vmatpush1.bf16.msra.mxu0 0
      %5294 = vmatprep.subr.bf16.mxu0 0
      %5295 = vmatpush1.bf16.msra.mxu0 0
      %5296 = vmatprep.subr.bf16.mxu0 0
      %5297 = vmatpush1.bf16.msra.mxu0 0
      %5298 = vmatprep.subr.bf16.mxu0 0
      %5299 = vmatpush1.bf16.msra.mxu0 0
      %5300 = vmatprep.subr.bf16.mxu0 0
      %5301 = vmatpush1.bf16.msra.mxu0 0
      %5302 = vmatprep.subr.bf16.mxu0 0
      %5303 = vmatpush1.bf16.msra.mxu0 0
      %5304 = vmatprep.subr.bf16.mxu0 0
      %5305 = vmatpush1.bf16.msra.mxu0 0
      %5306 = vmatprep.subr.bf16.mxu0 0
      %5307 = vmatpush1.bf16.msra.mxu0 0
      %5308 = vmatprep.subr.bf16.mxu0 0
      %5309 = vmatpush1.bf16.msra.mxu0 0
      %5310 = vmatprep.subr.bf16.mxu0 0
      %5311 = vmatpush1.bf16.msra.mxu0 0
      %5312 = vmatprep.subr.bf16.mxu0 0
      %5313 = vmatpush1.bf16.msra.mxu0 0
      %5314 = vmatprep.subr.bf16.mxu0 0
      %5315 = vmatpush1.bf16.msra.mxu0 0
      %5316 = vmatprep.mubr.bf16.mxu0 0
      %5317 = vmatmul.mubr.bf16.gmra.mrb[0].mxu0 %v4762
      %v5318 = vpop.f32.mrb[0].mxu0
      %v5319 = vadd.f32 %v4580, %v5318
      %v5320 = vpop.f32.mrb[0].mxu0
      %v5321 = vadd.f32 %v4584, %v5320
      %v5322 = vpop.f32.mrb[0].mxu0
      %v5323 = vadd.f32 %v4580, %v5322
      %v5324 = vpop.f32.mrb[0].mxu0
      %v5325 = vadd.f32 %v4584, %v5324
      %5326 = vmatprep.mubr.bf16.mxu0 0
      %5327 = vmatmul.mubr.bf16.gmra.mrb[0].mxu0 %v4765
      %v5328 = vpop.f32.mrb[0].mxu0
      %v5329 = vadd.f32 %v4580, %v5328
      %v5330 = vpop.f32.mrb[0].mxu0
      %v5331 = vadd.f32 %v4584, %v5330
      %v5332 = vpop.f32.mrb[0].mxu0
      %v5333 = vadd.f32 %v4580, %v5332
      %v5334 = vpop.f32.mrb[0].mxu0
      %v5335 = vadd.f32 %v4584, %v5334
      %5336 = vmatprep.mubr.bf16.mxu0 0
      %5337 = vmatmul.mubr.bf16.gmra.mrb[0].mxu0 %v4768
      %v5338 = vpop.f32.mrb[0].mxu0
      %v5339 = vadd.f32 %v4580, %v5338
      %v5340 = vpop.f32.mrb[0].mxu0
      %v5341 = vadd.f32 %v4584, %v5340
      %v5342 = vpop.f32.mrb[0].mxu0
      %v5343 = vadd.f32 %v4580, %v5342
      %v5344 = vpop.f32.mrb[0].mxu0
      %v5345 = vadd.f32 %v4584, %v5344
      %5346 = vmatprep.mubr.bf16.mxu0 0
      %5347 = vmatmul.mubr.bf16.gmra.mrb[0].mxu0 %v4771
      %v5348 = vpop.f32.mrb[0].mxu0
      %v5349 = vadd.f32 %v4580, %v5348
      %v5350 = vpop.f32.mrb[0].mxu0
      %v5351 = vadd.f32 %v4584, %v5350
      %v5352 = vpop.f32.mrb[0].mxu0
      %v5353 = vadd.f32 %v4580, %v5352
      %v5354 = vpop.f32.mrb[0].mxu0
      %v5355 = vadd.f32 %v4584, %v5354
      %5356 = vdwg.mxu0
      %v5357 = vmax.f32 %v4808, 0.0
      %v5358 = vmax.f32 %v4810, 0.0
      %v5359 = vmax.f32 %v4881, 0.0
      %v5360 = vmax.f32 %v4883, 0.0
      %v5361 = vmax.f32 %v4954, 0.0
      %v5362 = vmax.f32 %v4956, 0.0
      %v5363 = vmax.f32 %v5027, 0.0
      %v5364 = vmax.f32 %v5029, 0.0
      %v5365 = vmax.f32 %v5100, 0.0
      %v5366 = vmax.f32 %v5102, 0.0
      %v5367 = vmax.f32 %v5173, 0.0
      %v5368 = vmax.f32 %v5175, 0.0
      %v5369 = vmax.f32 %v5246, 0.0
      %v5370 = vmax.f32 %v5248, 0.0
      %v5371 = vmax.f32 %v5319, 0.0
      %v5372 = vmax.f32 %v5321, 0.0
      %v5373 = vmax.f32 %v4812, 0.0
      %v5374 = vmax.f32 %v4814, 0.0
      %v5375 = vmax.f32 %v4885, 0.0
      %v5376 = vmax.f32 %v4887, 0.0
      %v5377 = vmax.f32 %v4958, 0.0
      %v5378 = vmax.f32 %v4960, 0.0
      %v5379 = vmax.f32 %v5031, 0.0
      %v5380 = vmax.f32 %v5033, 0.0
      %v5381 = vmax.f32 %v5104, 0.0
      %v5382 = vmax.f32 %v5106, 0.0
      %v5383 = vmax.f32 %v5177, 0.0
      %v5384 = vmax.f32 %v5179, 0.0
      %v5385 = vmax.f32 %v5250, 0.0
      %v5386 = vmax.f32 %v5252, 0.0
      %v5387 = vmax.f32 %v5323, 0.0
      %v5388 = vmax.f32 %v5325, 0.0
      %v5389 = vmax.f32 %v4818, 0.0
      %v5390 = vmax.f32 %v4820, 0.0
      %v5391 = vmax.f32 %v4891, 0.0
      %v5392 = vmax.f32 %v4893, 0.0
      %v5393 = vmax.f32 %v4964, 0.0
      %v5394 = vmax.f32 %v4966, 0.0
      %v5395 = vmax.f32 %v5037, 0.0
      %v5396 = vmax.f32 %v5039, 0.0
      %v5397 = vmax.f32 %v5110, 0.0
      %v5398 = vmax.f32 %v5112, 0.0
      %v5399 = vmax.f32 %v5183, 0.0
      %v5400 = vmax.f32 %v5185, 0.0
      %v5401 = vmax.f32 %v5256, 0.0
      %v5402 = vmax.f32 %v5258, 0.0
      %v5403 = vmax.f32 %v5329, 0.0
      %v5404 = vmax.f32 %v5331, 0.0
      %v5405 = vmax.f32 %v4822, 0.0
      %v5406 = vmax.f32 %v4824, 0.0
      %v5407 = vmax.f32 %v4895, 0.0
      %v5408 = vmax.f32 %v4897, 0.0
      %v5409 = vmax.f32 %v4968, 0.0
      %v5410 = vmax.f32 %v4970, 0.0
      %v5411 = vmax.f32 %v5041, 0.0
      %v5412 = vmax.f32 %v5043, 0.0
      %v5413 = vmax.f32 %v5114, 0.0
      %v5414 = vmax.f32 %v5116, 0.0
      %v5415 = vmax.f32 %v5187, 0.0
      %v5416 = vmax.f32 %v5189, 0.0
      %v5417 = vmax.f32 %v5260, 0.0
      %v5418 = vmax.f32 %v5262, 0.0
      %v5419 = vmax.f32 %v5333, 0.0
      %v5420 = vmax.f32 %v5335, 0.0
      %v5421 = vmax.f32 %v4828, 0.0
      %v5422 = vmax.f32 %v4830, 0.0
      %v5423 = vmax.f32 %v4901, 0.0
      %v5424 = vmax.f32 %v4903, 0.0
      %v5425 = vmax.f32 %v4974, 0.0
      %v5426 = vmax.f32 %v4976, 0.0
      %v5427 = vmax.f32 %v5047, 0.0
      %v5428 = vmax.f32 %v5049, 0.0
      %v5429 = vmax.f32 %v5120, 0.0
      %v5430 = vmax.f32 %v5122, 0.0
      %v5431 = vmax.f32 %v5193, 0.0
      %v5432 = vmax.f32 %v5195, 0.0
      %v5433 = vmax.f32 %v5266, 0.0
      %v5434 = vmax.f32 %v5268, 0.0
      %v5435 = vmax.f32 %v5339, 0.0
      %v5436 = vmax.f32 %v5341, 0.0
      %v5437 = vmax.f32 %v4832, 0.0
      %v5438 = vmax.f32 %v4834, 0.0
      %v5439 = vmax.f32 %v4905, 0.0
      %v5440 = vmax.f32 %v4907, 0.0
      %v5441 = vmax.f32 %v4978, 0.0
      %v5442 = vmax.f32 %v4980, 0.0
      %v5443 = vmax.f32 %v5051, 0.0
      %v5444 = vmax.f32 %v5053, 0.0
      %v5445 = vmax.f32 %v5124, 0.0
      %v5446 = vmax.f32 %v5126, 0.0
      %v5447 = vmax.f32 %v5197, 0.0
      %v5448 = vmax.f32 %v5199, 0.0
      %v5449 = vmax.f32 %v5270, 0.0
      %v5450 = vmax.f32 %v5272, 0.0
      %v5451 = vmax.f32 %v5343, 0.0
      %v5452 = vmax.f32 %v5345, 0.0
      %v5453 = vmax.f32 %v4838, 0.0
      %v5454 = vmax.f32 %v4840, 0.0
      %v5455 = vmax.f32 %v4911, 0.0
      %v5456 = vmax.f32 %v4913, 0.0
      %v5457 = vmax.f32 %v4984, 0.0
      %v5458 = vmax.f32 %v4986, 0.0
      %v5459 = vmax.f32 %v5057, 0.0
      %v5460 = vmax.f32 %v5059, 0.0
      %v5461 = vmax.f32 %v5130, 0.0
      %v5462 = vmax.f32 %v5132, 0.0
      %v5463 = vmax.f32 %v5203, 0.0
      %v5464 = vmax.f32 %v5205, 0.0
      %v5465 = vmax.f32 %v5276, 0.0
      %v5466 = vmax.f32 %v5278, 0.0
      %v5467 = vmax.f32 %v5349, 0.0
      %v5468 = vmax.f32 %v5351, 0.0
      %v5469 = vmax.f32 %v4842, 0.0
      %v5470 = vmax.f32 %v4844, 0.0
      %v5471 = vmax.f32 %v4915, 0.0
      %v5472 = vmax.f32 %v4917, 0.0
      %v5473 = vmax.f32 %v4988, 0.0
      %v5474 = vmax.f32 %v4990, 0.0
      %v5475 = vmax.f32 %v5061, 0.0
      %v5476 = vmax.f32 %v5063, 0.0
      %v5477 = vmax.f32 %v5134, 0.0
      %v5478 = vmax.f32 %v5136, 0.0
      %v5479 = vmax.f32 %v5207, 0.0
      %v5480 = vmax.f32 %v5209, 0.0
      %v5481 = vmax.f32 %v5280, 0.0
      %v5482 = vmax.f32 %v5282, 0.0
      %v5483 = vmax.f32 %v5353, 0.0
      %v5484 = vmax.f32 %v5355, 0.0
      %v5485 = vpack.c.bf16 %v5373, %v5357
      %v5486 = vpack.c.bf16 %v5374, %v5358
      %v5487 = vpack.c.bf16 %v5375, %v5359
      %v5488 = vpack.c.bf16 %v5376, %v5360
      %v5489 = vpack.c.bf16 %v5377, %v5361
      %v5490 = vpack.c.bf16 %v5378, %v5362
      %v5491 = vpack.c.bf16 %v5379, %v5363
      %v5492 = vpack.c.bf16 %v5380, %v5364
      %v5493 = vpack.c.bf16 %v5381, %v5365
      %v5494 = vpack.c.bf16 %v5382, %v5366
      %v5495 = vpack.c.bf16 %v5383, %v5367
      %v5496 = vpack.c.bf16 %v5384, %v5368
      %v5497 = vpack.c.bf16 %v5385, %v5369
      %v5498 = vpack.c.bf16 %v5386, %v5370
      %v5499 = vpack.c.bf16 %v5387, %v5371
      %v5500 = vpack.c.bf16 %v5388, %v5372
      %v5501 = vpack.c.bf16 %v5405, %v5389
      %v5502 = vpack.c.bf16 %v5406, %v5390
      %v5503 = vpack.c.bf16 %v5407, %v5391
      %v5504 = vpack.c.bf16 %v5408, %v5392
      %v5505 = vpack.c.bf16 %v5409, %v5393
      %v5506 = vpack.c.bf16 %v5410, %v5394
      %v5507 = vpack.c.bf16 %v5411, %v5395
      %v5508 = vpack.c.bf16 %v5412, %v5396
      %v5509 = vpack.c.bf16 %v5413, %v5397
      %v5510 = vpack.c.bf16 %v5414, %v5398
      %v5511 = vpack.c.bf16 %v5415, %v5399
      %v5512 = vpack.c.bf16 %v5416, %v5400
      %v5513 = vpack.c.bf16 %v5417, %v5401
      %v5514 = vpack.c.bf16 %v5418, %v5402
      %v5515 = vpack.c.bf16 %v5419, %v5403
      %v5516 = vpack.c.bf16 %v5420, %v5404
      %v5517 = vpack.c.bf16 %v5437, %v5421
      %v5518 = vpack.c.bf16 %v5438, %v5422
      %v5519 = vpack.c.bf16 %v5439, %v5423
      %v5520 = vpack.c.bf16 %v5440, %v5424
      %v5521 = vpack.c.bf16 %v5441, %v5425
      %v5522 = vpack.c.bf16 %v5442, %v5426
      %v5523 = vpack.c.bf16 %v5443, %v5427
      %v5524 = vpack.c.bf16 %v5444, %v5428
      %v5525 = vpack.c.bf16 %v5445, %v5429
      %v5526 = vpack.c.bf16 %v5446, %v5430
      %v5527 = vpack.c.bf16 %v5447, %v5431
      %v5528 = vpack.c.bf16 %v5448, %v5432
      %v5529 = vpack.c.bf16 %v5449, %v5433
      %v5530 = vpack.c.bf16 %v5450, %v5434
      %v5531 = vpack.c.bf16 %v5451, %v5435
      %v5532 = vpack.c.bf16 %v5452, %v5436
      %v5533 = vpack.c.bf16 %v5469, %v5453
      %v5534 = vpack.c.bf16 %v5470, %v5454
      %v5535 = vpack.c.bf16 %v5471, %v5455
      %v5536 = vpack.c.bf16 %v5472, %v5456
      %v5537 = vpack.c.bf16 %v5473, %v5457
      %v5538 = vpack.c.bf16 %v5474, %v5458
      %v5539 = vpack.c.bf16 %v5475, %v5459
      %v5540 = vpack.c.bf16 %v5476, %v5460
      %v5541 = vpack.c.bf16 %v5477, %v5461
      %v5542 = vpack.c.bf16 %v5478, %v5462
      %v5543 = vpack.c.bf16 %v5479, %v5463
      %v5544 = vpack.c.bf16 %v5480, %v5464
      %v5545 = vpack.c.bf16 %v5481, %v5465
      %v5546 = vpack.c.bf16 %v5482, %v5466
      %v5547 = vpack.c.bf16 %v5483, %v5467
      %v5548 = vpack.c.bf16 %v5484, %v5468
      %v5549 = vld [vmem:[%s9] sm:$0xf]
      %v5550 = vld [vmem:[%s9 + $0x4] sm:$0xf]
      %v5551 = vld [vmem:[%s9 + $0x8] sm:$0xf]
      %v5552 = vld [vmem:[%s9 + $0xc] sm:$0xf]
      %v5553 = vld [vmem:[%s9 + $0x10] sm:$0xf]
      %v5554 = vld [vmem:[%s9 + $0x14] sm:$0xf]
      %v5555 = vld [vmem:[%s9 + $0x18] sm:$0xf]
      %v5556 = vld [vmem:[%s9 + $0x1c] sm:$0xf]
      %v5557 = vld [vmem:[%s9 + $0x20] sm:$0xf]
      %v5558 = vld [vmem:[%s9 + $0x24] sm:$0xf]
      %v5559 = vld [vmem:[%s9 + $0x28] sm:$0xf]
      %v5560 = vld [vmem:[%s9 + $0x2c] sm:$0xf]
      %v5561 = vld [vmem:[%s9 + $0x30] sm:$0xf]
      %v5562 = vld [vmem:[%s9 + $0x34] sm:$0xf]
      %v5563 = vld [vmem:[%s9 + $0x38] sm:$0xf]
      %v5564 = vld [vmem:[%s9 + $0x3c] sm:$0xf]
      %v5565 = vld [vmem:[%s9 + $0x40] sm:$0xf]
      %v5566 = vld [vmem:[%s9 + $0x44] sm:$0xf]
      %v5567 = vld [vmem:[%s9 + $0x48] sm:$0xf]
      %v5568 = vld [vmem:[%s9 + $0x4c] sm:$0xf]
      %v5569 = vld [vmem:[%s9 + $0x50] sm:$0xf]
      %v5570 = vld [vmem:[%s9 + $0x54] sm:$0xf]
      %v5571 = vld [vmem:[%s9 + $0x58] sm:$0xf]
      %v5572 = vld [vmem:[%s9 + $0x5c] sm:$0xf]
      %v5573 = vld [vmem:[%s9 + $0x60] sm:$0xf]
      %v5574 = vld [vmem:[%s9 + $0x64] sm:$0xf]
      %v5575 = vld [vmem:[%s9 + $0x68] sm:$0xf]
      %v5576 = vld [vmem:[%s9 + $0x6c] sm:$0xf]
      %v5577 = vld [vmem:[%s9 + $0x70] sm:$0xf]
      %v5578 = vld [vmem:[%s9 + $0x74] sm:$0xf]
      %v5579 = vld [vmem:[%s9 + $0x78] sm:$0xf]
      %v5580 = vld [vmem:[%s9 + $0x7c] sm:$0xf]
      %v5581 = vld [vmem:[%s9 + $0x80] sm:$0xf]
      %v5582 = vld [vmem:[%s9 + $0x84] sm:$0xf]
      %v5583 = vld [vmem:[%s9 + $0x88] sm:$0xf]
      %v5584 = vld [vmem:[%s9 + $0x8c] sm:$0xf]
      %v5585 = vld [vmem:[%s9 + $0x90] sm:$0xf]
      %v5586 = vld [vmem:[%s9 + $0x94] sm:$0xf]
      %v5587 = vld [vmem:[%s9 + $0x98] sm:$0xf]
      %v5588 = vld [vmem:[%s9 + $0x9c] sm:$0xf]
      %v5589 = vld [vmem:[%s9 + $0xa0] sm:$0xf]
      %v5590 = vld [vmem:[%s9 + $0xa4] sm:$0xf]
      %v5591 = vld [vmem:[%s9 + $0xa8] sm:$0xf]
      %v5592 = vld [vmem:[%s9 + $0xac] sm:$0xf]
      %v5593 = vld [vmem:[%s9 + $0xb0] sm:$0xf]
      %v5594 = vld [vmem:[%s9 + $0xb4] sm:$0xf]
      %v5595 = vld [vmem:[%s9 + $0xb8] sm:$0xf]
      %v5596 = vld [vmem:[%s9 + $0xbc] sm:$0xf]
      %v5597 = vld [vmem:[%s9 + $0xc0] sm:$0xf]
      %v5598 = vld [vmem:[%s9 + $0xc4] sm:$0xf]
      %v5599 = vld [vmem:[%s9 + $0xc8] sm:$0xf]
      %v5600 = vld [vmem:[%s9 + $0xcc] sm:$0xf]
      %v5601 = vld [vmem:[%s9 + $0xd0] sm:$0xf]
      %v5602 = vld [vmem:[%s9 + $0xd4] sm:$0xf]
      %v5603 = vld [vmem:[%s9 + $0xd8] sm:$0xf]
      %v5604 = vld [vmem:[%s9 + $0xdc] sm:$0xf]
      %v5605 = vld [vmem:[%s9 + $0xe0] sm:$0xf]
      %v5606 = vld [vmem:[%s9 + $0xe4] sm:$0xf]
      %v5607 = vld [vmem:[%s9 + $0xe8] sm:$0xf]
      %v5608 = vld [vmem:[%s9 + $0xec] sm:$0xf]
      %v5609 = vld [vmem:[%s9 + $0xf0] sm:$0xf]
      %v5610 = vld [vmem:[%s9 + $0xf4] sm:$0xf]
      %v5611 = vld [vmem:[%s9 + $0xf8] sm:$0xf]
      %v5612 = vld [vmem:[%s9 + $0xfc] sm:$0xf]
      %v5613 = vld [vmem:[%s9 + $0x100] sm:$0xf]
      %v5614 = vld [vmem:[%s9 + $0x104] sm:$0xf]
      %v5615 = vld [vmem:[%s9 + $0x108] sm:$0xf]
      %v5616 = vld [vmem:[%s9 + $0x10c] sm:$0xf]
      %v5617 = vld [vmem:[%s9 + $0x110] sm:$0xf]
      %v5618 = vld [vmem:[%s9 + $0x114] sm:$0xf]
      %v5619 = vld [vmem:[%s9 + $0x118] sm:$0xf]
      %v5620 = vld [vmem:[%s9 + $0x11c] sm:$0xf]
      %v5621 = vld [vmem:[%s9 + $0x120] sm:$0xf]
      %v5622 = vld [vmem:[%s9 + $0x124] sm:$0xf]
      %v5623 = vld [vmem:[%s9 + $0x128] sm:$0xf]
      %v5624 = vld [vmem:[%s9 + $0x12c] sm:$0xf]
      %v5625 = vld [vmem:[%s9 + $0x130] sm:$0xf]
      %v5626 = vld [vmem:[%s9 + $0x134] sm:$0xf]
      %v5627 = vld [vmem:[%s9 + $0x138] sm:$0xf]
      %v5628 = vld [vmem:[%s9 + $0x13c] sm:$0xf]
      %v5629 = vld [vmem:[%s9 + $0x140] sm:$0xf]
      %v5630 = vld [vmem:[%s9 + $0x144] sm:$0xf]
      %v5631 = vld [vmem:[%s9 + $0x148] sm:$0xf]
      %v5632 = vld [vmem:[%s9 + $0x14c] sm:$0xf]
      %v5633 = vld [vmem:[%s9 + $0x150] sm:$0xf]
      %v5634 = vld [vmem:[%s9 + $0x154] sm:$0xf]
      %v5635 = vld [vmem:[%s9 + $0x158] sm:$0xf]
      %v5636 = vld [vmem:[%s9 + $0x15c] sm:$0xf]
      %v5637 = vld [vmem:[%s9 + $0x160] sm:$0xf]
      %v5638 = vld [vmem:[%s9 + $0x164] sm:$0xf]
      %v5639 = vld [vmem:[%s9 + $0x168] sm:$0xf]
      %v5640 = vld [vmem:[%s9 + $0x16c] sm:$0xf]
      %v5641 = vld [vmem:[%s9 + $0x170] sm:$0xf]
      %v5642 = vld [vmem:[%s9 + $0x174] sm:$0xf]
      %v5643 = vld [vmem:[%s9 + $0x178] sm:$0xf]
      %v5644 = vld [vmem:[%s9 + $0x17c] sm:$0xf]
      %v5645 = vld [vmem:[%s9 + $0x180] sm:$0xf]
      %v5646 = vld [vmem:[%s9 + $0x184] sm:$0xf]
      %v5647 = vld [vmem:[%s9 + $0x188] sm:$0xf]
      %v5648 = vld [vmem:[%s9 + $0x18c] sm:$0xf]
      %v5649 = vld [vmem:[%s9 + $0x190] sm:$0xf]
      %v5650 = vld [vmem:[%s9 + $0x194] sm:$0xf]
      %v5651 = vld [vmem:[%s9 + $0x198] sm:$0xf]
      %v5652 = vld [vmem:[%s9 + $0x19c] sm:$0xf]
      %v5653 = vld [vmem:[%s9 + $0x1a0] sm:$0xf]
      %v5654 = vld [vmem:[%s9 + $0x1a4] sm:$0xf]
      %v5655 = vld [vmem:[%s9 + $0x1a8] sm:$0xf]
      %v5656 = vld [vmem:[%s9 + $0x1ac] sm:$0xf]
      %v5657 = vld [vmem:[%s9 + $0x1b0] sm:$0xf]
      %v5658 = vld [vmem:[%s9 + $0x1b4] sm:$0xf]
      %v5659 = vld [vmem:[%s9 + $0x1b8] sm:$0xf]
      %v5660 = vld [vmem:[%s9 + $0x1bc] sm:$0xf]
      %v5661 = vld [vmem:[%s9 + $0x1c0] sm:$0xf]
      %v5662 = vld [vmem:[%s9 + $0x1c4] sm:$0xf]
      %v5663 = vld [vmem:[%s9 + $0x1c8] sm:$0xf]
      %v5664 = vld [vmem:[%s9 + $0x1cc] sm:$0xf]
      %v5665 = vld [vmem:[%s9 + $0x1d0] sm:$0xf]
      %v5666 = vld [vmem:[%s9 + $0x1d4] sm:$0xf]
      %v5667 = vld [vmem:[%s9 + $0x1d8] sm:$0xf]
      %v5668 = vld [vmem:[%s9 + $0x1dc] sm:$0xf]
      %v5669 = vld [vmem:[%s9 + $0x1e0] sm:$0xf]
      %v5670 = vld [vmem:[%s9 + $0x1e4] sm:$0xf]
      %v5671 = vld [vmem:[%s9 + $0x1e8] sm:$0xf]
      %v5672 = vld [vmem:[%s9 + $0x1ec] sm:$0xf]
      %v5673 = vld [vmem:[%s9 + $0x1f0] sm:$0xf]
      %v5674 = vld [vmem:[%s9 + $0x1f4] sm:$0xf]
      %v5675 = vld [vmem:[%s9 + $0x1f8] sm:$0xf]
      %v5676 = vld [vmem:[%s9 + $0x1fc] sm:$0xf]
      %v5677 = vld [vmem:[%s9 + $0x200] sm:$0xf]
      %v5678 = vld [vmem:[%s9 + $0x204] sm:$0xf]
      %v5679 = vld [vmem:[%s9 + $0x208] sm:$0xf]
      %v5680 = vld [vmem:[%s9 + $0x20c] sm:$0xf]
      %v5681 = vld [vmem:[%s9 + $0x210] sm:$0xf]
      %v5682 = vld [vmem:[%s9 + $0x214] sm:$0xf]
      %v5683 = vld [vmem:[%s9 + $0x218] sm:$0xf]
      %v5684 = vld [vmem:[%s9 + $0x21c] sm:$0xf]
      %v5685 = vld [vmem:[%s9 + $0x220] sm:$0xf]
      %v5686 = vld [vmem:[%s9 + $0x224] sm:$0xf]
      %v5687 = vld [vmem:[%s9 + $0x228] sm:$0xf]
      %v5688 = vld [vmem:[%s9 + $0x22c] sm:$0xf]
      %v5689 = vld [vmem:[%s9 + $0x230] sm:$0xf]
      %v5690 = vld [vmem:[%s9 + $0x234] sm:$0xf]
      %v5691 = vld [vmem:[%s9 + $0x238] sm:$0xf]
      %v5692 = vld [vmem:[%s9 + $0x23c] sm:$0xf]
      %v5693 = vld [vmem:[%s9 + $0x240] sm:$0xf]
      %v5694 = vld [vmem:[%s9 + $0x244] sm:$0xf]
      %v5695 = vld [vmem:[%s9 + $0x248] sm:$0xf]
      %v5696 = vld [vmem:[%s9 + $0x24c] sm:$0xf]
      %v5697 = vld [vmem:[%s9 + $0x250] sm:$0xf]
      %v5698 = vld [vmem:[%s9 + $0x254] sm:$0xf]
      %v5699 = vld [vmem:[%s9 + $0x258] sm:$0xf]
      %v5700 = vld [vmem:[%s9 + $0x25c] sm:$0xf]
      %v5701 = vld [vmem:[%s9 + $0x260] sm:$0xf]
      %v5702 = vld [vmem:[%s9 + $0x264] sm:$0xf]
      %v5703 = vld [vmem:[%s9 + $0x268] sm:$0xf]
      %v5704 = vld [vmem:[%s9 + $0x26c] sm:$0xf]
      %v5705 = vld [vmem:[%s9 + $0x270] sm:$0xf]
      %v5706 = vld [vmem:[%s9 + $0x274] sm:$0xf]
      %v5707 = vld [vmem:[%s9 + $0x278] sm:$0xf]
      %v5708 = vld [vmem:[%s9 + $0x27c] sm:$0xf]
      %v5709 = vld [vmem:[%s9 + $0x280] sm:$0xf]
      %v5710 = vld [vmem:[%s9 + $0x284] sm:$0xf]
      %v5711 = vld [vmem:[%s9 + $0x288] sm:$0xf]
      %v5712 = vld [vmem:[%s9 + $0x28c] sm:$0xf]
      %v5713 = vld [vmem:[%s9 + $0x290] sm:$0xf]
      %v5714 = vld [vmem:[%s9 + $0x294] sm:$0xf]
      %v5715 = vld [vmem:[%s9 + $0x298] sm:$0xf]
      %v5716 = vld [vmem:[%s9 + $0x29c] sm:$0xf]
      %v5717 = vld [vmem:[%s9 + $0x2a0] sm:$0xf]
      %v5718 = vld [vmem:[%s9 + $0x2a4] sm:$0xf]
      %v5719 = vld [vmem:[%s9 + $0x2a8] sm:$0xf]
      %v5720 = vld [vmem:[%s9 + $0x2ac] sm:$0xf]
      %v5721 = vld [vmem:[%s9 + $0x2b0] sm:$0xf]
      %v5722 = vld [vmem:[%s9 + $0x2b4] sm:$0xf]
      %v5723 = vld [vmem:[%s9 + $0x2b8] sm:$0xf]
      %v5724 = vld [vmem:[%s9 + $0x2bc] sm:$0xf]
      %v5725 = vld [vmem:[%s9 + $0x2c0] sm:$0xf]
      %v5726 = vld [vmem:[%s9 + $0x2c4] sm:$0xf]
      %v5727 = vld [vmem:[%s9 + $0x2c8] sm:$0xf]
      %v5728 = vld [vmem:[%s9 + $0x2cc] sm:$0xf]
      %v5729 = vld [vmem:[%s9 + $0x2d0] sm:$0xf]
      %v5730 = vld [vmem:[%s9 + $0x2d4] sm:$0xf]
      %v5731 = vld [vmem:[%s9 + $0x2d8] sm:$0xf]
      %v5732 = vld [vmem:[%s9 + $0x2dc] sm:$0xf]
      %v5733 = vld [vmem:[%s9 + $0x2e0] sm:$0xf]
      %v5734 = vld [vmem:[%s9 + $0x2e4] sm:$0xf]
      %v5735 = vld [vmem:[%s9 + $0x2e8] sm:$0xf]
      %v5736 = vld [vmem:[%s9 + $0x2ec] sm:$0xf]
      %v5737 = vld [vmem:[%s9 + $0x2f0] sm:$0xf]
      %v5738 = vld [vmem:[%s9 + $0x2f4] sm:$0xf]
      %v5739 = vld [vmem:[%s9 + $0x2f8] sm:$0xf]
      %v5740 = vld [vmem:[%s9 + $0x2fc] sm:$0xf]
      %v5741 = vld [vmem:[%s9 + $0x300] sm:$0xf]
      %v5742 = vld [vmem:[%s9 + $0x304] sm:$0xf]
      %v5743 = vld [vmem:[%s9 + $0x308] sm:$0xf]
      %v5744 = vld [vmem:[%s9 + $0x30c] sm:$0xf]
      %v5745 = vld [vmem:[%s9 + $0x310] sm:$0xf]
      %v5746 = vld [vmem:[%s9 + $0x314] sm:$0xf]
      %v5747 = vld [vmem:[%s9 + $0x318] sm:$0xf]
      %v5748 = vld [vmem:[%s9 + $0x31c] sm:$0xf]
      %v5749 = vld [vmem:[%s9 + $0x320] sm:$0xf]
      %v5750 = vld [vmem:[%s9 + $0x324] sm:$0xf]
      %v5751 = vld [vmem:[%s9 + $0x328] sm:$0xf]
      %v5752 = vld [vmem:[%s9 + $0x32c] sm:$0xf]
      %v5753 = vld [vmem:[%s9 + $0x330] sm:$0xf]
      %v5754 = vld [vmem:[%s9 + $0x334] sm:$0xf]
      %v5755 = vld [vmem:[%s9 + $0x338] sm:$0xf]
      %v5756 = vld [vmem:[%s9 + $0x33c] sm:$0xf]
      %v5757 = vld [vmem:[%s9 + $0x340] sm:$0xf]
      %v5758 = vld [vmem:[%s9 + $0x344] sm:$0xf]
      %v5759 = vld [vmem:[%s9 + $0x348] sm:$0xf]
      %v5760 = vld [vmem:[%s9 + $0x34c] sm:$0xf]
      %v5761 = vld [vmem:[%s9 + $0x350] sm:$0xf]
      %v5762 = vld [vmem:[%s9 + $0x354] sm:$0xf]
      %v5763 = vld [vmem:[%s9 + $0x358] sm:$0xf]
      %v5764 = vld [vmem:[%s9 + $0x35c] sm:$0xf]
      %v5765 = vld [vmem:[%s9 + $0x360] sm:$0xf]
      %v5766 = vld [vmem:[%s9 + $0x364] sm:$0xf]
      %v5767 = vld [vmem:[%s9 + $0x368] sm:$0xf]
      %v5768 = vld [vmem:[%s9 + $0x36c] sm:$0xf]
      %v5769 = vld [vmem:[%s9 + $0x370] sm:$0xf]
      %v5770 = vld [vmem:[%s9 + $0x374] sm:$0xf]
      %v5771 = vld [vmem:[%s9 + $0x378] sm:$0xf]
      %v5772 = vld [vmem:[%s9 + $0x37c] sm:$0xf]
      %v5773 = vld [vmem:[%s9 + $0x380] sm:$0xf]
      %v5774 = vld [vmem:[%s9 + $0x384] sm:$0xf]
      %v5775 = vld [vmem:[%s9 + $0x388] sm:$0xf]
      %v5776 = vld [vmem:[%s9 + $0x38c] sm:$0xf]
      %v5777 = vld [vmem:[%s9 + $0x390] sm:$0xf]
      %v5778 = vld [vmem:[%s9 + $0x394] sm:$0xf]
      %v5779 = vld [vmem:[%s9 + $0x398] sm:$0xf]
      %v5780 = vld [vmem:[%s9 + $0x39c] sm:$0xf]
      %v5781 = vld [vmem:[%s9 + $0x3a0] sm:$0xf]
      %v5782 = vld [vmem:[%s9 + $0x3a4] sm:$0xf]
      %v5783 = vld [vmem:[%s9 + $0x3a8] sm:$0xf]
      %v5784 = vld [vmem:[%s9 + $0x3ac] sm:$0xf]
      %v5785 = vld [vmem:[%s9 + $0x3b0] sm:$0xf]
      %v5786 = vld [vmem:[%s9 + $0x3b4] sm:$0xf]
      %v5787 = vld [vmem:[%s9 + $0x3b8] sm:$0xf]
      %v5788 = vld [vmem:[%s9 + $0x3bc] sm:$0xf]
      %v5789 = vld [vmem:[%s9 + $0x3c0] sm:$0xf]
      %v5790 = vld [vmem:[%s9 + $0x3c4] sm:$0xf]
      %v5791 = vld [vmem:[%s9 + $0x3c8] sm:$0xf]
      %v5792 = vld [vmem:[%s9 + $0x3cc] sm:$0xf]
      %v5793 = vld [vmem:[%s9 + $0x3d0] sm:$0xf]
      %v5794 = vld [vmem:[%s9 + $0x3d4] sm:$0xf]
      %v5795 = vld [vmem:[%s9 + $0x3d8] sm:$0xf]
      %v5796 = vld [vmem:[%s9 + $0x3dc] sm:$0xf]
      %v5797 = vld [vmem:[%s9 + $0x3e0] sm:$0xf]
      %v5798 = vld [vmem:[%s9 + $0x3e4] sm:$0xf]
      %v5799 = vld [vmem:[%s9 + $0x3e8] sm:$0xf]
      %v5800 = vld [vmem:[%s9 + $0x3ec] sm:$0xf]
      %v5801 = vld [vmem:[%s9 + $0x3f0] sm:$0xf]
      %v5802 = vld [vmem:[%s9 + $0x3f4] sm:$0xf]
      %v5803 = vld [vmem:[%s9 + $0x3f8] sm:$0xf]
      %v5804 = vld [vmem:[%s9 + $0x3fc] sm:$0xf]
      %v5805 = vld [vmem:[%s10] sm:$0x1]
      %v5807 = vlaneseq
      %v5808 = vshrl.u32 %v5807, 7
      %v5809 = vsub.s32 0, %v5808
      %v5810 = vrot.slane %v5805, %v5809
      %v6068 = vunpack.c.l.b16 %v5549
      %v6069 = vunpack.c.l.b16 %v5550
      %v6070 = vunpack.c.l.b16 %v5551
      %v6071 = vunpack.c.l.b16 %v5552
      %v6072 = vunpack.c.l.b16 %v5553
      %v6073 = vunpack.c.l.b16 %v5554
      %v6074 = vunpack.c.l.b16 %v5555
      %v6075 = vunpack.c.l.b16 %v5556
      %v6076 = vunpack.c.l.b16 %v5557
      %v6077 = vunpack.c.l.b16 %v5558
      %v6078 = vunpack.c.l.b16 %v5559
      %v6079 = vunpack.c.l.b16 %v5560
      %v6080 = vunpack.c.l.b16 %v5561
      %v6081 = vunpack.c.l.b16 %v5562
      %v6082 = vunpack.c.l.b16 %v5563
      %v6083 = vunpack.c.l.b16 %v5564
      %v6084 = vunpack.c.l.b16 %v5565
      %v6085 = vunpack.c.l.b16 %v5566
      %v6086 = vunpack.c.l.b16 %v5567
      %v6087 = vunpack.c.l.b16 %v5568
      %v6088 = vunpack.c.l.b16 %v5569
      %v6089 = vunpack.c.l.b16 %v5570
      %v6090 = vunpack.c.l.b16 %v5571
      %v6091 = vunpack.c.l.b16 %v5572
      %v6092 = vunpack.c.l.b16 %v5573
      %v6093 = vunpack.c.l.b16 %v5574
      %v6094 = vunpack.c.l.b16 %v5575
      %v6095 = vunpack.c.l.b16 %v5576
      %v6096 = vunpack.c.l.b16 %v5577
      %v6097 = vunpack.c.l.b16 %v5578
      %v6098 = vunpack.c.l.b16 %v5579
      %v6099 = vunpack.c.l.b16 %v5580
      %v6100 = vunpack.c.l.b16 %v5581
      %v6101 = vunpack.c.l.b16 %v5582
      %v6102 = vunpack.c.l.b16 %v5583
      %v6103 = vunpack.c.l.b16 %v5584
      %v6104 = vunpack.c.l.b16 %v5585
      %v6105 = vunpack.c.l.b16 %v5586
      %v6106 = vunpack.c.l.b16 %v5587
      %v6107 = vunpack.c.l.b16 %v5588
      %v6108 = vunpack.c.l.b16 %v5589
      %v6109 = vunpack.c.l.b16 %v5590
      %v6110 = vunpack.c.l.b16 %v5591
      %v6111 = vunpack.c.l.b16 %v5592
      %v6112 = vunpack.c.l.b16 %v5593
      %v6113 = vunpack.c.l.b16 %v5594
      %v6114 = vunpack.c.l.b16 %v5595
      %v6115 = vunpack.c.l.b16 %v5596
      %v6116 = vunpack.c.l.b16 %v5597
      %v6117 = vunpack.c.l.b16 %v5598
      %v6118 = vunpack.c.l.b16 %v5599
      %v6119 = vunpack.c.l.b16 %v5600
      %v6120 = vunpack.c.l.b16 %v5601
      %v6121 = vunpack.c.l.b16 %v5602
      %v6122 = vunpack.c.l.b16 %v5603
      %v6123 = vunpack.c.l.b16 %v5604
      %v6124 = vunpack.c.l.b16 %v5605
      %v6125 = vunpack.c.l.b16 %v5606
      %v6126 = vunpack.c.l.b16 %v5607
      %v6127 = vunpack.c.l.b16 %v5608
      %v6128 = vunpack.c.l.b16 %v5609
      %v6129 = vunpack.c.l.b16 %v5610
      %v6130 = vunpack.c.l.b16 %v5611
      %v6131 = vunpack.c.l.b16 %v5612
      %v6132 = vunpack.c.l.b16 %v5613
      %v6133 = vunpack.c.l.b16 %v5614
      %v6134 = vunpack.c.l.b16 %v5615
      %v6135 = vunpack.c.l.b16 %v5616
      %v6136 = vunpack.c.l.b16 %v5617
      %v6137 = vunpack.c.l.b16 %v5618
      %v6138 = vunpack.c.l.b16 %v5619
      %v6139 = vunpack.c.l.b16 %v5620
      %v6140 = vunpack.c.l.b16 %v5621
      %v6141 = vunpack.c.l.b16 %v5622
      %v6142 = vunpack.c.l.b16 %v5623
      %v6143 = vunpack.c.l.b16 %v5624
      %v6144 = vunpack.c.l.b16 %v5625
      %v6145 = vunpack.c.l.b16 %v5626
      %v6146 = vunpack.c.l.b16 %v5627
      %v6147 = vunpack.c.l.b16 %v5628
      %v6148 = vunpack.c.l.b16 %v5629
      %v6149 = vunpack.c.l.b16 %v5630
      %v6150 = vunpack.c.l.b16 %v5631
      %v6151 = vunpack.c.l.b16 %v5632
      %v6152 = vunpack.c.l.b16 %v5633
      %v6153 = vunpack.c.l.b16 %v5634
      %v6154 = vunpack.c.l.b16 %v5635
      %v6155 = vunpack.c.l.b16 %v5636
      %v6156 = vunpack.c.l.b16 %v5637
      %v6157 = vunpack.c.l.b16 %v5638
      %v6158 = vunpack.c.l.b16 %v5639
      %v6159 = vunpack.c.l.b16 %v5640
      %v6160 = vunpack.c.l.b16 %v5641
      %v6161 = vunpack.c.l.b16 %v5642
      %v6162 = vunpack.c.l.b16 %v5643
      %v6163 = vunpack.c.l.b16 %v5644
      %v6164 = vunpack.c.l.b16 %v5645
      %v6165 = vunpack.c.l.b16 %v5646
      %v6166 = vunpack.c.l.b16 %v5647
      %v6167 = vunpack.c.l.b16 %v5648
      %v6168 = vunpack.c.l.b16 %v5649
      %v6169 = vunpack.c.l.b16 %v5650
      %v6170 = vunpack.c.l.b16 %v5651
      %v6171 = vunpack.c.l.b16 %v5652
      %v6172 = vunpack.c.l.b16 %v5653
      %v6173 = vunpack.c.l.b16 %v5654
      %v6174 = vunpack.c.l.b16 %v5655
      %v6175 = vunpack.c.l.b16 %v5656
      %v6176 = vunpack.c.l.b16 %v5657
      %v6177 = vunpack.c.l.b16 %v5658
      %v6178 = vunpack.c.l.b16 %v5659
      %v6179 = vunpack.c.l.b16 %v5660
      %v6180 = vunpack.c.l.b16 %v5661
      %v6181 = vunpack.c.l.b16 %v5662
      %v6182 = vunpack.c.l.b16 %v5663
      %v6183 = vunpack.c.l.b16 %v5664
      %v6184 = vunpack.c.l.b16 %v5665
      %v6185 = vunpack.c.l.b16 %v5666
      %v6186 = vunpack.c.l.b16 %v5667
      %v6187 = vunpack.c.l.b16 %v5668
      %v6188 = vunpack.c.l.b16 %v5669
      %v6189 = vunpack.c.l.b16 %v5670
      %v6190 = vunpack.c.l.b16 %v5671
      %v6191 = vunpack.c.l.b16 %v5672
      %v6192 = vunpack.c.l.b16 %v5673
      %v6193 = vunpack.c.l.b16 %v5674
      %v6194 = vunpack.c.l.b16 %v5675
      %v6195 = vunpack.c.l.b16 %v5676
      %v6196 = vunpack.c.l.b16 %v5677
      %v6197 = vunpack.c.l.b16 %v5678
      %v6198 = vunpack.c.l.b16 %v5679
      %v6199 = vunpack.c.l.b16 %v5680
      %v6200 = vunpack.c.l.b16 %v5681
      %v6201 = vunpack.c.l.b16 %v5682
      %v6202 = vunpack.c.l.b16 %v5683
      %v6203 = vunpack.c.l.b16 %v5684
      %v6204 = vunpack.c.l.b16 %v5685
      %v6205 = vunpack.c.l.b16 %v5686
      %v6206 = vunpack.c.l.b16 %v5687
      %v6207 = vunpack.c.l.b16 %v5688
      %v6208 = vunpack.c.l.b16 %v5689
      %v6209 = vunpack.c.l.b16 %v5690
      %v6210 = vunpack.c.l.b16 %v5691
      %v6211 = vunpack.c.l.b16 %v5692
      %v6212 = vunpack.c.l.b16 %v5693
      %v6213 = vunpack.c.l.b16 %v5694
      %v6214 = vunpack.c.l.b16 %v5695
      %v6215 = vunpack.c.l.b16 %v5696
      %v6216 = vunpack.c.l.b16 %v5697
      %v6217 = vunpack.c.l.b16 %v5698
      %v6218 = vunpack.c.l.b16 %v5699
      %v6219 = vunpack.c.l.b16 %v5700
      %v6220 = vunpack.c.l.b16 %v5701
      %v6221 = vunpack.c.l.b16 %v5702
      %v6222 = vunpack.c.l.b16 %v5703
      %v6223 = vunpack.c.l.b16 %v5704
      %v6224 = vunpack.c.l.b16 %v5705
      %v6225 = vunpack.c.l.b16 %v5706
      %v6226 = vunpack.c.l.b16 %v5707
      %v6227 = vunpack.c.l.b16 %v5708
      %v6228 = vunpack.c.l.b16 %v5709
      %v6229 = vunpack.c.l.b16 %v5710
      %v6230 = vunpack.c.l.b16 %v5711
      %v6231 = vunpack.c.l.b16 %v5712
      %v6232 = vunpack.c.l.b16 %v5713
      %v6233 = vunpack.c.l.b16 %v5714
      %v6234 = vunpack.c.l.b16 %v5715
      %v6235 = vunpack.c.l.b16 %v5716
      %v6236 = vunpack.c.l.b16 %v5717
      %v6237 = vunpack.c.l.b16 %v5718
      %v6238 = vunpack.c.l.b16 %v5719
      %v6239 = vunpack.c.l.b16 %v5720
      %v6240 = vunpack.c.l.b16 %v5721
      %v6241 = vunpack.c.l.b16 %v5722
      %v6242 = vunpack.c.l.b16 %v5723
      %v6243 = vunpack.c.l.b16 %v5724
      %v6244 = vunpack.c.l.b16 %v5725
      %v6245 = vunpack.c.l.b16 %v5726
      %v6246 = vunpack.c.l.b16 %v5727
      %v6247 = vunpack.c.l.b16 %v5728
      %v6248 = vunpack.c.l.b16 %v5729
      %v6249 = vunpack.c.l.b16 %v5730
      %v6250 = vunpack.c.l.b16 %v5731
      %v6251 = vunpack.c.l.b16 %v5732
      %v6252 = vunpack.c.l.b16 %v5733
      %v6253 = vunpack.c.l.b16 %v5734
      %v6254 = vunpack.c.l.b16 %v5735
      %v6255 = vunpack.c.l.b16 %v5736
      %v6256 = vunpack.c.l.b16 %v5737
      %v6257 = vunpack.c.l.b16 %v5738
      %v6258 = vunpack.c.l.b16 %v5739
      %v6259 = vunpack.c.l.b16 %v5740
      %v6260 = vunpack.c.l.b16 %v5741
      %v6261 = vunpack.c.l.b16 %v5742
      %v6262 = vunpack.c.l.b16 %v5743
      %v6263 = vunpack.c.l.b16 %v5744
      %v6264 = vunpack.c.l.b16 %v5745
      %v6265 = vunpack.c.l.b16 %v5746
      %v6266 = vunpack.c.l.b16 %v5747
      %v6267 = vunpack.c.l.b16 %v5748
      %v6268 = vunpack.c.l.b16 %v5749
      %v6269 = vunpack.c.l.b16 %v5750
      %v6270 = vunpack.c.l.b16 %v5751
      %v6271 = vunpack.c.l.b16 %v5752
      %v6272 = vunpack.c.l.b16 %v5753
      %v6273 = vunpack.c.l.b16 %v5754
      %v6274 = vunpack.c.l.b16 %v5755
      %v6275 = vunpack.c.l.b16 %v5756
      %v6276 = vunpack.c.l.b16 %v5757
      %v6277 = vunpack.c.l.b16 %v5758
      %v6278 = vunpack.c.l.b16 %v5759
      %v6279 = vunpack.c.l.b16 %v5760
      %v6280 = vunpack.c.l.b16 %v5761
      %v6281 = vunpack.c.l.b16 %v5762
      %v6282 = vunpack.c.l.b16 %v5763
      %v6283 = vunpack.c.l.b16 %v5764
      %v6284 = vunpack.c.l.b16 %v5765
      %v6285 = vunpack.c.l.b16 %v5766
      %v6286 = vunpack.c.l.b16 %v5767
      %v6287 = vunpack.c.l.b16 %v5768
      %v6288 = vunpack.c.l.b16 %v5769
      %v6289 = vunpack.c.l.b16 %v5770
      %v6290 = vunpack.c.l.b16 %v5771
      %v6291 = vunpack.c.l.b16 %v5772
      %v6292 = vunpack.c.l.b16 %v5773
      %v6293 = vunpack.c.l.b16 %v5774
      %v6294 = vunpack.c.l.b16 %v5775
      %v6295 = vunpack.c.l.b16 %v5776
      %v6296 = vunpack.c.l.b16 %v5777
      %v6297 = vunpack.c.l.b16 %v5778
      %v6298 = vunpack.c.l.b16 %v5779
      %v6299 = vunpack.c.l.b16 %v5780
      %v6300 = vunpack.c.l.b16 %v5781
      %v6301 = vunpack.c.l.b16 %v5782
      %v6302 = vunpack.c.l.b16 %v5783
      %v6303 = vunpack.c.l.b16 %v5784
      %v6304 = vunpack.c.l.b16 %v5785
      %v6305 = vunpack.c.l.b16 %v5786
      %v6306 = vunpack.c.l.b16 %v5787
      %v6307 = vunpack.c.l.b16 %v5788
      %v6308 = vunpack.c.l.b16 %v5789
      %v6309 = vunpack.c.l.b16 %v5790
      %v6310 = vunpack.c.l.b16 %v5791
      %v6311 = vunpack.c.l.b16 %v5792
      %v6312 = vunpack.c.l.b16 %v5793
      %v6313 = vunpack.c.l.b16 %v5794
      %v6314 = vunpack.c.l.b16 %v5795
      %v6315 = vunpack.c.l.b16 %v5796
      %v6316 = vunpack.c.l.b16 %v5797
      %v6317 = vunpack.c.l.b16 %v5798
      %v6318 = vunpack.c.l.b16 %v5799
      %v6319 = vunpack.c.l.b16 %v5800
      %v6320 = vunpack.c.l.b16 %v5801
      %v6321 = vunpack.c.l.b16 %v5802
      %v6322 = vunpack.c.l.b16 %v5803
      %v6323 = vunpack.c.l.b16 %v5804
      %v6324 = vpack.c.b16 %v6069, %v6068
      %v6325 = vpack.c.b16 %v6071, %v6070
      %v6326 = vpack.c.b16 %v6073, %v6072
      %v6327 = vpack.c.b16 %v6075, %v6074
      %v6328 = vpack.c.b16 %v6077, %v6076
      %v6329 = vpack.c.b16 %v6079, %v6078
      %v6330 = vpack.c.b16 %v6081, %v6080
      %v6331 = vpack.c.b16 %v6083, %v6082
      %v6332 = vpack.c.b16 %v6085, %v6084
      %v6333 = vpack.c.b16 %v6087, %v6086
      %v6334 = vpack.c.b16 %v6089, %v6088
      %v6335 = vpack.c.b16 %v6091, %v6090
      %v6336 = vpack.c.b16 %v6093, %v6092
      %v6337 = vpack.c.b16 %v6095, %v6094
      %v6338 = vpack.c.b16 %v6097, %v6096
      %v6339 = vpack.c.b16 %v6099, %v6098
      %v6340 = vpack.c.b16 %v6101, %v6100
      %v6341 = vpack.c.b16 %v6103, %v6102
      %v6342 = vpack.c.b16 %v6105, %v6104
      %v6343 = vpack.c.b16 %v6107, %v6106
      %v6344 = vpack.c.b16 %v6109, %v6108
      %v6345 = vpack.c.b16 %v6111, %v6110
      %v6346 = vpack.c.b16 %v6113, %v6112
      %v6347 = vpack.c.b16 %v6115, %v6114
      %v6348 = vpack.c.b16 %v6117, %v6116
      %v6349 = vpack.c.b16 %v6119, %v6118
      %v6350 = vpack.c.b16 %v6121, %v6120
      %v6351 = vpack.c.b16 %v6123, %v6122
      %v6352 = vpack.c.b16 %v6125, %v6124
      %v6353 = vpack.c.b16 %v6127, %v6126
      %v6354 = vpack.c.b16 %v6129, %v6128
      %v6355 = vpack.c.b16 %v6131, %v6130
      %v6356 = vpack.c.b16 %v6133, %v6132
      %v6357 = vpack.c.b16 %v6135, %v6134
      %v6358 = vpack.c.b16 %v6137, %v6136
      %v6359 = vpack.c.b16 %v6139, %v6138
      %v6360 = vpack.c.b16 %v6141, %v6140
      %v6361 = vpack.c.b16 %v6143, %v6142
      %v6362 = vpack.c.b16 %v6145, %v6144
      %v6363 = vpack.c.b16 %v6147, %v6146
      %v6364 = vpack.c.b16 %v6149, %v6148
      %v6365 = vpack.c.b16 %v6151, %v6150
      %v6366 = vpack.c.b16 %v6153, %v6152
      %v6367 = vpack.c.b16 %v6155, %v6154
      %v6368 = vpack.c.b16 %v6157, %v6156
      %v6369 = vpack.c.b16 %v6159, %v6158
      %v6370 = vpack.c.b16 %v6161, %v6160
      %v6371 = vpack.c.b16 %v6163, %v6162
      %v6372 = vpack.c.b16 %v6165, %v6164
      %v6373 = vpack.c.b16 %v6167, %v6166
      %v6374 = vpack.c.b16 %v6169, %v6168
      %v6375 = vpack.c.b16 %v6171, %v6170
      %v6376 = vpack.c.b16 %v6173, %v6172
      %v6377 = vpack.c.b16 %v6175, %v6174
      %v6378 = vpack.c.b16 %v6177, %v6176
      %v6379 = vpack.c.b16 %v6179, %v6178
      %v6380 = vpack.c.b16 %v6181, %v6180
      %v6381 = vpack.c.b16 %v6183, %v6182
      %v6382 = vpack.c.b16 %v6185, %v6184
      %v6383 = vpack.c.b16 %v6187, %v6186
      %v6384 = vpack.c.b16 %v6189, %v6188
      %v6385 = vpack.c.b16 %v6191, %v6190
      %v6386 = vpack.c.b16 %v6193, %v6192
      %v6387 = vpack.c.b16 %v6195, %v6194
      %v6388 = vpack.c.b16 %v6197, %v6196
      %v6389 = vpack.c.b16 %v6199, %v6198
      %v6390 = vpack.c.b16 %v6201, %v6200
      %v6391 = vpack.c.b16 %v6203, %v6202
      %v6392 = vpack.c.b16 %v6205, %v6204
      %v6393 = vpack.c.b16 %v6207, %v6206
      %v6394 = vpack.c.b16 %v6209, %v6208
      %v6395 = vpack.c.b16 %v6211, %v6210
      %v6396 = vpack.c.b16 %v6213, %v6212
      %v6397 = vpack.c.b16 %v6215, %v6214
      %v6398 = vpack.c.b16 %v6217, %v6216
      %v6399 = vpack.c.b16 %v6219, %v6218
      %v6400 = vpack.c.b16 %v6221, %v6220
      %v6401 = vpack.c.b16 %v6223, %v6222
      %v6402 = vpack.c.b16 %v6225, %v6224
      %v6403 = vpack.c.b16 %v6227, %v6226
      %v6404 = vpack.c.b16 %v6229, %v6228
      %v6405 = vpack.c.b16 %v6231, %v6230
      %v6406 = vpack.c.b16 %v6233, %v6232
      %v6407 = vpack.c.b16 %v6235, %v6234
      %v6408 = vpack.c.b16 %v6237, %v6236
      %v6409 = vpack.c.b16 %v6239, %v6238
      %v6410 = vpack.c.b16 %v6241, %v6240
      %v6411 = vpack.c.b16 %v6243, %v6242
      %v6412 = vpack.c.b16 %v6245, %v6244
      %v6413 = vpack.c.b16 %v6247, %v6246
      %v6414 = vpack.c.b16 %v6249, %v6248
      %v6415 = vpack.c.b16 %v6251, %v6250
      %v6416 = vpack.c.b16 %v6253, %v6252
      %v6417 = vpack.c.b16 %v6255, %v6254
      %v6418 = vpack.c.b16 %v6257, %v6256
      %v6419 = vpack.c.b16 %v6259, %v6258
      %v6420 = vpack.c.b16 %v6261, %v6260
      %v6421 = vpack.c.b16 %v6263, %v6262
      %v6422 = vpack.c.b16 %v6265, %v6264
      %v6423 = vpack.c.b16 %v6267, %v6266
      %v6424 = vpack.c.b16 %v6269, %v6268
      %v6425 = vpack.c.b16 %v6271, %v6270
      %v6426 = vpack.c.b16 %v6273, %v6272
      %v6427 = vpack.c.b16 %v6275, %v6274
      %v6428 = vpack.c.b16 %v6277, %v6276
      %v6429 = vpack.c.b16 %v6279, %v6278
      %v6430 = vpack.c.b16 %v6281, %v6280
      %v6431 = vpack.c.b16 %v6283, %v6282
      %v6432 = vpack.c.b16 %v6285, %v6284
      %v6433 = vpack.c.b16 %v6287, %v6286
      %v6434 = vpack.c.b16 %v6289, %v6288
      %v6435 = vpack.c.b16 %v6291, %v6290
      %v6436 = vpack.c.b16 %v6293, %v6292
      %v6437 = vpack.c.b16 %v6295, %v6294
      %v6438 = vpack.c.b16 %v6297, %v6296
      %v6439 = vpack.c.b16 %v6299, %v6298
      %v6440 = vpack.c.b16 %v6301, %v6300
      %v6441 = vpack.c.b16 %v6303, %v6302
      %v6442 = vpack.c.b16 %v6305, %v6304
      %v6443 = vpack.c.b16 %v6307, %v6306
      %v6444 = vpack.c.b16 %v6309, %v6308
      %v6445 = vpack.c.b16 %v6311, %v6310
      %v6446 = vpack.c.b16 %v6313, %v6312
      %v6447 = vpack.c.b16 %v6315, %v6314
      %v6448 = vpack.c.b16 %v6317, %v6316
      %v6449 = vpack.c.b16 %v6319, %v6318
      %v6450 = vpack.c.b16 %v6321, %v6320
      %v6451 = vpack.c.b16 %v6323, %v6322
      %6580 = vmatprep.subr.bf16.mxu0 0
      %6581 = vmatpush1.bf16.msra.mxu0 %v6324
      %6582 = vmatprep.subr.bf16.mxu0 0
      %6583 = vmatpush1.bf16.msra.mxu0 %v6325
      %6584 = vmatprep.subr.bf16.mxu0 0
      %6585 = vmatpush1.bf16.msra.mxu0 %v6326
      %6586 = vmatprep.subr.bf16.mxu0 0
      %6587 = vmatpush1.bf16.msra.mxu0 %v6327
      %6588 = vmatprep.subr.bf16.mxu0 0
      %6589 = vmatpush1.bf16.msra.mxu0 %v6328
      %6590 = vmatprep.subr.bf16.mxu0 0
      %6591 = vmatpush1.bf16.msra.mxu0 %v6329
      %6592 = vmatprep.subr.bf16.mxu0 0
      %6593 = vmatpush1.bf16.msra.mxu0 %v6330
      %6594 = vmatprep.subr.bf16.mxu0 0
      %6595 = vmatpush1.bf16.msra.mxu0 %v6331
      %6596 = vmatprep.subr.bf16.mxu0 0
      %6597 = vmatpush1.bf16.msra.mxu0 %v6332
      %6598 = vmatprep.subr.bf16.mxu0 0
      %6599 = vmatpush1.bf16.msra.mxu0 %v6333
      %6600 = vmatprep.subr.bf16.mxu0 0
      %6601 = vmatpush1.bf16.msra.mxu0 %v6334
      %6602 = vmatprep.subr.bf16.mxu0 0
      %6603 = vmatpush1.bf16.msra.mxu0 %v6335
      %6604 = vmatprep.subr.bf16.mxu0 0
      %6605 = vmatpush1.bf16.msra.mxu0 %v6336
      %6606 = vmatprep.subr.bf16.mxu0 0
      %6607 = vmatpush1.bf16.msra.mxu0 %v6337
      %6608 = vmatprep.subr.bf16.mxu0 0
      %6609 = vmatpush1.bf16.msra.mxu0 %v6338
      %6610 = vmatprep.subr.bf16.mxu0 0
      %6611 = vmatpush1.bf16.msra.mxu0 %v6339
      %6612 = vmatprep.mubr.bf16.mxu0 %v5486
      %6613 = vmatmul.mubr.bf16.gmra.mrb[0].mxu0 %v5485
      %v6614 = vpop.f32.mrb[0].mxu0
      %v6615 = vadd.f32 %v5810, %v6614
      %v6616 = vpop.f32.mrb[0].mxu0
      %v6617 = vpop.f32.mrb[0].mxu0
      %v6618 = vadd.f32 %v5810, %v6617
      %v6619 = vpop.f32.mrb[0].mxu0
      %6620 = vmatprep.mubr.bf16.mxu0 %v5502
      %6621 = vmatmul.mubr.bf16.gmra.mrb[0].mxu0 %v5501
      %v6622 = vpop.f32.mrb[0].mxu0
      %v6623 = vadd.f32 %v5810, %v6622
      %v6624 = vpop.f32.mrb[0].mxu0
      %v6625 = vpop.f32.mrb[0].mxu0
      %v6626 = vadd.f32 %v5810, %v6625
      %v6627 = vpop.f32.mrb[0].mxu0
      %6628 = vmatprep.mubr.bf16.mxu0 %v5518
      %6629 = vmatmul.mubr.bf16.gmra.mrb[0].mxu0 %v5517
      %v6630 = vpop.f32.mrb[0].mxu0
      %v6631 = vadd.f32 %v5810, %v6630
      %v6632 = vpop.f32.mrb[0].mxu0
      %v6633 = vpop.f32.mrb[0].mxu0
      %v6634 = vadd.f32 %v5810, %v6633
      %v6635 = vpop.f32.mrb[0].mxu0
      %6636 = vmatprep.mubr.bf16.mxu0 %v5534
      %6637 = vmatmul.mubr.bf16.gmra.mrb[0].mxu0 %v5533
      %v6638 = vpop.f32.mrb[0].mxu0
      %v6639 = vadd.f32 %v5810, %v6638
      %v6640 = vpop.f32.mrb[0].mxu0
      %v6641 = vpop.f32.mrb[0].mxu0
      %v6642 = vadd.f32 %v5810, %v6641
      %v6643 = vpop.f32.mrb[0].mxu0
      %6644 = vdwg.mxu0
      %6645 = vmatprep.subr.bf16.mxu0 0
      %6646 = vmatpush1.bf16.msra.mxu0 %v6340
      %6647 = vmatprep.subr.bf16.mxu0 0
      %6648 = vmatpush1.bf16.msra.mxu0 %v6341
      %6649 = vmatprep.subr.bf16.mxu0 0
      %6650 = vmatpush1.bf16.msra.mxu0 %v6342
      %6651 = vmatprep.subr.bf16.mxu0 0
      %6652 = vmatpush1.bf16.msra.mxu0 %v6343
      %6653 = vmatprep.subr.bf16.mxu0 0
      %6654 = vmatpush1.bf16.msra.mxu0 %v6344
      %6655 = vmatprep.subr.bf16.mxu0 0
      %6656 = vmatpush1.bf16.msra.mxu0 %v6345
      %6657 = vmatprep.subr.bf16.mxu0 0
      %6658 = vmatpush1.bf16.msra.mxu0 %v6346
      %6659 = vmatprep.subr.bf16.mxu0 0
      %6660 = vmatpush1.bf16.msra.mxu0 %v6347
      %6661 = vmatprep.subr.bf16.mxu0 0
      %6662 = vmatpush1.bf16.msra.mxu0 %v6348
      %6663 = vmatprep.subr.bf16.mxu0 0
      %6664 = vmatpush1.bf16.msra.mxu0 %v6349
      %6665 = vmatprep.subr.bf16.mxu0 0
      %6666 = vmatpush1.bf16.msra.mxu0 %v6350
      %6667 = vmatprep.subr.bf16.mxu0 0
      %6668 = vmatpush1.bf16.msra.mxu0 %v6351
      %6669 = vmatprep.subr.bf16.mxu0 0
      %6670 = vmatpush1.bf16.msra.mxu0 %v6352
      %6671 = vmatprep.subr.bf16.mxu0 0
      %6672 = vmatpush1.bf16.msra.mxu0 %v6353
      %6673 = vmatprep.subr.bf16.mxu0 0
      %6674 = vmatpush1.bf16.msra.mxu0 %v6354
      %6675 = vmatprep.subr.bf16.mxu0 0
      %6676 = vmatpush1.bf16.msra.mxu0 %v6355
      %6677 = vmatprep.mubr.bf16.mxu0 %v5488
      %6678 = vmatmul.mubr.bf16.gmra.mrb[0].mxu0 %v5487
      %v6679 = vpop.f32.mrb[0].mxu0
      %v6680 = vadd.f32 %v6615, %v6679
      %v6681 = vpop.f32.mrb[0].mxu0
      %v6682 = vpop.f32.mrb[0].mxu0
      %v6683 = vadd.f32 %v6618, %v6682
      %v6684 = vpop.f32.mrb[0].mxu0
      %6685 = vmatprep.mubr.bf16.mxu0 %v5504
      %6686 = vmatmul.mubr.bf16.gmra.mrb[0].mxu0 %v5503
      %v6687 = vpop.f32.mrb[0].mxu0
      %v6688 = vadd.f32 %v6623, %v6687
      %v6689 = vpop.f32.mrb[0].mxu0
      %v6690 = vpop.f32.mrb[0].mxu0
      %v6691 = vadd.f32 %v6626, %v6690
      %v6692 = vpop.f32.mrb[0].mxu0
      %6693 = vmatprep.mubr.bf16.mxu0 %v5520
      %6694 = vmatmul.mubr.bf16.gmra.mrb[0].mxu0 %v5519
      %v6695 = vpop.f32.mrb[0].mxu0
      %v6696 = vadd.f32 %v6631, %v6695
      %v6697 = vpop.f32.mrb[0].mxu0
      %v6698 = vpop.f32.mrb[0].mxu0
      %v6699 = vadd.f32 %v6634, %v6698
      %v6700 = vpop.f32.mrb[0].mxu0
      %6701 = vmatprep.mubr.bf16.mxu0 %v5536
      %6702 = vmatmul.mubr.bf16.gmra.mrb[0].mxu0 %v5535
      %v6703 = vpop.f32.mrb[0].mxu0
      %v6704 = vadd.f32 %v6639, %v6703
      %v6705 = vpop.f32.mrb[0].mxu0
      %v6706 = vpop.f32.mrb[0].mxu0
      %v6707 = vadd.f32 %v6642, %v6706
      %v6708 = vpop.f32.mrb[0].mxu0
      %6709 = vdwg.mxu0
      %6710 = vmatprep.subr.bf16.mxu0 0
      %6711 = vmatpush1.bf16.msra.mxu0 %v6356
      %6712 = vmatprep.subr.bf16.mxu0 0
      %6713 = vmatpush1.bf16.msra.mxu0 %v6357
      %6714 = vmatprep.subr.bf16.mxu0 0
      %6715 = vmatpush1.bf16.msra.mxu0 %v6358
      %6716 = vmatprep.subr.bf16.mxu0 0
      %6717 = vmatpush1.bf16.msra.mxu0 %v6359
      %6718 = vmatprep.subr.bf16.mxu0 0
      %6719 = vmatpush1.bf16.msra.mxu0 %v6360
      %6720 = vmatprep.subr.bf16.mxu0 0
      %6721 = vmatpush1.bf16.msra.mxu0 %v6361
      %6722 = vmatprep.subr.bf16.mxu0 0
      %6723 = vmatpush1.bf16.msra.mxu0 %v6362
      %6724 = vmatprep.subr.bf16.mxu0 0
      %6725 = vmatpush1.bf16.msra.mxu0 %v6363
      %6726 = vmatprep.subr.bf16.mxu0 0
      %6727 = vmatpush1.bf16.msra.mxu0 %v6364
      %6728 = vmatprep.subr.bf16.mxu0 0
      %6729 = vmatpush1.bf16.msra.mxu0 %v6365
      %6730 = vmatprep.subr.bf16.mxu0 0
      %6731 = vmatpush1.bf16.msra.mxu0 %v6366
      %6732 = vmatprep.subr.bf16.mxu0 0
      %6733 = vmatpush1.bf16.msra.mxu0 %v6367
      %6734 = vmatprep.subr.bf16.mxu0 0
      %6735 = vmatpush1.bf16.msra.mxu0 %v6368
      %6736 = vmatprep.subr.bf16.mxu0 0
      %6737 = vmatpush1.bf16.msra.mxu0 %v6369
      %6738 = vmatprep.subr.bf16.mxu0 0
      %6739 = vmatpush1.bf16.msra.mxu0 %v6370
      %6740 = vmatprep.subr.bf16.mxu0 0
      %6741 = vmatpush1.bf16.msra.mxu0 %v6371
      %6742 = vmatprep.mubr.bf16.mxu0 %v5490
      %6743 = vmatmul.mubr.bf16.gmra.mrb[0].mxu0 %v5489
      %v6744 = vpop.f32.mrb[0].mxu0
      %v6745 = vadd.f32 %v6680, %v6744
      %v6746 = vpop.f32.mrb[0].mxu0
      %v6747 = vpop.f32.mrb[0].mxu0
      %v6748 = vadd.f32 %v6683, %v6747
      %v6749 = vpop.f32.mrb[0].mxu0
      %6750 = vmatprep.mubr.bf16.mxu0 %v5506
      %6751 = vmatmul.mubr.bf16.gmra.mrb[0].mxu0 %v5505
      %v6752 = vpop.f32.mrb[0].mxu0
      %v6753 = vadd.f32 %v6688, %v6752
      %v6754 = vpop.f32.mrb[0].mxu0
      %v6755 = vpop.f32.mrb[0].mxu0
      %v6756 = vadd.f32 %v6691, %v6755
      %v6757 = vpop.f32.mrb[0].mxu0
      %6758 = vmatprep.mubr.bf16.mxu0 %v5522
      %6759 = vmatmul.mubr.bf16.gmra.mrb[0].mxu0 %v5521
      %v6760 = vpop.f32.mrb[0].mxu0
      %v6761 = vadd.f32 %v6696, %v6760
      %v6762 = vpop.f32.mrb[0].mxu0
      %v6763 = vpop.f32.mrb[0].mxu0
      %v6764 = vadd.f32 %v6699, %v6763
      %v6765 = vpop.f32.mrb[0].mxu0
      %6766 = vmatprep.mubr.bf16.mxu0 %v5538
      %6767 = vmatmul.mubr.bf16.gmra.mrb[0].mxu0 %v5537
      %v6768 = vpop.f32.mrb[0].mxu0
      %v6769 = vadd.f32 %v6704, %v6768
      %v6770 = vpop.f32.mrb[0].mxu0
      %v6771 = vpop.f32.mrb[0].mxu0
      %v6772 = vadd.f32 %v6707, %v6771
      %v6773 = vpop.f32.mrb[0].mxu0
      %6774 = vdwg.mxu0
      %6775 = vmatprep.subr.bf16.mxu0 0
      %6776 = vmatpush1.bf16.msra.mxu0 %v6372
      %6777 = vmatprep.subr.bf16.mxu0 0
      %6778 = vmatpush1.bf16.msra.mxu0 %v6373
      %6779 = vmatprep.subr.bf16.mxu0 0
      %6780 = vmatpush1.bf16.msra.mxu0 %v6374
      %6781 = vmatprep.subr.bf16.mxu0 0
      %6782 = vmatpush1.bf16.msra.mxu0 %v6375
      %6783 = vmatprep.subr.bf16.mxu0 0
      %6784 = vmatpush1.bf16.msra.mxu0 %v6376
      %6785 = vmatprep.subr.bf16.mxu0 0
      %6786 = vmatpush1.bf16.msra.mxu0 %v6377
      %6787 = vmatprep.subr.bf16.mxu0 0
      %6788 = vmatpush1.bf16.msra.mxu0 %v6378
      %6789 = vmatprep.subr.bf16.mxu0 0
      %6790 = vmatpush1.bf16.msra.mxu0 %v6379
      %6791 = vmatprep.subr.bf16.mxu0 0
      %6792 = vmatpush1.bf16.msra.mxu0 %v6380
      %6793 = vmatprep.subr.bf16.mxu0 0
      %6794 = vmatpush1.bf16.msra.mxu0 %v6381
      %6795 = vmatprep.subr.bf16.mxu0 0
      %6796 = vmatpush1.bf16.msra.mxu0 %v6382
      %6797 = vmatprep.subr.bf16.mxu0 0
      %6798 = vmatpush1.bf16.msra.mxu0 %v6383
      %6799 = vmatprep.subr.bf16.mxu0 0
      %6800 = vmatpush1.bf16.msra.mxu0 %v6384
      %6801 = vmatprep.subr.bf16.mxu0 0
      %6802 = vmatpush1.bf16.msra.mxu0 %v6385
      %6803 = vmatprep.subr.bf16.mxu0 0
      %6804 = vmatpush1.bf16.msra.mxu0 %v6386
      %6805 = vmatprep.subr.bf16.mxu0 0
      %6806 = vmatpush1.bf16.msra.mxu0 %v6387
      %6807 = vmatprep.mubr.bf16.mxu0 %v5492
      %6808 = vmatmul.mubr.bf16.gmra.mrb[0].mxu0 %v5491
      %v6809 = vpop.f32.mrb[0].mxu0
      %v6810 = vadd.f32 %v6745, %v6809
      %v6811 = vpop.f32.mrb[0].mxu0
      %v6812 = vpop.f32.mrb[0].mxu0
      %v6813 = vadd.f32 %v6748, %v6812
      %v6814 = vpop.f32.mrb[0].mxu0
      %6815 = vmatprep.mubr.bf16.mxu0 %v5508
      %6816 = vmatmul.mubr.bf16.gmra.mrb[0].mxu0 %v5507
      %v6817 = vpop.f32.mrb[0].mxu0
      %v6818 = vadd.f32 %v6753, %v6817
      %v6819 = vpop.f32.mrb[0].mxu0
      %v6820 = vpop.f32.mrb[0].mxu0
      %v6821 = vadd.f32 %v6756, %v6820
      %v6822 = vpop.f32.mrb[0].mxu0
      %6823 = vmatprep.mubr.bf16.mxu0 %v5524
      %6824 = vmatmul.mubr.bf16.gmra.mrb[0].mxu0 %v5523
      %v6825 = vpop.f32.mrb[0].mxu0
      %v6826 = vadd.f32 %v6761, %v6825
      %v6827 = vpop.f32.mrb[0].mxu0
      %v6828 = vpop.f32.mrb[0].mxu0
      %v6829 = vadd.f32 %v6764, %v6828
      %v6830 = vpop.f32.mrb[0].mxu0
      %6831 = vmatprep.mubr.bf16.mxu0 %v5540
      %6832 = vmatmul.mubr.bf16.gmra.mrb[0].mxu0 %v5539
      %v6833 = vpop.f32.mrb[0].mxu0
      %v6834 = vadd.f32 %v6769, %v6833
      %v6835 = vpop.f32.mrb[0].mxu0
      %v6836 = vpop.f32.mrb[0].mxu0
      %v6837 = vadd.f32 %v6772, %v6836
      %v6838 = vpop.f32.mrb[0].mxu0
      %6839 = vdwg.mxu0
      %6840 = vmatprep.subr.bf16.mxu0 0
      %6841 = vmatpush1.bf16.msra.mxu0 %v6388
      %6842 = vmatprep.subr.bf16.mxu0 0
      %6843 = vmatpush1.bf16.msra.mxu0 %v6389
      %6844 = vmatprep.subr.bf16.mxu0 0
      %6845 = vmatpush1.bf16.msra.mxu0 %v6390
      %6846 = vmatprep.subr.bf16.mxu0 0
      %6847 = vmatpush1.bf16.msra.mxu0 %v6391
      %6848 = vmatprep.subr.bf16.mxu0 0
      %6849 = vmatpush1.bf16.msra.mxu0 %v6392
      %6850 = vmatprep.subr.bf16.mxu0 0
      %6851 = vmatpush1.bf16.msra.mxu0 %v6393
      %6852 = vmatprep.subr.bf16.mxu0 0
      %6853 = vmatpush1.bf16.msra.mxu0 %v6394
      %6854 = vmatprep.subr.bf16.mxu0 0
      %6855 = vmatpush1.bf16.msra.mxu0 %v6395
      %6856 = vmatprep.subr.bf16.mxu0 0
      %6857 = vmatpush1.bf16.msra.mxu0 %v6396
      %6858 = vmatprep.subr.bf16.mxu0 0
      %6859 = vmatpush1.bf16.msra.mxu0 %v6397
      %6860 = vmatprep.subr.bf16.mxu0 0
      %6861 = vmatpush1.bf16.msra.mxu0 %v6398
      %6862 = vmatprep.subr.bf16.mxu0 0
      %6863 = vmatpush1.bf16.msra.mxu0 %v6399
      %6864 = vmatprep.subr.bf16.mxu0 0
      %6865 = vmatpush1.bf16.msra.mxu0 %v6400
      %6866 = vmatprep.subr.bf16.mxu0 0
      %6867 = vmatpush1.bf16.msra.mxu0 %v6401
      %6868 = vmatprep.subr.bf16.mxu0 0
      %6869 = vmatpush1.bf16.msra.mxu0 %v6402
      %6870 = vmatprep.subr.bf16.mxu0 0
      %6871 = vmatpush1.bf16.msra.mxu0 %v6403
      %6872 = vmatprep.mubr.bf16.mxu0 %v5494
      %6873 = vmatmul.mubr.bf16.gmra.mrb[0].mxu0 %v5493
      %v6874 = vpop.f32.mrb[0].mxu0
      %v6875 = vadd.f32 %v6810, %v6874
      %v6876 = vpop.f32.mrb[0].mxu0
      %v6877 = vpop.f32.mrb[0].mxu0
      %v6878 = vadd.f32 %v6813, %v6877
      %v6879 = vpop.f32.mrb[0].mxu0
      %6880 = vmatprep.mubr.bf16.mxu0 %v5510
      %6881 = vmatmul.mubr.bf16.gmra.mrb[0].mxu0 %v5509
      %v6882 = vpop.f32.mrb[0].mxu0
      %v6883 = vadd.f32 %v6818, %v6882
      %v6884 = vpop.f32.mrb[0].mxu0
      %v6885 = vpop.f32.mrb[0].mxu0
      %v6886 = vadd.f32 %v6821, %v6885
      %v6887 = vpop.f32.mrb[0].mxu0
      %6888 = vmatprep.mubr.bf16.mxu0 %v5526
      %6889 = vmatmul.mubr.bf16.gmra.mrb[0].mxu0 %v5525
      %v6890 = vpop.f32.mrb[0].mxu0
      %v6891 = vadd.f32 %v6826, %v6890
      %v6892 = vpop.f32.mrb[0].mxu0
      %v6893 = vpop.f32.mrb[0].mxu0
      %v6894 = vadd.f32 %v6829, %v6893
      %v6895 = vpop.f32.mrb[0].mxu0
      %6896 = vmatprep.mubr.bf16.mxu0 %v5542
      %6897 = vmatmul.mubr.bf16.gmra.mrb[0].mxu0 %v5541
      %v6898 = vpop.f32.mrb[0].mxu0
      %v6899 = vadd.f32 %v6834, %v6898
      %v6900 = vpop.f32.mrb[0].mxu0
      %v6901 = vpop.f32.mrb[0].mxu0
      %v6902 = vadd.f32 %v6837, %v6901
      %v6903 = vpop.f32.mrb[0].mxu0
      %6904 = vdwg.mxu0
      %6905 = vmatprep.subr.bf16.mxu0 0
      %6906 = vmatpush1.bf16.msra.mxu0 %v6404
      %6907 = vmatprep.subr.bf16.mxu0 0
      %6908 = vmatpush1.bf16.msra.mxu0 %v6405
      %6909 = vmatprep.subr.bf16.mxu0 0
      %6910 = vmatpush1.bf16.msra.mxu0 %v6406
      %6911 = vmatprep.subr.bf16.mxu0 0
      %6912 = vmatpush1.bf16.msra.mxu0 %v6407
      %6913 = vmatprep.subr.bf16.mxu0 0
      %6914 = vmatpush1.bf16.msra.mxu0 %v6408
      %6915 = vmatprep.subr.bf16.mxu0 0
      %6916 = vmatpush1.bf16.msra.mxu0 %v6409
      %6917 = vmatprep.subr.bf16.mxu0 0
      %6918 = vmatpush1.bf16.msra.mxu0 %v6410
      %6919 = vmatprep.subr.bf16.mxu0 0
      %6920 = vmatpush1.bf16.msra.mxu0 %v6411
      %6921 = vmatprep.subr.bf16.mxu0 0
      %6922 = vmatpush1.bf16.msra.mxu0 %v6412
      %6923 = vmatprep.subr.bf16.mxu0 0
      %6924 = vmatpush1.bf16.msra.mxu0 %v6413
      %6925 = vmatprep.subr.bf16.mxu0 0
      %6926 = vmatpush1.bf16.msra.mxu0 %v6414
      %6927 = vmatprep.subr.bf16.mxu0 0
      %6928 = vmatpush1.bf16.msra.mxu0 %v6415
      %6929 = vmatprep.subr.bf16.mxu0 0
      %6930 = vmatpush1.bf16.msra.mxu0 %v6416
      %6931 = vmatprep.subr.bf16.mxu0 0
      %6932 = vmatpush1.bf16.msra.mxu0 %v6417
      %6933 = vmatprep.subr.bf16.mxu0 0
      %6934 = vmatpush1.bf16.msra.mxu0 %v6418
      %6935 = vmatprep.subr.bf16.mxu0 0
      %6936 = vmatpush1.bf16.msra.mxu0 %v6419
      %6937 = vmatprep.mubr.bf16.mxu0 %v5496
      %6938 = vmatmul.mubr.bf16.gmra.mrb[0].mxu0 %v5495
      %v6939 = vpop.f32.mrb[0].mxu0
      %v6940 = vadd.f32 %v6875, %v6939
      %v6941 = vpop.f32.mrb[0].mxu0
      %v6942 = vpop.f32.mrb[0].mxu0
      %v6943 = vadd.f32 %v6878, %v6942
      %v6944 = vpop.f32.mrb[0].mxu0
      %6945 = vmatprep.mubr.bf16.mxu0 %v5512
      %6946 = vmatmul.mubr.bf16.gmra.mrb[0].mxu0 %v5511
      %v6947 = vpop.f32.mrb[0].mxu0
      %v6948 = vadd.f32 %v6883, %v6947
      %v6949 = vpop.f32.mrb[0].mxu0
      %v6950 = vpop.f32.mrb[0].mxu0
      %v6951 = vadd.f32 %v6886, %v6950
      %v6952 = vpop.f32.mrb[0].mxu0
      %6953 = vmatprep.mubr.bf16.mxu0 %v5528
      %6954 = vmatmul.mubr.bf16.gmra.mrb[0].mxu0 %v5527
      %v6955 = vpop.f32.mrb[0].mxu0
      %v6956 = vadd.f32 %v6891, %v6955
      %v6957 = vpop.f32.mrb[0].mxu0
      %v6958 = vpop.f32.mrb[0].mxu0
      %v6959 = vadd.f32 %v6894, %v6958
      %v6960 = vpop.f32.mrb[0].mxu0
      %6961 = vmatprep.mubr.bf16.mxu0 %v5544
      %6962 = vmatmul.mubr.bf16.gmra.mrb[0].mxu0 %v5543
      %v6963 = vpop.f32.mrb[0].mxu0
      %v6964 = vadd.f32 %v6899, %v6963
      %v6965 = vpop.f32.mrb[0].mxu0
      %v6966 = vpop.f32.mrb[0].mxu0
      %v6967 = vadd.f32 %v6902, %v6966
      %v6968 = vpop.f32.mrb[0].mxu0
      %6969 = vdwg.mxu0
      %6970 = vmatprep.subr.bf16.mxu0 0
      %6971 = vmatpush1.bf16.msra.mxu0 %v6420
      %6972 = vmatprep.subr.bf16.mxu0 0
      %6973 = vmatpush1.bf16.msra.mxu0 %v6421
      %6974 = vmatprep.subr.bf16.mxu0 0
      %6975 = vmatpush1.bf16.msra.mxu0 %v6422
      %6976 = vmatprep.subr.bf16.mxu0 0
      %6977 = vmatpush1.bf16.msra.mxu0 %v6423
      %6978 = vmatprep.subr.bf16.mxu0 0
      %6979 = vmatpush1.bf16.msra.mxu0 %v6424
      %6980 = vmatprep.subr.bf16.mxu0 0
      %6981 = vmatpush1.bf16.msra.mxu0 %v6425
      %6982 = vmatprep.subr.bf16.mxu0 0
      %6983 = vmatpush1.bf16.msra.mxu0 %v6426
      %6984 = vmatprep.subr.bf16.mxu0 0
      %6985 = vmatpush1.bf16.msra.mxu0 %v6427
      %6986 = vmatprep.subr.bf16.mxu0 0
      %6987 = vmatpush1.bf16.msra.mxu0 %v6428
      %6988 = vmatprep.subr.bf16.mxu0 0
      %6989 = vmatpush1.bf16.msra.mxu0 %v6429
      %6990 = vmatprep.subr.bf16.mxu0 0
      %6991 = vmatpush1.bf16.msra.mxu0 %v6430
      %6992 = vmatprep.subr.bf16.mxu0 0
      %6993 = vmatpush1.bf16.msra.mxu0 %v6431
      %6994 = vmatprep.subr.bf16.mxu0 0
      %6995 = vmatpush1.bf16.msra.mxu0 %v6432
      %6996 = vmatprep.subr.bf16.mxu0 0
      %6997 = vmatpush1.bf16.msra.mxu0 %v6433
      %6998 = vmatprep.subr.bf16.mxu0 0
      %6999 = vmatpush1.bf16.msra.mxu0 %v6434
      %7000 = vmatprep.subr.bf16.mxu0 0
      %7001 = vmatpush1.bf16.msra.mxu0 %v6435
      %7002 = vmatprep.mubr.bf16.mxu0 %v5498
      %7003 = vmatmul.mubr.bf16.gmra.mrb[0].mxu0 %v5497
      %v7004 = vpop.f32.mrb[0].mxu0
      %v7005 = vadd.f32 %v6940, %v7004
      %v7006 = vpop.f32.mrb[0].mxu0
      %v7007 = vpop.f32.mrb[0].mxu0
      %v7008 = vadd.f32 %v6943, %v7007
      %v7009 = vpop.f32.mrb[0].mxu0
      %7010 = vmatprep.mubr.bf16.mxu0 %v5514
      %7011 = vmatmul.mubr.bf16.gmra.mrb[0].mxu0 %v5513
      %v7012 = vpop.f32.mrb[0].mxu0
      %v7013 = vadd.f32 %v6948, %v7012
      %v7014 = vpop.f32.mrb[0].mxu0
      %v7015 = vpop.f32.mrb[0].mxu0
      %v7016 = vadd.f32 %v6951, %v7015
      %v7017 = vpop.f32.mrb[0].mxu0
      %7018 = vmatprep.mubr.bf16.mxu0 %v5530
      %7019 = vmatmul.mubr.bf16.gmra.mrb[0].mxu0 %v5529
      %v7020 = vpop.f32.mrb[0].mxu0
      %v7021 = vadd.f32 %v6956, %v7020
      %v7022 = vpop.f32.mrb[0].mxu0
      %v7023 = vpop.f32.mrb[0].mxu0
      %v7024 = vadd.f32 %v6959, %v7023
      %v7025 = vpop.f32.mrb[0].mxu0
      %7026 = vmatprep.mubr.bf16.mxu0 %v5546
      %7027 = vmatmul.mubr.bf16.gmra.mrb[0].mxu0 %v5545
      %v7028 = vpop.f32.mrb[0].mxu0
      %v7029 = vadd.f32 %v6964, %v7028
      %v7030 = vpop.f32.mrb[0].mxu0
      %v7031 = vpop.f32.mrb[0].mxu0
      %v7032 = vadd.f32 %v6967, %v7031
      %v7033 = vpop.f32.mrb[0].mxu0
      %7034 = vdwg.mxu0
      %7035 = vmatprep.subr.bf16.mxu0 0
      %7036 = vmatpush1.bf16.msra.mxu0 %v6436
      %7037 = vmatprep.subr.bf16.mxu0 0
      %7038 = vmatpush1.bf16.msra.mxu0 %v6437
      %7039 = vmatprep.subr.bf16.mxu0 0
      %7040 = vmatpush1.bf16.msra.mxu0 %v6438
      %7041 = vmatprep.subr.bf16.mxu0 0
      %7042 = vmatpush1.bf16.msra.mxu0 %v6439
      %7043 = vmatprep.subr.bf16.mxu0 0
      %7044 = vmatpush1.bf16.msra.mxu0 %v6440
      %7045 = vmatprep.subr.bf16.mxu0 0
      %7046 = vmatpush1.bf16.msra.mxu0 %v6441
      %7047 = vmatprep.subr.bf16.mxu0 0
      %7048 = vmatpush1.bf16.msra.mxu0 %v6442
      %7049 = vmatprep.subr.bf16.mxu0 0
      %7050 = vmatpush1.bf16.msra.mxu0 %v6443
      %7051 = vmatprep.subr.bf16.mxu0 0
      %7052 = vmatpush1.bf16.msra.mxu0 %v6444
      %7053 = vmatprep.subr.bf16.mxu0 0
      %7054 = vmatpush1.bf16.msra.mxu0 %v6445
      %7055 = vmatprep.subr.bf16.mxu0 0
      %7056 = vmatpush1.bf16.msra.mxu0 %v6446
      %7057 = vmatprep.subr.bf16.mxu0 0
      %7058 = vmatpush1.bf16.msra.mxu0 %v6447
      %7059 = vmatprep.subr.bf16.mxu0 0
      %7060 = vmatpush1.bf16.msra.mxu0 %v6448
      %7061 = vmatprep.subr.bf16.mxu0 0
      %7062 = vmatpush1.bf16.msra.mxu0 %v6449
      %7063 = vmatprep.subr.bf16.mxu0 0
      %7064 = vmatpush1.bf16.msra.mxu0 %v6450
      %7065 = vmatprep.subr.bf16.mxu0 0
      %7066 = vmatpush1.bf16.msra.mxu0 %v6451
      %7067 = vmatprep.mubr.bf16.mxu0 %v5500
      %7068 = vmatmul.mubr.bf16.gmra.mrb[0].mxu0 %v5499
      %v7069 = vpop.f32.mrb[0].mxu0
      %v7070 = vadd.f32 %v7005, %v7069
      %v7071 = vpop.f32.mrb[0].mxu0
      %v7072 = vpop.f32.mrb[0].mxu0
      %v7073 = vadd.f32 %v7008, %v7072
      %v7074 = vpop.f32.mrb[0].mxu0
      %7075 = vmatprep.mubr.bf16.mxu0 %v5516
      %7076 = vmatmul.mubr.bf16.gmra.mrb[0].mxu0 %v5515
      %v7077 = vpop.f32.mrb[0].mxu0
      %v7078 = vadd.f32 %v7013, %v7077
      %v7079 = vpop.f32.mrb[0].mxu0
      %v7080 = vpop.f32.mrb[0].mxu0
      %v7081 = vadd.f32 %v7016, %v7080
      %v7082 = vpop.f32.mrb[0].mxu0
      %7083 = vmatprep.mubr.bf16.mxu0 %v5532
      %7084 = vmatmul.mubr.bf16.gmra.mrb[0].mxu0 %v5531
      %v7085 = vpop.f32.mrb[0].mxu0
      %v7086 = vadd.f32 %v7021, %v7085
      %v7087 = vpop.f32.mrb[0].mxu0
      %v7088 = vpop.f32.mrb[0].mxu0
      %v7089 = vadd.f32 %v7024, %v7088
      %v7090 = vpop.f32.mrb[0].mxu0
      %7091 = vmatprep.mubr.bf16.mxu0 %v5548
      %7092 = vmatmul.mubr.bf16.gmra.mrb[0].mxu0 %v5547
      %v7093 = vpop.f32.mrb[0].mxu0
      %v7094 = vadd.f32 %v7029, %v7093
      %v7095 = vpop.f32.mrb[0].mxu0
      %v7096 = vpop.f32.mrb[0].mxu0
      %v7097 = vadd.f32 %v7032, %v7096
      %v7098 = vpop.f32.mrb[0].mxu0
      %7099 = vdwg.mxu0
      %v7100 = vadd.f32 %v4473, %v7070
      %v7101 = vadd.f32 %v4474, %v7073
      %v7102 = vadd.f32 %v4475, %v7078
      %v7103 = vadd.f32 %v4476, %v7081
      %v7104 = vadd.f32 %v4477, %v7086
      %v7105 = vadd.f32 %v4478, %v7089
      %v7106 = vadd.f32 %v4479, %v7094
      %v7107 = vadd.f32 %v4480, %v7097
      %v7108 = vld [vmem:[%s11] sm:$0x1]
      %v7109 = vld [vmem:[%s12] sm:$0x1]
      %v7110 = vsel %vm480, %v7100, 0.0
      %7111 = vadd.xlane.f32.xlu0 %v7110
      %v7112 = vpop.xlane.xlu0 %7111
      %v7113 = vsel %vm480, %v7101, 0.0
      %7114 = vadd.xlane.f32.xlu0 %v7113
      %v7115 = vpop.xlane.xlu0 %7114
      %v7116 = vsel %vm480, %v7102, 0.0
      %7117 = vadd.xlane.f32.xlu0 %v7116
      %v7118 = vpop.xlane.xlu0 %7117
      %v7119 = vsel %vm480, %v7103, 0.0
      %7120 = vadd.xlane.f32.xlu0 %v7119
      %v7121 = vpop.xlane.xlu0 %7120
      %v7122 = vsel %vm480, %v7104, 0.0
      %7123 = vadd.xlane.f32.xlu0 %v7122
      %v7124 = vpop.xlane.xlu0 %7123
      %v7125 = vsel %vm480, %v7105, 0.0
      %7126 = vadd.xlane.f32.xlu0 %v7125
      %v7127 = vpop.xlane.xlu0 %7126
      %v7128 = vsel %vm480, %v7106, 0.0
      %7129 = vadd.xlane.f32.xlu0 %v7128
      %v7130 = vpop.xlane.xlu0 %7129
      %v7131 = vsel %vm480, %v7107, 0.0
      %7132 = vadd.xlane.f32.xlu0 %v7131
      %v7133 = vpop.xlane.xlu0 %7132
      %v7134 = vmul.f32 %v7112, %v4372
      %v7135 = vmul.f32 %v7115, %v4372
      %v7136 = vmul.f32 %v7118, %v4372
      %v7137 = vmul.f32 %v7121, %v4372
      %v7138 = vmul.f32 %v7124, %v4372
      %v7139 = vmul.f32 %v7127, %v4372
      %v7140 = vmul.f32 %v7130, %v4372
      %v7141 = vmul.f32 %v7133, %v4372
      %v7142 = vsub.f32 %v7100, %v7134
      %v7143 = vsub.f32 %v7101, %v7135
      %v7144 = vsub.f32 %v7102, %v7136
      %v7145 = vsub.f32 %v7103, %v7137
      %v7146 = vsub.f32 %v7104, %v7138
      %v7147 = vsub.f32 %v7105, %v7139
      %v7148 = vsub.f32 %v7106, %v7140
      %v7149 = vsub.f32 %v7107, %v7141
      %v7150 = vmul.f32 %v7142, %v7142
      %v7151 = vmul.f32 %v7143, %v7143
      %v7152 = vmul.f32 %v7144, %v7144
      %v7153 = vmul.f32 %v7145, %v7145
      %v7154 = vmul.f32 %v7146, %v7146
      %v7155 = vmul.f32 %v7147, %v7147
      %v7156 = vmul.f32 %v7148, %v7148
      %v7157 = vmul.f32 %v7149, %v7149
      %v7158 = vsel %vm480, %v7150, 0.0
      %7159 = vadd.xlane.f32.xlu0 %v7158
      %v7160 = vpop.xlane.xlu0 %7159
      %v7161 = vsel %vm480, %v7151, 0.0
      %7162 = vadd.xlane.f32.xlu0 %v7161
      %v7163 = vpop.xlane.xlu0 %7162
      %v7164 = vsel %vm480, %v7152, 0.0
      %7165 = vadd.xlane.f32.xlu0 %v7164
      %v7166 = vpop.xlane.xlu0 %7165
      %v7167 = vsel %vm480, %v7153, 0.0
      %7168 = vadd.xlane.f32.xlu0 %v7167
      %v7169 = vpop.xlane.xlu0 %7168
      %v7170 = vsel %vm480, %v7154, 0.0
      %7171 = vadd.xlane.f32.xlu0 %v7170
      %v7172 = vpop.xlane.xlu0 %7171
      %v7173 = vsel %vm480, %v7155, 0.0
      %7174 = vadd.xlane.f32.xlu0 %v7173
      %v7175 = vpop.xlane.xlu0 %7174
      %v7176 = vsel %vm480, %v7156, 0.0
      %7177 = vadd.xlane.f32.xlu0 %v7176
      %v7178 = vpop.xlane.xlu0 %7177
      %v7179 = vsel %vm480, %v7157, 0.0
      %7180 = vadd.xlane.f32.xlu0 %v7179
      %v7181 = vpop.xlane.xlu0 %7180
      %v7182 = vmul.f32 %v7160, %v4372
      %v7183 = vmul.f32 %v7163, %v4372
      %v7184 = vmul.f32 %v7166, %v4372
      %v7185 = vmul.f32 %v7169, %v4372
      %v7186 = vmul.f32 %v7172, %v4372
      %v7187 = vmul.f32 %v7175, %v4372
      %v7188 = vmul.f32 %v7178, %v4372
      %v7189 = vmul.f32 %v7181, %v4372
      %v7190 = vadd.f32 %v7182, 1e-05
      %v7191 = vadd.f32 %v7183, 1e-05
      %v7192 = vadd.f32 %v7184, 1e-05
      %v7193 = vadd.f32 %v7185, 1e-05
      %v7194 = vadd.f32 %v7186, 1e-05
      %v7195 = vadd.f32 %v7187, 1e-05
      %v7196 = vadd.f32 %v7188, 1e-05
      %v7197 = vadd.f32 %v7189, 1e-05
      %v7198 = vrsqrt.pop %v7190
      %v7199 = vrsqrt.pop %v7191
      %v7200 = vrsqrt.pop %v7192
      %v7201 = vrsqrt.pop %v7193
      %v7202 = vrsqrt.pop %v7194
      %v7203 = vrsqrt.pop %v7195
      %v7204 = vrsqrt.pop %v7196
      %v7205 = vrsqrt.pop %v7197
      %v7206 = vmul.f32 %v7142, %v7198
      %v7207 = vmul.f32 %v7143, %v7199
      %v7208 = vmul.f32 %v7144, %v7200
      %v7209 = vmul.f32 %v7145, %v7201
      %v7210 = vmul.f32 %v7146, %v7202
      %v7211 = vmul.f32 %v7147, %v7203
      %v7212 = vmul.f32 %v7148, %v7204
      %v7213 = vmul.f32 %v7149, %v7205
      %v7215 = vlaneseq
      %v7216 = vshrl.u32 %v7215, 7
      %v7217 = vsub.s32 0, %v7216
      %v7218 = vrot.slane %v7108, %v7217
      %v7220 = vmul.f32 %v7206, %v7218
      %v7221 = vmul.f32 %v7207, %v7218
      %v7222 = vmul.f32 %v7208, %v7218
      %v7223 = vmul.f32 %v7209, %v7218
      %v7224 = vmul.f32 %v7210, %v7218
      %v7225 = vmul.f32 %v7211, %v7218
      %v7226 = vmul.f32 %v7212, %v7218
      %v7227 = vmul.f32 %v7213, %v7218
      %v7229 = vlaneseq
      %v7230 = vshrl.u32 %v7229, 7
      %v7231 = vsub.s32 0, %v7230
      %v7232 = vrot.slane %v7109, %v7231
      %v7234 = vadd.f32 %v7220, %v7232
      %v7235 = vadd.f32 %v7221, %v7232
      %v7236 = vadd.f32 %v7222, %v7232
      %v7237 = vadd.f32 %v7223, %v7232
      %v7238 = vadd.f32 %v7224, %v7232
      %v7239 = vadd.f32 %v7225, %v7232
      %v7240 = vadd.f32 %v7226, %v7232
      %v7241 = vadd.f32 %v7227, %v7232
      %7242 = vst.msk [vmem:[%s442] sm:$0xff] %vm480, %v7234
      %7243 = vst.msk [vmem:[%s442 + $0x8] sm:$0xff] %vm480, %v7235
      %7244 = vst.msk [vmem:[%s442 + $0x10] sm:$0xff] %vm480, %v7236
      %7245 = vst.msk [vmem:[%s442 + $0x18] sm:$0xff] %vm480, %v7237
      %7246 = vst.msk [vmem:[%s442 + $0x20] sm:$0xff] %vm480, %v7238
      %7247 = vst.msk [vmem:[%s442 + $0x28] sm:$0xff] %vm480, %v7239
      %7248 = vst.msk [vmem:[%s442 + $0x30] sm:$0xff] %vm480, %v7240
      %7249 = vst.msk [vmem:[%s442 + $0x38] sm:$0xff] %vm480, %v7241
      %s7250 = smul.u32 8, %s24
      %p7251 = scmp.lt.s32.totalorder %s7250, 15
      %s7252 = scalar_select %p7251, %s7250, 15
      %s7253 = smul.addr %s7252, 8
      %s7254 = scalar_lea.vmem %s13, %s7253
      // Predicated region
      $region73: #{aa_forward.6} parent=71 // pred_check
        %p7255 = pneg %p320
      $region74: #{aa_forward.6} parent=71 // pred_check_branch
        %7257 = sbr.rel (%p7255) target = $region76
      $region75: #{aa_forward.6} parent=71 // pred_region
        %s7258 = smul.u32 8, %s24
      $region76: #{aa_forward.6} parent=71 // pred_fallthru
        _
    $region72: #{aa_forward.6} parent=5 // pred_fallthru
      _
    %p7259 = scmp.le.s32.totalorder 2, %s19
    // Predicated region
    $region77: #{aa_forward.6} parent=5 // pred_check
      %p7260 = pneg %p7259
    $region78: #{aa_forward.6} parent=5 // pred_check_branch
      %7262 = sbr.rel (%p7260) target = $region80
    $region79: #{aa_forward.6} parent=5 // pred_region
      %s7263 = ssub.s32 %s19, 2
      // Predicated region
      $region81: #{aa_forward.6} parent=79 // pred_check
        %p7264 = pneg %p326
      $region82: #{aa_forward.6} parent=79 // pred_check_branch
        %7266 = sbr.rel (%p7264) target = $region84
      $region83: #{aa_forward.6} parent=79 // pred_region
        %s7267 = smul.u32 8, %s25
        %p7268 = scmp.lt.s32.totalorder %s7267, 15
        %s7269 = scalar_select %p7268, %s7267, 15
        %s7270 = smul.addr %s7269, 8
        %s7271 = scalar_lea.vmem %s13, %s7270
      $region84: #{aa_forward.6} parent=79 // pred_fallthru
        _
    $region80: #{aa_forward.6} parent=5 // pred_fallthru
      _
  $region6: #{aa_forward.6} parent=0 // loop_footer
    %s23 = sadd.s32 1, %s19
  $region7: #{aa_forward.6} parent=0 // loop_footer_branch
    %18 = sbr.rel target = $region3
  $region8: #{aa_forward.6} parent=0 // loop_exit
    _

</llo_original>
